<compile_context>
chip_gen: v7x
topology: tpu7x:2x2x1
jax: 0.10.0
libtpu: 0.0.40
codegen_flags: <defaults>
</compile_context>

<pallas_src>
import jax
import jax.numpy as jnp
from jax import lax
from jax.experimental import pallas as pl
from jax.experimental.pallas import tpu as pltpu


# Phase/tap map for ConvTranspose2d(k=4, s=2, p=1), per spatial dim.
# Output o = 2*r + p pulls input i with o = 2*i - 1 + k; in window coordinates
# d = i - r + 1 over the pad-1 input, only these (p, d) -> k taps are non-zero:
_TAP = {(0, 0): 3, (0, 1): 1, (1, 1): 2, (1, 2): 0}


def _phase_weights(weight_t):
    """(Cin, Cout, 4, 4) ConvTranspose2d weight -> (9, Cin, 4*Cout) phase matrix (f32)."""
    Cin, Cout = weight_t.shape[0], weight_t.shape[1]
    w = jnp.zeros((3, 3, Cin, Cout, 2, 2), dtype=jnp.float32)
    for (py, dy), ky in _TAP.items():
        for (px, dx), kx in _TAP.items():
            w = w.at[dy, dx, :, :, py, px].set(weight_t[:, :, ky, kx])
    # rows: tap t = dy*3 + dx; cols: co*4 + py*2 + px
    return w.reshape(9, Cin, Cout * 4)


def _deconv_acc(x_ref, w_ref):
    """Phase-decomposed deconv for one image: 9 in-kernel taps, f32 accumulator."""
    Hp, Wp, _ = x_ref.shape
    H, W = Hp - 2, Wp - 2
    P = H * W
    Nout = w_ref.shape[-1]
    acc = jnp.zeros((P, Nout), jnp.float32)
    for t in range(9):                                   # static unroll, 9 MXU dots
        dy, dx = divmod(t, 3)
        tap = x_ref[pl.ds(dy, H), pl.ds(dx, W), :].reshape(P, -1)   # (P, Cin)
        acc = acc + jnp.dot(tap, w_ref[t], preferred_element_type=jnp.float32)
    return acc


# ---------------------------------------------------------------------------
# Pass 1: per-image partial BatchNorm statistics (sum, centered sum of squares)
# ---------------------------------------------------------------------------
def _stats_kernel(x_ref, w_ref, stat_ref):
    # x_ref: (H+2, W+2, Cin) bf16    w_ref: (9, Cin, Nout) bf16
    # stat_ref: (8, Nout) f32 -- row 0 = column sums, row 1 = centered sumsq (M2).
    acc = _deconv_acc(x_ref, w_ref)
    P = acc.shape[0]
    col_sum = jnp.sum(acc, axis=0, keepdims=True)                  # (1, Nout)
    col_mean = col_sum * (1.0 / P)
    col_m2 = jnp.sum((acc - col_mean) ** 2, axis=0, keepdims=True) # (1, Nout)
    stat_ref[0:1, :] = col_sum
    stat_ref[1:2, :] = col_m2


# ---------------------------------------------------------------------------
# Pass 2: recompute deconv with inv_std-folded weights, add bias, ReLU, store
# ---------------------------------------------------------------------------
def _apply_kernel(x_ref, w_ref, b_ref, o_ref):
    # w_ref columns already scaled by inv_std; b_ref = -mean * inv_std  (1, Nout) f32.
    acc = _deconv_acc(x_ref, w_ref)
    o_ref[...] = jnp.maximum(acc + b_ref[...], 0.0).astype(o_ref.dtype)


# ---------------------------------------------------------------------------
# DeconvBlock forward
# ---------------------------------------------------------------------------
def deconv_block_forward(x_nchw, weight_t, *, eps=1e-5, compute_dtype=jnp.bfloat16,
                         out_dtype=jnp.float32, out_layout="NCHW"):
    """ConvTranspose2d(4, 2, 1, bias=False) -> BatchNorm2d(train) -> ReLU.

    x_nchw:   (N, Cin, H, W) f32
    weight_t: PyTorch ConvTranspose2d weight, (Cin, Cout, 4, 4) f32
    out_layout: "NCHW" (module parity) or "phase" ((N, H, W, Cout, 2, 2), skips the
                epilogue transpose -- review item 3).
    """
    N, Cin, H, W = x_nchw.shape
    w_cin, Cout, K, K2 = weight_t.shape
    assert (w_cin, K, K2) == (Cin, 4, 4), "kernel specialised for k=4, s=2, p=1"
    Ho, Wo = 2 * H, 2 * W
    P = H * W
    Nout = 4 * Cout
    Hp, Wp = H + 2, W + 2

    # Padded NHWC activation, read directly by both passes (no im2col materialization).
    x_nhwc = jnp.transpose(x_nchw, (0, 2, 3, 1))
    x_pad = jnp.pad(x_nhwc, ((0, 0), (1, 1), (1, 1), (0, 0))).astype(compute_dtype)

    w_phase = _phase_weights(weight_t.astype(jnp.float32))          # (9, Cin, Nout) f32
    w_bf = w_phase.astype(compute_dtype)

    # Explicit VMEM budget (review items 7/8): per-step working set, double-buffered,
    # clamped to stay within every generation's scoped/physical limits.
    itm = jnp.dtype(compute_dtype).itemsize
    est = (2 * (Hp * Wp * Cin * itm)            # x slab, double-buffered
           + 2 * (9 * Cin * Nout * itm)         # resident weights (2 buffers worst case)
           + 2 * (P * Nout * jnp.dtype(out_dtype).itemsize)   # output block
           + P * Nout * 4 + 8 * Nout * 4)       # f32 accumulator + stats
    vmem_limit = int(min(max(4 * est, 32 << 20), 56 << 20))
    cparams = pltpu.CompilerParams(dimension_semantics=("parallel",),
                                   vmem_limit_bytes=vmem_limit)

    x_spec = pl.BlockSpec((None, Hp, Wp, Cin), lambda n: (n, 0, 0, 0))
    w_spec = pl.BlockSpec((9, Cin, Nout), lambda n: (0, 0, 0))      # resident weight

    # ---- pass 1: per-image partial statistics; "parallel" grid => both v7x cores ----
    stats = pl.pallas_call(
        _stats_kernel,
        grid_spec=pltpu.PrefetchScalarGridSpec(
            num_scalar_prefetch=0,
            grid=(N,),
            in_specs=[x_spec, w_spec],
            out_specs=pl.BlockSpec((None, 8, Nout), lambda n: (n, 0, 0))),
        out_shape=jax.ShapeDtypeStruct((N, 8, Nout), jnp.float32),
        compiler_params=cparams,
    )(x_pad, w_bf)

    # ---- Chan-style combination of per-(image, phase-column) partials (numerically
    #      stable, avoids the E[y^2]-E[y]^2 cancellation) ----
    col_sum = stats[:, 0, :]                                        # (N, Nout)
    col_m2 = stats[:, 1, :]                                         # (N, Nout)
    col_mean = col_sum / P
    n_pix = N * Ho * Wo                                             # per-channel population
    ch_mean = col_sum.reshape(N, Cout, 4).sum(axis=(0, 2)) / n_pix
    delta = col_mean.reshape(N, Cout, 4) - ch_mean[None, :, None]
    ch_m2 = (col_m2.reshape(N, Cout, 4).sum(axis=(0, 2))
             + P * jnp.sum(delta * delta, axis=(0, 2)))
    ch_var = ch_m2 / n_pix                                          # biased var (PyTorch BN)
    ch_inv = lax.rsqrt(ch_var + eps)

    # ---- fold BN into pass 2: W' = W * inv_std (per column), b = -mean * inv_std ----
    w_norm = (w_phase * jnp.repeat(ch_inv, 4)[None, None, :]).astype(compute_dtype)
    bias = jnp.repeat(-ch_mean * ch_inv, 4).reshape(1, Nout).astype(jnp.float32)

    # ---- pass 2: recompute deconv (cheaper than spilling y), folded BN + ReLU; the
    #      store writes only the Nout real columns (128-lane dense whenever Cout>=32) ----
    out = pl.pallas_call(
        _apply_kernel,
        grid_spec=pltpu.PrefetchScalarGridSpec(
            num_scalar_prefetch=0,
            grid=(N,),
            in_specs=[x_spec, w_spec,
                      pl.BlockSpec((1, Nout), lambda n: (0, 0))],
            out_specs=pl.BlockSpec((None, P, Nout), lambda n: (n, 0, 0))),
        out_shape=jax.ShapeDtypeStruct((N, P, Nout), out_dtype),
        compiler_params=cparams,
    )(x_pad, w_norm, bias)

    out = out.reshape(N, H, W, Cout, 2, 2)               # (n, r, c, co, py, px)
    if out_layout == "phase":
        return out                                       # consumer skips the transpose
    # NCHW for module parity: the single remaining XLA transpose of the output.
    return jnp.transpose(out, (0, 3, 1, 4, 2, 5)).reshape(N, Cout, Ho, Wo)


# ---------------------------------------------------------------------------
# Pure-JAX reference (module semantics) for the correctness check
# ---------------------------------------------------------------------------
def deconv_block_reference(x_nchw, weight_t, *, eps=1e-5):
    Cin, Cout, K, _ = weight_t.shape
    w_conv = jnp.transpose(weight_t[:, :, ::-1, ::-1], (1, 0, 2, 3))  # (Cout, Cin, K, K)
    y = lax.conv_general_dilated(
        x_nchw, w_conv,
        window_strides=(1, 1),
        padding=[(K - 1 - 1, K - 1 - 1)] * 2,
        lhs_dilation=(2, 2),
        dimension_numbers=("NCHW", "OIHW", "NCHW"),
    )
    mean = jnp.mean(y, axis=(0, 2, 3), keepdims=True)
    var = jnp.mean((y - mean) ** 2, axis=(0, 2, 3), keepdims=True)
    return jnp.maximum((y - mean) * lax.rsqrt(var + eps), 0.0)


if __name__ == "__main__":
    key = jax.random.PRNGKey(0)
    k_x, k_w = jax.random.split(key)

    N, Cin, Cout, H, W, K = 2, 4, 8, 16, 16, 4

    x = jax.random.normal(k_x, (N, Cin, H, W), dtype=jnp.float32)

    # Deterministic kaiming_normal_ (ReLU branch): PyTorch fan_in for the
    # ConvTranspose2d weight (Cin, Cout, K, K) is Cout * K * K.
    fan_in = Cout * K * K
    std = (2.0 / fan_in) ** 0.5
    weight_t = std * jax.random.normal(k_w, (Cin, Cout, K, K), dtype=jnp.float32)

    fwd = jax.jit(deconv_block_forward)
    out = jax.block_until_ready(fwd(x, weight_t))
    assert out.shape == (N, Cout, 2 * H, 2 * W), out.shape
    assert bool(jnp.all(jnp.isfinite(out)))

    # Check vs. the reference fed the same bf16-rounded operands (validates the kernel
    # math; folding inv_std into the bf16 weights adds ~one extra bf16 rounding).
    x_bf = x.astype(jnp.bfloat16).astype(jnp.float32)
    w_bf = weight_t.astype(jnp.bfloat16).astype(jnp.float32)
    ref_same = deconv_block_reference(x_bf, w_bf)
    err_same = float(jnp.max(jnp.abs(out - ref_same)))
    assert jnp.allclose(out, ref_same, atol=5e-2, rtol=5e-2), err_same

    # Loose check vs. full-f32 module semantics (bf16 MXU inputs).
    ref_f32 = deconv_block_reference(x, weight_t)
    err_f32 = float(jnp.max(jnp.abs(out - ref_f32)))
    assert jnp.allclose(out, ref_f32, atol=1e-1, rtol=1e-1), err_f32

    print("KERNEL_OK")
</pallas_src>

<mosaic_0001>
module attributes {stable_mosaic.version = 11 : i64} {
  func.func @_stats_kernel(%arg0: i32, %arg1: memref<1x18x18x4xbf16, #tpu.memory_space<vmem>>, %arg2: memref<9x4x32xbf16, #tpu.memory_space<vmem>>, %arg3: memref<1x8x32xf32, #tpu.memory_space<vmem>>) attributes {dimension_semantics = [#tpu.dimension_semantics<parallel>], iteration_bounds = array<i64: 2>, scalar_prefetch = 0 : i64, scratch_operands = 0 : i64, tpu.core_type = #tpu.core_type<tc>, window_params = [{transform_indices = @transform_0, window_bounds = array<i64: 1, 18, 18, 4>}, {pipeline_mode = #tpu.pipeline_mode<synchronous>, transform_indices = @transform_1, window_bounds = array<i64: 9, 4, 32>}, {transform_indices = @transform_2, window_bounds = array<i64: 1, 8, 32>}]} {
    %cst = arith.constant 0.000000e+00 : f32
    %0 = vector.broadcast %cst : f32 to vector<256x32xf32>
    %c0 = arith.constant 0 : index
    %c0_0 = arith.constant 0 : index
    %c0_1 = arith.constant 0 : index
    %c0_2 = arith.constant 0 : index
    %1 = vector.load %arg1[%c0, %c0_0, %c0_1, %c0_2] : memref<1x18x18x4xbf16, #tpu.memory_space<vmem>>, vector<1x16x16x4xbf16>
    %2 = vector.shape_cast %1 : vector<1x16x16x4xbf16> to vector<16x16x4xbf16>
    %3 = vector.shape_cast %2 : vector<16x16x4xbf16> to vector<256x4xbf16>
    %c0_3 = arith.constant 0 : index
    %c0_4 = arith.constant 0 : index
    %c0_5 = arith.constant 0 : index
    %4 = vector.load %arg2[%c0_3, %c0_4, %c0_5] : memref<9x4x32xbf16, #tpu.memory_space<vmem>>, vector<1x4x32xbf16>
    %5 = vector.shape_cast %4 : vector<1x4x32xbf16> to vector<4x32xbf16>
    %cst_6 = arith.constant dense<0.000000e+00> : vector<256x32xf32>
    %6 = tpu.matmul %3, %5, %cst_6 {dimension_numbers = #tpu.dot_dimension_numbers<[1], [0], [0], [1], [0, 0, 1, 1], [], []>} : vector<256x4xbf16>, vector<4x32xbf16>, vector<256x32xf32> -> vector<256x32xf32>
    %7 = arith.addf %0, %6 : vector<256x32xf32>
    %c0_7 = arith.constant 0 : index
    %c0_8 = arith.constant 0 : index
    %c1 = arith.constant 1 : index
    %c0_9 = arith.constant 0 : index
    %8 = vector.load %arg1[%c0_7, %c0_8, %c1, %c0_9] : memref<1x18x18x4xbf16, #tpu.memory_space<vmem>>, vector<1x16x16x4xbf16>
    %9 = vector.shape_cast %8 : vector<1x16x16x4xbf16> to vector<16x16x4xbf16>
    %10 = vector.shape_cast %9 : vector<16x16x4xbf16> to vector<256x4xbf16>
    %c1_10 = arith.constant 1 : index
    %c0_11 = arith.constant 0 : index
    %c0_12 = arith.constant 0 : index
    %11 = vector.load %arg2[%c1_10, %c0_11, %c0_12] : memref<9x4x32xbf16, #tpu.memory_space<vmem>>, vector<1x4x32xbf16>
    %12 = vector.shape_cast %11 : vector<1x4x32xbf16> to vector<4x32xbf16>
    %cst_13 = arith.constant dense<0.000000e+00> : vector<256x32xf32>
    %13 = tpu.matmul %10, %12, %cst_13 {dimension_numbers = #tpu.dot_dimension_numbers<[1], [0], [0], [1], [0, 0, 1, 1], [], []>} : vector<256x4xbf16>, vector<4x32xbf16>, vector<256x32xf32> -> vector<256x32xf32>
    %14 = arith.addf %7, %13 : vector<256x32xf32>
    %c0_14 = arith.constant 0 : index
    %c0_15 = arith.constant 0 : index
    %c2 = arith.constant 2 : index
    %c0_16 = arith.constant 0 : index
    %15 = vector.load %arg1[%c0_14, %c0_15, %c2, %c0_16] : memref<1x18x18x4xbf16, #tpu.memory_space<vmem>>, vector<1x16x16x4xbf16>
    %16 = vector.shape_cast %15 : vector<1x16x16x4xbf16> to vector<16x16x4xbf16>
    %17 = vector.shape_cast %16 : vector<16x16x4xbf16> to vector<256x4xbf16>
    %c2_17 = arith.constant 2 : index
    %c0_18 = arith.constant 0 : index
    %c0_19 = arith.constant 0 : index
    %18 = vector.load %arg2[%c2_17, %c0_18, %c0_19] : memref<9x4x32xbf16, #tpu.memory_space<vmem>>, vector<1x4x32xbf16>
    %19 = vector.shape_cast %18 : vector<1x4x32xbf16> to vector<4x32xbf16>
    %cst_20 = arith.constant dense<0.000000e+00> : vector<256x32xf32>
    %20 = tpu.matmul %17, %19, %cst_20 {dimension_numbers = #tpu.dot_dimension_numbers<[1], [0], [0], [1], [0, 0, 1, 1], [], []>} : vector<256x4xbf16>, vector<4x32xbf16>, vector<256x32xf32> -> vector<256x32xf32>
    %21 = arith.addf %14, %20 : vector<256x32xf32>
    %c0_21 = arith.constant 0 : index
    %c1_22 = arith.constant 1 : index
    %c0_23 = arith.constant 0 : index
    %c0_24 = arith.constant 0 : index
    %22 = vector.load %arg1[%c0_21, %c1_22, %c0_23, %c0_24] : memref<1x18x18x4xbf16, #tpu.memory_space<vmem>>, vector<1x16x16x4xbf16>
    %23 = vector.shape_cast %22 : vector<1x16x16x4xbf16> to vector<16x16x4xbf16>
    %24 = vector.shape_cast %23 : vector<16x16x4xbf16> to vector<256x4xbf16>
    %c3 = arith.constant 3 : index
    %c0_25 = arith.constant 0 : index
    %c0_26 = arith.constant 0 : index
    %25 = vector.load %arg2[%c3, %c0_25, %c0_26] : memref<9x4x32xbf16, #tpu.memory_space<vmem>>, vector<1x4x32xbf16>
    %26 = vector.shape_cast %25 : vector<1x4x32xbf16> to vector<4x32xbf16>
    %cst_27 = arith.constant dense<0.000000e+00> : vector<256x32xf32>
    %27 = tpu.matmul %24, %26, %cst_27 {dimension_numbers = #tpu.dot_dimension_numbers<[1], [0], [0], [1], [0, 0, 1, 1], [], []>} : vector<256x4xbf16>, vector<4x32xbf16>, vector<256x32xf32> -> vector<256x32xf32>
    %28 = arith.addf %21, %27 : vector<256x32xf32>
    %c0_28 = arith.constant 0 : index
    %c1_29 = arith.constant 1 : index
    %c1_30 = arith.constant 1 : index
    %c0_31 = arith.constant 0 : index
    %29 = vector.load %arg1[%c0_28, %c1_29, %c1_30, %c0_31] : memref<1x18x18x4xbf16, #tpu.memory_space<vmem>>, vector<1x16x16x4xbf16>
    %30 = vector.shape_cast %29 : vector<1x16x16x4xbf16> to vector<16x16x4xbf16>
    %31 = vector.shape_cast %30 : vector<16x16x4xbf16> to vector<256x4xbf16>
    %c4 = arith.constant 4 : index
    %c0_32 = arith.constant 0 : index
    %c0_33 = arith.constant 0 : index
    %32 = vector.load %arg2[%c4, %c0_32, %c0_33] : memref<9x4x32xbf16, #tpu.memory_space<vmem>>, vector<1x4x32xbf16>
    %33 = vector.shape_cast %32 : vector<1x4x32xbf16> to vector<4x32xbf16>
    %cst_34 = arith.constant dense<0.000000e+00> : vector<256x32xf32>
    %34 = tpu.matmul %31, %33, %cst_34 {dimension_numbers = #tpu.dot_dimension_numbers<[1], [0], [0], [1], [0, 0, 1, 1], [], []>} : vector<256x4xbf16>, vector<4x32xbf16>, vector<256x32xf32> -> vector<256x32xf32>
    %35 = arith.addf %28, %34 : vector<256x32xf32>
    %c0_35 = arith.constant 0 : index
    %c1_36 = arith.constant 1 : index
    %c2_37 = arith.constant 2 : index
    %c0_38 = arith.constant 0 : index
    %36 = vector.load %arg1[%c0_35, %c1_36, %c2_37, %c0_38] : memref<1x18x18x4xbf16, #tpu.memory_space<vmem>>, vector<1x16x16x4xbf16>
    %37 = vector.shape_cast %36 : vector<1x16x16x4xbf16> to vector<16x16x4xbf16>
    %38 = vector.shape_cast %37 : vector<16x16x4xbf16> to vector<256x4xbf16>
    %c5 = arith.constant 5 : index
    %c0_39 = arith.constant 0 : index
    %c0_40 = arith.constant 0 : index
    %39 = vector.load %arg2[%c5, %c0_39, %c0_40] : memref<9x4x32xbf16, #tpu.memory_space<vmem>>, vector<1x4x32xbf16>
    %40 = vector.shape_cast %39 : vector<1x4x32xbf16> to vector<4x32xbf16>
    %cst_41 = arith.constant dense<0.000000e+00> : vector<256x32xf32>
    %41 = tpu.matmul %38, %40, %cst_41 {dimension_numbers = #tpu.dot_dimension_numbers<[1], [0], [0], [1], [0, 0, 1, 1], [], []>} : vector<256x4xbf16>, vector<4x32xbf16>, vector<256x32xf32> -> vector<256x32xf32>
    %42 = arith.addf %35, %41 : vector<256x32xf32>
    %c0_42 = arith.constant 0 : index
    %c2_43 = arith.constant 2 : index
    %c0_44 = arith.constant 0 : index
    %c0_45 = arith.constant 0 : index
    %43 = vector.load %arg1[%c0_42, %c2_43, %c0_44, %c0_45] : memref<1x18x18x4xbf16, #tpu.memory_space<vmem>>, vector<1x16x16x4xbf16>
    %44 = vector.shape_cast %43 : vector<1x16x16x4xbf16> to vector<16x16x4xbf16>
    %45 = vector.shape_cast %44 : vector<16x16x4xbf16> to vector<256x4xbf16>
    %c6 = arith.constant 6 : index
    %c0_46 = arith.constant 0 : index
    %c0_47 = arith.constant 0 : index
    %46 = vector.load %arg2[%c6, %c0_46, %c0_47] : memref<9x4x32xbf16, #tpu.memory_space<vmem>>, vector<1x4x32xbf16>
    %47 = vector.shape_cast %46 : vector<1x4x32xbf16> to vector<4x32xbf16>
    %cst_48 = arith.constant dense<0.000000e+00> : vector<256x32xf32>
    %48 = tpu.matmul %45, %47, %cst_48 {dimension_numbers = #tpu.dot_dimension_numbers<[1], [0], [0], [1], [0, 0, 1, 1], [], []>} : vector<256x4xbf16>, vector<4x32xbf16>, vector<256x32xf32> -> vector<256x32xf32>
    %49 = arith.addf %42, %48 : vector<256x32xf32>
    %c0_49 = arith.constant 0 : index
    %c2_50 = arith.constant 2 : index
    %c1_51 = arith.constant 1 : index
    %c0_52 = arith.constant 0 : index
    %50 = vector.load %arg1[%c0_49, %c2_50, %c1_51, %c0_52] : memref<1x18x18x4xbf16, #tpu.memory_space<vmem>>, vector<1x16x16x4xbf16>
    %51 = vector.shape_cast %50 : vector<1x16x16x4xbf16> to vector<16x16x4xbf16>
    %52 = vector.shape_cast %51 : vector<16x16x4xbf16> to vector<256x4xbf16>
    %c7 = arith.constant 7 : index
    %c0_53 = arith.constant 0 : index
    %c0_54 = arith.constant 0 : index
    %53 = vector.load %arg2[%c7, %c0_53, %c0_54] : memref<9x4x32xbf16, #tpu.memory_space<vmem>>, vector<1x4x32xbf16>
    %54 = vector.shape_cast %53 : vector<1x4x32xbf16> to vector<4x32xbf16>
    %cst_55 = arith.constant dense<0.000000e+00> : vector<256x32xf32>
    %55 = tpu.matmul %52, %54, %cst_55 {dimension_numbers = #tpu.dot_dimension_numbers<[1], [0], [0], [1], [0, 0, 1, 1], [], []>} : vector<256x4xbf16>, vector<4x32xbf16>, vector<256x32xf32> -> vector<256x32xf32>
    %56 = arith.addf %49, %55 : vector<256x32xf32>
    %c0_56 = arith.constant 0 : index
    %c2_57 = arith.constant 2 : index
    %c2_58 = arith.constant 2 : index
    %c0_59 = arith.constant 0 : index
    %57 = vector.load %arg1[%c0_56, %c2_57, %c2_58, %c0_59] : memref<1x18x18x4xbf16, #tpu.memory_space<vmem>>, vector<1x16x16x4xbf16>
    %58 = vector.shape_cast %57 : vector<1x16x16x4xbf16> to vector<16x16x4xbf16>
    %59 = vector.shape_cast %58 : vector<16x16x4xbf16> to vector<256x4xbf16>
    %c8 = arith.constant 8 : index
    %c0_60 = arith.constant 0 : index
    %c0_61 = arith.constant 0 : index
    %60 = vector.load %arg2[%c8, %c0_60, %c0_61] : memref<9x4x32xbf16, #tpu.memory_space<vmem>>, vector<1x4x32xbf16>
    %61 = vector.shape_cast %60 : vector<1x4x32xbf16> to vector<4x32xbf16>
    %cst_62 = arith.constant dense<0.000000e+00> : vector<256x32xf32>
    %62 = tpu.matmul %59, %61, %cst_62 {dimension_numbers = #tpu.dot_dimension_numbers<[1], [0], [0], [1], [0, 0, 1, 1], [], []>} : vector<256x4xbf16>, vector<4x32xbf16>, vector<256x32xf32> -> vector<256x32xf32>
    %63 = arith.addf %56, %62 : vector<256x32xf32>
    %cst_63 = arith.constant dense<0.000000e+00> : vector<32xf32>
    %64 = vector.multi_reduction <add>, %63, %cst_63 [0] : vector<256x32xf32> to vector<32xf32>
    %65 = vector.shape_cast %64 : vector<32xf32> to vector<1x32xf32>
    %cst_64 = arith.constant 3.906250e-03 : f32
    %66 = vector.broadcast %cst_64 : f32 to vector<1x32xf32>
    %67 = arith.mulf %65, %66 : vector<1x32xf32>
    %68 = vector.broadcast %67 : vector<1x32xf32> to vector<256x32xf32>
    %69 = arith.subf %63, %68 : vector<256x32xf32>
    %70 = arith.mulf %69, %69 : vector<256x32xf32>
    %cst_65 = arith.constant dense<0.000000e+00> : vector<32xf32>
    %71 = vector.multi_reduction <add>, %70, %cst_65 [0] : vector<256x32xf32> to vector<32xf32>
    %72 = vector.shape_cast %71 : vector<32xf32> to vector<1x32xf32>
    %c0_66 = arith.constant 0 : index
    %c0_67 = arith.constant 0 : index
    %c0_68 = arith.constant 0 : index
    %73 = vector.load %arg3[%c0_66, %c0_67, %c0_68] : memref<1x8x32xf32, #tpu.memory_space<vmem>>, vector<1x1x32xf32>
    %74 = vector.shape_cast %73 : vector<1x1x32xf32> to vector<1x32xf32>
    %75 = vector.shape_cast %65 : vector<1x32xf32> to vector<1x1x32xf32>
    tpu.vector_store %arg3[%c0_66, %c0_67, %c0_68], %75 {strides = array<i32>} : memref<1x8x32xf32, #tpu.memory_space<vmem>>, vector<1x1x32xf32>,
    %c0_69 = arith.constant 0 : index
    %c1_70 = arith.constant 1 : index
    %c0_71 = arith.constant 0 : index
    %76 = vector.load %arg3[%c0_69, %c1_70, %c0_71] : memref<1x8x32xf32, #tpu.memory_space<vmem>>, vector<1x1x32xf32>
    %77 = vector.shape_cast %76 : vector<1x1x32xf32> to vector<1x32xf32>
    %78 = vector.shape_cast %72 : vector<1x32xf32> to vector<1x1x32xf32>
    tpu.vector_store %arg3[%c0_69, %c1_70, %c0_71], %78 {strides = array<i32>} : memref<1x8x32xf32, #tpu.memory_space<vmem>>, vector<1x1x32xf32>,
    return
  }
  func.func @transform_0(%arg0: i32) -> (i32, i32, i32, i32) {
    %c0_i32 = arith.constant 0 : i32
    %c0_i32_0 = arith.constant 0 : i32
    %c0_i32_1 = arith.constant 0 : i32
    %c0_i32_2 = arith.constant 0 : i32
    return %arg0, %c0_i32, %c0_i32_0, %c0_i32_1 : i32, i32, i32, i32
  }
  func.func @transform_1(%arg0: i32) -> (i32, i32, i32) {
    %c0_i32 = arith.constant 0 : i32
    %c0_i32_0 = arith.constant 0 : i32
    %c0_i32_1 = arith.constant 0 : i32
    %c0_i32_2 = arith.constant 0 : i32
    return %c0_i32, %c0_i32_0, %c0_i32_1 : i32, i32, i32
  }
  func.func @transform_2(%arg0: i32) -> (i32, i32, i32) {
    %c0_i32 = arith.constant 0 : i32
    %c0_i32_0 = arith.constant 0 : i32
    %c0_i32_1 = arith.constant 0 : i32
    return %arg0, %c0_i32, %c0_i32_0 : i32, i32, i32
  }
}

module attributes {stable_mosaic.version = 11 : i64} {
  func.func @_apply_kernel(%arg0: i32, %arg1: memref<1x18x18x4xbf16, #tpu.memory_space<vmem>>, %arg2: memref<9x4x32xbf16, #tpu.memory_space<vmem>>, %arg3: memref<1x32xf32, #tpu.memory_space<vmem>>, %arg4: memref<1x256x32xf32, #tpu.memory_space<vmem>>) attributes {dimension_semantics = [#tpu.dimension_semantics<parallel>], iteration_bounds = array<i64: 2>, scalar_prefetch = 0 : i64, scratch_operands = 0 : i64, tpu.core_type = #tpu.core_type<tc>, window_params = [{transform_indices = @transform_0, window_bounds = array<i64: 1, 18, 18, 4>}, {pipeline_mode = #tpu.pipeline_mode<synchronous>, transform_indices = @transform_1, window_bounds = array<i64: 9, 4, 32>}, {pipeline_mode = #tpu.pipeline_mode<synchronous>, transform_indices = @transform_2, window_bounds = array<i64: 1, 32>}, {transform_indices = @transform_3, window_bounds = array<i64: 1, 256, 32>}]} {
    %cst = arith.constant 0.000000e+00 : f32
    %0 = vector.broadcast %cst : f32 to vector<256x32xf32>
    %c0 = arith.constant 0 : index
    %c0_0 = arith.constant 0 : index
    %c0_1 = arith.constant 0 : index
    %c0_2 = arith.constant 0 : index
    %1 = vector.load %arg1[%c0, %c0_0, %c0_1, %c0_2] : memref<1x18x18x4xbf16, #tpu.memory_space<vmem>>, vector<1x16x16x4xbf16>
    %2 = vector.shape_cast %1 : vector<1x16x16x4xbf16> to vector<16x16x4xbf16>
    %3 = vector.shape_cast %2 : vector<16x16x4xbf16> to vector<256x4xbf16>
    %c0_3 = arith.constant 0 : index
    %c0_4 = arith.constant 0 : index
    %c0_5 = arith.constant 0 : index
    %4 = vector.load %arg2[%c0_3, %c0_4, %c0_5] : memref<9x4x32xbf16, #tpu.memory_space<vmem>>, vector<1x4x32xbf16>
    %5 = vector.shape_cast %4 : vector<1x4x32xbf16> to vector<4x32xbf16>
    %cst_6 = arith.constant dense<0.000000e+00> : vector<256x32xf32>
    %6 = tpu.matmul %3, %5, %cst_6 {dimension_numbers = #tpu.dot_dimension_numbers<[1], [0], [0], [1], [0, 0, 1, 1], [], []>} : vector<256x4xbf16>, vector<4x32xbf16>, vector<256x32xf32> -> vector<256x32xf32>
    %7 = arith.addf %0, %6 : vector<256x32xf32>
    %c0_7 = arith.constant 0 : index
    %c0_8 = arith.constant 0 : index
    %c1 = arith.constant 1 : index
    %c0_9 = arith.constant 0 : index
    %8 = vector.load %arg1[%c0_7, %c0_8, %c1, %c0_9] : memref<1x18x18x4xbf16, #tpu.memory_space<vmem>>, vector<1x16x16x4xbf16>
    %9 = vector.shape_cast %8 : vector<1x16x16x4xbf16> to vector<16x16x4xbf16>
    %10 = vector.shape_cast %9 : vector<16x16x4xbf16> to vector<256x4xbf16>
    %c1_10 = arith.constant 1 : index
    %c0_11 = arith.constant 0 : index
    %c0_12 = arith.constant 0 : index
    %11 = vector.load %arg2[%c1_10, %c0_11, %c0_12] : memref<9x4x32xbf16, #tpu.memory_space<vmem>>, vector<1x4x32xbf16>
    %12 = vector.shape_cast %11 : vector<1x4x32xbf16> to vector<4x32xbf16>
    %cst_13 = arith.constant dense<0.000000e+00> : vector<256x32xf32>
    %13 = tpu.matmul %10, %12, %cst_13 {dimension_numbers = #tpu.dot_dimension_numbers<[1], [0], [0], [1], [0, 0, 1, 1], [], []>} : vector<256x4xbf16>, vector<4x32xbf16>, vector<256x32xf32> -> vector<256x32xf32>
    %14 = arith.addf %7, %13 : vector<256x32xf32>
    %c0_14 = arith.constant 0 : index
    %c0_15 = arith.constant 0 : index
    %c2 = arith.constant 2 : index
    %c0_16 = arith.constant 0 : index
    %15 = vector.load %arg1[%c0_14, %c0_15, %c2, %c0_16] : memref<1x18x18x4xbf16, #tpu.memory_space<vmem>>, vector<1x16x16x4xbf16>
    %16 = vector.shape_cast %15 : vector<1x16x16x4xbf16> to vector<16x16x4xbf16>
    %17 = vector.shape_cast %16 : vector<16x16x4xbf16> to vector<256x4xbf16>
    %c2_17 = arith.constant 2 : index
    %c0_18 = arith.constant 0 : index
    %c0_19 = arith.constant 0 : index
    %18 = vector.load %arg2[%c2_17, %c0_18, %c0_19] : memref<9x4x32xbf16, #tpu.memory_space<vmem>>, vector<1x4x32xbf16>
    %19 = vector.shape_cast %18 : vector<1x4x32xbf16> to vector<4x32xbf16>
    %cst_20 = arith.constant dense<0.000000e+00> : vector<256x32xf32>
    %20 = tpu.matmul %17, %19, %cst_20 {dimension_numbers = #tpu.dot_dimension_numbers<[1], [0], [0], [1], [0, 0, 1, 1], [], []>} : vector<256x4xbf16>, vector<4x32xbf16>, vector<256x32xf32> -> vector<256x32xf32>
    %21 = arith.addf %14, %20 : vector<256x32xf32>
    %c0_21 = arith.constant 0 : index
    %c1_22 = arith.constant 1 : index
    %c0_23 = arith.constant 0 : index
    %c0_24 = arith.constant 0 : index
    %22 = vector.load %arg1[%c0_21, %c1_22, %c0_23, %c0_24] : memref<1x18x18x4xbf16, #tpu.memory_space<vmem>>, vector<1x16x16x4xbf16>
    %23 = vector.shape_cast %22 : vector<1x16x16x4xbf16> to vector<16x16x4xbf16>
    %24 = vector.shape_cast %23 : vector<16x16x4xbf16> to vector<256x4xbf16>
    %c3 = arith.constant 3 : index
    %c0_25 = arith.constant 0 : index
    %c0_26 = arith.constant 0 : index
    %25 = vector.load %arg2[%c3, %c0_25, %c0_26] : memref<9x4x32xbf16, #tpu.memory_space<vmem>>, vector<1x4x32xbf16>
    %26 = vector.shape_cast %25 : vector<1x4x32xbf16> to vector<4x32xbf16>
    %cst_27 = arith.constant dense<0.000000e+00> : vector<256x32xf32>
    %27 = tpu.matmul %24, %26, %cst_27 {dimension_numbers = #tpu.dot_dimension_numbers<[1], [0], [0], [1], [0, 0, 1, 1], [], []>} : vector<256x4xbf16>, vector<4x32xbf16>, vector<256x32xf32> -> vector<256x32xf32>
    %28 = arith.addf %21, %27 : vector<256x32xf32>
    %c0_28 = arith.constant 0 : index
    %c1_29 = arith.constant 1 : index
    %c1_30 = arith.constant 1 : index
    %c0_31 = arith.constant 0 : index
    %29 = vector.load %arg1[%c0_28, %c1_29, %c1_30, %c0_31] : memref<1x18x18x4xbf16, #tpu.memory_space<vmem>>, vector<1x16x16x4xbf16>
    %30 = vector.shape_cast %29 : vector<1x16x16x4xbf16> to vector<16x16x4xbf16>
    %31 = vector.shape_cast %30 : vector<16x16x4xbf16> to vector<256x4xbf16>
    %c4 = arith.constant 4 : index
    %c0_32 = arith.constant 0 : index
    %c0_33 = arith.constant 0 : index
    %32 = vector.load %arg2[%c4, %c0_32, %c0_33] : memref<9x4x32xbf16, #tpu.memory_space<vmem>>, vector<1x4x32xbf16>
    %33 = vector.shape_cast %32 : vector<1x4x32xbf16> to vector<4x32xbf16>
    %cst_34 = arith.constant dense<0.000000e+00> : vector<256x32xf32>
    %34 = tpu.matmul %31, %33, %cst_34 {dimension_numbers = #tpu.dot_dimension_numbers<[1], [0], [0], [1], [0, 0, 1, 1], [], []>} : vector<256x4xbf16>, vector<4x32xbf16>, vector<256x32xf32> -> vector<256x32xf32>
    %35 = arith.addf %28, %34 : vector<256x32xf32>
    %c0_35 = arith.constant 0 : index
    %c1_36 = arith.constant 1 : index
    %c2_37 = arith.constant 2 : index
    %c0_38 = arith.constant 0 : index
    %36 = vector.load %arg1[%c0_35, %c1_36, %c2_37, %c0_38] : memref<1x18x18x4xbf16, #tpu.memory_space<vmem>>, vector<1x16x16x4xbf16>
    %37 = vector.shape_cast %36 : vector<1x16x16x4xbf16> to vector<16x16x4xbf16>
    %38 = vector.shape_cast %37 : vector<16x16x4xbf16> to vector<256x4xbf16>
    %c5 = arith.constant 5 : index
    %c0_39 = arith.constant 0 : index
    %c0_40 = arith.constant 0 : index
    %39 = vector.load %arg2[%c5, %c0_39, %c0_40] : memref<9x4x32xbf16, #tpu.memory_space<vmem>>, vector<1x4x32xbf16>
    %40 = vector.shape_cast %39 : vector<1x4x32xbf16> to vector<4x32xbf16>
    %cst_41 = arith.constant dense<0.000000e+00> : vector<256x32xf32>
    %41 = tpu.matmul %38, %40, %cst_41 {dimension_numbers = #tpu.dot_dimension_numbers<[1], [0], [0], [1], [0, 0, 1, 1], [], []>} : vector<256x4xbf16>, vector<4x32xbf16>, vector<256x32xf32> -> vector<256x32xf32>
    %42 = arith.addf %35, %41 : vector<256x32xf32>
    %c0_42 = arith.constant 0 : index
    %c2_43 = arith.constant 2 : index
    %c0_44 = arith.constant 0 : index
    %c0_45 = arith.constant 0 : index
    %43 = vector.load %arg1[%c0_42, %c2_43, %c0_44, %c0_45] : memref<1x18x18x4xbf16, #tpu.memory_space<vmem>>, vector<1x16x16x4xbf16>
    %44 = vector.shape_cast %43 : vector<1x16x16x4xbf16> to vector<16x16x4xbf16>
    %45 = vector.shape_cast %44 : vector<16x16x4xbf16> to vector<256x4xbf16>
    %c6 = arith.constant 6 : index
    %c0_46 = arith.constant 0 : index
    %c0_47 = arith.constant 0 : index
    %46 = vector.load %arg2[%c6, %c0_46, %c0_47] : memref<9x4x32xbf16, #tpu.memory_space<vmem>>, vector<1x4x32xbf16>
    %47 = vector.shape_cast %46 : vector<1x4x32xbf16> to vector<4x32xbf16>
    %cst_48 = arith.constant dense<0.000000e+00> : vector<256x32xf32>
    %48 = tpu.matmul %45, %47, %cst_48 {dimension_numbers = #tpu.dot_dimension_numbers<[1], [0], [0], [1], [0, 0, 1, 1], [], []>} : vector<256x4xbf16>, vector<4x32xbf16>, vector<256x32xf32> -> vector<256x32xf32>
    %49 = arith.addf %42, %48 : vector<256x32xf32>
    %c0_49 = arith.constant 0 : index
    %c2_50 = arith.constant 2 : index
    %c1_51 = arith.constant 1 : index
    %c0_52 = arith.constant 0 : index
    %50 = vector.load %arg1[%c0_49, %c2_50, %c1_51, %c0_52] : memref<1x18x18x4xbf16, #tpu.memory_space<vmem>>, vector<1x16x16x4xbf16>
    %51 = vector.shape_cast %50 : vector<1x16x16x4xbf16> to vector<16x16x4xbf16>
    %52 = vector.shape_cast %51 : vector<16x16x4xbf16> to vector<256x4xbf16>
    %c7 = arith.constant 7 : index
    %c0_53 = arith.constant 0 : index
    %c0_54 = arith.constant 0 : index
    %53 = vector.load %arg2[%c7, %c0_53, %c0_54] : memref<9x4x32xbf16, #tpu.memory_space<vmem>>, vector<1x4x32xbf16>
    %54 = vector.shape_cast %53 : vector<1x4x32xbf16> to vector<4x32xbf16>
    %cst_55 = arith.constant dense<0.000000e+00> : vector<256x32xf32>
    %55 = tpu.matmul %52, %54, %cst_55 {dimension_numbers = #tpu.dot_dimension_numbers<[1], [0], [0], [1], [0, 0, 1, 1], [], []>} : vector<256x4xbf16>, vector<4x32xbf16>, vector<256x32xf32> -> vector<256x32xf32>
    %56 = arith.addf %49, %55 : vector<256x32xf32>
    %c0_56 = arith.constant 0 : index
    %c2_57 = arith.constant 2 : index
    %c2_58 = arith.constant 2 : index
    %c0_59 = arith.constant 0 : index
    %57 = vector.load %arg1[%c0_56, %c2_57, %c2_58, %c0_59] : memref<1x18x18x4xbf16, #tpu.memory_space<vmem>>, vector<1x16x16x4xbf16>
    %58 = vector.shape_cast %57 : vector<1x16x16x4xbf16> to vector<16x16x4xbf16>
    %59 = vector.shape_cast %58 : vector<16x16x4xbf16> to vector<256x4xbf16>
    %c8 = arith.constant 8 : index
    %c0_60 = arith.constant 0 : index
    %c0_61 = arith.constant 0 : index
    %60 = vector.load %arg2[%c8, %c0_60, %c0_61] : memref<9x4x32xbf16, #tpu.memory_space<vmem>>, vector<1x4x32xbf16>
    %61 = vector.shape_cast %60 : vector<1x4x32xbf16> to vector<4x32xbf16>
    %cst_62 = arith.constant dense<0.000000e+00> : vector<256x32xf32>
    %62 = tpu.matmul %59, %61, %cst_62 {dimension_numbers = #tpu.dot_dimension_numbers<[1], [0], [0], [1], [0, 0, 1, 1], [], []>} : vector<256x4xbf16>, vector<4x32xbf16>, vector<256x32xf32> -> vector<256x32xf32>
    %63 = arith.addf %56, %62 : vector<256x32xf32>
    %c0_63 = arith.constant 0 : index
    %c0_64 = arith.constant 0 : index
    %64 = vector.load %arg3[%c0_63, %c0_64] : memref<1x32xf32, #tpu.memory_space<vmem>>, vector<1x32xf32>
    %65 = vector.broadcast %64 : vector<1x32xf32> to vector<256x32xf32>
    %66 = arith.addf %63, %65 : vector<256x32xf32>
    %cst_65 = arith.constant 0.000000e+00 : f32
    %67 = vector.broadcast %cst_65 : f32 to vector<256x32xf32>
    %68 = arith.maximumf %66, %67 : vector<256x32xf32>
    %c0_66 = arith.constant 0 : index
    %c0_67 = arith.constant 0 : index
    %c0_68 = arith.constant 0 : index
    %69 = vector.load %arg4[%c0_66, %c0_67, %c0_68] : memref<1x256x32xf32, #tpu.memory_space<vmem>>, vector<1x256x32xf32>
    %70 = vector.shape_cast %69 : vector<1x256x32xf32> to vector<256x32xf32>
    %71 = vector.shape_cast %68 : vector<256x32xf32> to vector<1x256x32xf32>
    tpu.vector_store %arg4[%c0_66, %c0_67, %c0_68], %71 {strides = array<i32>} : memref<1x256x32xf32, #tpu.memory_space<vmem>>, vector<1x256x32xf32>,
    return
  }
  func.func @transform_0(%arg0: i32) -> (i32, i32, i32, i32) {
    %c0_i32 = arith.constant 0 : i32
    %c0_i32_0 = arith.constant 0 : i32
    %c0_i32_1 = arith.constant 0 : i32
    %c0_i32_2 = arith.constant 0 : i32
    return %arg0, %c0_i32, %c0_i32_0, %c0_i32_1 : i32, i32, i32, i32
  }
  func.func @transform_1(%arg0: i32) -> (i32, i32, i32) {
    %c0_i32 = arith.constant 0 : i32
    %c0_i32_0 = arith.constant 0 : i32
    %c0_i32_1 = arith.constant 0 : i32
    %c0_i32_2 = arith.constant 0 : i32
    return %c0_i32, %c0_i32_0, %c0_i32_1 : i32, i32, i32
  }
  func.func @transform_2(%arg0: i32) -> (i32, i32) {
    %c0_i32 = arith.constant 0 : i32
    %c0_i32_0 = arith.constant 0 : i32
    %c0_i32_1 = arith.constant 0 : i32
    return %c0_i32, %c0_i32_0 : i32, i32
  }
  func.func @transform_3(%arg0: i32) -> (i32, i32, i32) {
    %c0_i32 = arith.constant 0 : i32
    %c0_i32_0 = arith.constant 0 : i32
    %c0_i32_1 = arith.constant 0 : i32
    return %arg0, %c0_i32, %c0_i32_0 : i32, i32, i32
  }
}

</mosaic_0001>

<llo_original>
// kernel: deconv_block_forward.3
$region0: #{deconv_block_forward.3}
  #allocation0 [shape = 'u32[]', space=smem, size = 0x4, offset = 0x4, fixed_abs, tag = 'smem constant byte address 0x4 - core index']
  #allocation1 [shape = 'u32[144,128]{1,0:T(1,128)}', space=vmem, size = 0x12000, scoped, tag = 'internal scratch']
  %s0 = inlined_call_operand.vmem [shape: bf16[2,18,18,4], index: 0, kind: input, shape index: {}]
  %s1 = inlined_call_operand.vmem [shape: bf16[9,4,32], index: 1, kind: input, shape index: {}]
  %s2 = inlined_call_operand.vmem [shape: f32[1,32], index: 2, kind: input, shape index: {}]
  %s3 = inlined_call_operand.vmem [shape: f32[2,256,32], index: 3, kind: output, shape index: {}]
  %s4 = sld [smem:[#allocation0]]
  $region45: #{deconv_block_forward.3} parent=0
    _
  %s6 = ssub.s32 1, %s4
  %s7 = scalar_select 0, %s6, %s4
  loop: start=0, step=1, limit=4
  $region2: #{deconv_block_forward.3} parent=0 // loop_pre_header
    _
  $region3: #{deconv_block_forward.3} parent=0 // loop_header
    %s9 = sphi 0, %s13
    %p10 = scmp.ge.s32.totalorder %s9, 4
    %s19 = sphi 0, %s21
    %s22 = sphi 0, %s19
    %s23 = sphi 0, %s22
    %s39 = sphi 0, %s23
    %s43 = sphi 0, %s43
    %s45 = sphi 0, %s43
    %s46 = sphi 0, %s45
    %s60 = sphi 0, %s46
    %s64 = sphi 0, %s64
    %s66 = sphi 0, %s64
    %s67 = sphi 0, %s66
    %s81 = sphi 0, %s67
    %s87 = sphi 0, %s89
    %s90 = sphi 0, %s87
    %s91 = sphi 0, %s90
    %s107 = sphi 0, %s91
  $region4: #{deconv_block_forward.3} parent=0 // loop_header_branch
    %12 = sbr.rel (%p10) target = $region8
  $region5: #{deconv_block_forward.3} parent=0 // loop_body
    %s14 = ssub.s32 %s9, 1
    %s15 = ssub.s32 %s9, 2
    %s16 = sadd.s32 %s9, 1
    %s17 = ssub.s32 %s9, %s16
    %p18 = scmp.eq.s32.totalorder %s17, 0
    %s20 = sadd.s32 %s19, 1
    %s21 = scalar_select %p18, %s19, %s20
    %p24 = pneg %p18
    %p25 = scmp.eq.s32.totalorder %s9, 1
    %p26 = por %p24, %p25
    %p27 = scmp.ne.s32.totalorder %s19, %s22
    %p28 = scmp.eq.s32.totalorder %s9, 0
    %p29 = por %p27, %p28
    %p30 = scmp.ne.s32.totalorder %s19, %s22
    %p31 = scmp.eq.s32.totalorder %s14, 1
    %p32 = por %p30, %p31
    %p33 = scmp.ne.s32.totalorder %s22, %s23
    %p34 = scmp.eq.s32.totalorder %s14, 0
    %p35 = por %p33, %p34
    %p36 = scmp.ne.s32.totalorder %s22, %s23
    %p37 = scmp.eq.s32.totalorder %s15, 1
    %p38 = por %p36, %p37
    %p40 = scmp.ne.s32.totalorder %s23, %s39
    %p41 = scmp.eq.s32.totalorder %s15, 0
    %p42 = por %p40, %p41
    %s44 = sadd.s32 %s43, 1
    %p47 = scmp.eq.s32.totalorder %s9, 1
    %p48 = scmp.ne.s32.totalorder %s43, %s45
    %p49 = scmp.eq.s32.totalorder %s9, 0
    %p50 = por %p48, %p49
    %p51 = scmp.ne.s32.totalorder %s43, %s45
    %p52 = scmp.eq.s32.totalorder %s14, 1
    %p53 = por %p51, %p52
    %p54 = scmp.ne.s32.totalorder %s45, %s46
    %p55 = scmp.eq.s32.totalorder %s14, 0
    %p56 = por %p54, %p55
    %p57 = scmp.ne.s32.totalorder %s45, %s46
    %p58 = scmp.eq.s32.totalorder %s15, 1
    %p59 = por %p57, %p58
    %p61 = scmp.ne.s32.totalorder %s46, %s60
    %p62 = scmp.eq.s32.totalorder %s15, 0
    %p63 = por %p61, %p62
    %s65 = sadd.s32 %s64, 1
    %p68 = scmp.eq.s32.totalorder %s9, 1
    %p69 = scmp.ne.s32.totalorder %s64, %s66
    %p70 = scmp.eq.s32.totalorder %s9, 0
    %p71 = por %p69, %p70
    %p72 = scmp.ne.s32.totalorder %s64, %s66
    %p73 = scmp.eq.s32.totalorder %s14, 1
    %p74 = por %p72, %p73
    %p75 = scmp.ne.s32.totalorder %s66, %s67
    %p76 = scmp.eq.s32.totalorder %s14, 0
    %p77 = por %p75, %p76
    %p78 = scmp.ne.s32.totalorder %s66, %s67
    %p79 = scmp.eq.s32.totalorder %s15, 1
    %p80 = por %p78, %p79
    %p82 = scmp.ne.s32.totalorder %s67, %s81
    %p83 = scmp.eq.s32.totalorder %s15, 0
    %p84 = por %p82, %p83
    %s85 = ssub.s32 %s9, %s16
    %p86 = scmp.eq.s32.totalorder %s85, 0
    %s88 = sadd.s32 %s87, 1
    %s89 = scalar_select %p86, %s87, %s88
    %p92 = pneg %p86
    %p93 = scmp.eq.s32.totalorder %s9, 1
    %p94 = por %p92, %p93
    %p95 = scmp.ne.s32.totalorder %s87, %s90
    %p96 = scmp.eq.s32.totalorder %s9, 0
    %p97 = por %p95, %p96
    %p98 = scmp.ne.s32.totalorder %s87, %s90
    %p99 = scmp.eq.s32.totalorder %s14, 1
    %p100 = por %p98, %p99
    %p101 = scmp.ne.s32.totalorder %s90, %s91
    %p102 = scmp.eq.s32.totalorder %s14, 0
    %p103 = por %p101, %p102
    %p104 = scmp.ne.s32.totalorder %s90, %s91
    %p105 = scmp.eq.s32.totalorder %s15, 1
    %p106 = por %p104, %p105
    %p108 = scmp.ne.s32.totalorder %s91, %s107
    %p109 = scmp.eq.s32.totalorder %s15, 0
    %p110 = por %p108, %p109
    %p111 = scmp.le.s32.totalorder 1, %s9
    %p112 = scmp.lt.s32.totalorder %s9, 3
    %p113 = pnand %p111, %p112
    %p114 = pneg %p113
    // Predicated region
    $region9: #{deconv_block_forward.3} parent=5 // pred_check
      _
    $region10: #{deconv_block_forward.3} parent=5 // pred_check_branch
      %116 = sbr.rel (%p113) target = $region12
    $region11: #{deconv_block_forward.3} parent=5 // pred_region
      %s117 = ssub.s32 %s9, 1
      // Predicated region
      $region13: #{deconv_block_forward.3} parent=11 // pred_check
        %p118 = pneg %p56
      $region14: #{deconv_block_forward.3} parent=11 // pred_check_branch
        %120 = sbr.rel (%p118) target = $region16
      $region15: #{deconv_block_forward.3} parent=11 // pred_region
        _
      $region16: #{deconv_block_forward.3} parent=11 // pred_fallthru
        _
      // Predicated region
      $region17: #{deconv_block_forward.3} parent=11 // pred_check
        %p121 = pneg %p77
      $region18: #{deconv_block_forward.3} parent=11 // pred_check_branch
        %123 = sbr.rel (%p121) target = $region20
      $region19: #{deconv_block_forward.3} parent=11 // pred_region
        _
      $region20: #{deconv_block_forward.3} parent=11 // pred_fallthru
        _
    $region12: #{deconv_block_forward.3} parent=5 // pred_fallthru
      _
    %p124 = scmp.lt.s32.totalorder %s9, 2
    // Predicated region
    $region21: #{deconv_block_forward.3} parent=5 // pred_check
      %p125 = pneg %p124
    $region22: #{deconv_block_forward.3} parent=5 // pred_check_branch
      %127 = sbr.rel (%p125) target = $region24
    $region23: #{deconv_block_forward.3} parent=5 // pred_region
      // Predicated region
      $region25: #{deconv_block_forward.3} parent=23 // pred_check
        %p128 = pneg %p29
      $region26: #{deconv_block_forward.3} parent=23 // pred_check_branch
        %130 = sbr.rel (%p128) target = $region28
      $region27: #{deconv_block_forward.3} parent=23 // pred_region
        %p131 = scmp.lt.s32.totalorder %s9, 1
        %s132 = scalar_select %p131, %s9, 1
        %s133 = smul.addr %s132, 54
        %s134 = smul.addr %s133, 4
        %s135 = scalar_lea.vmem %s0, %s134
      $region28: #{deconv_block_forward.3} parent=23 // pred_fallthru
        _
    $region24: #{deconv_block_forward.3} parent=5 // pred_fallthru
      _
    %p136 = scmp.le.s32.totalorder 1, %s9
    %p137 = scmp.lt.s32.totalorder %s9, 3
    %p138 = pnand %p136, %p137
    %p139 = pneg %p138
    // Predicated region
    $region29: #{deconv_block_forward.3} parent=5 // pred_check
      _
    $region30: #{deconv_block_forward.3} parent=5 // pred_check_branch
      %141 = sbr.rel (%p138) target = $region32
    $region31: #{deconv_block_forward.3} parent=5 // pred_region
      %s142 = ssub.s32 %s9, 1
      %p143 = scmp.lt.s32.totalorder %s14, 1
      %s144 = scalar_select %p143, %s14, 1
      %s145 = smul.addr %s144, 54
      %s146 = smul.addr %s145, 4
      %s147 = scalar_lea.vmem %s0, %s146
      %p148 = pneg %p35
      %p149 = pneg %p32
      %p150 = pneg %p56
      %p151 = pneg %p53
      %p152 = pneg %p77
      %p153 = pneg %p74
      %p154 = pneg %p103
      %p155 = pneg %p100
      %p156 = scmp.lt.s32.totalorder %s14, 1
      %s157 = scalar_select %p156, %s14, 1
      %s158 = smul.addr %s157, 32
      %s159 = smul.addr %s158, 8
      %s160 = scalar_lea.vmem %s3, %s159
      %p161 = scmp.lt.s32.totalorder %s14, 1
      %s162 = scalar_select %p161, %s14, 1
      %s163 = smul.addr %s162, 54
      %s164 = smul.addr %s163, 4
      %s165 = scalar_lea.vmem %s0, %s164
      %p166 = scmp.lt.s32.totalorder %s14, 1
      %s167 = scalar_select %p166, %s14, 1
      %s168 = smul.addr %s167, 32
      %s169 = smul.addr %s168, 8
      %s170 = scalar_lea.vmem %s3, %s169
      %v172 = vld [vmem:[%s165] sm:$0xf]
      %v173 = vld [vmem:[%s165 + $0x4] sm:$0xf]
      %v174 = vld [vmem:[%s165 + $0xc] sm:$0xf]
      %v175 = vld [vmem:[%s165 + $0x10] sm:$0xf]
      %v176 = vld [vmem:[%s165 + $0x18] sm:$0xf]
      %v177 = vld [vmem:[%s165 + $0x1c] sm:$0xf]
      %v178 = vld [vmem:[%s165 + $0x24] sm:$0xf]
      %v179 = vld [vmem:[%s165 + $0x28] sm:$0xf]
      %v180 = vld [vmem:[%s165 + $0x30] sm:$0xf]
      %v181 = vld [vmem:[%s165 + $0x34] sm:$0xf]
      %v182 = vld [vmem:[%s165 + $0x3c] sm:$0xf]
      %v183 = vld [vmem:[%s165 + $0x40] sm:$0xf]
      %v184 = vld [vmem:[%s165 + $0x48] sm:$0xf]
      %v185 = vld [vmem:[%s165 + $0x4c] sm:$0xf]
      %v186 = vld [vmem:[%s165 + $0x54] sm:$0xf]
      %v187 = vld [vmem:[%s165 + $0x58] sm:$0xf]
      %v188 = vld [vmem:[%s165 + $0x60] sm:$0xf]
      %v189 = vld [vmem:[%s165 + $0x64] sm:$0xf]
      %v190 = vld [vmem:[%s165 + $0x6c] sm:$0xf]
      %v191 = vld [vmem:[%s165 + $0x70] sm:$0xf]
      %v192 = vld [vmem:[%s165 + $0x78] sm:$0xf]
      %v193 = vld [vmem:[%s165 + $0x7c] sm:$0xf]
      %v194 = vld [vmem:[%s165 + $0x84] sm:$0xf]
      %v195 = vld [vmem:[%s165 + $0x88] sm:$0xf]
      %v196 = vld [vmem:[%s165 + $0x90] sm:$0xf]
      %v197 = vld [vmem:[%s165 + $0x94] sm:$0xf]
      %v198 = vld [vmem:[%s165 + $0x9c] sm:$0xf]
      %v199 = vld [vmem:[%s165 + $0xa0] sm:$0xf]
      %v200 = vld [vmem:[%s165 + $0xa8] sm:$0xf]
      %v201 = vld [vmem:[%s165 + $0xac] sm:$0xf]
      %v202 = vld [vmem:[%s165 + $0xb4] sm:$0xf]
      %v203 = vld [vmem:[%s165 + $0xb8] sm:$0xf]
      %v204 = vld [vmem:[%s1] sm:$0x3]
      %v205 = vld [vmem:[%s165 + $0x8] sm:$0x1]
      %v206 = vld [vmem:[%s165 + $0x14] sm:$0x1]
      %v207 = vld [vmem:[%s165 + $0x20] sm:$0x1]
      %v208 = vld [vmem:[%s165 + $0x2c] sm:$0x1]
      %v209 = vld [vmem:[%s165 + $0x38] sm:$0x1]
      %v210 = vld [vmem:[%s165 + $0x44] sm:$0x1]
      %v211 = vld [vmem:[%s165 + $0x50] sm:$0x1]
      %v212 = vld [vmem:[%s165 + $0x5c] sm:$0x1]
      %v213 = vld [vmem:[%s165 + $0x68] sm:$0x1]
      %v214 = vld [vmem:[%s165 + $0x74] sm:$0x1]
      %v215 = vld [vmem:[%s165 + $0x80] sm:$0x1]
      %v216 = vld [vmem:[%s165 + $0x8c] sm:$0x1]
      %v217 = vld [vmem:[%s165 + $0x98] sm:$0x1]
      %v218 = vld [vmem:[%s165 + $0xa4] sm:$0x1]
      %v219 = vld [vmem:[%s165 + $0xb0] sm:$0x1]
      %v220 = vld [vmem:[%s165 + $0xbc] sm:$0x1]
      %vm221 = vsmask.f32 3328
      %vm222 = vsmask.f32 7440
      %vm223 = vmor %vm221, %vm222
      %v225 = vshrl.u32 %v172, 16
      %v227 = vrot.slane %v225, 4
      %v228 = vshll.u32 %v172, 16
      %v230 = vrot.slane %v228, 5
      %v231 = vor.u32 %v227, %v230
      %v232 = vrot.slane %v231, 4
      %v234 = vshll.u32 %v173, 16
      %v236 = vrot.slane %v234, 5
      %v237 = vsel %vm223, %v232, %v236
      %v238 = vshrl.u32 %v173, 16
      %v240 = vrot.slane %v238, 4
      %v241 = vor.u32 %v240, %v236
      %v242 = vrot.slane %v241, 4
      %v244 = vshll.u32 %v205, 16
      %v246 = vrot.slane %v244, 5
      %v247 = vsel %vm223, %v242, %v246
      %v249 = vshrl.u32 %v174, 16
      %v251 = vrot.slane %v249, 4
      %v252 = vshll.u32 %v174, 16
      %v254 = vrot.slane %v252, 5
      %v255 = vor.u32 %v251, %v254
      %v256 = vrot.slane %v255, 4
      %v258 = vshll.u32 %v175, 16
      %v260 = vrot.slane %v258, 5
      %v261 = vsel %vm223, %v256, %v260
      %v262 = vshrl.u32 %v175, 16
      %v264 = vrot.slane %v262, 4
      %v265 = vor.u32 %v264, %v260
      %v266 = vrot.slane %v265, 4
      %v268 = vshll.u32 %v206, 16
      %v270 = vrot.slane %v268, 5
      %v271 = vsel %vm223, %v266, %v270
      %v273 = vshrl.u32 %v176, 16
      %v275 = vrot.slane %v273, 4
      %v276 = vshll.u32 %v176, 16
      %v278 = vrot.slane %v276, 5
      %v279 = vor.u32 %v275, %v278
      %v280 = vrot.slane %v279, 4
      %v282 = vshll.u32 %v177, 16
      %v284 = vrot.slane %v282, 5
      %v285 = vsel %vm223, %v280, %v284
      %v286 = vshrl.u32 %v177, 16
      %v288 = vrot.slane %v286, 4
      %v289 = vor.u32 %v288, %v284
      %v290 = vrot.slane %v289, 4
      %v292 = vshll.u32 %v207, 16
      %v294 = vrot.slane %v292, 5
      %v295 = vsel %vm223, %v290, %v294
      %v297 = vshrl.u32 %v178, 16
      %v299 = vrot.slane %v297, 4
      %v300 = vshll.u32 %v178, 16
      %v302 = vrot.slane %v300, 5
      %v303 = vor.u32 %v299, %v302
      %v304 = vrot.slane %v303, 4
      %v306 = vshll.u32 %v179, 16
      %v308 = vrot.slane %v306, 5
      %v309 = vsel %vm223, %v304, %v308
      %v310 = vshrl.u32 %v179, 16
      %v312 = vrot.slane %v310, 4
      %v313 = vor.u32 %v312, %v308
      %v314 = vrot.slane %v313, 4
      %v316 = vshll.u32 %v208, 16
      %v318 = vrot.slane %v316, 5
      %v319 = vsel %vm223, %v314, %v318
      %v321 = vshrl.u32 %v180, 16
      %v323 = vrot.slane %v321, 4
      %v324 = vshll.u32 %v180, 16
      %v326 = vrot.slane %v324, 5
      %v327 = vor.u32 %v323, %v326
      %v328 = vrot.slane %v327, 4
      %v330 = vshll.u32 %v181, 16
      %v332 = vrot.slane %v330, 5
      %v333 = vsel %vm223, %v328, %v332
      %v334 = vshrl.u32 %v181, 16
      %v336 = vrot.slane %v334, 4
      %v337 = vor.u32 %v336, %v332
      %v338 = vrot.slane %v337, 4
      %v340 = vshll.u32 %v209, 16
      %v342 = vrot.slane %v340, 5
      %v343 = vsel %vm223, %v338, %v342
      %v345 = vshrl.u32 %v182, 16
      %v347 = vrot.slane %v345, 4
      %v348 = vshll.u32 %v182, 16
      %v350 = vrot.slane %v348, 5
      %v351 = vor.u32 %v347, %v350
      %v352 = vrot.slane %v351, 4
      %v354 = vshll.u32 %v183, 16
      %v356 = vrot.slane %v354, 5
      %v357 = vsel %vm223, %v352, %v356
      %v358 = vshrl.u32 %v183, 16
      %v360 = vrot.slane %v358, 4
      %v361 = vor.u32 %v360, %v356
      %v362 = vrot.slane %v361, 4
      %v364 = vshll.u32 %v210, 16
      %v366 = vrot.slane %v364, 5
      %v367 = vsel %vm223, %v362, %v366
      %v369 = vshrl.u32 %v184, 16
      %v371 = vrot.slane %v369, 4
      %v372 = vshll.u32 %v184, 16
      %v374 = vrot.slane %v372, 5
      %v375 = vor.u32 %v371, %v374
      %v376 = vrot.slane %v375, 4
      %v378 = vshll.u32 %v185, 16
      %v380 = vrot.slane %v378, 5
      %v381 = vsel %vm223, %v376, %v380
      %v382 = vshrl.u32 %v185, 16
      %v384 = vrot.slane %v382, 4
      %v385 = vor.u32 %v384, %v380
      %v386 = vrot.slane %v385, 4
      %v388 = vshll.u32 %v211, 16
      %v390 = vrot.slane %v388, 5
      %v391 = vsel %vm223, %v386, %v390
      %v393 = vshrl.u32 %v186, 16
      %v395 = vrot.slane %v393, 4
      %v396 = vshll.u32 %v186, 16
      %v398 = vrot.slane %v396, 5
      %v399 = vor.u32 %v395, %v398
      %v400 = vrot.slane %v399, 4
      %v402 = vshll.u32 %v187, 16
      %v404 = vrot.slane %v402, 5
      %v405 = vsel %vm223, %v400, %v404
      %v406 = vshrl.u32 %v187, 16
      %v408 = vrot.slane %v406, 4
      %v409 = vor.u32 %v408, %v404
      %v410 = vrot.slane %v409, 4
      %v412 = vshll.u32 %v212, 16
      %v414 = vrot.slane %v412, 5
      %v415 = vsel %vm223, %v410, %v414
      %v417 = vshrl.u32 %v188, 16
      %v419 = vrot.slane %v417, 4
      %v420 = vshll.u32 %v188, 16
      %v422 = vrot.slane %v420, 5
      %v423 = vor.u32 %v419, %v422
      %v424 = vrot.slane %v423, 4
      %v426 = vshll.u32 %v189, 16
      %v428 = vrot.slane %v426, 5
      %v429 = vsel %vm223, %v424, %v428
      %v430 = vshrl.u32 %v189, 16
      %v432 = vrot.slane %v430, 4
      %v433 = vor.u32 %v432, %v428
      %v434 = vrot.slane %v433, 4
      %v436 = vshll.u32 %v213, 16
      %v438 = vrot.slane %v436, 5
      %v439 = vsel %vm223, %v434, %v438
      %v441 = vshrl.u32 %v190, 16
      %v443 = vrot.slane %v441, 4
      %v444 = vshll.u32 %v190, 16
      %v446 = vrot.slane %v444, 5
      %v447 = vor.u32 %v443, %v446
      %v448 = vrot.slane %v447, 4
      %v450 = vshll.u32 %v191, 16
      %v452 = vrot.slane %v450, 5
      %v453 = vsel %vm223, %v448, %v452
      %v454 = vshrl.u32 %v191, 16
      %v456 = vrot.slane %v454, 4
      %v457 = vor.u32 %v456, %v452
      %v458 = vrot.slane %v457, 4
      %v460 = vshll.u32 %v214, 16
      %v462 = vrot.slane %v460, 5
      %v463 = vsel %vm223, %v458, %v462
      %v465 = vshrl.u32 %v192, 16
      %v467 = vrot.slane %v465, 4
      %v468 = vshll.u32 %v192, 16
      %v470 = vrot.slane %v468, 5
      %v471 = vor.u32 %v467, %v470
      %v472 = vrot.slane %v471, 4
      %v474 = vshll.u32 %v193, 16
      %v476 = vrot.slane %v474, 5
      %v477 = vsel %vm223, %v472, %v476
      %v478 = vshrl.u32 %v193, 16
      %v480 = vrot.slane %v478, 4
      %v481 = vor.u32 %v480, %v476
      %v482 = vrot.slane %v481, 4
      %v484 = vshll.u32 %v215, 16
      %v486 = vrot.slane %v484, 5
      %v487 = vsel %vm223, %v482, %v486
      %v489 = vshrl.u32 %v194, 16
      %v491 = vrot.slane %v489, 4
      %v492 = vshll.u32 %v194, 16
      %v494 = vrot.slane %v492, 5
      %v495 = vor.u32 %v491, %v494
      %v496 = vrot.slane %v495, 4
      %v498 = vshll.u32 %v195, 16
      %v500 = vrot.slane %v498, 5
      %v501 = vsel %vm223, %v496, %v500
      %v502 = vshrl.u32 %v195, 16
      %v504 = vrot.slane %v502, 4
      %v505 = vor.u32 %v504, %v500
      %v506 = vrot.slane %v505, 4
      %v508 = vshll.u32 %v216, 16
      %v510 = vrot.slane %v508, 5
      %v511 = vsel %vm223, %v506, %v510
      %v513 = vshrl.u32 %v196, 16
      %v515 = vrot.slane %v513, 4
      %v516 = vshll.u32 %v196, 16
      %v518 = vrot.slane %v516, 5
      %v519 = vor.u32 %v515, %v518
      %v520 = vrot.slane %v519, 4
      %v522 = vshll.u32 %v197, 16
      %v524 = vrot.slane %v522, 5
      %v525 = vsel %vm223, %v520, %v524
      %v526 = vshrl.u32 %v197, 16
      %v528 = vrot.slane %v526, 4
      %v529 = vor.u32 %v528, %v524
      %v530 = vrot.slane %v529, 4
      %v532 = vshll.u32 %v217, 16
      %v534 = vrot.slane %v532, 5
      %v535 = vsel %vm223, %v530, %v534
      %v537 = vshrl.u32 %v198, 16
      %v539 = vrot.slane %v537, 4
      %v540 = vshll.u32 %v198, 16
      %v542 = vrot.slane %v540, 5
      %v543 = vor.u32 %v539, %v542
      %v544 = vrot.slane %v543, 4
      %v546 = vshll.u32 %v199, 16
      %v548 = vrot.slane %v546, 5
      %v549 = vsel %vm223, %v544, %v548
      %v550 = vshrl.u32 %v199, 16
      %v552 = vrot.slane %v550, 4
      %v553 = vor.u32 %v552, %v548
      %v554 = vrot.slane %v553, 4
      %v556 = vshll.u32 %v218, 16
      %v558 = vrot.slane %v556, 5
      %v559 = vsel %vm223, %v554, %v558
      %v561 = vshrl.u32 %v200, 16
      %v563 = vrot.slane %v561, 4
      %v564 = vshll.u32 %v200, 16
      %v566 = vrot.slane %v564, 5
      %v567 = vor.u32 %v563, %v566
      %v568 = vrot.slane %v567, 4
      %v570 = vshll.u32 %v201, 16
      %v572 = vrot.slane %v570, 5
      %v573 = vsel %vm223, %v568, %v572
      %v574 = vshrl.u32 %v201, 16
      %v576 = vrot.slane %v574, 4
      %v577 = vor.u32 %v576, %v572
      %v578 = vrot.slane %v577, 4
      %v580 = vshll.u32 %v219, 16
      %v582 = vrot.slane %v580, 5
      %v583 = vsel %vm223, %v578, %v582
      %v585 = vshrl.u32 %v202, 16
      %v587 = vrot.slane %v585, 4
      %v588 = vshll.u32 %v202, 16
      %v590 = vrot.slane %v588, 5
      %v591 = vor.u32 %v587, %v590
      %v592 = vrot.slane %v591, 4
      %v594 = vshll.u32 %v203, 16
      %v596 = vrot.slane %v594, 5
      %v597 = vsel %vm223, %v592, %v596
      %v598 = vshrl.u32 %v203, 16
      %v600 = vrot.slane %v598, 4
      %v601 = vor.u32 %v600, %v596
      %v602 = vrot.slane %v601, 4
      %v604 = vshll.u32 %v220, 16
      %v606 = vrot.slane %v604, 5
      %v607 = vsel %vm223, %v602, %v606
      %s608 = scalar_lea.vmem %s1, 2
      %v609 = vld [vmem:[%s608] sm:$0x3]
      %v610 = vunpack.c.l.b16 %v237
      %v611 = vunpack.c.l.b16 %v247
      %v612 = vunpack.c.l.b16 %v261
      %v613 = vunpack.c.l.b16 %v271
      %v614 = vunpack.c.l.b16 %v285
      %v615 = vunpack.c.l.b16 %v295
      %v616 = vunpack.c.l.b16 %v309
      %v617 = vunpack.c.l.b16 %v319
      %v618 = vunpack.c.l.b16 %v333
      %v619 = vunpack.c.l.b16 %v343
      %v620 = vunpack.c.l.b16 %v357
      %v621 = vunpack.c.l.b16 %v367
      %v622 = vunpack.c.l.b16 %v381
      %v623 = vunpack.c.l.b16 %v391
      %v624 = vunpack.c.l.b16 %v405
      %v625 = vunpack.c.l.b16 %v415
      %v626 = vunpack.c.l.b16 %v429
      %v627 = vunpack.c.l.b16 %v439
      %v628 = vunpack.c.l.b16 %v453
      %v629 = vunpack.c.l.b16 %v463
      %v630 = vunpack.c.l.b16 %v477
      %v631 = vunpack.c.l.b16 %v487
      %v632 = vunpack.c.l.b16 %v501
      %v633 = vunpack.c.l.b16 %v511
      %v634 = vunpack.c.l.b16 %v525
      %v635 = vunpack.c.l.b16 %v535
      %v636 = vunpack.c.l.b16 %v549
      %v637 = vunpack.c.l.b16 %v559
      %v638 = vunpack.c.l.b16 %v573
      %v639 = vunpack.c.l.b16 %v583
      %v640 = vunpack.c.l.b16 %v597
      %v641 = vunpack.c.l.b16 %v607
      %v642 = vpack.c.b16 %v611, %v610
      %v643 = vpack.c.b16 %v613, %v612
      %v644 = vpack.c.b16 %v615, %v614
      %v645 = vpack.c.b16 %v617, %v616
      %v646 = vpack.c.b16 %v619, %v618
      %v647 = vpack.c.b16 %v621, %v620
      %v648 = vpack.c.b16 %v623, %v622
      %v649 = vpack.c.b16 %v625, %v624
      %v650 = vpack.c.b16 %v627, %v626
      %v651 = vpack.c.b16 %v629, %v628
      %v652 = vpack.c.b16 %v631, %v630
      %v653 = vpack.c.b16 %v633, %v632
      %v654 = vpack.c.b16 %v635, %v634
      %v655 = vpack.c.b16 %v637, %v636
      %v656 = vpack.c.b16 %v639, %v638
      %v657 = vpack.c.b16 %v641, %v640
      %vm658 = vcmask 31744
      %v660 = vsel %vm658, %v642, 0
      %v663 = vsel %vm658, %v643, 0
      %v666 = vsel %vm658, %v644, 0
      %v669 = vsel %vm658, %v645, 0
      %v672 = vsel %vm658, %v646, 0
      %v675 = vsel %vm658, %v647, 0
      %v678 = vsel %vm658, %v648, 0
      %v681 = vsel %vm658, %v649, 0
      %v684 = vsel %vm658, %v650, 0
      %v687 = vsel %vm658, %v651, 0
      %v690 = vsel %vm658, %v652, 0
      %v693 = vsel %vm658, %v653, 0
      %v696 = vsel %vm658, %v654, 0
      %v699 = vsel %vm658, %v655, 0
      %v702 = vsel %vm658, %v656, 0
      %v705 = vsel %vm658, %v657, 0
      %vm707 = vcmask 1041408
      %v709 = vsel %vm707, %v609, 0
      %711 = vmatprep.subr.bf16.mxu0 0
      %712 = vmatpush1.bf16.msra.mxu0 %v709
      %713 = vmatprep.subr.bf16.mxu0 0
      %714 = vmatpush1.bf16.msra.mxu0 0
      %715 = vmatprep.subr.bf16.mxu0 0
      %716 = vmatpush1.bf16.msra.mxu0 0
      %717 = vmatprep.subr.bf16.mxu0 0
      %718 = vmatpush1.bf16.msra.mxu0 0
      %719 = vmatprep.subr.bf16.mxu0 0
      %720 = vmatpush1.bf16.msra.mxu0 0
      %721 = vmatprep.subr.bf16.mxu0 0
      %722 = vmatpush1.bf16.msra.mxu0 0
      %723 = vmatprep.subr.bf16.mxu0 0
      %724 = vmatpush1.bf16.msra.mxu0 0
      %725 = vmatprep.subr.bf16.mxu0 0
      %726 = vmatpush1.bf16.msra.mxu0 0
      %727 = vmatprep.subr.bf16.mxu0 0
      %728 = vmatpush1.bf16.msra.mxu0 0
      %729 = vmatprep.subr.bf16.mxu0 0
      %730 = vmatpush1.bf16.msra.mxu0 0
      %731 = vmatprep.subr.bf16.mxu0 0
      %732 = vmatpush1.bf16.msra.mxu0 0
      %733 = vmatprep.subr.bf16.mxu0 0
      %734 = vmatpush1.bf16.msra.mxu0 0
      %735 = vmatprep.subr.bf16.mxu0 0
      %736 = vmatpush1.bf16.msra.mxu0 0
      %737 = vmatprep.subr.bf16.mxu0 0
      %738 = vmatpush1.bf16.msra.mxu0 0
      %739 = vmatprep.subr.bf16.mxu0 0
      %740 = vmatpush1.bf16.msra.mxu0 0
      %741 = vmatprep.subr.bf16.mxu0 0
      %742 = vmatpush1.bf16.msra.mxu0 0
      %743 = vmatprep.mubr.bf16.mxu0 0
      %744 = vmatmul.mubr.bf16.gmra.mrb[0].mxu0 %v660
      %v745 = vpop.f32.mrb[0].mxu0
      %v746 = vadd.f32 0.0, %v745
      %v747 = vpop.f32.mrb[0].mxu0
      %v748 = vpop.f32.mrb[0].mxu0
      %v749 = vadd.f32 0.0, %v748
      %v750 = vpop.f32.mrb[0].mxu0
      %751 = vmatprep.mubr.bf16.mxu0 0
      %752 = vmatmul.mubr.bf16.gmra.mrb[0].mxu0 %v663
      %v753 = vpop.f32.mrb[0].mxu0
      %v754 = vadd.f32 0.0, %v753
      %v755 = vpop.f32.mrb[0].mxu0
      %v756 = vpop.f32.mrb[0].mxu0
      %v757 = vadd.f32 0.0, %v756
      %v758 = vpop.f32.mrb[0].mxu0
      %759 = vmatprep.mubr.bf16.mxu0 0
      %760 = vmatmul.mubr.bf16.gmra.mrb[0].mxu0 %v666
      %v761 = vpop.f32.mrb[0].mxu0
      %v762 = vadd.f32 0.0, %v761
      %v763 = vpop.f32.mrb[0].mxu0
      %v764 = vpop.f32.mrb[0].mxu0
      %v765 = vadd.f32 0.0, %v764
      %v766 = vpop.f32.mrb[0].mxu0
      %767 = vmatprep.mubr.bf16.mxu0 0
      %768 = vmatmul.mubr.bf16.gmra.mrb[0].mxu0 %v669
      %v769 = vpop.f32.mrb[0].mxu0
      %v770 = vadd.f32 0.0, %v769
      %v771 = vpop.f32.mrb[0].mxu0
      %v772 = vpop.f32.mrb[0].mxu0
      %v773 = vadd.f32 0.0, %v772
      %v774 = vpop.f32.mrb[0].mxu0
      %775 = vmatprep.mubr.bf16.mxu0 0
      %776 = vmatmul.mubr.bf16.gmra.mrb[0].mxu0 %v672
      %v777 = vpop.f32.mrb[0].mxu0
      %v778 = vadd.f32 0.0, %v777
      %v779 = vpop.f32.mrb[0].mxu0
      %v780 = vpop.f32.mrb[0].mxu0
      %v781 = vadd.f32 0.0, %v780
      %v782 = vpop.f32.mrb[0].mxu0
      %783 = vmatprep.mubr.bf16.mxu0 0
      %784 = vmatmul.mubr.bf16.gmra.mrb[0].mxu0 %v675
      %v785 = vpop.f32.mrb[0].mxu0
      %v786 = vadd.f32 0.0, %v785
      %v787 = vpop.f32.mrb[0].mxu0
      %v788 = vpop.f32.mrb[0].mxu0
      %v789 = vadd.f32 0.0, %v788
      %v790 = vpop.f32.mrb[0].mxu0
      %791 = vmatprep.mubr.bf16.mxu0 0
      %792 = vmatmul.mubr.bf16.gmra.mrb[0].mxu0 %v678
      %v793 = vpop.f32.mrb[0].mxu0
      %v794 = vadd.f32 0.0, %v793
      %v795 = vpop.f32.mrb[0].mxu0
      %v796 = vpop.f32.mrb[0].mxu0
      %v797 = vadd.f32 0.0, %v796
      %v798 = vpop.f32.mrb[0].mxu0
      %799 = vmatprep.mubr.bf16.mxu0 0
      %800 = vmatmul.mubr.bf16.gmra.mrb[0].mxu0 %v681
      %v801 = vpop.f32.mrb[0].mxu0
      %v802 = vadd.f32 0.0, %v801
      %v803 = vpop.f32.mrb[0].mxu0
      %v804 = vpop.f32.mrb[0].mxu0
      %v805 = vadd.f32 0.0, %v804
      %v806 = vpop.f32.mrb[0].mxu0
      %807 = vmatprep.mubr.bf16.mxu0 0
      %808 = vmatmul.mubr.bf16.gmra.mrb[0].mxu0 %v684
      %v809 = vpop.f32.mrb[0].mxu0
      %v810 = vadd.f32 0.0, %v809
      %v811 = vpop.f32.mrb[0].mxu0
      %v812 = vpop.f32.mrb[0].mxu0
      %v813 = vadd.f32 0.0, %v812
      %v814 = vpop.f32.mrb[0].mxu0
      %815 = vmatprep.mubr.bf16.mxu0 0
      %816 = vmatmul.mubr.bf16.gmra.mrb[0].mxu0 %v687
      %v817 = vpop.f32.mrb[0].mxu0
      %v818 = vadd.f32 0.0, %v817
      %v819 = vpop.f32.mrb[0].mxu0
      %v820 = vpop.f32.mrb[0].mxu0
      %v821 = vadd.f32 0.0, %v820
      %v822 = vpop.f32.mrb[0].mxu0
      %823 = vmatprep.mubr.bf16.mxu0 0
      %824 = vmatmul.mubr.bf16.gmra.mrb[0].mxu0 %v690
      %v825 = vpop.f32.mrb[0].mxu0
      %v826 = vadd.f32 0.0, %v825
      %v827 = vpop.f32.mrb[0].mxu0
      %v828 = vpop.f32.mrb[0].mxu0
      %v829 = vadd.f32 0.0, %v828
      %v830 = vpop.f32.mrb[0].mxu0
      %831 = vmatprep.mubr.bf16.mxu0 0
      %832 = vmatmul.mubr.bf16.gmra.mrb[0].mxu0 %v693
      %v833 = vpop.f32.mrb[0].mxu0
      %v834 = vadd.f32 0.0, %v833
      %v835 = vpop.f32.mrb[0].mxu0
      %v836 = vpop.f32.mrb[0].mxu0
      %v837 = vadd.f32 0.0, %v836
      %v838 = vpop.f32.mrb[0].mxu0
      %839 = vmatprep.mubr.bf16.mxu0 0
      %840 = vmatmul.mubr.bf16.gmra.mrb[0].mxu0 %v696
      %v841 = vpop.f32.mrb[0].mxu0
      %v842 = vadd.f32 0.0, %v841
      %v843 = vpop.f32.mrb[0].mxu0
      %v844 = vpop.f32.mrb[0].mxu0
      %v845 = vadd.f32 0.0, %v844
      %v846 = vpop.f32.mrb[0].mxu0
      %847 = vmatprep.mubr.bf16.mxu0 0
      %848 = vmatmul.mubr.bf16.gmra.mrb[0].mxu0 %v699
      %v849 = vpop.f32.mrb[0].mxu0
      %v850 = vadd.f32 0.0, %v849
      %v851 = vpop.f32.mrb[0].mxu0
      %v852 = vpop.f32.mrb[0].mxu0
      %v853 = vadd.f32 0.0, %v852
      %v854 = vpop.f32.mrb[0].mxu0
      %855 = vmatprep.mubr.bf16.mxu0 0
      %856 = vmatmul.mubr.bf16.gmra.mrb[0].mxu0 %v702
      %v857 = vpop.f32.mrb[0].mxu0
      %v858 = vadd.f32 0.0, %v857
      %v859 = vpop.f32.mrb[0].mxu0
      %v860 = vpop.f32.mrb[0].mxu0
      %v861 = vadd.f32 0.0, %v860
      %v862 = vpop.f32.mrb[0].mxu0
      %863 = vmatprep.mubr.bf16.mxu0 0
      %864 = vmatmul.mubr.bf16.gmra.mrb[0].mxu0 %v705
      %v865 = vpop.f32.mrb[0].mxu0
      %v866 = vadd.f32 0.0, %v865
      %v867 = vpop.f32.mrb[0].mxu0
      %v868 = vpop.f32.mrb[0].mxu0
      %v869 = vadd.f32 0.0, %v868
      %v870 = vpop.f32.mrb[0].mxu0
      %871 = vdwg.mxu0
      %v904 = vunpack.c.l.b16 %v172
      %v905 = vunpack.c.l.b16 %v173
      %v906 = vunpack.c.l.b16 %v174
      %v907 = vunpack.c.l.b16 %v175
      %v908 = vunpack.c.l.b16 %v176
      %v909 = vunpack.c.l.b16 %v177
      %v910 = vunpack.c.l.b16 %v178
      %v911 = vunpack.c.l.b16 %v179
      %v912 = vunpack.c.l.b16 %v180
      %v913 = vunpack.c.l.b16 %v181
      %v914 = vunpack.c.l.b16 %v182
      %v915 = vunpack.c.l.b16 %v183
      %v916 = vunpack.c.l.b16 %v184
      %v917 = vunpack.c.l.b16 %v185
      %v918 = vunpack.c.l.b16 %v186
      %v919 = vunpack.c.l.b16 %v187
      %v920 = vunpack.c.l.b16 %v188
      %v921 = vunpack.c.l.b16 %v189
      %v922 = vunpack.c.l.b16 %v190
      %v923 = vunpack.c.l.b16 %v191
      %v924 = vunpack.c.l.b16 %v192
      %v925 = vunpack.c.l.b16 %v193
      %v926 = vunpack.c.l.b16 %v194
      %v927 = vunpack.c.l.b16 %v195
      %v928 = vunpack.c.l.b16 %v196
      %v929 = vunpack.c.l.b16 %v197
      %v930 = vunpack.c.l.b16 %v198
      %v931 = vunpack.c.l.b16 %v199
      %v932 = vunpack.c.l.b16 %v200
      %v933 = vunpack.c.l.b16 %v201
      %v934 = vunpack.c.l.b16 %v202
      %v935 = vunpack.c.l.b16 %v203
      %v936 = vpack.c.b16 %v905, %v904
      %v937 = vpack.c.b16 %v907, %v906
      %v938 = vpack.c.b16 %v909, %v908
      %v939 = vpack.c.b16 %v911, %v910
      %v940 = vpack.c.b16 %v913, %v912
      %v941 = vpack.c.b16 %v915, %v914
      %v942 = vpack.c.b16 %v917, %v916
      %v943 = vpack.c.b16 %v919, %v918
      %v944 = vpack.c.b16 %v921, %v920
      %v945 = vpack.c.b16 %v923, %v922
      %v946 = vpack.c.b16 %v925, %v924
      %v947 = vpack.c.b16 %v927, %v926
      %v948 = vpack.c.b16 %v929, %v928
      %v949 = vpack.c.b16 %v931, %v930
      %v950 = vpack.c.b16 %v933, %v932
      %v951 = vpack.c.b16 %v935, %v934
      %v953 = vsel %vm658, %v936, 0
      %v956 = vsel %vm658, %v937, 0
      %v959 = vsel %vm658, %v938, 0
      %v962 = vsel %vm658, %v939, 0
      %v965 = vsel %vm658, %v940, 0
      %v968 = vsel %vm658, %v941, 0
      %v971 = vsel %vm658, %v942, 0
      %v974 = vsel %vm658, %v943, 0
      %v977 = vsel %vm658, %v944, 0
      %v980 = vsel %vm658, %v945, 0
      %v983 = vsel %vm658, %v946, 0
      %v986 = vsel %vm658, %v947, 0
      %v989 = vsel %vm658, %v948, 0
      %v992 = vsel %vm658, %v949, 0
      %v995 = vsel %vm658, %v950, 0
      %v998 = vsel %vm658, %v951, 0
      %v1001 = vsel %vm707, %v204, 0
      %1003 = vmatprep.subr.bf16.mxu0 0
      %1004 = vmatpush1.bf16.msra.mxu0 %v1001
      %1005 = vmatprep.subr.bf16.mxu0 0
      %1006 = vmatpush1.bf16.msra.mxu0 0
      %1007 = vmatprep.subr.bf16.mxu0 0
      %1008 = vmatpush1.bf16.msra.mxu0 0
      %1009 = vmatprep.subr.bf16.mxu0 0
      %1010 = vmatpush1.bf16.msra.mxu0 0
      %1011 = vmatprep.subr.bf16.mxu0 0
      %1012 = vmatpush1.bf16.msra.mxu0 0
      %1013 = vmatprep.subr.bf16.mxu0 0
      %1014 = vmatpush1.bf16.msra.mxu0 0
      %1015 = vmatprep.subr.bf16.mxu0 0
      %1016 = vmatpush1.bf16.msra.mxu0 0
      %1017 = vmatprep.subr.bf16.mxu0 0
      %1018 = vmatpush1.bf16.msra.mxu0 0
      %1019 = vmatprep.subr.bf16.mxu0 0
      %1020 = vmatpush1.bf16.msra.mxu0 0
      %1021 = vmatprep.subr.bf16.mxu0 0
      %1022 = vmatpush1.bf16.msra.mxu0 0
      %1023 = vmatprep.subr.bf16.mxu0 0
      %1024 = vmatpush1.bf16.msra.mxu0 0
      %1025 = vmatprep.subr.bf16.mxu0 0
      %1026 = vmatpush1.bf16.msra.mxu0 0
      %1027 = vmatprep.subr.bf16.mxu0 0
      %1028 = vmatpush1.bf16.msra.mxu0 0
      %1029 = vmatprep.subr.bf16.mxu0 0
      %1030 = vmatpush1.bf16.msra.mxu0 0
      %1031 = vmatprep.subr.bf16.mxu0 0
      %1032 = vmatpush1.bf16.msra.mxu0 0
      %1033 = vmatprep.subr.bf16.mxu0 0
      %1034 = vmatpush1.bf16.msra.mxu0 0
      %1035 = vmatprep.mubr.bf16.mxu0 0
      %1036 = vmatmul.mubr.bf16.gmra.mrb[0].mxu0 %v953
      %v1037 = vpop.f32.mrb[0].mxu0
      %v1038 = vadd.f32 %v746, %v1037
      %v1039 = vpop.f32.mrb[0].mxu0
      %v1040 = vpop.f32.mrb[0].mxu0
      %v1041 = vadd.f32 %v749, %v1040
      %v1042 = vpop.f32.mrb[0].mxu0
      %1043 = vmatprep.mubr.bf16.mxu0 0
      %1044 = vmatmul.mubr.bf16.gmra.mrb[0].mxu0 %v956
      %v1045 = vpop.f32.mrb[0].mxu0
      %v1046 = vadd.f32 %v754, %v1045
      %v1047 = vpop.f32.mrb[0].mxu0
      %v1048 = vpop.f32.mrb[0].mxu0
      %v1049 = vadd.f32 %v757, %v1048
      %v1050 = vpop.f32.mrb[0].mxu0
      %1051 = vmatprep.mubr.bf16.mxu0 0
      %1052 = vmatmul.mubr.bf16.gmra.mrb[0].mxu0 %v959
      %v1053 = vpop.f32.mrb[0].mxu0
      %v1054 = vadd.f32 %v762, %v1053
      %v1055 = vpop.f32.mrb[0].mxu0
      %v1056 = vpop.f32.mrb[0].mxu0
      %v1057 = vadd.f32 %v765, %v1056
      %v1058 = vpop.f32.mrb[0].mxu0
      %1059 = vmatprep.mubr.bf16.mxu0 0
      %1060 = vmatmul.mubr.bf16.gmra.mrb[0].mxu0 %v962
      %v1061 = vpop.f32.mrb[0].mxu0
      %v1062 = vadd.f32 %v770, %v1061
      %v1063 = vpop.f32.mrb[0].mxu0
      %v1064 = vpop.f32.mrb[0].mxu0
      %v1065 = vadd.f32 %v773, %v1064
      %v1066 = vpop.f32.mrb[0].mxu0
      %1067 = vmatprep.mubr.bf16.mxu0 0
      %1068 = vmatmul.mubr.bf16.gmra.mrb[0].mxu0 %v965
      %v1069 = vpop.f32.mrb[0].mxu0
      %v1070 = vadd.f32 %v778, %v1069
      %v1071 = vpop.f32.mrb[0].mxu0
      %v1072 = vpop.f32.mrb[0].mxu0
      %v1073 = vadd.f32 %v781, %v1072
      %v1074 = vpop.f32.mrb[0].mxu0
      %1075 = vmatprep.mubr.bf16.mxu0 0
      %1076 = vmatmul.mubr.bf16.gmra.mrb[0].mxu0 %v968
      %v1077 = vpop.f32.mrb[0].mxu0
      %v1078 = vadd.f32 %v786, %v1077
      %v1079 = vpop.f32.mrb[0].mxu0
      %v1080 = vpop.f32.mrb[0].mxu0
      %v1081 = vadd.f32 %v789, %v1080
      %v1082 = vpop.f32.mrb[0].mxu0
      %1083 = vmatprep.mubr.bf16.mxu0 0
      %1084 = vmatmul.mubr.bf16.gmra.mrb[0].mxu0 %v971
      %v1085 = vpop.f32.mrb[0].mxu0
      %v1086 = vadd.f32 %v794, %v1085
      %v1087 = vpop.f32.mrb[0].mxu0
      %v1088 = vpop.f32.mrb[0].mxu0
      %v1089 = vadd.f32 %v797, %v1088
      %v1090 = vpop.f32.mrb[0].mxu0
      %1091 = vmatprep.mubr.bf16.mxu0 0
      %1092 = vmatmul.mubr.bf16.gmra.mrb[0].mxu0 %v974
      %v1093 = vpop.f32.mrb[0].mxu0
      %v1094 = vadd.f32 %v802, %v1093
      %v1095 = vpop.f32.mrb[0].mxu0
      %v1096 = vpop.f32.mrb[0].mxu0
      %v1097 = vadd.f32 %v805, %v1096
      %v1098 = vpop.f32.mrb[0].mxu0
      %1099 = vmatprep.mubr.bf16.mxu0 0
      %1100 = vmatmul.mubr.bf16.gmra.mrb[0].mxu0 %v977
      %v1101 = vpop.f32.mrb[0].mxu0
      %v1102 = vadd.f32 %v810, %v1101
      %v1103 = vpop.f32.mrb[0].mxu0
      %v1104 = vpop.f32.mrb[0].mxu0
      %v1105 = vadd.f32 %v813, %v1104
      %v1106 = vpop.f32.mrb[0].mxu0
      %1107 = vmatprep.mubr.bf16.mxu0 0
      %1108 = vmatmul.mubr.bf16.gmra.mrb[0].mxu0 %v980
      %v1109 = vpop.f32.mrb[0].mxu0
      %v1110 = vadd.f32 %v818, %v1109
      %v1111 = vpop.f32.mrb[0].mxu0
      %v1112 = vpop.f32.mrb[0].mxu0
      %v1113 = vadd.f32 %v821, %v1112
      %v1114 = vpop.f32.mrb[0].mxu0
      %1115 = vmatprep.mubr.bf16.mxu0 0
      %1116 = vmatmul.mubr.bf16.gmra.mrb[0].mxu0 %v983
      %v1117 = vpop.f32.mrb[0].mxu0
      %v1118 = vadd.f32 %v826, %v1117
      %v1119 = vpop.f32.mrb[0].mxu0
      %v1120 = vpop.f32.mrb[0].mxu0
      %v1121 = vadd.f32 %v829, %v1120
      %v1122 = vpop.f32.mrb[0].mxu0
      %1123 = vmatprep.mubr.bf16.mxu0 0
      %1124 = vmatmul.mubr.bf16.gmra.mrb[0].mxu0 %v986
      %v1125 = vpop.f32.mrb[0].mxu0
      %v1126 = vadd.f32 %v834, %v1125
      %v1127 = vpop.f32.mrb[0].mxu0
      %v1128 = vpop.f32.mrb[0].mxu0
      %v1129 = vadd.f32 %v837, %v1128
      %v1130 = vpop.f32.mrb[0].mxu0
      %1131 = vmatprep.mubr.bf16.mxu0 0
      %1132 = vmatmul.mubr.bf16.gmra.mrb[0].mxu0 %v989
      %v1133 = vpop.f32.mrb[0].mxu0
      %v1134 = vadd.f32 %v842, %v1133
      %v1135 = vpop.f32.mrb[0].mxu0
      %v1136 = vpop.f32.mrb[0].mxu0
      %v1137 = vadd.f32 %v845, %v1136
      %v1138 = vpop.f32.mrb[0].mxu0
      %1139 = vmatprep.mubr.bf16.mxu0 0
      %1140 = vmatmul.mubr.bf16.gmra.mrb[0].mxu0 %v992
      %v1141 = vpop.f32.mrb[0].mxu0
      %v1142 = vadd.f32 %v850, %v1141
      %v1143 = vpop.f32.mrb[0].mxu0
      %v1144 = vpop.f32.mrb[0].mxu0
      %v1145 = vadd.f32 %v853, %v1144
      %v1146 = vpop.f32.mrb[0].mxu0
      %1147 = vmatprep.mubr.bf16.mxu0 0
      %1148 = vmatmul.mubr.bf16.gmra.mrb[0].mxu0 %v995
      %v1149 = vpop.f32.mrb[0].mxu0
      %v1150 = vadd.f32 %v858, %v1149
      %v1151 = vpop.f32.mrb[0].mxu0
      %v1152 = vpop.f32.mrb[0].mxu0
      %v1153 = vadd.f32 %v861, %v1152
      %v1154 = vpop.f32.mrb[0].mxu0
      %1155 = vmatprep.mubr.bf16.mxu0 0
      %1156 = vmatmul.mubr.bf16.gmra.mrb[0].mxu0 %v998
      %v1157 = vpop.f32.mrb[0].mxu0
      %v1158 = vadd.f32 %v866, %v1157
      %v1159 = vpop.f32.mrb[0].mxu0
      %v1160 = vpop.f32.mrb[0].mxu0
      %v1161 = vadd.f32 %v869, %v1160
      %v1162 = vpop.f32.mrb[0].mxu0
      %1163 = vdwg.mxu0
      %v1164 = vld [vmem:[%s165] sm:$0xe]
      %v1165 = vld [vmem:[%s165 + $0xc] sm:$0xe]
      %v1166 = vld [vmem:[%s165 + $0x18] sm:$0xe]
      %v1167 = vld [vmem:[%s165 + $0x24] sm:$0xe]
      %v1168 = vld [vmem:[%s165 + $0x30] sm:$0xe]
      %v1169 = vld [vmem:[%s165 + $0x3c] sm:$0xe]
      %v1170 = vld [vmem:[%s165 + $0x48] sm:$0xe]
      %v1171 = vld [vmem:[%s165 + $0x54] sm:$0xe]
      %v1172 = vld [vmem:[%s165 + $0x60] sm:$0xe]
      %v1173 = vld [vmem:[%s165 + $0x6c] sm:$0xe]
      %v1174 = vld [vmem:[%s165 + $0x78] sm:$0xe]
      %v1175 = vld [vmem:[%s165 + $0x84] sm:$0xe]
      %v1176 = vld [vmem:[%s165 + $0x90] sm:$0xe]
      %v1177 = vld [vmem:[%s165 + $0x9c] sm:$0xe]
      %v1178 = vld [vmem:[%s165 + $0xa8] sm:$0xe]
      %v1179 = vld [vmem:[%s165 + $0xb4] sm:$0xe]
      %vm1212 = vcmask 1042432
      %vm1213 = vcmask 1046532
      %vm1214 = vmor %vm1212, %vm1213
      %v1215 = vrot.slane %v1164, 5
      %v1216 = vrot.slane %v1215, 4
      %v1217 = vrot.slane %v173, 5
      %v1218 = vsel %vm1214, %v1216, %v1217
      %v1219 = vrot.slane %v1217, 4
      %v1220 = vrot.slane %v205, 5
      %v1221 = vsel %vm1214, %v1219, %v1220
      %v1222 = vrot.slane %v1165, 5
      %v1223 = vrot.slane %v1222, 4
      %v1224 = vrot.slane %v175, 5
      %v1225 = vsel %vm1214, %v1223, %v1224
      %v1226 = vrot.slane %v1224, 4
      %v1227 = vrot.slane %v206, 5
      %v1228 = vsel %vm1214, %v1226, %v1227
      %v1229 = vrot.slane %v1166, 5
      %v1230 = vrot.slane %v1229, 4
      %v1231 = vrot.slane %v177, 5
      %v1232 = vsel %vm1214, %v1230, %v1231
      %v1233 = vrot.slane %v1231, 4
      %v1234 = vrot.slane %v207, 5
      %v1235 = vsel %vm1214, %v1233, %v1234
      %v1236 = vrot.slane %v1167, 5
      %v1237 = vrot.slane %v1236, 4
      %v1238 = vrot.slane %v179, 5
      %v1239 = vsel %vm1214, %v1237, %v1238
      %v1240 = vrot.slane %v1238, 4
      %v1241 = vrot.slane %v208, 5
      %v1242 = vsel %vm1214, %v1240, %v1241
      %v1243 = vrot.slane %v1168, 5
      %v1244 = vrot.slane %v1243, 4
      %v1245 = vrot.slane %v181, 5
      %v1246 = vsel %vm1214, %v1244, %v1245
      %v1247 = vrot.slane %v1245, 4
      %v1248 = vrot.slane %v209, 5
      %v1249 = vsel %vm1214, %v1247, %v1248
      %v1250 = vrot.slane %v1169, 5
      %v1251 = vrot.slane %v1250, 4
      %v1252 = vrot.slane %v183, 5
      %v1253 = vsel %vm1214, %v1251, %v1252
      %v1254 = vrot.slane %v1252, 4
      %v1255 = vrot.slane %v210, 5
      %v1256 = vsel %vm1214, %v1254, %v1255
      %v1257 = vrot.slane %v1170, 5
      %v1258 = vrot.slane %v1257, 4
      %v1259 = vrot.slane %v185, 5
      %v1260 = vsel %vm1214, %v1258, %v1259
      %v1261 = vrot.slane %v1259, 4
      %v1262 = vrot.slane %v211, 5
      %v1263 = vsel %vm1214, %v1261, %v1262
      %v1264 = vrot.slane %v1171, 5
      %v1265 = vrot.slane %v1264, 4
      %v1266 = vrot.slane %v187, 5
      %v1267 = vsel %vm1214, %v1265, %v1266
      %v1268 = vrot.slane %v1266, 4
      %v1269 = vrot.slane %v212, 5
      %v1270 = vsel %vm1214, %v1268, %v1269
      %v1271 = vrot.slane %v1172, 5
      %v1272 = vrot.slane %v1271, 4
      %v1273 = vrot.slane %v189, 5
      %v1274 = vsel %vm1214, %v1272, %v1273
      %v1275 = vrot.slane %v1273, 4
      %v1276 = vrot.slane %v213, 5
      %v1277 = vsel %vm1214, %v1275, %v1276
      %v1278 = vrot.slane %v1173, 5
      %v1279 = vrot.slane %v1278, 4
      %v1280 = vrot.slane %v191, 5
      %v1281 = vsel %vm1214, %v1279, %v1280
      %v1282 = vrot.slane %v1280, 4
      %v1283 = vrot.slane %v214, 5
      %v1284 = vsel %vm1214, %v1282, %v1283
      %v1285 = vrot.slane %v1174, 5
      %v1286 = vrot.slane %v1285, 4
      %v1287 = vrot.slane %v193, 5
      %v1288 = vsel %vm1214, %v1286, %v1287
      %v1289 = vrot.slane %v1287, 4
      %v1290 = vrot.slane %v215, 5
      %v1291 = vsel %vm1214, %v1289, %v1290
      %v1292 = vrot.slane %v1175, 5
      %v1293 = vrot.slane %v1292, 4
      %v1294 = vrot.slane %v195, 5
      %v1295 = vsel %vm1214, %v1293, %v1294
      %v1296 = vrot.slane %v1294, 4
      %v1297 = vrot.slane %v216, 5
      %v1298 = vsel %vm1214, %v1296, %v1297
      %v1299 = vrot.slane %v1176, 5
      %v1300 = vrot.slane %v1299, 4
      %v1301 = vrot.slane %v197, 5
      %v1302 = vsel %vm1214, %v1300, %v1301
      %v1303 = vrot.slane %v1301, 4
      %v1304 = vrot.slane %v217, 5
      %v1305 = vsel %vm1214, %v1303, %v1304
      %v1306 = vrot.slane %v1177, 5
      %v1307 = vrot.slane %v1306, 4
      %v1308 = vrot.slane %v199, 5
      %v1309 = vsel %vm1214, %v1307, %v1308
      %v1310 = vrot.slane %v1308, 4
      %v1311 = vrot.slane %v218, 5
      %v1312 = vsel %vm1214, %v1310, %v1311
      %v1313 = vrot.slane %v1178, 5
      %v1314 = vrot.slane %v1313, 4
      %v1315 = vrot.slane %v201, 5
      %v1316 = vsel %vm1214, %v1314, %v1315
      %v1317 = vrot.slane %v1315, 4
      %v1318 = vrot.slane %v219, 5
      %v1319 = vsel %vm1214, %v1317, %v1318
      %v1320 = vrot.slane %v1179, 5
      %v1321 = vrot.slane %v1320, 4
      %v1322 = vrot.slane %v203, 5
      %v1323 = vsel %vm1214, %v1321, %v1322
      %v1324 = vrot.slane %v1322, 4
      %v1325 = vrot.slane %v220, 5
      %v1326 = vsel %vm1214, %v1324, %v1325
      %s1327 = scalar_lea.vmem %s1, 4
      %v1328 = vld [vmem:[%s1327] sm:$0x3]
      %v1329 = vunpack.c.l.b16 %v1218
      %v1330 = vunpack.c.l.b16 %v1221
      %v1331 = vunpack.c.l.b16 %v1225
      %v1332 = vunpack.c.l.b16 %v1228
      %v1333 = vunpack.c.l.b16 %v1232
      %v1334 = vunpack.c.l.b16 %v1235
      %v1335 = vunpack.c.l.b16 %v1239
      %v1336 = vunpack.c.l.b16 %v1242
      %v1337 = vunpack.c.l.b16 %v1246
      %v1338 = vunpack.c.l.b16 %v1249
      %v1339 = vunpack.c.l.b16 %v1253
      %v1340 = vunpack.c.l.b16 %v1256
      %v1341 = vunpack.c.l.b16 %v1260
      %v1342 = vunpack.c.l.b16 %v1263
      %v1343 = vunpack.c.l.b16 %v1267
      %v1344 = vunpack.c.l.b16 %v1270
      %v1345 = vunpack.c.l.b16 %v1274
      %v1346 = vunpack.c.l.b16 %v1277
      %v1347 = vunpack.c.l.b16 %v1281
      %v1348 = vunpack.c.l.b16 %v1284
      %v1349 = vunpack.c.l.b16 %v1288
      %v1350 = vunpack.c.l.b16 %v1291
      %v1351 = vunpack.c.l.b16 %v1295
      %v1352 = vunpack.c.l.b16 %v1298
      %v1353 = vunpack.c.l.b16 %v1302
      %v1354 = vunpack.c.l.b16 %v1305
      %v1355 = vunpack.c.l.b16 %v1309
      %v1356 = vunpack.c.l.b16 %v1312
      %v1357 = vunpack.c.l.b16 %v1316
      %v1358 = vunpack.c.l.b16 %v1319
      %v1359 = vunpack.c.l.b16 %v1323
      %v1360 = vunpack.c.l.b16 %v1326
      %v1361 = vpack.c.b16 %v1330, %v1329
      %v1362 = vpack.c.b16 %v1332, %v1331
      %v1363 = vpack.c.b16 %v1334, %v1333
      %v1364 = vpack.c.b16 %v1336, %v1335
      %v1365 = vpack.c.b16 %v1338, %v1337
      %v1366 = vpack.c.b16 %v1340, %v1339
      %v1367 = vpack.c.b16 %v1342, %v1341
      %v1368 = vpack.c.b16 %v1344, %v1343
      %v1369 = vpack.c.b16 %v1346, %v1345
      %v1370 = vpack.c.b16 %v1348, %v1347
      %v1371 = vpack.c.b16 %v1350, %v1349
      %v1372 = vpack.c.b16 %v1352, %v1351
      %v1373 = vpack.c.b16 %v1354, %v1353
      %v1374 = vpack.c.b16 %v1356, %v1355
      %v1375 = vpack.c.b16 %v1358, %v1357
      %v1376 = vpack.c.b16 %v1360, %v1359
      %v1378 = vsel %vm658, %v1361, 0
      %v1381 = vsel %vm658, %v1362, 0
      %v1384 = vsel %vm658, %v1363, 0
      %v1387 = vsel %vm658, %v1364, 0
      %v1390 = vsel %vm658, %v1365, 0
      %v1393 = vsel %vm658, %v1366, 0
      %v1396 = vsel %vm658, %v1367, 0
      %v1399 = vsel %vm658, %v1368, 0
      %v1402 = vsel %vm658, %v1369, 0
      %v1405 = vsel %vm658, %v1370, 0
      %v1408 = vsel %vm658, %v1371, 0
      %v1411 = vsel %vm658, %v1372, 0
      %v1414 = vsel %vm658, %v1373, 0
      %v1417 = vsel %vm658, %v1374, 0
      %v1420 = vsel %vm658, %v1375, 0
      %v1423 = vsel %vm658, %v1376, 0
      %v1426 = vsel %vm707, %v1328, 0
      %1428 = vmatprep.subr.bf16.mxu0 0
      %1429 = vmatpush1.bf16.msra.mxu0 %v1426
      %1430 = vmatprep.subr.bf16.mxu0 0
      %1431 = vmatpush1.bf16.msra.mxu0 0
      %1432 = vmatprep.subr.bf16.mxu0 0
      %1433 = vmatpush1.bf16.msra.mxu0 0
      %1434 = vmatprep.subr.bf16.mxu0 0
      %1435 = vmatpush1.bf16.msra.mxu0 0
      %1436 = vmatprep.subr.bf16.mxu0 0
      %1437 = vmatpush1.bf16.msra.mxu0 0
      %1438 = vmatprep.subr.bf16.mxu0 0
      %1439 = vmatpush1.bf16.msra.mxu0 0
      %1440 = vmatprep.subr.bf16.mxu0 0
      %1441 = vmatpush1.bf16.msra.mxu0 0
      %1442 = vmatprep.subr.bf16.mxu0 0
      %1443 = vmatpush1.bf16.msra.mxu0 0
      %1444 = vmatprep.subr.bf16.mxu0 0
      %1445 = vmatpush1.bf16.msra.mxu0 0
      %1446 = vmatprep.subr.bf16.mxu0 0
      %1447 = vmatpush1.bf16.msra.mxu0 0
      %1448 = vmatprep.subr.bf16.mxu0 0
      %1449 = vmatpush1.bf16.msra.mxu0 0
      %1450 = vmatprep.subr.bf16.mxu0 0
      %1451 = vmatpush1.bf16.msra.mxu0 0
      %1452 = vmatprep.subr.bf16.mxu0 0
      %1453 = vmatpush1.bf16.msra.mxu0 0
      %1454 = vmatprep.subr.bf16.mxu0 0
      %1455 = vmatpush1.bf16.msra.mxu0 0
      %1456 = vmatprep.subr.bf16.mxu0 0
      %1457 = vmatpush1.bf16.msra.mxu0 0
      %1458 = vmatprep.subr.bf16.mxu0 0
      %1459 = vmatpush1.bf16.msra.mxu0 0
      %1460 = vmatprep.mubr.bf16.mxu0 0
      %1461 = vmatmul.mubr.bf16.gmra.mrb[0].mxu0 %v1378
      %v1462 = vpop.f32.mrb[0].mxu0
      %v1463 = vadd.f32 0.0, %v1462
      %v1464 = vpop.f32.mrb[0].mxu0
      %v1465 = vpop.f32.mrb[0].mxu0
      %v1466 = vadd.f32 0.0, %v1465
      %v1467 = vpop.f32.mrb[0].mxu0
      %1468 = vmatprep.mubr.bf16.mxu0 0
      %1469 = vmatmul.mubr.bf16.gmra.mrb[0].mxu0 %v1381
      %v1470 = vpop.f32.mrb[0].mxu0
      %v1471 = vadd.f32 0.0, %v1470
      %v1472 = vpop.f32.mrb[0].mxu0
      %v1473 = vpop.f32.mrb[0].mxu0
      %v1474 = vadd.f32 0.0, %v1473
      %v1475 = vpop.f32.mrb[0].mxu0
      %1476 = vmatprep.mubr.bf16.mxu0 0
      %1477 = vmatmul.mubr.bf16.gmra.mrb[0].mxu0 %v1384
      %v1478 = vpop.f32.mrb[0].mxu0
      %v1479 = vadd.f32 0.0, %v1478
      %v1480 = vpop.f32.mrb[0].mxu0
      %v1481 = vpop.f32.mrb[0].mxu0
      %v1482 = vadd.f32 0.0, %v1481
      %v1483 = vpop.f32.mrb[0].mxu0
      %1484 = vmatprep.mubr.bf16.mxu0 0
      %1485 = vmatmul.mubr.bf16.gmra.mrb[0].mxu0 %v1387
      %v1486 = vpop.f32.mrb[0].mxu0
      %v1487 = vadd.f32 0.0, %v1486
      %v1488 = vpop.f32.mrb[0].mxu0
      %v1489 = vpop.f32.mrb[0].mxu0
      %v1490 = vadd.f32 0.0, %v1489
      %v1491 = vpop.f32.mrb[0].mxu0
      %1492 = vmatprep.mubr.bf16.mxu0 0
      %1493 = vmatmul.mubr.bf16.gmra.mrb[0].mxu0 %v1390
      %v1494 = vpop.f32.mrb[0].mxu0
      %v1495 = vadd.f32 0.0, %v1494
      %v1496 = vpop.f32.mrb[0].mxu0
      %v1497 = vpop.f32.mrb[0].mxu0
      %v1498 = vadd.f32 0.0, %v1497
      %v1499 = vpop.f32.mrb[0].mxu0
      %1500 = vmatprep.mubr.bf16.mxu0 0
      %1501 = vmatmul.mubr.bf16.gmra.mrb[0].mxu0 %v1393
      %v1502 = vpop.f32.mrb[0].mxu0
      %v1503 = vadd.f32 0.0, %v1502
      %v1504 = vpop.f32.mrb[0].mxu0
      %v1505 = vpop.f32.mrb[0].mxu0
      %v1506 = vadd.f32 0.0, %v1505
      %v1507 = vpop.f32.mrb[0].mxu0
      %1508 = vmatprep.mubr.bf16.mxu0 0
      %1509 = vmatmul.mubr.bf16.gmra.mrb[0].mxu0 %v1396
      %v1510 = vpop.f32.mrb[0].mxu0
      %v1511 = vadd.f32 0.0, %v1510
      %v1512 = vpop.f32.mrb[0].mxu0
      %v1513 = vpop.f32.mrb[0].mxu0
      %v1514 = vadd.f32 0.0, %v1513
      %v1515 = vpop.f32.mrb[0].mxu0
      %1516 = vmatprep.mubr.bf16.mxu0 0
      %1517 = vmatmul.mubr.bf16.gmra.mrb[0].mxu0 %v1399
      %v1518 = vpop.f32.mrb[0].mxu0
      %v1519 = vadd.f32 0.0, %v1518
      %v1520 = vpop.f32.mrb[0].mxu0
      %v1521 = vpop.f32.mrb[0].mxu0
      %v1522 = vadd.f32 0.0, %v1521
      %v1523 = vpop.f32.mrb[0].mxu0
      %1524 = vmatprep.mubr.bf16.mxu0 0
      %1525 = vmatmul.mubr.bf16.gmra.mrb[0].mxu0 %v1402
      %v1526 = vpop.f32.mrb[0].mxu0
      %v1527 = vadd.f32 0.0, %v1526
      %v1528 = vpop.f32.mrb[0].mxu0
      %v1529 = vpop.f32.mrb[0].mxu0
      %v1530 = vadd.f32 0.0, %v1529
      %v1531 = vpop.f32.mrb[0].mxu0
      %1532 = vmatprep.mubr.bf16.mxu0 0
      %1533 = vmatmul.mubr.bf16.gmra.mrb[0].mxu0 %v1405
      %v1534 = vpop.f32.mrb[0].mxu0
      %v1535 = vadd.f32 0.0, %v1534
      %v1536 = vpop.f32.mrb[0].mxu0
      %v1537 = vpop.f32.mrb[0].mxu0
      %v1538 = vadd.f32 0.0, %v1537
      %v1539 = vpop.f32.mrb[0].mxu0
      %1540 = vmatprep.mubr.bf16.mxu0 0
      %1541 = vmatmul.mubr.bf16.gmra.mrb[0].mxu0 %v1408
      %v1542 = vpop.f32.mrb[0].mxu0
      %v1543 = vadd.f32 0.0, %v1542
      %v1544 = vpop.f32.mrb[0].mxu0
      %v1545 = vpop.f32.mrb[0].mxu0
      %v1546 = vadd.f32 0.0, %v1545
      %v1547 = vpop.f32.mrb[0].mxu0
      %1548 = vmatprep.mubr.bf16.mxu0 0
      %1549 = vmatmul.mubr.bf16.gmra.mrb[0].mxu0 %v1411
      %v1550 = vpop.f32.mrb[0].mxu0
      %v1551 = vadd.f32 0.0, %v1550
      %v1552 = vpop.f32.mrb[0].mxu0
      %v1553 = vpop.f32.mrb[0].mxu0
      %v1554 = vadd.f32 0.0, %v1553
      %v1555 = vpop.f32.mrb[0].mxu0
      %1556 = vmatprep.mubr.bf16.mxu0 0
      %1557 = vmatmul.mubr.bf16.gmra.mrb[0].mxu0 %v1414
      %v1558 = vpop.f32.mrb[0].mxu0
      %v1559 = vadd.f32 0.0, %v1558
      %v1560 = vpop.f32.mrb[0].mxu0
      %v1561 = vpop.f32.mrb[0].mxu0
      %v1562 = vadd.f32 0.0, %v1561
      %v1563 = vpop.f32.mrb[0].mxu0
      %1564 = vmatprep.mubr.bf16.mxu0 0
      %1565 = vmatmul.mubr.bf16.gmra.mrb[0].mxu0 %v1417
      %v1566 = vpop.f32.mrb[0].mxu0
      %v1567 = vadd.f32 0.0, %v1566
      %v1568 = vpop.f32.mrb[0].mxu0
      %v1569 = vpop.f32.mrb[0].mxu0
      %v1570 = vadd.f32 0.0, %v1569
      %v1571 = vpop.f32.mrb[0].mxu0
      %1572 = vmatprep.mubr.bf16.mxu0 0
      %1573 = vmatmul.mubr.bf16.gmra.mrb[0].mxu0 %v1420
      %v1574 = vpop.f32.mrb[0].mxu0
      %v1575 = vadd.f32 0.0, %v1574
      %v1576 = vpop.f32.mrb[0].mxu0
      %v1577 = vpop.f32.mrb[0].mxu0
      %v1578 = vadd.f32 0.0, %v1577
      %v1579 = vpop.f32.mrb[0].mxu0
      %1580 = vmatprep.mubr.bf16.mxu0 0
      %1581 = vmatmul.mubr.bf16.gmra.mrb[0].mxu0 %v1423
      %v1582 = vpop.f32.mrb[0].mxu0
      %v1583 = vadd.f32 0.0, %v1582
      %v1584 = vpop.f32.mrb[0].mxu0
      %v1585 = vpop.f32.mrb[0].mxu0
      %v1586 = vadd.f32 0.0, %v1585
      %v1587 = vpop.f32.mrb[0].mxu0
      %1588 = vdwg.mxu0
      %v1589 = vadd.f32 %v1038, %v1463
      %v1590 = vadd.f32 %v1041, %v1466
      %v1591 = vadd.f32 %v1046, %v1471
      %v1592 = vadd.f32 %v1049, %v1474
      %v1593 = vadd.f32 %v1054, %v1479
      %v1594 = vadd.f32 %v1057, %v1482
      %v1595 = vadd.f32 %v1062, %v1487
      %v1596 = vadd.f32 %v1065, %v1490
      %v1597 = vadd.f32 %v1070, %v1495
      %v1598 = vadd.f32 %v1073, %v1498
      %v1599 = vadd.f32 %v1078, %v1503
      %v1600 = vadd.f32 %v1081, %v1506
      %v1601 = vadd.f32 %v1086, %v1511
      %v1602 = vadd.f32 %v1089, %v1514
      %v1603 = vadd.f32 %v1094, %v1519
      %v1604 = vadd.f32 %v1097, %v1522
      %v1605 = vadd.f32 %v1102, %v1527
      %v1606 = vadd.f32 %v1105, %v1530
      %v1607 = vadd.f32 %v1110, %v1535
      %v1608 = vadd.f32 %v1113, %v1538
      %v1609 = vadd.f32 %v1118, %v1543
      %v1610 = vadd.f32 %v1121, %v1546
      %v1611 = vadd.f32 %v1126, %v1551
      %v1612 = vadd.f32 %v1129, %v1554
      %v1613 = vadd.f32 %v1134, %v1559
      %v1614 = vadd.f32 %v1137, %v1562
      %v1615 = vadd.f32 %v1142, %v1567
      %v1616 = vadd.f32 %v1145, %v1570
      %v1617 = vadd.f32 %v1150, %v1575
      %v1618 = vadd.f32 %v1153, %v1578
      %v1619 = vadd.f32 %v1158, %v1583
      %v1620 = vadd.f32 %v1161, %v1586
      %s1621 = scalar_lea.vmem %s165, 12
      %v1622 = vld [vmem:[%s1621] sm:$0xf]
      %v1623 = vld [vmem:[%s1621 + $0x4] sm:$0xf]
      %v1624 = vld [vmem:[%s1621 + $0xc] sm:$0xf]
      %v1625 = vld [vmem:[%s1621 + $0x10] sm:$0xf]
      %v1626 = vld [vmem:[%s1621 + $0x18] sm:$0xf]
      %v1627 = vld [vmem:[%s1621 + $0x1c] sm:$0xf]
      %v1628 = vld [vmem:[%s1621 + $0x24] sm:$0xf]
      %v1629 = vld [vmem:[%s1621 + $0x28] sm:$0xf]
      %v1630 = vld [vmem:[%s1621 + $0x30] sm:$0xf]
      %v1631 = vld [vmem:[%s1621 + $0x34] sm:$0xf]
      %v1632 = vld [vmem:[%s1621 + $0x3c] sm:$0xf]
      %v1633 = vld [vmem:[%s1621 + $0x40] sm:$0xf]
      %v1634 = vld [vmem:[%s1621 + $0x48] sm:$0xf]
      %v1635 = vld [vmem:[%s1621 + $0x4c] sm:$0xf]
      %v1636 = vld [vmem:[%s1621 + $0x54] sm:$0xf]
      %v1637 = vld [vmem:[%s1621 + $0x58] sm:$0xf]
      %v1638 = vld [vmem:[%s1621 + $0x60] sm:$0xf]
      %v1639 = vld [vmem:[%s1621 + $0x64] sm:$0xf]
      %v1640 = vld [vmem:[%s1621 + $0x6c] sm:$0xf]
      %v1641 = vld [vmem:[%s1621 + $0x70] sm:$0xf]
      %v1642 = vld [vmem:[%s1621 + $0x78] sm:$0xf]
      %v1643 = vld [vmem:[%s1621 + $0x7c] sm:$0xf]
      %v1644 = vld [vmem:[%s1621 + $0x84] sm:$0xf]
      %v1645 = vld [vmem:[%s1621 + $0x88] sm:$0xf]
      %v1646 = vld [vmem:[%s1621 + $0x90] sm:$0xf]
      %v1647 = vld [vmem:[%s1621 + $0x94] sm:$0xf]
      %v1648 = vld [vmem:[%s1621 + $0x9c] sm:$0xf]
      %v1649 = vld [vmem:[%s1621 + $0xa0] sm:$0xf]
      %v1650 = vld [vmem:[%s1621 + $0xa8] sm:$0xf]
      %v1651 = vld [vmem:[%s1621 + $0xac] sm:$0xf]
      %v1652 = vld [vmem:[%s1621 + $0xb4] sm:$0xf]
      %v1653 = vld [vmem:[%s1621 + $0xb8] sm:$0xf]
      %s1654 = scalar_lea.vmem %s1, 6
      %v1655 = vld [vmem:[%s1654] sm:$0x3]
      %v1688 = vunpack.c.l.b16 %v1622
      %v1689 = vunpack.c.l.b16 %v1623
      %v1690 = vunpack.c.l.b16 %v1624
      %v1691 = vunpack.c.l.b16 %v1625
      %v1692 = vunpack.c.l.b16 %v1626
      %v1693 = vunpack.c.l.b16 %v1627
      %v1694 = vunpack.c.l.b16 %v1628
      %v1695 = vunpack.c.l.b16 %v1629
      %v1696 = vunpack.c.l.b16 %v1630
      %v1697 = vunpack.c.l.b16 %v1631
      %v1698 = vunpack.c.l.b16 %v1632
      %v1699 = vunpack.c.l.b16 %v1633
      %v1700 = vunpack.c.l.b16 %v1634
      %v1701 = vunpack.c.l.b16 %v1635
      %v1702 = vunpack.c.l.b16 %v1636
      %v1703 = vunpack.c.l.b16 %v1637
      %v1704 = vunpack.c.l.b16 %v1638
      %v1705 = vunpack.c.l.b16 %v1639
      %v1706 = vunpack.c.l.b16 %v1640
      %v1707 = vunpack.c.l.b16 %v1641
      %v1708 = vunpack.c.l.b16 %v1642
      %v1709 = vunpack.c.l.b16 %v1643
      %v1710 = vunpack.c.l.b16 %v1644
      %v1711 = vunpack.c.l.b16 %v1645
      %v1712 = vunpack.c.l.b16 %v1646
      %v1713 = vunpack.c.l.b16 %v1647
      %v1714 = vunpack.c.l.b16 %v1648
      %v1715 = vunpack.c.l.b16 %v1649
      %v1716 = vunpack.c.l.b16 %v1650
      %v1717 = vunpack.c.l.b16 %v1651
      %v1718 = vunpack.c.l.b16 %v1652
      %v1719 = vunpack.c.l.b16 %v1653
      %v1720 = vpack.c.b16 %v1689, %v1688
      %v1721 = vpack.c.b16 %v1691, %v1690
      %v1722 = vpack.c.b16 %v1693, %v1692
      %v1723 = vpack.c.b16 %v1695, %v1694
      %v1724 = vpack.c.b16 %v1697, %v1696
      %v1725 = vpack.c.b16 %v1699, %v1698
      %v1726 = vpack.c.b16 %v1701, %v1700
      %v1727 = vpack.c.b16 %v1703, %v1702
      %v1728 = vpack.c.b16 %v1705, %v1704
      %v1729 = vpack.c.b16 %v1707, %v1706
      %v1730 = vpack.c.b16 %v1709, %v1708
      %v1731 = vpack.c.b16 %v1711, %v1710
      %v1732 = vpack.c.b16 %v1713, %v1712
      %v1733 = vpack.c.b16 %v1715, %v1714
      %v1734 = vpack.c.b16 %v1717, %v1716
      %v1735 = vpack.c.b16 %v1719, %v1718
      %v1737 = vsel %vm658, %v1720, 0
      %v1740 = vsel %vm658, %v1721, 0
      %v1743 = vsel %vm658, %v1722, 0
      %v1746 = vsel %vm658, %v1723, 0
      %v1749 = vsel %vm658, %v1724, 0
      %v1752 = vsel %vm658, %v1725, 0
      %v1755 = vsel %vm658, %v1726, 0
      %v1758 = vsel %vm658, %v1727, 0
      %v1761 = vsel %vm658, %v1728, 0
      %v1764 = vsel %vm658, %v1729, 0
      %v1767 = vsel %vm658, %v1730, 0
      %v1770 = vsel %vm658, %v1731, 0
      %v1773 = vsel %vm658, %v1732, 0
      %v1776 = vsel %vm658, %v1733, 0
      %v1779 = vsel %vm658, %v1734, 0
      %v1782 = vsel %vm658, %v1735, 0
      %v1785 = vsel %vm707, %v1655, 0
      %1787 = vmatprep.subr.bf16.mxu0 0
      %1788 = vmatpush1.bf16.msra.mxu0 %v1785
      %1789 = vmatprep.subr.bf16.mxu0 0
      %1790 = vmatpush1.bf16.msra.mxu0 0
      %1791 = vmatprep.subr.bf16.mxu0 0
      %1792 = vmatpush1.bf16.msra.mxu0 0
      %1793 = vmatprep.subr.bf16.mxu0 0
      %1794 = vmatpush1.bf16.msra.mxu0 0
      %1795 = vmatprep.subr.bf16.mxu0 0
      %1796 = vmatpush1.bf16.msra.mxu0 0
      %1797 = vmatprep.subr.bf16.mxu0 0
      %1798 = vmatpush1.bf16.msra.mxu0 0
      %1799 = vmatprep.subr.bf16.mxu0 0
      %1800 = vmatpush1.bf16.msra.mxu0 0
      %1801 = vmatprep.subr.bf16.mxu0 0
      %1802 = vmatpush1.bf16.msra.mxu0 0
      %1803 = vmatprep.subr.bf16.mxu0 0
      %1804 = vmatpush1.bf16.msra.mxu0 0
      %1805 = vmatprep.subr.bf16.mxu0 0
      %1806 = vmatpush1.bf16.msra.mxu0 0
      %1807 = vmatprep.subr.bf16.mxu0 0
      %1808 = vmatpush1.bf16.msra.mxu0 0
      %1809 = vmatprep.subr.bf16.mxu0 0
      %1810 = vmatpush1.bf16.msra.mxu0 0
      %1811 = vmatprep.subr.bf16.mxu0 0
      %1812 = vmatpush1.bf16.msra.mxu0 0
      %1813 = vmatprep.subr.bf16.mxu0 0
      %1814 = vmatpush1.bf16.msra.mxu0 0
      %1815 = vmatprep.subr.bf16.mxu0 0
      %1816 = vmatpush1.bf16.msra.mxu0 0
      %1817 = vmatprep.subr.bf16.mxu0 0
      %1818 = vmatpush1.bf16.msra.mxu0 0
      %1819 = vmatprep.mubr.bf16.mxu0 0
      %1820 = vmatmul.mubr.bf16.gmra.mrb[0].mxu0 %v1737
      %v1821 = vpop.f32.mrb[0].mxu0
      %v1822 = vadd.f32 0.0, %v1821
      %v1823 = vpop.f32.mrb[0].mxu0
      %v1824 = vpop.f32.mrb[0].mxu0
      %v1825 = vadd.f32 0.0, %v1824
      %v1826 = vpop.f32.mrb[0].mxu0
      %1827 = vmatprep.mubr.bf16.mxu0 0
      %1828 = vmatmul.mubr.bf16.gmra.mrb[0].mxu0 %v1740
      %v1829 = vpop.f32.mrb[0].mxu0
      %v1830 = vadd.f32 0.0, %v1829
      %v1831 = vpop.f32.mrb[0].mxu0
      %v1832 = vpop.f32.mrb[0].mxu0
      %v1833 = vadd.f32 0.0, %v1832
      %v1834 = vpop.f32.mrb[0].mxu0
      %1835 = vmatprep.mubr.bf16.mxu0 0
      %1836 = vmatmul.mubr.bf16.gmra.mrb[0].mxu0 %v1743
      %v1837 = vpop.f32.mrb[0].mxu0
      %v1838 = vadd.f32 0.0, %v1837
      %v1839 = vpop.f32.mrb[0].mxu0
      %v1840 = vpop.f32.mrb[0].mxu0
      %v1841 = vadd.f32 0.0, %v1840
      %v1842 = vpop.f32.mrb[0].mxu0
      %1843 = vmatprep.mubr.bf16.mxu0 0
      %1844 = vmatmul.mubr.bf16.gmra.mrb[0].mxu0 %v1746
      %v1845 = vpop.f32.mrb[0].mxu0
      %v1846 = vadd.f32 0.0, %v1845
      %v1847 = vpop.f32.mrb[0].mxu0
      %v1848 = vpop.f32.mrb[0].mxu0
      %v1849 = vadd.f32 0.0, %v1848
      %v1850 = vpop.f32.mrb[0].mxu0
      %1851 = vmatprep.mubr.bf16.mxu0 0
      %1852 = vmatmul.mubr.bf16.gmra.mrb[0].mxu0 %v1749
      %v1853 = vpop.f32.mrb[0].mxu0
      %v1854 = vadd.f32 0.0, %v1853
      %v1855 = vpop.f32.mrb[0].mxu0
      %v1856 = vpop.f32.mrb[0].mxu0
      %v1857 = vadd.f32 0.0, %v1856
      %v1858 = vpop.f32.mrb[0].mxu0
      %1859 = vmatprep.mubr.bf16.mxu0 0
      %1860 = vmatmul.mubr.bf16.gmra.mrb[0].mxu0 %v1752
      %v1861 = vpop.f32.mrb[0].mxu0
      %v1862 = vadd.f32 0.0, %v1861
      %v1863 = vpop.f32.mrb[0].mxu0
      %v1864 = vpop.f32.mrb[0].mxu0
      %v1865 = vadd.f32 0.0, %v1864
      %v1866 = vpop.f32.mrb[0].mxu0
      %1867 = vmatprep.mubr.bf16.mxu0 0
      %1868 = vmatmul.mubr.bf16.gmra.mrb[0].mxu0 %v1755
      %v1869 = vpop.f32.mrb[0].mxu0
      %v1870 = vadd.f32 0.0, %v1869
      %v1871 = vpop.f32.mrb[0].mxu0
      %v1872 = vpop.f32.mrb[0].mxu0
      %v1873 = vadd.f32 0.0, %v1872
      %v1874 = vpop.f32.mrb[0].mxu0
      %1875 = vmatprep.mubr.bf16.mxu0 0
      %1876 = vmatmul.mubr.bf16.gmra.mrb[0].mxu0 %v1758
      %v1877 = vpop.f32.mrb[0].mxu0
      %v1878 = vadd.f32 0.0, %v1877
      %v1879 = vpop.f32.mrb[0].mxu0
      %v1880 = vpop.f32.mrb[0].mxu0
      %v1881 = vadd.f32 0.0, %v1880
      %v1882 = vpop.f32.mrb[0].mxu0
      %1883 = vmatprep.mubr.bf16.mxu0 0
      %1884 = vmatmul.mubr.bf16.gmra.mrb[0].mxu0 %v1761
      %v1885 = vpop.f32.mrb[0].mxu0
      %v1886 = vadd.f32 0.0, %v1885
      %v1887 = vpop.f32.mrb[0].mxu0
      %v1888 = vpop.f32.mrb[0].mxu0
      %v1889 = vadd.f32 0.0, %v1888
      %v1890 = vpop.f32.mrb[0].mxu0
      %1891 = vmatprep.mubr.bf16.mxu0 0
      %1892 = vmatmul.mubr.bf16.gmra.mrb[0].mxu0 %v1764
      %v1893 = vpop.f32.mrb[0].mxu0
      %v1894 = vadd.f32 0.0, %v1893
      %v1895 = vpop.f32.mrb[0].mxu0
      %v1896 = vpop.f32.mrb[0].mxu0
      %v1897 = vadd.f32 0.0, %v1896
      %v1898 = vpop.f32.mrb[0].mxu0
      %1899 = vmatprep.mubr.bf16.mxu0 0
      %1900 = vmatmul.mubr.bf16.gmra.mrb[0].mxu0 %v1767
      %v1901 = vpop.f32.mrb[0].mxu0
      %v1902 = vadd.f32 0.0, %v1901
      %v1903 = vpop.f32.mrb[0].mxu0
      %v1904 = vpop.f32.mrb[0].mxu0
      %v1905 = vadd.f32 0.0, %v1904
      %v1906 = vpop.f32.mrb[0].mxu0
      %1907 = vmatprep.mubr.bf16.mxu0 0
      %1908 = vmatmul.mubr.bf16.gmra.mrb[0].mxu0 %v1770
      %v1909 = vpop.f32.mrb[0].mxu0
      %v1910 = vadd.f32 0.0, %v1909
      %v1911 = vpop.f32.mrb[0].mxu0
      %v1912 = vpop.f32.mrb[0].mxu0
      %v1913 = vadd.f32 0.0, %v1912
      %v1914 = vpop.f32.mrb[0].mxu0
      %1915 = vmatprep.mubr.bf16.mxu0 0
      %1916 = vmatmul.mubr.bf16.gmra.mrb[0].mxu0 %v1773
      %v1917 = vpop.f32.mrb[0].mxu0
      %v1918 = vadd.f32 0.0, %v1917
      %v1919 = vpop.f32.mrb[0].mxu0
      %v1920 = vpop.f32.mrb[0].mxu0
      %v1921 = vadd.f32 0.0, %v1920
      %v1922 = vpop.f32.mrb[0].mxu0
      %1923 = vmatprep.mubr.bf16.mxu0 0
      %1924 = vmatmul.mubr.bf16.gmra.mrb[0].mxu0 %v1776
      %v1925 = vpop.f32.mrb[0].mxu0
      %v1926 = vadd.f32 0.0, %v1925
      %v1927 = vpop.f32.mrb[0].mxu0
      %v1928 = vpop.f32.mrb[0].mxu0
      %v1929 = vadd.f32 0.0, %v1928
      %v1930 = vpop.f32.mrb[0].mxu0
      %1931 = vmatprep.mubr.bf16.mxu0 0
      %1932 = vmatmul.mubr.bf16.gmra.mrb[0].mxu0 %v1779
      %v1933 = vpop.f32.mrb[0].mxu0
      %v1934 = vadd.f32 0.0, %v1933
      %v1935 = vpop.f32.mrb[0].mxu0
      %v1936 = vpop.f32.mrb[0].mxu0
      %v1937 = vadd.f32 0.0, %v1936
      %v1938 = vpop.f32.mrb[0].mxu0
      %1939 = vmatprep.mubr.bf16.mxu0 0
      %1940 = vmatmul.mubr.bf16.gmra.mrb[0].mxu0 %v1782
      %v1941 = vpop.f32.mrb[0].mxu0
      %v1942 = vadd.f32 0.0, %v1941
      %v1943 = vpop.f32.mrb[0].mxu0
      %v1944 = vpop.f32.mrb[0].mxu0
      %v1945 = vadd.f32 0.0, %v1944
      %v1946 = vpop.f32.mrb[0].mxu0
      %1947 = vdwg.mxu0
      %v1948 = vadd.f32 %v1589, %v1822
      %v1949 = vadd.f32 %v1590, %v1825
      %v1950 = vadd.f32 %v1591, %v1830
      %v1951 = vadd.f32 %v1592, %v1833
      %v1952 = vadd.f32 %v1593, %v1838
      %v1953 = vadd.f32 %v1594, %v1841
      %v1954 = vadd.f32 %v1595, %v1846
      %v1955 = vadd.f32 %v1596, %v1849
      %v1956 = vadd.f32 %v1597, %v1854
      %v1957 = vadd.f32 %v1598, %v1857
      %v1958 = vadd.f32 %v1599, %v1862
      %v1959 = vadd.f32 %v1600, %v1865
      %v1960 = vadd.f32 %v1601, %v1870
      %v1961 = vadd.f32 %v1602, %v1873
      %v1962 = vadd.f32 %v1603, %v1878
      %v1963 = vadd.f32 %v1604, %v1881
      %v1964 = vadd.f32 %v1605, %v1886
      %v1965 = vadd.f32 %v1606, %v1889
      %v1966 = vadd.f32 %v1607, %v1894
      %v1967 = vadd.f32 %v1608, %v1897
      %v1968 = vadd.f32 %v1609, %v1902
      %v1969 = vadd.f32 %v1610, %v1905
      %v1970 = vadd.f32 %v1611, %v1910
      %v1971 = vadd.f32 %v1612, %v1913
      %v1972 = vadd.f32 %v1613, %v1918
      %v1973 = vadd.f32 %v1614, %v1921
      %v1974 = vadd.f32 %v1615, %v1926
      %v1975 = vadd.f32 %v1616, %v1929
      %v1976 = vadd.f32 %v1617, %v1934
      %v1977 = vadd.f32 %v1618, %v1937
      %v1978 = vadd.f32 %v1619, %v1942
      %v1979 = vadd.f32 %v1620, %v1945
      %v1980 = vld [vmem:[%s1621] sm:$0xf]
      %v1981 = vld [vmem:[%s1621 + $0x4] sm:$0xf]
      %v1982 = vld [vmem:[%s1621 + $0x8] sm:$0x1]
      %v1983 = vld [vmem:[%s1621 + $0xc] sm:$0xf]
      %v1984 = vld [vmem:[%s1621 + $0x10] sm:$0xf]
      %v1985 = vld [vmem:[%s1621 + $0x14] sm:$0x1]
      %v1986 = vld [vmem:[%s1621 + $0x18] sm:$0xf]
      %v1987 = vld [vmem:[%s1621 + $0x1c] sm:$0xf]
      %v1988 = vld [vmem:[%s1621 + $0x20] sm:$0x1]
      %v1989 = vld [vmem:[%s1621 + $0x24] sm:$0xf]
      %v1990 = vld [vmem:[%s1621 + $0x28] sm:$0xf]
      %v1991 = vld [vmem:[%s1621 + $0x2c] sm:$0x1]
      %v1992 = vld [vmem:[%s1621 + $0x30] sm:$0xf]
      %v1993 = vld [vmem:[%s1621 + $0x34] sm:$0xf]
      %v1994 = vld [vmem:[%s1621 + $0x38] sm:$0x1]
      %v1995 = vld [vmem:[%s1621 + $0x3c] sm:$0xf]
      %v1996 = vld [vmem:[%s1621 + $0x40] sm:$0xf]
      %v1997 = vld [vmem:[%s1621 + $0x44] sm:$0x1]
      %v1998 = vld [vmem:[%s1621 + $0x48] sm:$0xf]
      %v1999 = vld [vmem:[%s1621 + $0x4c] sm:$0xf]
      %v2000 = vld [vmem:[%s1621 + $0x50] sm:$0x1]
      %v2001 = vld [vmem:[%s1621 + $0x54] sm:$0xf]
      %v2002 = vld [vmem:[%s1621 + $0x58] sm:$0xf]
      %v2003 = vld [vmem:[%s1621 + $0x5c] sm:$0x1]
      %v2004 = vld [vmem:[%s1621 + $0x60] sm:$0xf]
      %v2005 = vld [vmem:[%s1621 + $0x64] sm:$0xf]
      %v2006 = vld [vmem:[%s1621 + $0x68] sm:$0x1]
      %v2007 = vld [vmem:[%s1621 + $0x6c] sm:$0xf]
      %v2008 = vld [vmem:[%s1621 + $0x70] sm:$0xf]
      %v2009 = vld [vmem:[%s1621 + $0x74] sm:$0x1]
      %v2010 = vld [vmem:[%s1621 + $0x78] sm:$0xf]
      %v2011 = vld [vmem:[%s1621 + $0x7c] sm:$0xf]
      %v2012 = vld [vmem:[%s1621 + $0x80] sm:$0x1]
      %v2013 = vld [vmem:[%s1621 + $0x84] sm:$0xf]
      %v2014 = vld [vmem:[%s1621 + $0x88] sm:$0xf]
      %v2015 = vld [vmem:[%s1621 + $0x8c] sm:$0x1]
      %v2016 = vld [vmem:[%s1621 + $0x90] sm:$0xf]
      %v2017 = vld [vmem:[%s1621 + $0x94] sm:$0xf]
      %v2018 = vld [vmem:[%s1621 + $0x98] sm:$0x1]
      %v2019 = vld [vmem:[%s1621 + $0x9c] sm:$0xf]
      %v2020 = vld [vmem:[%s1621 + $0xa0] sm:$0xf]
      %v2021 = vld [vmem:[%s1621 + $0xa4] sm:$0x1]
      %v2022 = vld [vmem:[%s1621 + $0xa8] sm:$0xf]
      %v2023 = vld [vmem:[%s1621 + $0xac] sm:$0xf]
      %v2024 = vld [vmem:[%s1621 + $0xb0] sm:$0x1]
      %v2025 = vld [vmem:[%s1621 + $0xb4] sm:$0xf]
      %v2026 = vld [vmem:[%s1621 + $0xb8] sm:$0xf]
      %v2027 = vld [vmem:[%s1621 + $0xbc] sm:$0x1]
      %v2029 = vshrl.u32 %v1980, 16
      %v2031 = vrot.slane %v2029, 4
      %v2032 = vshll.u32 %v1980, 16
      %v2034 = vrot.slane %v2032, 5
      %v2035 = vor.u32 %v2031, %v2034
      %v2036 = vrot.slane %v2035, 4
      %v2038 = vshll.u32 %v1981, 16
      %v2040 = vrot.slane %v2038, 5
      %v2041 = vsel %vm223, %v2036, %v2040
      %v2042 = vshrl.u32 %v1981, 16
      %v2044 = vrot.slane %v2042, 4
      %v2045 = vor.u32 %v2044, %v2040
      %v2046 = vrot.slane %v2045, 4
      %v2048 = vshll.u32 %v1982, 16
      %v2050 = vrot.slane %v2048, 5
      %v2051 = vsel %vm223, %v2046, %v2050
      %v2053 = vshrl.u32 %v1983, 16
      %v2055 = vrot.slane %v2053, 4
      %v2056 = vshll.u32 %v1983, 16
      %v2058 = vrot.slane %v2056, 5
      %v2059 = vor.u32 %v2055, %v2058
      %v2060 = vrot.slane %v2059, 4
      %v2062 = vshll.u32 %v1984, 16
      %v2064 = vrot.slane %v2062, 5
      %v2065 = vsel %vm223, %v2060, %v2064
      %v2066 = vshrl.u32 %v1984, 16
      %v2068 = vrot.slane %v2066, 4
      %v2069 = vor.u32 %v2068, %v2064
      %v2070 = vrot.slane %v2069, 4
      %v2072 = vshll.u32 %v1985, 16
      %v2074 = vrot.slane %v2072, 5
      %v2075 = vsel %vm223, %v2070, %v2074
      %v2077 = vshrl.u32 %v1986, 16
      %v2079 = vrot.slane %v2077, 4
      %v2080 = vshll.u32 %v1986, 16
      %v2082 = vrot.slane %v2080, 5
      %v2083 = vor.u32 %v2079, %v2082
      %v2084 = vrot.slane %v2083, 4
      %v2086 = vshll.u32 %v1987, 16
      %v2088 = vrot.slane %v2086, 5
      %v2089 = vsel %vm223, %v2084, %v2088
      %v2090 = vshrl.u32 %v1987, 16
      %v2092 = vrot.slane %v2090, 4
      %v2093 = vor.u32 %v2092, %v2088
      %v2094 = vrot.slane %v2093, 4
      %v2096 = vshll.u32 %v1988, 16
      %v2098 = vrot.slane %v2096, 5
      %v2099 = vsel %vm223, %v2094, %v2098
      %v2101 = vshrl.u32 %v1989, 16
      %v2103 = vrot.slane %v2101, 4
      %v2104 = vshll.u32 %v1989, 16
      %v2106 = vrot.slane %v2104, 5
      %v2107 = vor.u32 %v2103, %v2106
      %v2108 = vrot.slane %v2107, 4
      %v2110 = vshll.u32 %v1990, 16
      %v2112 = vrot.slane %v2110, 5
      %v2113 = vsel %vm223, %v2108, %v2112
      %v2114 = vshrl.u32 %v1990, 16
      %v2116 = vrot.slane %v2114, 4
      %v2117 = vor.u32 %v2116, %v2112
      %v2118 = vrot.slane %v2117, 4
      %v2120 = vshll.u32 %v1991, 16
      %v2122 = vrot.slane %v2120, 5
      %v2123 = vsel %vm223, %v2118, %v2122
      %v2125 = vshrl.u32 %v1992, 16
      %v2127 = vrot.slane %v2125, 4
      %v2128 = vshll.u32 %v1992, 16
      %v2130 = vrot.slane %v2128, 5
      %v2131 = vor.u32 %v2127, %v2130
      %v2132 = vrot.slane %v2131, 4
      %v2134 = vshll.u32 %v1993, 16
      %v2136 = vrot.slane %v2134, 5
      %v2137 = vsel %vm223, %v2132, %v2136
      %v2138 = vshrl.u32 %v1993, 16
      %v2140 = vrot.slane %v2138, 4
      %v2141 = vor.u32 %v2140, %v2136
      %v2142 = vrot.slane %v2141, 4
      %v2144 = vshll.u32 %v1994, 16
      %v2146 = vrot.slane %v2144, 5
      %v2147 = vsel %vm223, %v2142, %v2146
      %v2149 = vshrl.u32 %v1995, 16
      %v2151 = vrot.slane %v2149, 4
      %v2152 = vshll.u32 %v1995, 16
      %v2154 = vrot.slane %v2152, 5
      %v2155 = vor.u32 %v2151, %v2154
      %v2156 = vrot.slane %v2155, 4
      %v2158 = vshll.u32 %v1996, 16
      %v2160 = vrot.slane %v2158, 5
      %v2161 = vsel %vm223, %v2156, %v2160
      %v2162 = vshrl.u32 %v1996, 16
      %v2164 = vrot.slane %v2162, 4
      %v2165 = vor.u32 %v2164, %v2160
      %v2166 = vrot.slane %v2165, 4
      %v2168 = vshll.u32 %v1997, 16
      %v2170 = vrot.slane %v2168, 5
      %v2171 = vsel %vm223, %v2166, %v2170
      %v2173 = vshrl.u32 %v1998, 16
      %v2175 = vrot.slane %v2173, 4
      %v2176 = vshll.u32 %v1998, 16
      %v2178 = vrot.slane %v2176, 5
      %v2179 = vor.u32 %v2175, %v2178
      %v2180 = vrot.slane %v2179, 4
      %v2182 = vshll.u32 %v1999, 16
      %v2184 = vrot.slane %v2182, 5
      %v2185 = vsel %vm223, %v2180, %v2184
      %v2186 = vshrl.u32 %v1999, 16
      %v2188 = vrot.slane %v2186, 4
      %v2189 = vor.u32 %v2188, %v2184
      %v2190 = vrot.slane %v2189, 4
      %v2192 = vshll.u32 %v2000, 16
      %v2194 = vrot.slane %v2192, 5
      %v2195 = vsel %vm223, %v2190, %v2194
      %v2197 = vshrl.u32 %v2001, 16
      %v2199 = vrot.slane %v2197, 4
      %v2200 = vshll.u32 %v2001, 16
      %v2202 = vrot.slane %v2200, 5
      %v2203 = vor.u32 %v2199, %v2202
      %v2204 = vrot.slane %v2203, 4
      %v2206 = vshll.u32 %v2002, 16
      %v2208 = vrot.slane %v2206, 5
      %v2209 = vsel %vm223, %v2204, %v2208
      %v2210 = vshrl.u32 %v2002, 16
      %v2212 = vrot.slane %v2210, 4
      %v2213 = vor.u32 %v2212, %v2208
      %v2214 = vrot.slane %v2213, 4
      %v2216 = vshll.u32 %v2003, 16
      %v2218 = vrot.slane %v2216, 5
      %v2219 = vsel %vm223, %v2214, %v2218
      %v2221 = vshrl.u32 %v2004, 16
      %v2223 = vrot.slane %v2221, 4
      %v2224 = vshll.u32 %v2004, 16
      %v2226 = vrot.slane %v2224, 5
      %v2227 = vor.u32 %v2223, %v2226
      %v2228 = vrot.slane %v2227, 4
      %v2230 = vshll.u32 %v2005, 16
      %v2232 = vrot.slane %v2230, 5
      %v2233 = vsel %vm223, %v2228, %v2232
      %v2234 = vshrl.u32 %v2005, 16
      %v2236 = vrot.slane %v2234, 4
      %v2237 = vor.u32 %v2236, %v2232
      %v2238 = vrot.slane %v2237, 4
      %v2240 = vshll.u32 %v2006, 16
      %v2242 = vrot.slane %v2240, 5
      %v2243 = vsel %vm223, %v2238, %v2242
      %v2245 = vshrl.u32 %v2007, 16
      %v2247 = vrot.slane %v2245, 4
      %v2248 = vshll.u32 %v2007, 16
      %v2250 = vrot.slane %v2248, 5
      %v2251 = vor.u32 %v2247, %v2250
      %v2252 = vrot.slane %v2251, 4
      %v2254 = vshll.u32 %v2008, 16
      %v2256 = vrot.slane %v2254, 5
      %v2257 = vsel %vm223, %v2252, %v2256
      %v2258 = vshrl.u32 %v2008, 16
      %v2260 = vrot.slane %v2258, 4
      %v2261 = vor.u32 %v2260, %v2256
      %v2262 = vrot.slane %v2261, 4
      %v2264 = vshll.u32 %v2009, 16
      %v2266 = vrot.slane %v2264, 5
      %v2267 = vsel %vm223, %v2262, %v2266
      %v2269 = vshrl.u32 %v2010, 16
      %v2271 = vrot.slane %v2269, 4
      %v2272 = vshll.u32 %v2010, 16
      %v2274 = vrot.slane %v2272, 5
      %v2275 = vor.u32 %v2271, %v2274
      %v2276 = vrot.slane %v2275, 4
      %v2278 = vshll.u32 %v2011, 16
      %v2280 = vrot.slane %v2278, 5
      %v2281 = vsel %vm223, %v2276, %v2280
      %v2282 = vshrl.u32 %v2011, 16
      %v2284 = vrot.slane %v2282, 4
      %v2285 = vor.u32 %v2284, %v2280
      %v2286 = vrot.slane %v2285, 4
      %v2288 = vshll.u32 %v2012, 16
      %v2290 = vrot.slane %v2288, 5
      %v2291 = vsel %vm223, %v2286, %v2290
      %v2293 = vshrl.u32 %v2013, 16
      %v2295 = vrot.slane %v2293, 4
      %v2296 = vshll.u32 %v2013, 16
      %v2298 = vrot.slane %v2296, 5
      %v2299 = vor.u32 %v2295, %v2298
      %v2300 = vrot.slane %v2299, 4
      %v2302 = vshll.u32 %v2014, 16
      %v2304 = vrot.slane %v2302, 5
      %v2305 = vsel %vm223, %v2300, %v2304
      %v2306 = vshrl.u32 %v2014, 16
      %v2308 = vrot.slane %v2306, 4
      %v2309 = vor.u32 %v2308, %v2304
      %v2310 = vrot.slane %v2309, 4
      %v2312 = vshll.u32 %v2015, 16
      %v2314 = vrot.slane %v2312, 5
      %v2315 = vsel %vm223, %v2310, %v2314
      %v2317 = vshrl.u32 %v2016, 16
      %v2319 = vrot.slane %v2317, 4
      %v2320 = vshll.u32 %v2016, 16
      %v2322 = vrot.slane %v2320, 5
      %v2323 = vor.u32 %v2319, %v2322
      %v2324 = vrot.slane %v2323, 4
      %v2326 = vshll.u32 %v2017, 16
      %v2328 = vrot.slane %v2326, 5
      %v2329 = vsel %vm223, %v2324, %v2328
      %v2330 = vshrl.u32 %v2017, 16
      %v2332 = vrot.slane %v2330, 4
      %v2333 = vor.u32 %v2332, %v2328
      %v2334 = vrot.slane %v2333, 4
      %v2336 = vshll.u32 %v2018, 16
      %v2338 = vrot.slane %v2336, 5
      %v2339 = vsel %vm223, %v2334, %v2338
      %v2341 = vshrl.u32 %v2019, 16
      %v2343 = vrot.slane %v2341, 4
      %v2344 = vshll.u32 %v2019, 16
      %v2346 = vrot.slane %v2344, 5
      %v2347 = vor.u32 %v2343, %v2346
      %v2348 = vrot.slane %v2347, 4
      %v2350 = vshll.u32 %v2020, 16
      %v2352 = vrot.slane %v2350, 5
      %v2353 = vsel %vm223, %v2348, %v2352
      %v2354 = vshrl.u32 %v2020, 16
      %v2356 = vrot.slane %v2354, 4
      %v2357 = vor.u32 %v2356, %v2352
      %v2358 = vrot.slane %v2357, 4
      %v2360 = vshll.u32 %v2021, 16
      %v2362 = vrot.slane %v2360, 5
      %v2363 = vsel %vm223, %v2358, %v2362
      %v2365 = vshrl.u32 %v2022, 16
      %v2367 = vrot.slane %v2365, 4
      %v2368 = vshll.u32 %v2022, 16
      %v2370 = vrot.slane %v2368, 5
      %v2371 = vor.u32 %v2367, %v2370
      %v2372 = vrot.slane %v2371, 4
      %v2374 = vshll.u32 %v2023, 16
      %v2376 = vrot.slane %v2374, 5
      %v2377 = vsel %vm223, %v2372, %v2376
      %v2378 = vshrl.u32 %v2023, 16
      %v2380 = vrot.slane %v2378, 4
      %v2381 = vor.u32 %v2380, %v2376
      %v2382 = vrot.slane %v2381, 4
      %v2384 = vshll.u32 %v2024, 16
      %v2386 = vrot.slane %v2384, 5
      %v2387 = vsel %vm223, %v2382, %v2386
      %v2389 = vshrl.u32 %v2025, 16
      %v2391 = vrot.slane %v2389, 4
      %v2392 = vshll.u32 %v2025, 16
      %v2394 = vrot.slane %v2392, 5
      %v2395 = vor.u32 %v2391, %v2394
      %v2396 = vrot.slane %v2395, 4
      %v2398 = vshll.u32 %v2026, 16
      %v2400 = vrot.slane %v2398, 5
      %v2401 = vsel %vm223, %v2396, %v2400
      %v2402 = vshrl.u32 %v2026, 16
      %v2404 = vrot.slane %v2402, 4
      %v2405 = vor.u32 %v2404, %v2400
      %v2406 = vrot.slane %v2405, 4
      %v2408 = vshll.u32 %v2027, 16
      %v2410 = vrot.slane %v2408, 5
      %v2411 = vsel %vm223, %v2406, %v2410
      %s2412 = scalar_lea.vmem %s1, 8
      %v2413 = vld [vmem:[%s2412] sm:$0x3]
      %v2414 = vunpack.c.l.b16 %v2041
      %v2415 = vunpack.c.l.b16 %v2051
      %v2416 = vunpack.c.l.b16 %v2065
      %v2417 = vunpack.c.l.b16 %v2075
      %v2418 = vunpack.c.l.b16 %v2089
      %v2419 = vunpack.c.l.b16 %v2099
      %v2420 = vunpack.c.l.b16 %v2113
      %v2421 = vunpack.c.l.b16 %v2123
      %v2422 = vunpack.c.l.b16 %v2137
      %v2423 = vunpack.c.l.b16 %v2147
      %v2424 = vunpack.c.l.b16 %v2161
      %v2425 = vunpack.c.l.b16 %v2171
      %v2426 = vunpack.c.l.b16 %v2185
      %v2427 = vunpack.c.l.b16 %v2195
      %v2428 = vunpack.c.l.b16 %v2209
      %v2429 = vunpack.c.l.b16 %v2219
      %v2430 = vunpack.c.l.b16 %v2233
      %v2431 = vunpack.c.l.b16 %v2243
      %v2432 = vunpack.c.l.b16 %v2257
      %v2433 = vunpack.c.l.b16 %v2267
      %v2434 = vunpack.c.l.b16 %v2281
      %v2435 = vunpack.c.l.b16 %v2291
      %v2436 = vunpack.c.l.b16 %v2305
      %v2437 = vunpack.c.l.b16 %v2315
      %v2438 = vunpack.c.l.b16 %v2329
      %v2439 = vunpack.c.l.b16 %v2339
      %v2440 = vunpack.c.l.b16 %v2353
      %v2441 = vunpack.c.l.b16 %v2363
      %v2442 = vunpack.c.l.b16 %v2377
      %v2443 = vunpack.c.l.b16 %v2387
      %v2444 = vunpack.c.l.b16 %v2401
      %v2445 = vunpack.c.l.b16 %v2411
      %v2446 = vpack.c.b16 %v2415, %v2414
      %v2447 = vpack.c.b16 %v2417, %v2416
      %v2448 = vpack.c.b16 %v2419, %v2418
      %v2449 = vpack.c.b16 %v2421, %v2420
      %v2450 = vpack.c.b16 %v2423, %v2422
      %v2451 = vpack.c.b16 %v2425, %v2424
      %v2452 = vpack.c.b16 %v2427, %v2426
      %v2453 = vpack.c.b16 %v2429, %v2428
      %v2454 = vpack.c.b16 %v2431, %v2430
      %v2455 = vpack.c.b16 %v2433, %v2432
      %v2456 = vpack.c.b16 %v2435, %v2434
      %v2457 = vpack.c.b16 %v2437, %v2436
      %v2458 = vpack.c.b16 %v2439, %v2438
      %v2459 = vpack.c.b16 %v2441, %v2440
      %v2460 = vpack.c.b16 %v2443, %v2442
      %v2461 = vpack.c.b16 %v2445, %v2444
      %v2463 = vsel %vm658, %v2446, 0
      %v2466 = vsel %vm658, %v2447, 0
      %v2469 = vsel %vm658, %v2448, 0
      %v2472 = vsel %vm658, %v2449, 0
      %v2475 = vsel %vm658, %v2450, 0
      %v2478 = vsel %vm658, %v2451, 0
      %v2481 = vsel %vm658, %v2452, 0
      %v2484 = vsel %vm658, %v2453, 0
      %v2487 = vsel %vm658, %v2454, 0
      %v2490 = vsel %vm658, %v2455, 0
      %v2493 = vsel %vm658, %v2456, 0
      %v2496 = vsel %vm658, %v2457, 0
      %v2499 = vsel %vm658, %v2458, 0
      %v2502 = vsel %vm658, %v2459, 0
      %v2505 = vsel %vm658, %v2460, 0
      %v2508 = vsel %vm658, %v2461, 0
      %v2511 = vsel %vm707, %v2413, 0
      %2513 = vmatprep.subr.bf16.mxu0 0
      %2514 = vmatpush1.bf16.msra.mxu0 %v2511
      %2515 = vmatprep.subr.bf16.mxu0 0
      %2516 = vmatpush1.bf16.msra.mxu0 0
      %2517 = vmatprep.subr.bf16.mxu0 0
      %2518 = vmatpush1.bf16.msra.mxu0 0
      %2519 = vmatprep.subr.bf16.mxu0 0
      %2520 = vmatpush1.bf16.msra.mxu0 0
      %2521 = vmatprep.subr.bf16.mxu0 0
      %2522 = vmatpush1.bf16.msra.mxu0 0
      %2523 = vmatprep.subr.bf16.mxu0 0
      %2524 = vmatpush1.bf16.msra.mxu0 0
      %2525 = vmatprep.subr.bf16.mxu0 0
      %2526 = vmatpush1.bf16.msra.mxu0 0
      %2527 = vmatprep.subr.bf16.mxu0 0
      %2528 = vmatpush1.bf16.msra.mxu0 0
      %2529 = vmatprep.subr.bf16.mxu0 0
      %2530 = vmatpush1.bf16.msra.mxu0 0
      %2531 = vmatprep.subr.bf16.mxu0 0
      %2532 = vmatpush1.bf16.msra.mxu0 0
      %2533 = vmatprep.subr.bf16.mxu0 0
      %2534 = vmatpush1.bf16.msra.mxu0 0
      %2535 = vmatprep.subr.bf16.mxu0 0
      %2536 = vmatpush1.bf16.msra.mxu0 0
      %2537 = vmatprep.subr.bf16.mxu0 0
      %2538 = vmatpush1.bf16.msra.mxu0 0
      %2539 = vmatprep.subr.bf16.mxu0 0
      %2540 = vmatpush1.bf16.msra.mxu0 0
      %2541 = vmatprep.subr.bf16.mxu0 0
      %2542 = vmatpush1.bf16.msra.mxu0 0
      %2543 = vmatprep.subr.bf16.mxu0 0
      %2544 = vmatpush1.bf16.msra.mxu0 0
      %2545 = vmatprep.mubr.bf16.mxu0 0
      %2546 = vmatmul.mubr.bf16.gmra.mrb[0].mxu0 %v2463
      %v2547 = vpop.f32.mrb[0].mxu0
      %v2548 = vadd.f32 0.0, %v2547
      %v2549 = vpop.f32.mrb[0].mxu0
      %v2550 = vpop.f32.mrb[0].mxu0
      %v2551 = vadd.f32 0.0, %v2550
      %v2552 = vpop.f32.mrb[0].mxu0
      %2553 = vmatprep.mubr.bf16.mxu0 0
      %2554 = vmatmul.mubr.bf16.gmra.mrb[0].mxu0 %v2466
      %v2555 = vpop.f32.mrb[0].mxu0
      %v2556 = vadd.f32 0.0, %v2555
      %v2557 = vpop.f32.mrb[0].mxu0
      %v2558 = vpop.f32.mrb[0].mxu0
      %v2559 = vadd.f32 0.0, %v2558
      %v2560 = vpop.f32.mrb[0].mxu0
      %2561 = vmatprep.mubr.bf16.mxu0 0
      %2562 = vmatmul.mubr.bf16.gmra.mrb[0].mxu0 %v2469
      %v2563 = vpop.f32.mrb[0].mxu0
      %v2564 = vadd.f32 0.0, %v2563
      %v2565 = vpop.f32.mrb[0].mxu0
      %v2566 = vpop.f32.mrb[0].mxu0
      %v2567 = vadd.f32 0.0, %v2566
      %v2568 = vpop.f32.mrb[0].mxu0
      %2569 = vmatprep.mubr.bf16.mxu0 0
      %2570 = vmatmul.mubr.bf16.gmra.mrb[0].mxu0 %v2472
      %v2571 = vpop.f32.mrb[0].mxu0
      %v2572 = vadd.f32 0.0, %v2571
      %v2573 = vpop.f32.mrb[0].mxu0
      %v2574 = vpop.f32.mrb[0].mxu0
      %v2575 = vadd.f32 0.0, %v2574
      %v2576 = vpop.f32.mrb[0].mxu0
      %2577 = vmatprep.mubr.bf16.mxu0 0
      %2578 = vmatmul.mubr.bf16.gmra.mrb[0].mxu0 %v2475
      %v2579 = vpop.f32.mrb[0].mxu0
      %v2580 = vadd.f32 0.0, %v2579
      %v2581 = vpop.f32.mrb[0].mxu0
      %v2582 = vpop.f32.mrb[0].mxu0
      %v2583 = vadd.f32 0.0, %v2582
      %v2584 = vpop.f32.mrb[0].mxu0
      %2585 = vmatprep.mubr.bf16.mxu0 0
      %2586 = vmatmul.mubr.bf16.gmra.mrb[0].mxu0 %v2478
      %v2587 = vpop.f32.mrb[0].mxu0
      %v2588 = vadd.f32 0.0, %v2587
      %v2589 = vpop.f32.mrb[0].mxu0
      %v2590 = vpop.f32.mrb[0].mxu0
      %v2591 = vadd.f32 0.0, %v2590
      %v2592 = vpop.f32.mrb[0].mxu0
      %2593 = vmatprep.mubr.bf16.mxu0 0
      %2594 = vmatmul.mubr.bf16.gmra.mrb[0].mxu0 %v2481
      %v2595 = vpop.f32.mrb[0].mxu0
      %v2596 = vadd.f32 0.0, %v2595
      %v2597 = vpop.f32.mrb[0].mxu0
      %v2598 = vpop.f32.mrb[0].mxu0
      %v2599 = vadd.f32 0.0, %v2598
      %v2600 = vpop.f32.mrb[0].mxu0
      %2601 = vmatprep.mubr.bf16.mxu0 0
      %2602 = vmatmul.mubr.bf16.gmra.mrb[0].mxu0 %v2484
      %v2603 = vpop.f32.mrb[0].mxu0
      %v2604 = vadd.f32 0.0, %v2603
      %v2605 = vpop.f32.mrb[0].mxu0
      %v2606 = vpop.f32.mrb[0].mxu0
      %v2607 = vadd.f32 0.0, %v2606
      %v2608 = vpop.f32.mrb[0].mxu0
      %2609 = vmatprep.mubr.bf16.mxu0 0
      %2610 = vmatmul.mubr.bf16.gmra.mrb[0].mxu0 %v2487
      %v2611 = vpop.f32.mrb[0].mxu0
      %v2612 = vadd.f32 0.0, %v2611
      %v2613 = vpop.f32.mrb[0].mxu0
      %v2614 = vpop.f32.mrb[0].mxu0
      %v2615 = vadd.f32 0.0, %v2614
      %v2616 = vpop.f32.mrb[0].mxu0
      %2617 = vmatprep.mubr.bf16.mxu0 0
      %2618 = vmatmul.mubr.bf16.gmra.mrb[0].mxu0 %v2490
      %v2619 = vpop.f32.mrb[0].mxu0
      %v2620 = vadd.f32 0.0, %v2619
      %v2621 = vpop.f32.mrb[0].mxu0
      %v2622 = vpop.f32.mrb[0].mxu0
      %v2623 = vadd.f32 0.0, %v2622
      %v2624 = vpop.f32.mrb[0].mxu0
      %2625 = vmatprep.mubr.bf16.mxu0 0
      %2626 = vmatmul.mubr.bf16.gmra.mrb[0].mxu0 %v2493
      %v2627 = vpop.f32.mrb[0].mxu0
      %v2628 = vadd.f32 0.0, %v2627
      %v2629 = vpop.f32.mrb[0].mxu0
      %v2630 = vpop.f32.mrb[0].mxu0
      %v2631 = vadd.f32 0.0, %v2630
      %v2632 = vpop.f32.mrb[0].mxu0
      %2633 = vmatprep.mubr.bf16.mxu0 0
      %2634 = vmatmul.mubr.bf16.gmra.mrb[0].mxu0 %v2496
      %v2635 = vpop.f32.mrb[0].mxu0
      %v2636 = vadd.f32 0.0, %v2635
      %v2637 = vpop.f32.mrb[0].mxu0
      %v2638 = vpop.f32.mrb[0].mxu0
      %v2639 = vadd.f32 0.0, %v2638
      %v2640 = vpop.f32.mrb[0].mxu0
      %2641 = vmatprep.mubr.bf16.mxu0 0
      %2642 = vmatmul.mubr.bf16.gmra.mrb[0].mxu0 %v2499
      %v2643 = vpop.f32.mrb[0].mxu0
      %v2644 = vadd.f32 0.0, %v2643
      %v2645 = vpop.f32.mrb[0].mxu0
      %v2646 = vpop.f32.mrb[0].mxu0
      %v2647 = vadd.f32 0.0, %v2646
      %v2648 = vpop.f32.mrb[0].mxu0
      %2649 = vmatprep.mubr.bf16.mxu0 0
      %2650 = vmatmul.mubr.bf16.gmra.mrb[0].mxu0 %v2502
      %v2651 = vpop.f32.mrb[0].mxu0
      %v2652 = vadd.f32 0.0, %v2651
      %v2653 = vpop.f32.mrb[0].mxu0
      %v2654 = vpop.f32.mrb[0].mxu0
      %v2655 = vadd.f32 0.0, %v2654
      %v2656 = vpop.f32.mrb[0].mxu0
      %2657 = vmatprep.mubr.bf16.mxu0 0
      %2658 = vmatmul.mubr.bf16.gmra.mrb[0].mxu0 %v2505
      %v2659 = vpop.f32.mrb[0].mxu0
      %v2660 = vadd.f32 0.0, %v2659
      %v2661 = vpop.f32.mrb[0].mxu0
      %v2662 = vpop.f32.mrb[0].mxu0
      %v2663 = vadd.f32 0.0, %v2662
      %v2664 = vpop.f32.mrb[0].mxu0
      %2665 = vmatprep.mubr.bf16.mxu0 0
      %2666 = vmatmul.mubr.bf16.gmra.mrb[0].mxu0 %v2508
      %v2667 = vpop.f32.mrb[0].mxu0
      %v2668 = vadd.f32 0.0, %v2667
      %v2669 = vpop.f32.mrb[0].mxu0
      %v2670 = vpop.f32.mrb[0].mxu0
      %v2671 = vadd.f32 0.0, %v2670
      %v2672 = vpop.f32.mrb[0].mxu0
      %2673 = vdwg.mxu0
      %v2674 = vadd.f32 %v1948, %v2548
      %v2675 = vadd.f32 %v1949, %v2551
      %v2676 = vadd.f32 %v1950, %v2556
      %v2677 = vadd.f32 %v1951, %v2559
      %v2678 = vadd.f32 %v1952, %v2564
      %v2679 = vadd.f32 %v1953, %v2567
      %v2680 = vadd.f32 %v1954, %v2572
      %v2681 = vadd.f32 %v1955, %v2575
      %v2682 = vadd.f32 %v1956, %v2580
      %v2683 = vadd.f32 %v1957, %v2583
      %v2684 = vadd.f32 %v1958, %v2588
      %v2685 = vadd.f32 %v1959, %v2591
      %v2686 = vadd.f32 %v1960, %v2596
      %v2687 = vadd.f32 %v1961, %v2599
      %v2688 = vadd.f32 %v1962, %v2604
      %v2689 = vadd.f32 %v1963, %v2607
      %v2690 = vadd.f32 %v1964, %v2612
      %v2691 = vadd.f32 %v1965, %v2615
      %v2692 = vadd.f32 %v1966, %v2620
      %v2693 = vadd.f32 %v1967, %v2623
      %v2694 = vadd.f32 %v1968, %v2628
      %v2695 = vadd.f32 %v1969, %v2631
      %v2696 = vadd.f32 %v1970, %v2636
      %v2697 = vadd.f32 %v1971, %v2639
      %v2698 = vadd.f32 %v1972, %v2644
      %v2699 = vadd.f32 %v1973, %v2647
      %v2700 = vadd.f32 %v1974, %v2652
      %v2701 = vadd.f32 %v1975, %v2655
      %v2702 = vadd.f32 %v1976, %v2660
      %v2703 = vadd.f32 %v1977, %v2663
      %v2704 = vadd.f32 %v1978, %v2668
      %v2705 = vadd.f32 %v1979, %v2671
      %v2706 = vld [vmem:[%s1621] sm:$0xe]
      %v2707 = vld [vmem:[%s1621 + $0xc] sm:$0xe]
      %v2708 = vld [vmem:[%s1621 + $0x18] sm:$0xe]
      %v2709 = vld [vmem:[%s1621 + $0x24] sm:$0xe]
      %v2710 = vld [vmem:[%s1621 + $0x30] sm:$0xe]
      %v2711 = vld [vmem:[%s1621 + $0x3c] sm:$0xe]
      %v2712 = vld [vmem:[%s1621 + $0x48] sm:$0xe]
      %v2713 = vld [vmem:[%s1621 + $0x54] sm:$0xe]
      %v2714 = vld [vmem:[%s1621 + $0x60] sm:$0xe]
      %v2715 = vld [vmem:[%s1621 + $0x6c] sm:$0xe]
      %v2716 = vld [vmem:[%s1621 + $0x78] sm:$0xe]
      %v2717 = vld [vmem:[%s1621 + $0x84] sm:$0xe]
      %v2718 = vld [vmem:[%s1621 + $0x90] sm:$0xe]
      %v2719 = vld [vmem:[%s1621 + $0x9c] sm:$0xe]
      %v2720 = vld [vmem:[%s1621 + $0xa8] sm:$0xe]
      %v2721 = vld [vmem:[%s1621 + $0xb4] sm:$0xe]
      %v2770 = vrot.slane %v2706, 5
      %v2771 = vrot.slane %v2770, 4
      %v2772 = vrot.slane %v1981, 5
      %v2773 = vsel %vm1214, %v2771, %v2772
      %v2774 = vrot.slane %v2772, 4
      %v2775 = vrot.slane %v1982, 5
      %v2776 = vsel %vm1214, %v2774, %v2775
      %v2777 = vrot.slane %v2707, 5
      %v2778 = vrot.slane %v2777, 4
      %v2779 = vrot.slane %v1984, 5
      %v2780 = vsel %vm1214, %v2778, %v2779
      %v2781 = vrot.slane %v2779, 4
      %v2782 = vrot.slane %v1985, 5
      %v2783 = vsel %vm1214, %v2781, %v2782
      %v2784 = vrot.slane %v2708, 5
      %v2785 = vrot.slane %v2784, 4
      %v2786 = vrot.slane %v1987, 5
      %v2787 = vsel %vm1214, %v2785, %v2786
      %v2788 = vrot.slane %v2786, 4
      %v2789 = vrot.slane %v1988, 5
      %v2790 = vsel %vm1214, %v2788, %v2789
      %v2791 = vrot.slane %v2709, 5
      %v2792 = vrot.slane %v2791, 4
      %v2793 = vrot.slane %v1990, 5
      %v2794 = vsel %vm1214, %v2792, %v2793
      %v2795 = vrot.slane %v2793, 4
      %v2796 = vrot.slane %v1991, 5
      %v2797 = vsel %vm1214, %v2795, %v2796
      %v2798 = vrot.slane %v2710, 5
      %v2799 = vrot.slane %v2798, 4
      %v2800 = vrot.slane %v1993, 5
      %v2801 = vsel %vm1214, %v2799, %v2800
      %v2802 = vrot.slane %v2800, 4
      %v2803 = vrot.slane %v1994, 5
      %v2804 = vsel %vm1214, %v2802, %v2803
      %v2805 = vrot.slane %v2711, 5
      %v2806 = vrot.slane %v2805, 4
      %v2807 = vrot.slane %v1996, 5
      %v2808 = vsel %vm1214, %v2806, %v2807
      %v2809 = vrot.slane %v2807, 4
      %v2810 = vrot.slane %v1997, 5
      %v2811 = vsel %vm1214, %v2809, %v2810
      %v2812 = vrot.slane %v2712, 5
      %v2813 = vrot.slane %v2812, 4
      %v2814 = vrot.slane %v1999, 5
      %v2815 = vsel %vm1214, %v2813, %v2814
      %v2816 = vrot.slane %v2814, 4
      %v2817 = vrot.slane %v2000, 5
      %v2818 = vsel %vm1214, %v2816, %v2817
      %v2819 = vrot.slane %v2713, 5
      %v2820 = vrot.slane %v2819, 4
      %v2821 = vrot.slane %v2002, 5
      %v2822 = vsel %vm1214, %v2820, %v2821
      %v2823 = vrot.slane %v2821, 4
      %v2824 = vrot.slane %v2003, 5
      %v2825 = vsel %vm1214, %v2823, %v2824
      %v2826 = vrot.slane %v2714, 5
      %v2827 = vrot.slane %v2826, 4
      %v2828 = vrot.slane %v2005, 5
      %v2829 = vsel %vm1214, %v2827, %v2828
      %v2830 = vrot.slane %v2828, 4
      %v2831 = vrot.slane %v2006, 5
      %v2832 = vsel %vm1214, %v2830, %v2831
      %v2833 = vrot.slane %v2715, 5
      %v2834 = vrot.slane %v2833, 4
      %v2835 = vrot.slane %v2008, 5
      %v2836 = vsel %vm1214, %v2834, %v2835
      %v2837 = vrot.slane %v2835, 4
      %v2838 = vrot.slane %v2009, 5
      %v2839 = vsel %vm1214, %v2837, %v2838
      %v2840 = vrot.slane %v2716, 5
      %v2841 = vrot.slane %v2840, 4
      %v2842 = vrot.slane %v2011, 5
      %v2843 = vsel %vm1214, %v2841, %v2842
      %v2844 = vrot.slane %v2842, 4
      %v2845 = vrot.slane %v2012, 5
      %v2846 = vsel %vm1214, %v2844, %v2845
      %v2847 = vrot.slane %v2717, 5
      %v2848 = vrot.slane %v2847, 4
      %v2849 = vrot.slane %v2014, 5
      %v2850 = vsel %vm1214, %v2848, %v2849
      %v2851 = vrot.slane %v2849, 4
      %v2852 = vrot.slane %v2015, 5
      %v2853 = vsel %vm1214, %v2851, %v2852
      %v2854 = vrot.slane %v2718, 5
      %v2855 = vrot.slane %v2854, 4
      %v2856 = vrot.slane %v2017, 5
      %v2857 = vsel %vm1214, %v2855, %v2856
      %v2858 = vrot.slane %v2856, 4
      %v2859 = vrot.slane %v2018, 5
      %v2860 = vsel %vm1214, %v2858, %v2859
      %v2861 = vrot.slane %v2719, 5
      %v2862 = vrot.slane %v2861, 4
      %v2863 = vrot.slane %v2020, 5
      %v2864 = vsel %vm1214, %v2862, %v2863
      %v2865 = vrot.slane %v2863, 4
      %v2866 = vrot.slane %v2021, 5
      %v2867 = vsel %vm1214, %v2865, %v2866
      %v2868 = vrot.slane %v2720, 5
      %v2869 = vrot.slane %v2868, 4
      %v2870 = vrot.slane %v2023, 5
      %v2871 = vsel %vm1214, %v2869, %v2870
      %v2872 = vrot.slane %v2870, 4
      %v2873 = vrot.slane %v2024, 5
      %v2874 = vsel %vm1214, %v2872, %v2873
      %v2875 = vrot.slane %v2721, 5
      %v2876 = vrot.slane %v2875, 4
      %v2877 = vrot.slane %v2026, 5
      %v2878 = vsel %vm1214, %v2876, %v2877
      %v2879 = vrot.slane %v2877, 4
      %v2880 = vrot.slane %v2027, 5
      %v2881 = vsel %vm1214, %v2879, %v2880
      %s2882 = scalar_lea.vmem %s1, 10
      %v2883 = vld [vmem:[%s2882] sm:$0x3]
      %v2884 = vunpack.c.l.b16 %v2773
      %v2885 = vunpack.c.l.b16 %v2776
      %v2886 = vunpack.c.l.b16 %v2780
      %v2887 = vunpack.c.l.b16 %v2783
      %v2888 = vunpack.c.l.b16 %v2787
      %v2889 = vunpack.c.l.b16 %v2790
      %v2890 = vunpack.c.l.b16 %v2794
      %v2891 = vunpack.c.l.b16 %v2797
      %v2892 = vunpack.c.l.b16 %v2801
      %v2893 = vunpack.c.l.b16 %v2804
      %v2894 = vunpack.c.l.b16 %v2808
      %v2895 = vunpack.c.l.b16 %v2811
      %v2896 = vunpack.c.l.b16 %v2815
      %v2897 = vunpack.c.l.b16 %v2818
      %v2898 = vunpack.c.l.b16 %v2822
      %v2899 = vunpack.c.l.b16 %v2825
      %v2900 = vunpack.c.l.b16 %v2829
      %v2901 = vunpack.c.l.b16 %v2832
      %v2902 = vunpack.c.l.b16 %v2836
      %v2903 = vunpack.c.l.b16 %v2839
      %v2904 = vunpack.c.l.b16 %v2843
      %v2905 = vunpack.c.l.b16 %v2846
      %v2906 = vunpack.c.l.b16 %v2850
      %v2907 = vunpack.c.l.b16 %v2853
      %v2908 = vunpack.c.l.b16 %v2857
      %v2909 = vunpack.c.l.b16 %v2860
      %v2910 = vunpack.c.l.b16 %v2864
      %v2911 = vunpack.c.l.b16 %v2867
      %v2912 = vunpack.c.l.b16 %v2871
      %v2913 = vunpack.c.l.b16 %v2874
      %v2914 = vunpack.c.l.b16 %v2878
      %v2915 = vunpack.c.l.b16 %v2881
      %v2916 = vpack.c.b16 %v2885, %v2884
      %v2917 = vpack.c.b16 %v2887, %v2886
      %v2918 = vpack.c.b16 %v2889, %v2888
      %v2919 = vpack.c.b16 %v2891, %v2890
      %v2920 = vpack.c.b16 %v2893, %v2892
      %v2921 = vpack.c.b16 %v2895, %v2894
      %v2922 = vpack.c.b16 %v2897, %v2896
      %v2923 = vpack.c.b16 %v2899, %v2898
      %v2924 = vpack.c.b16 %v2901, %v2900
      %v2925 = vpack.c.b16 %v2903, %v2902
      %v2926 = vpack.c.b16 %v2905, %v2904
      %v2927 = vpack.c.b16 %v2907, %v2906
      %v2928 = vpack.c.b16 %v2909, %v2908
      %v2929 = vpack.c.b16 %v2911, %v2910
      %v2930 = vpack.c.b16 %v2913, %v2912
      %v2931 = vpack.c.b16 %v2915, %v2914
      %v2933 = vsel %vm658, %v2916, 0
      %v2936 = vsel %vm658, %v2917, 0
      %v2939 = vsel %vm658, %v2918, 0
      %v2942 = vsel %vm658, %v2919, 0
      %v2945 = vsel %vm658, %v2920, 0
      %v2948 = vsel %vm658, %v2921, 0
      %v2951 = vsel %vm658, %v2922, 0
      %v2954 = vsel %vm658, %v2923, 0
      %v2957 = vsel %vm658, %v2924, 0
      %v2960 = vsel %vm658, %v2925, 0
      %v2963 = vsel %vm658, %v2926, 0
      %v2966 = vsel %vm658, %v2927, 0
      %v2969 = vsel %vm658, %v2928, 0
      %v2972 = vsel %vm658, %v2929, 0
      %v2975 = vsel %vm658, %v2930, 0
      %v2978 = vsel %vm658, %v2931, 0
      %v2981 = vsel %vm707, %v2883, 0
      %2983 = vmatprep.subr.bf16.mxu0 0
      %2984 = vmatpush1.bf16.msra.mxu0 %v2981
      %2985 = vmatprep.subr.bf16.mxu0 0
      %2986 = vmatpush1.bf16.msra.mxu0 0
      %2987 = vmatprep.subr.bf16.mxu0 0
      %2988 = vmatpush1.bf16.msra.mxu0 0
      %2989 = vmatprep.subr.bf16.mxu0 0
      %2990 = vmatpush1.bf16.msra.mxu0 0
      %2991 = vmatprep.subr.bf16.mxu0 0
      %2992 = vmatpush1.bf16.msra.mxu0 0
      %2993 = vmatprep.subr.bf16.mxu0 0
      %2994 = vmatpush1.bf16.msra.mxu0 0
      %2995 = vmatprep.subr.bf16.mxu0 0
      %2996 = vmatpush1.bf16.msra.mxu0 0
      %2997 = vmatprep.subr.bf16.mxu0 0
      %2998 = vmatpush1.bf16.msra.mxu0 0
      %2999 = vmatprep.subr.bf16.mxu0 0
      %3000 = vmatpush1.bf16.msra.mxu0 0
      %3001 = vmatprep.subr.bf16.mxu0 0
      %3002 = vmatpush1.bf16.msra.mxu0 0
      %3003 = vmatprep.subr.bf16.mxu0 0
      %3004 = vmatpush1.bf16.msra.mxu0 0
      %3005 = vmatprep.subr.bf16.mxu0 0
      %3006 = vmatpush1.bf16.msra.mxu0 0
      %3007 = vmatprep.subr.bf16.mxu0 0
      %3008 = vmatpush1.bf16.msra.mxu0 0
      %3009 = vmatprep.subr.bf16.mxu0 0
      %3010 = vmatpush1.bf16.msra.mxu0 0
      %3011 = vmatprep.subr.bf16.mxu0 0
      %3012 = vmatpush1.bf16.msra.mxu0 0
      %3013 = vmatprep.subr.bf16.mxu0 0
      %3014 = vmatpush1.bf16.msra.mxu0 0
      %3015 = vmatprep.mubr.bf16.mxu0 0
      %3016 = vmatmul.mubr.bf16.gmra.mrb[0].mxu0 %v2933
      %v3017 = vpop.f32.mrb[0].mxu0
      %v3018 = vadd.f32 0.0, %v3017
      %v3019 = vpop.f32.mrb[0].mxu0
      %v3020 = vpop.f32.mrb[0].mxu0
      %v3021 = vadd.f32 0.0, %v3020
      %v3022 = vpop.f32.mrb[0].mxu0
      %3023 = vmatprep.mubr.bf16.mxu0 0
      %3024 = vmatmul.mubr.bf16.gmra.mrb[0].mxu0 %v2936
      %v3025 = vpop.f32.mrb[0].mxu0
      %v3026 = vadd.f32 0.0, %v3025
      %v3027 = vpop.f32.mrb[0].mxu0
      %v3028 = vpop.f32.mrb[0].mxu0
      %v3029 = vadd.f32 0.0, %v3028
      %v3030 = vpop.f32.mrb[0].mxu0
      %3031 = vmatprep.mubr.bf16.mxu0 0
      %3032 = vmatmul.mubr.bf16.gmra.mrb[0].mxu0 %v2939
      %v3033 = vpop.f32.mrb[0].mxu0
      %v3034 = vadd.f32 0.0, %v3033
      %v3035 = vpop.f32.mrb[0].mxu0
      %v3036 = vpop.f32.mrb[0].mxu0
      %v3037 = vadd.f32 0.0, %v3036
      %v3038 = vpop.f32.mrb[0].mxu0
      %3039 = vmatprep.mubr.bf16.mxu0 0
      %3040 = vmatmul.mubr.bf16.gmra.mrb[0].mxu0 %v2942
      %v3041 = vpop.f32.mrb[0].mxu0
      %v3042 = vadd.f32 0.0, %v3041
      %v3043 = vpop.f32.mrb[0].mxu0
      %v3044 = vpop.f32.mrb[0].mxu0
      %v3045 = vadd.f32 0.0, %v3044
      %v3046 = vpop.f32.mrb[0].mxu0
      %3047 = vmatprep.mubr.bf16.mxu0 0
      %3048 = vmatmul.mubr.bf16.gmra.mrb[0].mxu0 %v2945
      %v3049 = vpop.f32.mrb[0].mxu0
      %v3050 = vadd.f32 0.0, %v3049
      %v3051 = vpop.f32.mrb[0].mxu0
      %v3052 = vpop.f32.mrb[0].mxu0
      %v3053 = vadd.f32 0.0, %v3052
      %v3054 = vpop.f32.mrb[0].mxu0
      %3055 = vmatprep.mubr.bf16.mxu0 0
      %3056 = vmatmul.mubr.bf16.gmra.mrb[0].mxu0 %v2948
      %v3057 = vpop.f32.mrb[0].mxu0
      %v3058 = vadd.f32 0.0, %v3057
      %v3059 = vpop.f32.mrb[0].mxu0
      %v3060 = vpop.f32.mrb[0].mxu0
      %v3061 = vadd.f32 0.0, %v3060
      %v3062 = vpop.f32.mrb[0].mxu0
      %3063 = vmatprep.mubr.bf16.mxu0 0
      %3064 = vmatmul.mubr.bf16.gmra.mrb[0].mxu0 %v2951
      %v3065 = vpop.f32.mrb[0].mxu0
      %v3066 = vadd.f32 0.0, %v3065
      %v3067 = vpop.f32.mrb[0].mxu0
      %v3068 = vpop.f32.mrb[0].mxu0
      %v3069 = vadd.f32 0.0, %v3068
      %v3070 = vpop.f32.mrb[0].mxu0
      %3071 = vmatprep.mubr.bf16.mxu0 0
      %3072 = vmatmul.mubr.bf16.gmra.mrb[0].mxu0 %v2954
      %v3073 = vpop.f32.mrb[0].mxu0
      %v3074 = vadd.f32 0.0, %v3073
      %v3075 = vpop.f32.mrb[0].mxu0
      %v3076 = vpop.f32.mrb[0].mxu0
      %v3077 = vadd.f32 0.0, %v3076
      %v3078 = vpop.f32.mrb[0].mxu0
      %3079 = vmatprep.mubr.bf16.mxu0 0
      %3080 = vmatmul.mubr.bf16.gmra.mrb[0].mxu0 %v2957
      %v3081 = vpop.f32.mrb[0].mxu0
      %v3082 = vadd.f32 0.0, %v3081
      %v3083 = vpop.f32.mrb[0].mxu0
      %v3084 = vpop.f32.mrb[0].mxu0
      %v3085 = vadd.f32 0.0, %v3084
      %v3086 = vpop.f32.mrb[0].mxu0
      %3087 = vmatprep.mubr.bf16.mxu0 0
      %3088 = vmatmul.mubr.bf16.gmra.mrb[0].mxu0 %v2960
      %v3089 = vpop.f32.mrb[0].mxu0
      %v3090 = vadd.f32 0.0, %v3089
      %v3091 = vpop.f32.mrb[0].mxu0
      %v3092 = vpop.f32.mrb[0].mxu0
      %v3093 = vadd.f32 0.0, %v3092
      %v3094 = vpop.f32.mrb[0].mxu0
      %3095 = vmatprep.mubr.bf16.mxu0 0
      %3096 = vmatmul.mubr.bf16.gmra.mrb[0].mxu0 %v2963
      %v3097 = vpop.f32.mrb[0].mxu0
      %v3098 = vadd.f32 0.0, %v3097
      %v3099 = vpop.f32.mrb[0].mxu0
      %v3100 = vpop.f32.mrb[0].mxu0
      %v3101 = vadd.f32 0.0, %v3100
      %v3102 = vpop.f32.mrb[0].mxu0
      %3103 = vmatprep.mubr.bf16.mxu0 0
      %3104 = vmatmul.mubr.bf16.gmra.mrb[0].mxu0 %v2966
      %v3105 = vpop.f32.mrb[0].mxu0
      %v3106 = vadd.f32 0.0, %v3105
      %v3107 = vpop.f32.mrb[0].mxu0
      %v3108 = vpop.f32.mrb[0].mxu0
      %v3109 = vadd.f32 0.0, %v3108
      %v3110 = vpop.f32.mrb[0].mxu0
      %3111 = vmatprep.mubr.bf16.mxu0 0
      %3112 = vmatmul.mubr.bf16.gmra.mrb[0].mxu0 %v2969
      %v3113 = vpop.f32.mrb[0].mxu0
      %v3114 = vadd.f32 0.0, %v3113
      %v3115 = vpop.f32.mrb[0].mxu0
      %v3116 = vpop.f32.mrb[0].mxu0
      %v3117 = vadd.f32 0.0, %v3116
      %v3118 = vpop.f32.mrb[0].mxu0
      %3119 = vmatprep.mubr.bf16.mxu0 0
      %3120 = vmatmul.mubr.bf16.gmra.mrb[0].mxu0 %v2972
      %v3121 = vpop.f32.mrb[0].mxu0
      %v3122 = vadd.f32 0.0, %v3121
      %v3123 = vpop.f32.mrb[0].mxu0
      %v3124 = vpop.f32.mrb[0].mxu0
      %v3125 = vadd.f32 0.0, %v3124
      %v3126 = vpop.f32.mrb[0].mxu0
      %3127 = vmatprep.mubr.bf16.mxu0 0
      %3128 = vmatmul.mubr.bf16.gmra.mrb[0].mxu0 %v2975
      %v3129 = vpop.f32.mrb[0].mxu0
      %v3130 = vadd.f32 0.0, %v3129
      %v3131 = vpop.f32.mrb[0].mxu0
      %v3132 = vpop.f32.mrb[0].mxu0
      %v3133 = vadd.f32 0.0, %v3132
      %v3134 = vpop.f32.mrb[0].mxu0
      %3135 = vmatprep.mubr.bf16.mxu0 0
      %3136 = vmatmul.mubr.bf16.gmra.mrb[0].mxu0 %v2978
      %v3137 = vpop.f32.mrb[0].mxu0
      %v3138 = vadd.f32 0.0, %v3137
      %v3139 = vpop.f32.mrb[0].mxu0
      %v3140 = vpop.f32.mrb[0].mxu0
      %v3141 = vadd.f32 0.0, %v3140
      %v3142 = vpop.f32.mrb[0].mxu0
      %3143 = vdwg.mxu0
      %v3144 = vadd.f32 %v2674, %v3018
      %v3145 = vadd.f32 %v2675, %v3021
      %v3146 = vadd.f32 %v2676, %v3026
      %v3147 = vadd.f32 %v2677, %v3029
      %v3148 = vadd.f32 %v2678, %v3034
      %v3149 = vadd.f32 %v2679, %v3037
      %v3150 = vadd.f32 %v2680, %v3042
      %v3151 = vadd.f32 %v2681, %v3045
      %v3152 = vadd.f32 %v2682, %v3050
      %v3153 = vadd.f32 %v2683, %v3053
      %v3154 = vadd.f32 %v2684, %v3058
      %v3155 = vadd.f32 %v2685, %v3061
      %v3156 = vadd.f32 %v2686, %v3066
      %v3157 = vadd.f32 %v2687, %v3069
      %v3158 = vadd.f32 %v2688, %v3074
      %v3159 = vadd.f32 %v2689, %v3077
      %v3160 = vadd.f32 %v2690, %v3082
      %v3161 = vadd.f32 %v2691, %v3085
      %v3162 = vadd.f32 %v2692, %v3090
      %v3163 = vadd.f32 %v2693, %v3093
      %v3164 = vadd.f32 %v2694, %v3098
      %v3165 = vadd.f32 %v2695, %v3101
      %v3166 = vadd.f32 %v2696, %v3106
      %v3167 = vadd.f32 %v2697, %v3109
      %v3168 = vadd.f32 %v2698, %v3114
      %v3169 = vadd.f32 %v2699, %v3117
      %v3170 = vadd.f32 %v2700, %v3122
      %v3171 = vadd.f32 %v2701, %v3125
      %v3172 = vadd.f32 %v2702, %v3130
      %v3173 = vadd.f32 %v2703, %v3133
      %v3174 = vadd.f32 %v2704, %v3138
      %v3175 = vadd.f32 %v2705, %v3141
      %s3176 = scalar_lea.vmem %s165, 24
      %v3177 = vld [vmem:[%s3176] sm:$0xf]
      %v3178 = vld [vmem:[%s3176 + $0x4] sm:$0xf]
      %v3179 = vld [vmem:[%s3176 + $0xc] sm:$0xf]
      %v3180 = vld [vmem:[%s3176 + $0x10] sm:$0xf]
      %v3181 = vld [vmem:[%s3176 + $0x18] sm:$0xf]
      %v3182 = vld [vmem:[%s3176 + $0x1c] sm:$0xf]
      %v3183 = vld [vmem:[%s3176 + $0x24] sm:$0xf]
      %v3184 = vld [vmem:[%s3176 + $0x28] sm:$0xf]
      %v3185 = vld [vmem:[%s3176 + $0x30] sm:$0xf]
      %v3186 = vld [vmem:[%s3176 + $0x34] sm:$0xf]
      %v3187 = vld [vmem:[%s3176 + $0x3c] sm:$0xf]
      %v3188 = vld [vmem:[%s3176 + $0x40] sm:$0xf]
      %v3189 = vld [vmem:[%s3176 + $0x48] sm:$0xf]
      %v3190 = vld [vmem:[%s3176 + $0x4c] sm:$0xf]
      %v3191 = vld [vmem:[%s3176 + $0x54] sm:$0xf]
      %v3192 = vld [vmem:[%s3176 + $0x58] sm:$0xf]
      %v3193 = vld [vmem:[%s3176 + $0x60] sm:$0xf]
      %v3194 = vld [vmem:[%s3176 + $0x64] sm:$0xf]
      %v3195 = vld [vmem:[%s3176 + $0x6c] sm:$0xf]
      %v3196 = vld [vmem:[%s3176 + $0x70] sm:$0xf]
      %v3197 = vld [vmem:[%s3176 + $0x78] sm:$0xf]
      %v3198 = vld [vmem:[%s3176 + $0x7c] sm:$0xf]
      %v3199 = vld [vmem:[%s3176 + $0x84] sm:$0xf]
      %v3200 = vld [vmem:[%s3176 + $0x88] sm:$0xf]
      %v3201 = vld [vmem:[%s3176 + $0x90] sm:$0xf]
      %v3202 = vld [vmem:[%s3176 + $0x94] sm:$0xf]
      %v3203 = vld [vmem:[%s3176 + $0x9c] sm:$0xf]
      %v3204 = vld [vmem:[%s3176 + $0xa0] sm:$0xf]
      %v3205 = vld [vmem:[%s3176 + $0xa8] sm:$0xf]
      %v3206 = vld [vmem:[%s3176 + $0xac] sm:$0xf]
      %v3207 = vld [vmem:[%s3176 + $0xb4] sm:$0xf]
      %v3208 = vld [vmem:[%s3176 + $0xb8] sm:$0xf]
      %s3209 = scalar_lea.vmem %s1, 12
      %v3210 = vld [vmem:[%s3209] sm:$0x3]
      %v3243 = vunpack.c.l.b16 %v3177
      %v3244 = vunpack.c.l.b16 %v3178
      %v3245 = vunpack.c.l.b16 %v3179
      %v3246 = vunpack.c.l.b16 %v3180
      %v3247 = vunpack.c.l.b16 %v3181
      %v3248 = vunpack.c.l.b16 %v3182
      %v3249 = vunpack.c.l.b16 %v3183
      %v3250 = vunpack.c.l.b16 %v3184
      %v3251 = vunpack.c.l.b16 %v3185
      %v3252 = vunpack.c.l.b16 %v3186
      %v3253 = vunpack.c.l.b16 %v3187
      %v3254 = vunpack.c.l.b16 %v3188
      %v3255 = vunpack.c.l.b16 %v3189
      %v3256 = vunpack.c.l.b16 %v3190
      %v3257 = vunpack.c.l.b16 %v3191
      %v3258 = vunpack.c.l.b16 %v3192
      %v3259 = vunpack.c.l.b16 %v3193
      %v3260 = vunpack.c.l.b16 %v3194
      %v3261 = vunpack.c.l.b16 %v3195
      %v3262 = vunpack.c.l.b16 %v3196
      %v3263 = vunpack.c.l.b16 %v3197
      %v3264 = vunpack.c.l.b16 %v3198
      %v3265 = vunpack.c.l.b16 %v3199
      %v3266 = vunpack.c.l.b16 %v3200
      %v3267 = vunpack.c.l.b16 %v3201
      %v3268 = vunpack.c.l.b16 %v3202
      %v3269 = vunpack.c.l.b16 %v3203
      %v3270 = vunpack.c.l.b16 %v3204
      %v3271 = vunpack.c.l.b16 %v3205
      %v3272 = vunpack.c.l.b16 %v3206
      %v3273 = vunpack.c.l.b16 %v3207
      %v3274 = vunpack.c.l.b16 %v3208
      %v3275 = vpack.c.b16 %v3244, %v3243
      %v3276 = vpack.c.b16 %v3246, %v3245
      %v3277 = vpack.c.b16 %v3248, %v3247
      %v3278 = vpack.c.b16 %v3250, %v3249
      %v3279 = vpack.c.b16 %v3252, %v3251
      %v3280 = vpack.c.b16 %v3254, %v3253
      %v3281 = vpack.c.b16 %v3256, %v3255
      %v3282 = vpack.c.b16 %v3258, %v3257
      %v3283 = vpack.c.b16 %v3260, %v3259
      %v3284 = vpack.c.b16 %v3262, %v3261
      %v3285 = vpack.c.b16 %v3264, %v3263
      %v3286 = vpack.c.b16 %v3266, %v3265
      %v3287 = vpack.c.b16 %v3268, %v3267
      %v3288 = vpack.c.b16 %v3270, %v3269
      %v3289 = vpack.c.b16 %v3272, %v3271
      %v3290 = vpack.c.b16 %v3274, %v3273
      %v3292 = vsel %vm658, %v3275, 0
      %v3295 = vsel %vm658, %v3276, 0
      %v3298 = vsel %vm658, %v3277, 0
      %v3301 = vsel %vm658, %v3278, 0
      %v3304 = vsel %vm658, %v3279, 0
      %v3307 = vsel %vm658, %v3280, 0
      %v3310 = vsel %vm658, %v3281, 0
      %v3313 = vsel %vm658, %v3282, 0
      %v3316 = vsel %vm658, %v3283, 0
      %v3319 = vsel %vm658, %v3284, 0
      %v3322 = vsel %vm658, %v3285, 0
      %v3325 = vsel %vm658, %v3286, 0
      %v3328 = vsel %vm658, %v3287, 0
      %v3331 = vsel %vm658, %v3288, 0
      %v3334 = vsel %vm658, %v3289, 0
      %v3337 = vsel %vm658, %v3290, 0
      %v3340 = vsel %vm707, %v3210, 0
      %3342 = vmatprep.subr.bf16.mxu0 0
      %3343 = vmatpush1.bf16.msra.mxu0 %v3340
      %3344 = vmatprep.subr.bf16.mxu0 0
      %3345 = vmatpush1.bf16.msra.mxu0 0
      %3346 = vmatprep.subr.bf16.mxu0 0
      %3347 = vmatpush1.bf16.msra.mxu0 0
      %3348 = vmatprep.subr.bf16.mxu0 0
      %3349 = vmatpush1.bf16.msra.mxu0 0
      %3350 = vmatprep.subr.bf16.mxu0 0
      %3351 = vmatpush1.bf16.msra.mxu0 0
      %3352 = vmatprep.subr.bf16.mxu0 0
      %3353 = vmatpush1.bf16.msra.mxu0 0
      %3354 = vmatprep.subr.bf16.mxu0 0
      %3355 = vmatpush1.bf16.msra.mxu0 0
      %3356 = vmatprep.subr.bf16.mxu0 0
      %3357 = vmatpush1.bf16.msra.mxu0 0
      %3358 = vmatprep.subr.bf16.mxu0 0
      %3359 = vmatpush1.bf16.msra.mxu0 0
      %3360 = vmatprep.subr.bf16.mxu0 0
      %3361 = vmatpush1.bf16.msra.mxu0 0
      %3362 = vmatprep.subr.bf16.mxu0 0
      %3363 = vmatpush1.bf16.msra.mxu0 0
      %3364 = vmatprep.subr.bf16.mxu0 0
      %3365 = vmatpush1.bf16.msra.mxu0 0
      %3366 = vmatprep.subr.bf16.mxu0 0
      %3367 = vmatpush1.bf16.msra.mxu0 0
      %3368 = vmatprep.subr.bf16.mxu0 0
      %3369 = vmatpush1.bf16.msra.mxu0 0
      %3370 = vmatprep.subr.bf16.mxu0 0
      %3371 = vmatpush1.bf16.msra.mxu0 0
      %3372 = vmatprep.subr.bf16.mxu0 0
      %3373 = vmatpush1.bf16.msra.mxu0 0
      %3374 = vmatprep.mubr.bf16.mxu0 0
      %3375 = vmatmul.mubr.bf16.gmra.mrb[0].mxu0 %v3292
      %v3376 = vpop.f32.mrb[0].mxu0
      %v3377 = vadd.f32 0.0, %v3376
      %v3378 = vpop.f32.mrb[0].mxu0
      %v3379 = vpop.f32.mrb[0].mxu0
      %v3380 = vadd.f32 0.0, %v3379
      %v3381 = vpop.f32.mrb[0].mxu0
      %3382 = vmatprep.mubr.bf16.mxu0 0
      %3383 = vmatmul.mubr.bf16.gmra.mrb[0].mxu0 %v3295
      %v3384 = vpop.f32.mrb[0].mxu0
      %v3385 = vadd.f32 0.0, %v3384
      %v3386 = vpop.f32.mrb[0].mxu0
      %v3387 = vpop.f32.mrb[0].mxu0
      %v3388 = vadd.f32 0.0, %v3387
      %v3389 = vpop.f32.mrb[0].mxu0
      %3390 = vmatprep.mubr.bf16.mxu0 0
      %3391 = vmatmul.mubr.bf16.gmra.mrb[0].mxu0 %v3298
      %v3392 = vpop.f32.mrb[0].mxu0
      %v3393 = vadd.f32 0.0, %v3392
      %v3394 = vpop.f32.mrb[0].mxu0
      %v3395 = vpop.f32.mrb[0].mxu0
      %v3396 = vadd.f32 0.0, %v3395
      %v3397 = vpop.f32.mrb[0].mxu0
      %3398 = vmatprep.mubr.bf16.mxu0 0
      %3399 = vmatmul.mubr.bf16.gmra.mrb[0].mxu0 %v3301
      %v3400 = vpop.f32.mrb[0].mxu0
      %v3401 = vadd.f32 0.0, %v3400
      %v3402 = vpop.f32.mrb[0].mxu0
      %v3403 = vpop.f32.mrb[0].mxu0
      %v3404 = vadd.f32 0.0, %v3403
      %v3405 = vpop.f32.mrb[0].mxu0
      %3406 = vmatprep.mubr.bf16.mxu0 0
      %3407 = vmatmul.mubr.bf16.gmra.mrb[0].mxu0 %v3304
      %v3408 = vpop.f32.mrb[0].mxu0
      %v3409 = vadd.f32 0.0, %v3408
      %v3410 = vpop.f32.mrb[0].mxu0
      %v3411 = vpop.f32.mrb[0].mxu0
      %v3412 = vadd.f32 0.0, %v3411
      %v3413 = vpop.f32.mrb[0].mxu0
      %3414 = vmatprep.mubr.bf16.mxu0 0
      %3415 = vmatmul.mubr.bf16.gmra.mrb[0].mxu0 %v3307
      %v3416 = vpop.f32.mrb[0].mxu0
      %v3417 = vadd.f32 0.0, %v3416
      %v3418 = vpop.f32.mrb[0].mxu0
      %v3419 = vpop.f32.mrb[0].mxu0
      %v3420 = vadd.f32 0.0, %v3419
      %v3421 = vpop.f32.mrb[0].mxu0
      %3422 = vmatprep.mubr.bf16.mxu0 0
      %3423 = vmatmul.mubr.bf16.gmra.mrb[0].mxu0 %v3310
      %v3424 = vpop.f32.mrb[0].mxu0
      %v3425 = vadd.f32 0.0, %v3424
      %v3426 = vpop.f32.mrb[0].mxu0
      %v3427 = vpop.f32.mrb[0].mxu0
      %v3428 = vadd.f32 0.0, %v3427
      %v3429 = vpop.f32.mrb[0].mxu0
      %3430 = vmatprep.mubr.bf16.mxu0 0
      %3431 = vmatmul.mubr.bf16.gmra.mrb[0].mxu0 %v3313
      %v3432 = vpop.f32.mrb[0].mxu0
      %v3433 = vadd.f32 0.0, %v3432
      %v3434 = vpop.f32.mrb[0].mxu0
      %v3435 = vpop.f32.mrb[0].mxu0
      %v3436 = vadd.f32 0.0, %v3435
      %v3437 = vpop.f32.mrb[0].mxu0
      %3438 = vmatprep.mubr.bf16.mxu0 0
      %3439 = vmatmul.mubr.bf16.gmra.mrb[0].mxu0 %v3316
      %v3440 = vpop.f32.mrb[0].mxu0
      %v3441 = vadd.f32 0.0, %v3440
      %v3442 = vpop.f32.mrb[0].mxu0
      %v3443 = vpop.f32.mrb[0].mxu0
      %v3444 = vadd.f32 0.0, %v3443
      %v3445 = vpop.f32.mrb[0].mxu0
      %3446 = vmatprep.mubr.bf16.mxu0 0
      %3447 = vmatmul.mubr.bf16.gmra.mrb[0].mxu0 %v3319
      %v3448 = vpop.f32.mrb[0].mxu0
      %v3449 = vadd.f32 0.0, %v3448
      %v3450 = vpop.f32.mrb[0].mxu0
      %v3451 = vpop.f32.mrb[0].mxu0
      %v3452 = vadd.f32 0.0, %v3451
      %v3453 = vpop.f32.mrb[0].mxu0
      %3454 = vmatprep.mubr.bf16.mxu0 0
      %3455 = vmatmul.mubr.bf16.gmra.mrb[0].mxu0 %v3322
      %v3456 = vpop.f32.mrb[0].mxu0
      %v3457 = vadd.f32 0.0, %v3456
      %v3458 = vpop.f32.mrb[0].mxu0
      %v3459 = vpop.f32.mrb[0].mxu0
      %v3460 = vadd.f32 0.0, %v3459
      %v3461 = vpop.f32.mrb[0].mxu0
      %3462 = vmatprep.mubr.bf16.mxu0 0
      %3463 = vmatmul.mubr.bf16.gmra.mrb[0].mxu0 %v3325
      %v3464 = vpop.f32.mrb[0].mxu0
      %v3465 = vadd.f32 0.0, %v3464
      %v3466 = vpop.f32.mrb[0].mxu0
      %v3467 = vpop.f32.mrb[0].mxu0
      %v3468 = vadd.f32 0.0, %v3467
      %v3469 = vpop.f32.mrb[0].mxu0
      %3470 = vmatprep.mubr.bf16.mxu0 0
      %3471 = vmatmul.mubr.bf16.gmra.mrb[0].mxu0 %v3328
      %v3472 = vpop.f32.mrb[0].mxu0
      %v3473 = vadd.f32 0.0, %v3472
      %v3474 = vpop.f32.mrb[0].mxu0
      %v3475 = vpop.f32.mrb[0].mxu0
      %v3476 = vadd.f32 0.0, %v3475
      %v3477 = vpop.f32.mrb[0].mxu0
      %3478 = vmatprep.mubr.bf16.mxu0 0
      %3479 = vmatmul.mubr.bf16.gmra.mrb[0].mxu0 %v3331
      %v3480 = vpop.f32.mrb[0].mxu0
      %v3481 = vadd.f32 0.0, %v3480
      %v3482 = vpop.f32.mrb[0].mxu0
      %v3483 = vpop.f32.mrb[0].mxu0
      %v3484 = vadd.f32 0.0, %v3483
      %v3485 = vpop.f32.mrb[0].mxu0
      %3486 = vmatprep.mubr.bf16.mxu0 0
      %3487 = vmatmul.mubr.bf16.gmra.mrb[0].mxu0 %v3334
      %v3488 = vpop.f32.mrb[0].mxu0
      %v3489 = vadd.f32 0.0, %v3488
      %v3490 = vpop.f32.mrb[0].mxu0
      %v3491 = vpop.f32.mrb[0].mxu0
      %v3492 = vadd.f32 0.0, %v3491
      %v3493 = vpop.f32.mrb[0].mxu0
      %3494 = vmatprep.mubr.bf16.mxu0 0
      %3495 = vmatmul.mubr.bf16.gmra.mrb[0].mxu0 %v3337
      %v3496 = vpop.f32.mrb[0].mxu0
      %v3497 = vadd.f32 0.0, %v3496
      %v3498 = vpop.f32.mrb[0].mxu0
      %v3499 = vpop.f32.mrb[0].mxu0
      %v3500 = vadd.f32 0.0, %v3499
      %v3501 = vpop.f32.mrb[0].mxu0
      %3502 = vdwg.mxu0
      %v3503 = vadd.f32 %v3144, %v3377
      %v3504 = vadd.f32 %v3145, %v3380
      %v3505 = vadd.f32 %v3146, %v3385
      %v3506 = vadd.f32 %v3147, %v3388
      %v3507 = vadd.f32 %v3148, %v3393
      %v3508 = vadd.f32 %v3149, %v3396
      %v3509 = vadd.f32 %v3150, %v3401
      %v3510 = vadd.f32 %v3151, %v3404
      %v3511 = vadd.f32 %v3152, %v3409
      %v3512 = vadd.f32 %v3153, %v3412
      %v3513 = vadd.f32 %v3154, %v3417
      %v3514 = vadd.f32 %v3155, %v3420
      %v3515 = vadd.f32 %v3156, %v3425
      %v3516 = vadd.f32 %v3157, %v3428
      %v3517 = vadd.f32 %v3158, %v3433
      %v3518 = vadd.f32 %v3159, %v3436
      %v3519 = vadd.f32 %v3160, %v3441
      %v3520 = vadd.f32 %v3161, %v3444
      %v3521 = vadd.f32 %v3162, %v3449
      %v3522 = vadd.f32 %v3163, %v3452
      %v3523 = vadd.f32 %v3164, %v3457
      %v3524 = vadd.f32 %v3165, %v3460
      %v3525 = vadd.f32 %v3166, %v3465
      %v3526 = vadd.f32 %v3167, %v3468
      %v3527 = vadd.f32 %v3168, %v3473
      %v3528 = vadd.f32 %v3169, %v3476
      %v3529 = vadd.f32 %v3170, %v3481
      %v3530 = vadd.f32 %v3171, %v3484
      %v3531 = vadd.f32 %v3172, %v3489
      %v3532 = vadd.f32 %v3173, %v3492
      %v3533 = vadd.f32 %v3174, %v3497
      %v3534 = vadd.f32 %v3175, %v3500
      %v3535 = vld [vmem:[%s3176] sm:$0xf]
      %v3536 = vld [vmem:[%s3176 + $0x4] sm:$0xf]
      %v3537 = vld [vmem:[%s3176 + $0x8] sm:$0x1]
      %v3538 = vld [vmem:[%s3176 + $0xc] sm:$0xf]
      %v3539 = vld [vmem:[%s3176 + $0x10] sm:$0xf]
      %v3540 = vld [vmem:[%s3176 + $0x14] sm:$0x1]
      %v3541 = vld [vmem:[%s3176 + $0x18] sm:$0xf]
      %v3542 = vld [vmem:[%s3176 + $0x1c] sm:$0xf]
      %v3543 = vld [vmem:[%s3176 + $0x20] sm:$0x1]
      %v3544 = vld [vmem:[%s3176 + $0x24] sm:$0xf]
      %v3545 = vld [vmem:[%s3176 + $0x28] sm:$0xf]
      %v3546 = vld [vmem:[%s3176 + $0x2c] sm:$0x1]
      %v3547 = vld [vmem:[%s3176 + $0x30] sm:$0xf]
      %v3548 = vld [vmem:[%s3176 + $0x34] sm:$0xf]
      %v3549 = vld [vmem:[%s3176 + $0x38] sm:$0x1]
      %v3550 = vld [vmem:[%s3176 + $0x3c] sm:$0xf]
      %v3551 = vld [vmem:[%s3176 + $0x40] sm:$0xf]
      %v3552 = vld [vmem:[%s3176 + $0x44] sm:$0x1]
      %v3553 = vld [vmem:[%s3176 + $0x48] sm:$0xf]
      %v3554 = vld [vmem:[%s3176 + $0x4c] sm:$0xf]
      %v3555 = vld [vmem:[%s3176 + $0x50] sm:$0x1]
      %v3556 = vld [vmem:[%s3176 + $0x54] sm:$0xf]
      %v3557 = vld [vmem:[%s3176 + $0x58] sm:$0xf]
      %v3558 = vld [vmem:[%s3176 + $0x5c] sm:$0x1]
      %v3559 = vld [vmem:[%s3176 + $0x60] sm:$0xf]
      %v3560 = vld [vmem:[%s3176 + $0x64] sm:$0xf]
      %v3561 = vld [vmem:[%s3176 + $0x68] sm:$0x1]
      %v3562 = vld [vmem:[%s3176 + $0x6c] sm:$0xf]
      %v3563 = vld [vmem:[%s3176 + $0x70] sm:$0xf]
      %v3564 = vld [vmem:[%s3176 + $0x74] sm:$0x1]
      %v3565 = vld [vmem:[%s3176 + $0x78] sm:$0xf]
      %v3566 = vld [vmem:[%s3176 + $0x7c] sm:$0xf]
      %v3567 = vld [vmem:[%s3176 + $0x80] sm:$0x1]
      %v3568 = vld [vmem:[%s3176 + $0x84] sm:$0xf]
      %v3569 = vld [vmem:[%s3176 + $0x88] sm:$0xf]
      %v3570 = vld [vmem:[%s3176 + $0x8c] sm:$0x1]
      %v3571 = vld [vmem:[%s3176 + $0x90] sm:$0xf]
      %v3572 = vld [vmem:[%s3176 + $0x94] sm:$0xf]
      %v3573 = vld [vmem:[%s3176 + $0x98] sm:$0x1]
      %v3574 = vld [vmem:[%s3176 + $0x9c] sm:$0xf]
      %v3575 = vld [vmem:[%s3176 + $0xa0] sm:$0xf]
      %v3576 = vld [vmem:[%s3176 + $0xa4] sm:$0x1]
      %v3577 = vld [vmem:[%s3176 + $0xa8] sm:$0xf]
      %v3578 = vld [vmem:[%s3176 + $0xac] sm:$0xf]
      %v3579 = vld [vmem:[%s3176 + $0xb0] sm:$0x1]
      %v3580 = vld [vmem:[%s3176 + $0xb4] sm:$0xf]
      %v3581 = vld [vmem:[%s3176 + $0xb8] sm:$0xf]
      %v3582 = vld [vmem:[%s3176 + $0xbc] sm:$0x1]
      %v3584 = vshrl.u32 %v3535, 16
      %v3586 = vrot.slane %v3584, 4
      %v3587 = vshll.u32 %v3535, 16
      %v3589 = vrot.slane %v3587, 5
      %v3590 = vor.u32 %v3586, %v3589
      %v3591 = vrot.slane %v3590, 4
      %v3593 = vshll.u32 %v3536, 16
      %v3595 = vrot.slane %v3593, 5
      %v3596 = vsel %vm223, %v3591, %v3595
      %v3597 = vshrl.u32 %v3536, 16
      %v3599 = vrot.slane %v3597, 4
      %v3600 = vor.u32 %v3599, %v3595
      %v3601 = vrot.slane %v3600, 4
      %v3603 = vshll.u32 %v3537, 16
      %v3605 = vrot.slane %v3603, 5
      %v3606 = vsel %vm223, %v3601, %v3605
      %v3608 = vshrl.u32 %v3538, 16
      %v3610 = vrot.slane %v3608, 4
      %v3611 = vshll.u32 %v3538, 16
      %v3613 = vrot.slane %v3611, 5
      %v3614 = vor.u32 %v3610, %v3613
      %v3615 = vrot.slane %v3614, 4
      %v3617 = vshll.u32 %v3539, 16
      %v3619 = vrot.slane %v3617, 5
      %v3620 = vsel %vm223, %v3615, %v3619
      %v3621 = vshrl.u32 %v3539, 16
      %v3623 = vrot.slane %v3621, 4
      %v3624 = vor.u32 %v3623, %v3619
      %v3625 = vrot.slane %v3624, 4
      %v3627 = vshll.u32 %v3540, 16
      %v3629 = vrot.slane %v3627, 5
      %v3630 = vsel %vm223, %v3625, %v3629
      %v3632 = vshrl.u32 %v3541, 16
      %v3634 = vrot.slane %v3632, 4
      %v3635 = vshll.u32 %v3541, 16
      %v3637 = vrot.slane %v3635, 5
      %v3638 = vor.u32 %v3634, %v3637
      %v3639 = vrot.slane %v3638, 4
      %v3641 = vshll.u32 %v3542, 16
      %v3643 = vrot.slane %v3641, 5
      %v3644 = vsel %vm223, %v3639, %v3643
      %v3645 = vshrl.u32 %v3542, 16
      %v3647 = vrot.slane %v3645, 4
      %v3648 = vor.u32 %v3647, %v3643
      %v3649 = vrot.slane %v3648, 4
      %v3651 = vshll.u32 %v3543, 16
      %v3653 = vrot.slane %v3651, 5
      %v3654 = vsel %vm223, %v3649, %v3653
      %v3656 = vshrl.u32 %v3544, 16
      %v3658 = vrot.slane %v3656, 4
      %v3659 = vshll.u32 %v3544, 16
      %v3661 = vrot.slane %v3659, 5
      %v3662 = vor.u32 %v3658, %v3661
      %v3663 = vrot.slane %v3662, 4
      %v3665 = vshll.u32 %v3545, 16
      %v3667 = vrot.slane %v3665, 5
      %v3668 = vsel %vm223, %v3663, %v3667
      %v3669 = vshrl.u32 %v3545, 16
      %v3671 = vrot.slane %v3669, 4
      %v3672 = vor.u32 %v3671, %v3667
      %v3673 = vrot.slane %v3672, 4
      %v3675 = vshll.u32 %v3546, 16
      %v3677 = vrot.slane %v3675, 5
      %v3678 = vsel %vm223, %v3673, %v3677
      %v3680 = vshrl.u32 %v3547, 16
      %v3682 = vrot.slane %v3680, 4
      %v3683 = vshll.u32 %v3547, 16
      %v3685 = vrot.slane %v3683, 5
      %v3686 = vor.u32 %v3682, %v3685
      %v3687 = vrot.slane %v3686, 4
      %v3689 = vshll.u32 %v3548, 16
      %v3691 = vrot.slane %v3689, 5
      %v3692 = vsel %vm223, %v3687, %v3691
      %v3693 = vshrl.u32 %v3548, 16
      %v3695 = vrot.slane %v3693, 4
      %v3696 = vor.u32 %v3695, %v3691
      %v3697 = vrot.slane %v3696, 4
      %v3699 = vshll.u32 %v3549, 16
      %v3701 = vrot.slane %v3699, 5
      %v3702 = vsel %vm223, %v3697, %v3701
      %v3704 = vshrl.u32 %v3550, 16
      %v3706 = vrot.slane %v3704, 4
      %v3707 = vshll.u32 %v3550, 16
      %v3709 = vrot.slane %v3707, 5
      %v3710 = vor.u32 %v3706, %v3709
      %v3711 = vrot.slane %v3710, 4
      %v3713 = vshll.u32 %v3551, 16
      %v3715 = vrot.slane %v3713, 5
      %v3716 = vsel %vm223, %v3711, %v3715
      %v3717 = vshrl.u32 %v3551, 16
      %v3719 = vrot.slane %v3717, 4
      %v3720 = vor.u32 %v3719, %v3715
      %v3721 = vrot.slane %v3720, 4
      %v3723 = vshll.u32 %v3552, 16
      %v3725 = vrot.slane %v3723, 5
      %v3726 = vsel %vm223, %v3721, %v3725
      %v3728 = vshrl.u32 %v3553, 16
      %v3730 = vrot.slane %v3728, 4
      %v3731 = vshll.u32 %v3553, 16
      %v3733 = vrot.slane %v3731, 5
      %v3734 = vor.u32 %v3730, %v3733
      %v3735 = vrot.slane %v3734, 4
      %v3737 = vshll.u32 %v3554, 16
      %v3739 = vrot.slane %v3737, 5
      %v3740 = vsel %vm223, %v3735, %v3739
      %v3741 = vshrl.u32 %v3554, 16
      %v3743 = vrot.slane %v3741, 4
      %v3744 = vor.u32 %v3743, %v3739
      %v3745 = vrot.slane %v3744, 4
      %v3747 = vshll.u32 %v3555, 16
      %v3749 = vrot.slane %v3747, 5
      %v3750 = vsel %vm223, %v3745, %v3749
      %v3752 = vshrl.u32 %v3556, 16
      %v3754 = vrot.slane %v3752, 4
      %v3755 = vshll.u32 %v3556, 16
      %v3757 = vrot.slane %v3755, 5
      %v3758 = vor.u32 %v3754, %v3757
      %v3759 = vrot.slane %v3758, 4
      %v3761 = vshll.u32 %v3557, 16
      %v3763 = vrot.slane %v3761, 5
      %v3764 = vsel %vm223, %v3759, %v3763
      %v3765 = vshrl.u32 %v3557, 16
      %v3767 = vrot.slane %v3765, 4
      %v3768 = vor.u32 %v3767, %v3763
      %v3769 = vrot.slane %v3768, 4
      %v3771 = vshll.u32 %v3558, 16
      %v3773 = vrot.slane %v3771, 5
      %v3774 = vsel %vm223, %v3769, %v3773
      %v3776 = vshrl.u32 %v3559, 16
      %v3778 = vrot.slane %v3776, 4
      %v3779 = vshll.u32 %v3559, 16
      %v3781 = vrot.slane %v3779, 5
      %v3782 = vor.u32 %v3778, %v3781
      %v3783 = vrot.slane %v3782, 4
      %v3785 = vshll.u32 %v3560, 16
      %v3787 = vrot.slane %v3785, 5
      %v3788 = vsel %vm223, %v3783, %v3787
      %v3789 = vshrl.u32 %v3560, 16
      %v3791 = vrot.slane %v3789, 4
      %v3792 = vor.u32 %v3791, %v3787
      %v3793 = vrot.slane %v3792, 4
      %v3795 = vshll.u32 %v3561, 16
      %v3797 = vrot.slane %v3795, 5
      %v3798 = vsel %vm223, %v3793, %v3797
      %v3800 = vshrl.u32 %v3562, 16
      %v3802 = vrot.slane %v3800, 4
      %v3803 = vshll.u32 %v3562, 16
      %v3805 = vrot.slane %v3803, 5
      %v3806 = vor.u32 %v3802, %v3805
      %v3807 = vrot.slane %v3806, 4
      %v3809 = vshll.u32 %v3563, 16
      %v3811 = vrot.slane %v3809, 5
      %v3812 = vsel %vm223, %v3807, %v3811
      %v3813 = vshrl.u32 %v3563, 16
      %v3815 = vrot.slane %v3813, 4
      %v3816 = vor.u32 %v3815, %v3811
      %v3817 = vrot.slane %v3816, 4
      %v3819 = vshll.u32 %v3564, 16
      %v3821 = vrot.slane %v3819, 5
      %v3822 = vsel %vm223, %v3817, %v3821
      %v3824 = vshrl.u32 %v3565, 16
      %v3826 = vrot.slane %v3824, 4
      %v3827 = vshll.u32 %v3565, 16
      %v3829 = vrot.slane %v3827, 5
      %v3830 = vor.u32 %v3826, %v3829
      %v3831 = vrot.slane %v3830, 4
      %v3833 = vshll.u32 %v3566, 16
      %v3835 = vrot.slane %v3833, 5
      %v3836 = vsel %vm223, %v3831, %v3835
      %v3837 = vshrl.u32 %v3566, 16
      %v3839 = vrot.slane %v3837, 4
      %v3840 = vor.u32 %v3839, %v3835
      %v3841 = vrot.slane %v3840, 4
      %v3843 = vshll.u32 %v3567, 16
      %v3845 = vrot.slane %v3843, 5
      %v3846 = vsel %vm223, %v3841, %v3845
      %v3848 = vshrl.u32 %v3568, 16
      %v3850 = vrot.slane %v3848, 4
      %v3851 = vshll.u32 %v3568, 16
      %v3853 = vrot.slane %v3851, 5
      %v3854 = vor.u32 %v3850, %v3853
      %v3855 = vrot.slane %v3854, 4
      %v3857 = vshll.u32 %v3569, 16
      %v3859 = vrot.slane %v3857, 5
      %v3860 = vsel %vm223, %v3855, %v3859
      %v3861 = vshrl.u32 %v3569, 16
      %v3863 = vrot.slane %v3861, 4
      %v3864 = vor.u32 %v3863, %v3859
      %v3865 = vrot.slane %v3864, 4
      %v3867 = vshll.u32 %v3570, 16
      %v3869 = vrot.slane %v3867, 5
      %v3870 = vsel %vm223, %v3865, %v3869
      %v3872 = vshrl.u32 %v3571, 16
      %v3874 = vrot.slane %v3872, 4
      %v3875 = vshll.u32 %v3571, 16
      %v3877 = vrot.slane %v3875, 5
      %v3878 = vor.u32 %v3874, %v3877
      %v3879 = vrot.slane %v3878, 4
      %v3881 = vshll.u32 %v3572, 16
      %v3883 = vrot.slane %v3881, 5
      %v3884 = vsel %vm223, %v3879, %v3883
      %v3885 = vshrl.u32 %v3572, 16
      %v3887 = vrot.slane %v3885, 4
      %v3888 = vor.u32 %v3887, %v3883
      %v3889 = vrot.slane %v3888, 4
      %v3891 = vshll.u32 %v3573, 16
      %v3893 = vrot.slane %v3891, 5
      %v3894 = vsel %vm223, %v3889, %v3893
      %v3896 = vshrl.u32 %v3574, 16
      %v3898 = vrot.slane %v3896, 4
      %v3899 = vshll.u32 %v3574, 16
      %v3901 = vrot.slane %v3899, 5
      %v3902 = vor.u32 %v3898, %v3901
      %v3903 = vrot.slane %v3902, 4
      %v3905 = vshll.u32 %v3575, 16
      %v3907 = vrot.slane %v3905, 5
      %v3908 = vsel %vm223, %v3903, %v3907
      %v3909 = vshrl.u32 %v3575, 16
      %v3911 = vrot.slane %v3909, 4
      %v3912 = vor.u32 %v3911, %v3907
      %v3913 = vrot.slane %v3912, 4
      %v3915 = vshll.u32 %v3576, 16
      %v3917 = vrot.slane %v3915, 5
      %v3918 = vsel %vm223, %v3913, %v3917
      %v3920 = vshrl.u32 %v3577, 16
      %v3922 = vrot.slane %v3920, 4
      %v3923 = vshll.u32 %v3577, 16
      %v3925 = vrot.slane %v3923, 5
      %v3926 = vor.u32 %v3922, %v3925
      %v3927 = vrot.slane %v3926, 4
      %v3929 = vshll.u32 %v3578, 16
      %v3931 = vrot.slane %v3929, 5
      %v3932 = vsel %vm223, %v3927, %v3931
      %v3933 = vshrl.u32 %v3578, 16
      %v3935 = vrot.slane %v3933, 4
      %v3936 = vor.u32 %v3935, %v3931
      %v3937 = vrot.slane %v3936, 4
      %v3939 = vshll.u32 %v3579, 16
      %v3941 = vrot.slane %v3939, 5
      %v3942 = vsel %vm223, %v3937, %v3941
      %v3944 = vshrl.u32 %v3580, 16
      %v3946 = vrot.slane %v3944, 4
      %v3947 = vshll.u32 %v3580, 16
      %v3949 = vrot.slane %v3947, 5
      %v3950 = vor.u32 %v3946, %v3949
      %v3951 = vrot.slane %v3950, 4
      %v3953 = vshll.u32 %v3581, 16
      %v3955 = vrot.slane %v3953, 5
      %v3956 = vsel %vm223, %v3951, %v3955
      %v3957 = vshrl.u32 %v3581, 16
      %v3959 = vrot.slane %v3957, 4
      %v3960 = vor.u32 %v3959, %v3955
      %v3961 = vrot.slane %v3960, 4
      %v3963 = vshll.u32 %v3582, 16
      %v3965 = vrot.slane %v3963, 5
      %v3966 = vsel %vm223, %v3961, %v3965
      %s3967 = scalar_lea.vmem %s1, 14
      %v3968 = vld [vmem:[%s3967] sm:$0x3]
      %v3969 = vunpack.c.l.b16 %v3596
      %v3970 = vunpack.c.l.b16 %v3606
      %v3971 = vunpack.c.l.b16 %v3620
      %v3972 = vunpack.c.l.b16 %v3630
      %v3973 = vunpack.c.l.b16 %v3644
      %v3974 = vunpack.c.l.b16 %v3654
      %v3975 = vunpack.c.l.b16 %v3668
      %v3976 = vunpack.c.l.b16 %v3678
      %v3977 = vunpack.c.l.b16 %v3692
      %v3978 = vunpack.c.l.b16 %v3702
      %v3979 = vunpack.c.l.b16 %v3716
      %v3980 = vunpack.c.l.b16 %v3726
      %v3981 = vunpack.c.l.b16 %v3740
      %v3982 = vunpack.c.l.b16 %v3750
      %v3983 = vunpack.c.l.b16 %v3764
      %v3984 = vunpack.c.l.b16 %v3774
      %v3985 = vunpack.c.l.b16 %v3788
      %v3986 = vunpack.c.l.b16 %v3798
      %v3987 = vunpack.c.l.b16 %v3812
      %v3988 = vunpack.c.l.b16 %v3822
      %v3989 = vunpack.c.l.b16 %v3836
      %v3990 = vunpack.c.l.b16 %v3846
      %v3991 = vunpack.c.l.b16 %v3860
      %v3992 = vunpack.c.l.b16 %v3870
      %v3993 = vunpack.c.l.b16 %v3884
      %v3994 = vunpack.c.l.b16 %v3894
      %v3995 = vunpack.c.l.b16 %v3908
      %v3996 = vunpack.c.l.b16 %v3918
      %v3997 = vunpack.c.l.b16 %v3932
      %v3998 = vunpack.c.l.b16 %v3942
      %v3999 = vunpack.c.l.b16 %v3956
      %v4000 = vunpack.c.l.b16 %v3966
      %v4001 = vpack.c.b16 %v3970, %v3969
      %v4002 = vpack.c.b16 %v3972, %v3971
      %v4003 = vpack.c.b16 %v3974, %v3973
      %v4004 = vpack.c.b16 %v3976, %v3975
      %v4005 = vpack.c.b16 %v3978, %v3977
      %v4006 = vpack.c.b16 %v3980, %v3979
      %v4007 = vpack.c.b16 %v3982, %v3981
      %v4008 = vpack.c.b16 %v3984, %v3983
      %v4009 = vpack.c.b16 %v3986, %v3985
      %v4010 = vpack.c.b16 %v3988, %v3987
      %v4011 = vpack.c.b16 %v3990, %v3989
      %v4012 = vpack.c.b16 %v3992, %v3991
      %v4013 = vpack.c.b16 %v3994, %v3993
      %v4014 = vpack.c.b16 %v3996, %v3995
      %v4015 = vpack.c.b16 %v3998, %v3997
      %v4016 = vpack.c.b16 %v4000, %v3999
      %v4018 = vsel %vm658, %v4001, 0
      %v4021 = vsel %vm658, %v4002, 0
      %v4024 = vsel %vm658, %v4003, 0
      %v4027 = vsel %vm658, %v4004, 0
      %v4030 = vsel %vm658, %v4005, 0
      %v4033 = vsel %vm658, %v4006, 0
      %v4036 = vsel %vm658, %v4007, 0
      %v4039 = vsel %vm658, %v4008, 0
      %v4042 = vsel %vm658, %v4009, 0
      %v4045 = vsel %vm658, %v4010, 0
      %v4048 = vsel %vm658, %v4011, 0
      %v4051 = vsel %vm658, %v4012, 0
      %v4054 = vsel %vm658, %v4013, 0
      %v4057 = vsel %vm658, %v4014, 0
      %v4060 = vsel %vm658, %v4015, 0
      %v4063 = vsel %vm658, %v4016, 0
      %v4066 = vsel %vm707, %v3968, 0
      %4068 = vmatprep.subr.bf16.mxu0 0
      %4069 = vmatpush1.bf16.msra.mxu0 %v4066
      %4070 = vmatprep.subr.bf16.mxu0 0
      %4071 = vmatpush1.bf16.msra.mxu0 0
      %4072 = vmatprep.subr.bf16.mxu0 0
      %4073 = vmatpush1.bf16.msra.mxu0 0
      %4074 = vmatprep.subr.bf16.mxu0 0
      %4075 = vmatpush1.bf16.msra.mxu0 0
      %4076 = vmatprep.subr.bf16.mxu0 0
      %4077 = vmatpush1.bf16.msra.mxu0 0
      %4078 = vmatprep.subr.bf16.mxu0 0
      %4079 = vmatpush1.bf16.msra.mxu0 0
      %4080 = vmatprep.subr.bf16.mxu0 0
      %4081 = vmatpush1.bf16.msra.mxu0 0
      %4082 = vmatprep.subr.bf16.mxu0 0
      %4083 = vmatpush1.bf16.msra.mxu0 0
      %4084 = vmatprep.subr.bf16.mxu0 0
      %4085 = vmatpush1.bf16.msra.mxu0 0
      %4086 = vmatprep.subr.bf16.mxu0 0
      %4087 = vmatpush1.bf16.msra.mxu0 0
      %4088 = vmatprep.subr.bf16.mxu0 0
      %4089 = vmatpush1.bf16.msra.mxu0 0
      %4090 = vmatprep.subr.bf16.mxu0 0
      %4091 = vmatpush1.bf16.msra.mxu0 0
      %4092 = vmatprep.subr.bf16.mxu0 0
      %4093 = vmatpush1.bf16.msra.mxu0 0
      %4094 = vmatprep.subr.bf16.mxu0 0
      %4095 = vmatpush1.bf16.msra.mxu0 0
      %4096 = vmatprep.subr.bf16.mxu0 0
      %4097 = vmatpush1.bf16.msra.mxu0 0
      %4098 = vmatprep.subr.bf16.mxu0 0
      %4099 = vmatpush1.bf16.msra.mxu0 0
      %4100 = vmatprep.mubr.bf16.mxu0 0
      %4101 = vmatmul.mubr.bf16.gmra.mrb[0].mxu0 %v4018
      %v4102 = vpop.f32.mrb[0].mxu0
      %v4103 = vadd.f32 0.0, %v4102
      %v4104 = vpop.f32.mrb[0].mxu0
      %v4105 = vpop.f32.mrb[0].mxu0
      %v4106 = vadd.f32 0.0, %v4105
      %v4107 = vpop.f32.mrb[0].mxu0
      %4108 = vmatprep.mubr.bf16.mxu0 0
      %4109 = vmatmul.mubr.bf16.gmra.mrb[0].mxu0 %v4021
      %v4110 = vpop.f32.mrb[0].mxu0
      %v4111 = vadd.f32 0.0, %v4110
      %v4112 = vpop.f32.mrb[0].mxu0
      %v4113 = vpop.f32.mrb[0].mxu0
      %v4114 = vadd.f32 0.0, %v4113
      %v4115 = vpop.f32.mrb[0].mxu0
      %4116 = vmatprep.mubr.bf16.mxu0 0
      %4117 = vmatmul.mubr.bf16.gmra.mrb[0].mxu0 %v4024
      %v4118 = vpop.f32.mrb[0].mxu0
      %v4119 = vadd.f32 0.0, %v4118
      %v4120 = vpop.f32.mrb[0].mxu0
      %v4121 = vpop.f32.mrb[0].mxu0
      %v4122 = vadd.f32 0.0, %v4121
      %v4123 = vpop.f32.mrb[0].mxu0
      %4124 = vmatprep.mubr.bf16.mxu0 0
      %4125 = vmatmul.mubr.bf16.gmra.mrb[0].mxu0 %v4027
      %v4126 = vpop.f32.mrb[0].mxu0
      %v4127 = vadd.f32 0.0, %v4126
      %v4128 = vpop.f32.mrb[0].mxu0
      %v4129 = vpop.f32.mrb[0].mxu0
      %v4130 = vadd.f32 0.0, %v4129
      %v4131 = vpop.f32.mrb[0].mxu0
      %4132 = vmatprep.mubr.bf16.mxu0 0
      %4133 = vmatmul.mubr.bf16.gmra.mrb[0].mxu0 %v4030
      %v4134 = vpop.f32.mrb[0].mxu0
      %v4135 = vadd.f32 0.0, %v4134
      %v4136 = vpop.f32.mrb[0].mxu0
      %v4137 = vpop.f32.mrb[0].mxu0
      %v4138 = vadd.f32 0.0, %v4137
      %v4139 = vpop.f32.mrb[0].mxu0
      %4140 = vmatprep.mubr.bf16.mxu0 0
      %4141 = vmatmul.mubr.bf16.gmra.mrb[0].mxu0 %v4033
      %v4142 = vpop.f32.mrb[0].mxu0
      %v4143 = vadd.f32 0.0, %v4142
      %v4144 = vpop.f32.mrb[0].mxu0
      %v4145 = vpop.f32.mrb[0].mxu0
      %v4146 = vadd.f32 0.0, %v4145
      %v4147 = vpop.f32.mrb[0].mxu0
      %4148 = vmatprep.mubr.bf16.mxu0 0
      %4149 = vmatmul.mubr.bf16.gmra.mrb[0].mxu0 %v4036
      %v4150 = vpop.f32.mrb[0].mxu0
      %v4151 = vadd.f32 0.0, %v4150
      %v4152 = vpop.f32.mrb[0].mxu0
      %v4153 = vpop.f32.mrb[0].mxu0
      %v4154 = vadd.f32 0.0, %v4153
      %v4155 = vpop.f32.mrb[0].mxu0
      %4156 = vmatprep.mubr.bf16.mxu0 0
      %4157 = vmatmul.mubr.bf16.gmra.mrb[0].mxu0 %v4039
      %v4158 = vpop.f32.mrb[0].mxu0
      %v4159 = vadd.f32 0.0, %v4158
      %v4160 = vpop.f32.mrb[0].mxu0
      %v4161 = vpop.f32.mrb[0].mxu0
      %v4162 = vadd.f32 0.0, %v4161
      %v4163 = vpop.f32.mrb[0].mxu0
      %4164 = vmatprep.mubr.bf16.mxu0 0
      %4165 = vmatmul.mubr.bf16.gmra.mrb[0].mxu0 %v4042
      %v4166 = vpop.f32.mrb[0].mxu0
      %v4167 = vadd.f32 0.0, %v4166
      %v4168 = vpop.f32.mrb[0].mxu0
      %v4169 = vpop.f32.mrb[0].mxu0
      %v4170 = vadd.f32 0.0, %v4169
      %v4171 = vpop.f32.mrb[0].mxu0
      %4172 = vmatprep.mubr.bf16.mxu0 0
      %4173 = vmatmul.mubr.bf16.gmra.mrb[0].mxu0 %v4045
      %v4174 = vpop.f32.mrb[0].mxu0
      %v4175 = vadd.f32 0.0, %v4174
      %v4176 = vpop.f32.mrb[0].mxu0
      %v4177 = vpop.f32.mrb[0].mxu0
      %v4178 = vadd.f32 0.0, %v4177
      %v4179 = vpop.f32.mrb[0].mxu0
      %4180 = vmatprep.mubr.bf16.mxu0 0
      %4181 = vmatmul.mubr.bf16.gmra.mrb[0].mxu0 %v4048
      %v4182 = vpop.f32.mrb[0].mxu0
      %v4183 = vadd.f32 0.0, %v4182
      %v4184 = vpop.f32.mrb[0].mxu0
      %v4185 = vpop.f32.mrb[0].mxu0
      %v4186 = vadd.f32 0.0, %v4185
      %v4187 = vpop.f32.mrb[0].mxu0
      %4188 = vmatprep.mubr.bf16.mxu0 0
      %4189 = vmatmul.mubr.bf16.gmra.mrb[0].mxu0 %v4051
      %v4190 = vpop.f32.mrb[0].mxu0
      %v4191 = vadd.f32 0.0, %v4190
      %v4192 = vpop.f32.mrb[0].mxu0
      %v4193 = vpop.f32.mrb[0].mxu0
      %v4194 = vadd.f32 0.0, %v4193
      %v4195 = vpop.f32.mrb[0].mxu0
      %4196 = vmatprep.mubr.bf16.mxu0 0
      %4197 = vmatmul.mubr.bf16.gmra.mrb[0].mxu0 %v4054
      %v4198 = vpop.f32.mrb[0].mxu0
      %v4199 = vadd.f32 0.0, %v4198
      %v4200 = vpop.f32.mrb[0].mxu0
      %v4201 = vpop.f32.mrb[0].mxu0
      %v4202 = vadd.f32 0.0, %v4201
      %v4203 = vpop.f32.mrb[0].mxu0
      %4204 = vmatprep.mubr.bf16.mxu0 0
      %4205 = vmatmul.mubr.bf16.gmra.mrb[0].mxu0 %v4057
      %v4206 = vpop.f32.mrb[0].mxu0
      %v4207 = vadd.f32 0.0, %v4206
      %v4208 = vpop.f32.mrb[0].mxu0
      %v4209 = vpop.f32.mrb[0].mxu0
      %v4210 = vadd.f32 0.0, %v4209
      %v4211 = vpop.f32.mrb[0].mxu0
      %4212 = vmatprep.mubr.bf16.mxu0 0
      %4213 = vmatmul.mubr.bf16.gmra.mrb[0].mxu0 %v4060
      %v4214 = vpop.f32.mrb[0].mxu0
      %v4215 = vadd.f32 0.0, %v4214
      %v4216 = vpop.f32.mrb[0].mxu0
      %v4217 = vpop.f32.mrb[0].mxu0
      %v4218 = vadd.f32 0.0, %v4217
      %v4219 = vpop.f32.mrb[0].mxu0
      %4220 = vmatprep.mubr.bf16.mxu0 0
      %4221 = vmatmul.mubr.bf16.gmra.mrb[0].mxu0 %v4063
      %v4222 = vpop.f32.mrb[0].mxu0
      %v4223 = vadd.f32 0.0, %v4222
      %v4224 = vpop.f32.mrb[0].mxu0
      %v4225 = vpop.f32.mrb[0].mxu0
      %v4226 = vadd.f32 0.0, %v4225
      %v4227 = vpop.f32.mrb[0].mxu0
      %4228 = vdwg.mxu0
      %v4229 = vadd.f32 %v3503, %v4103
      %v4230 = vadd.f32 %v3504, %v4106
      %v4231 = vadd.f32 %v3505, %v4111
      %v4232 = vadd.f32 %v3506, %v4114
      %v4233 = vadd.f32 %v3507, %v4119
      %v4234 = vadd.f32 %v3508, %v4122
      %v4235 = vadd.f32 %v3509, %v4127
      %v4236 = vadd.f32 %v3510, %v4130
      %v4237 = vadd.f32 %v3511, %v4135
      %v4238 = vadd.f32 %v3512, %v4138
      %v4239 = vadd.f32 %v3513, %v4143
      %v4240 = vadd.f32 %v3514, %v4146
      %v4241 = vadd.f32 %v3515, %v4151
      %v4242 = vadd.f32 %v3516, %v4154
      %v4243 = vadd.f32 %v3517, %v4159
      %v4244 = vadd.f32 %v3518, %v4162
      %v4245 = vadd.f32 %v3519, %v4167
      %v4246 = vadd.f32 %v3520, %v4170
      %v4247 = vadd.f32 %v3521, %v4175
      %v4248 = vadd.f32 %v3522, %v4178
      %v4249 = vadd.f32 %v3523, %v4183
      %v4250 = vadd.f32 %v3524, %v4186
      %v4251 = vadd.f32 %v3525, %v4191
      %v4252 = vadd.f32 %v3526, %v4194
      %v4253 = vadd.f32 %v3527, %v4199
      %v4254 = vadd.f32 %v3528, %v4202
      %v4255 = vadd.f32 %v3529, %v4207
      %v4256 = vadd.f32 %v3530, %v4210
      %v4257 = vadd.f32 %v3531, %v4215
      %v4258 = vadd.f32 %v3532, %v4218
      %v4259 = vadd.f32 %v3533, %v4223
      %v4260 = vadd.f32 %v3534, %v4226
      %v4261 = vld [vmem:[%s3176] sm:$0xe]
      %v4262 = vld [vmem:[%s3176 + $0xc] sm:$0xe]
      %v4263 = vld [vmem:[%s3176 + $0x18] sm:$0xe]
      %v4264 = vld [vmem:[%s3176 + $0x24] sm:$0xe]
      %v4265 = vld [vmem:[%s3176 + $0x30] sm:$0xe]
      %v4266 = vld [vmem:[%s3176 + $0x3c] sm:$0xe]
      %v4267 = vld [vmem:[%s3176 + $0x48] sm:$0xe]
      %v4268 = vld [vmem:[%s3176 + $0x54] sm:$0xe]
      %v4269 = vld [vmem:[%s3176 + $0x60] sm:$0xe]
      %v4270 = vld [vmem:[%s3176 + $0x6c] sm:$0xe]
      %v4271 = vld [vmem:[%s3176 + $0x78] sm:$0xe]
      %v4272 = vld [vmem:[%s3176 + $0x84] sm:$0xe]
      %v4273 = vld [vmem:[%s3176 + $0x90] sm:$0xe]
      %v4274 = vld [vmem:[%s3176 + $0x9c] sm:$0xe]
      %v4275 = vld [vmem:[%s3176 + $0xa8] sm:$0xe]
      %v4276 = vld [vmem:[%s3176 + $0xb4] sm:$0xe]
      %v4325 = vrot.slane %v4261, 5
      %v4326 = vrot.slane %v4325, 4
      %v4327 = vrot.slane %v3536, 5
      %v4328 = vsel %vm1214, %v4326, %v4327
      %v4329 = vrot.slane %v4327, 4
      %v4330 = vrot.slane %v3537, 5
      %v4331 = vsel %vm1214, %v4329, %v4330
      %v4332 = vrot.slane %v4262, 5
      %v4333 = vrot.slane %v4332, 4
      %v4334 = vrot.slane %v3539, 5
      %v4335 = vsel %vm1214, %v4333, %v4334
      %v4336 = vrot.slane %v4334, 4
      %v4337 = vrot.slane %v3540, 5
      %v4338 = vsel %vm1214, %v4336, %v4337
      %v4339 = vrot.slane %v4263, 5
      %v4340 = vrot.slane %v4339, 4
      %v4341 = vrot.slane %v3542, 5
      %v4342 = vsel %vm1214, %v4340, %v4341
      %v4343 = vrot.slane %v4341, 4
      %v4344 = vrot.slane %v3543, 5
      %v4345 = vsel %vm1214, %v4343, %v4344
      %v4346 = vrot.slane %v4264, 5
      %v4347 = vrot.slane %v4346, 4
      %v4348 = vrot.slane %v3545, 5
      %v4349 = vsel %vm1214, %v4347, %v4348
      %v4350 = vrot.slane %v4348, 4
      %v4351 = vrot.slane %v3546, 5
      %v4352 = vsel %vm1214, %v4350, %v4351
      %v4353 = vrot.slane %v4265, 5
      %v4354 = vrot.slane %v4353, 4
      %v4355 = vrot.slane %v3548, 5
      %v4356 = vsel %vm1214, %v4354, %v4355
      %v4357 = vrot.slane %v4355, 4
      %v4358 = vrot.slane %v3549, 5
      %v4359 = vsel %vm1214, %v4357, %v4358
      %v4360 = vrot.slane %v4266, 5
      %v4361 = vrot.slane %v4360, 4
      %v4362 = vrot.slane %v3551, 5
      %v4363 = vsel %vm1214, %v4361, %v4362
      %v4364 = vrot.slane %v4362, 4
      %v4365 = vrot.slane %v3552, 5
      %v4366 = vsel %vm1214, %v4364, %v4365
      %v4367 = vrot.slane %v4267, 5
      %v4368 = vrot.slane %v4367, 4
      %v4369 = vrot.slane %v3554, 5
      %v4370 = vsel %vm1214, %v4368, %v4369
      %v4371 = vrot.slane %v4369, 4
      %v4372 = vrot.slane %v3555, 5
      %v4373 = vsel %vm1214, %v4371, %v4372
      %v4374 = vrot.slane %v4268, 5
      %v4375 = vrot.slane %v4374, 4
      %v4376 = vrot.slane %v3557, 5
      %v4377 = vsel %vm1214, %v4375, %v4376
      %v4378 = vrot.slane %v4376, 4
      %v4379 = vrot.slane %v3558, 5
      %v4380 = vsel %vm1214, %v4378, %v4379
      %v4381 = vrot.slane %v4269, 5
      %v4382 = vrot.slane %v4381, 4
      %v4383 = vrot.slane %v3560, 5
      %v4384 = vsel %vm1214, %v4382, %v4383
      %v4385 = vrot.slane %v4383, 4
      %v4386 = vrot.slane %v3561, 5
      %v4387 = vsel %vm1214, %v4385, %v4386
      %v4388 = vrot.slane %v4270, 5
      %v4389 = vrot.slane %v4388, 4
      %v4390 = vrot.slane %v3563, 5
      %v4391 = vsel %vm1214, %v4389, %v4390
      %v4392 = vrot.slane %v4390, 4
      %v4393 = vrot.slane %v3564, 5
      %v4394 = vsel %vm1214, %v4392, %v4393
      %v4395 = vrot.slane %v4271, 5
      %v4396 = vrot.slane %v4395, 4
      %v4397 = vrot.slane %v3566, 5
      %v4398 = vsel %vm1214, %v4396, %v4397
      %v4399 = vrot.slane %v4397, 4
      %v4400 = vrot.slane %v3567, 5
      %v4401 = vsel %vm1214, %v4399, %v4400
      %v4402 = vrot.slane %v4272, 5
      %v4403 = vrot.slane %v4402, 4
      %v4404 = vrot.slane %v3569, 5
      %v4405 = vsel %vm1214, %v4403, %v4404
      %v4406 = vrot.slane %v4404, 4
      %v4407 = vrot.slane %v3570, 5
      %v4408 = vsel %vm1214, %v4406, %v4407
      %v4409 = vrot.slane %v4273, 5
      %v4410 = vrot.slane %v4409, 4
      %v4411 = vrot.slane %v3572, 5
      %v4412 = vsel %vm1214, %v4410, %v4411
      %v4413 = vrot.slane %v4411, 4
      %v4414 = vrot.slane %v3573, 5
      %v4415 = vsel %vm1214, %v4413, %v4414
      %v4416 = vrot.slane %v4274, 5
      %v4417 = vrot.slane %v4416, 4
      %v4418 = vrot.slane %v3575, 5
      %v4419 = vsel %vm1214, %v4417, %v4418
      %v4420 = vrot.slane %v4418, 4
      %v4421 = vrot.slane %v3576, 5
      %v4422 = vsel %vm1214, %v4420, %v4421
      %v4423 = vrot.slane %v4275, 5
      %v4424 = vrot.slane %v4423, 4
      %v4425 = vrot.slane %v3578, 5
      %v4426 = vsel %vm1214, %v4424, %v4425
      %v4427 = vrot.slane %v4425, 4
      %v4428 = vrot.slane %v3579, 5
      %v4429 = vsel %vm1214, %v4427, %v4428
      %v4430 = vrot.slane %v4276, 5
      %v4431 = vrot.slane %v4430, 4
      %v4432 = vrot.slane %v3581, 5
      %v4433 = vsel %vm1214, %v4431, %v4432
      %v4434 = vrot.slane %v4432, 4
      %v4435 = vrot.slane %v3582, 5
      %v4436 = vsel %vm1214, %v4434, %v4435
      %s4437 = scalar_lea.vmem %s1, 16
      %v4438 = vld [vmem:[%s4437] sm:$0x3]
      %v4439 = vunpack.c.l.b16 %v4328
      %v4440 = vunpack.c.l.b16 %v4331
      %v4441 = vunpack.c.l.b16 %v4335
      %v4442 = vunpack.c.l.b16 %v4338
      %v4443 = vunpack.c.l.b16 %v4342
      %v4444 = vunpack.c.l.b16 %v4345
      %v4445 = vunpack.c.l.b16 %v4349
      %v4446 = vunpack.c.l.b16 %v4352
      %v4447 = vunpack.c.l.b16 %v4356
      %v4448 = vunpack.c.l.b16 %v4359
      %v4449 = vunpack.c.l.b16 %v4363
      %v4450 = vunpack.c.l.b16 %v4366
      %v4451 = vunpack.c.l.b16 %v4370
      %v4452 = vunpack.c.l.b16 %v4373
      %v4453 = vunpack.c.l.b16 %v4377
      %v4454 = vunpack.c.l.b16 %v4380
      %v4455 = vunpack.c.l.b16 %v4384
      %v4456 = vunpack.c.l.b16 %v4387
      %v4457 = vunpack.c.l.b16 %v4391
      %v4458 = vunpack.c.l.b16 %v4394
      %v4459 = vunpack.c.l.b16 %v4398
      %v4460 = vunpack.c.l.b16 %v4401
      %v4461 = vunpack.c.l.b16 %v4405
      %v4462 = vunpack.c.l.b16 %v4408
      %v4463 = vunpack.c.l.b16 %v4412
      %v4464 = vunpack.c.l.b16 %v4415
      %v4465 = vunpack.c.l.b16 %v4419
      %v4466 = vunpack.c.l.b16 %v4422
      %v4467 = vunpack.c.l.b16 %v4426
      %v4468 = vunpack.c.l.b16 %v4429
      %v4469 = vunpack.c.l.b16 %v4433
      %v4470 = vunpack.c.l.b16 %v4436
      %v4471 = vpack.c.b16 %v4440, %v4439
      %v4472 = vpack.c.b16 %v4442, %v4441
      %v4473 = vpack.c.b16 %v4444, %v4443
      %v4474 = vpack.c.b16 %v4446, %v4445
      %v4475 = vpack.c.b16 %v4448, %v4447
      %v4476 = vpack.c.b16 %v4450, %v4449
      %v4477 = vpack.c.b16 %v4452, %v4451
      %v4478 = vpack.c.b16 %v4454, %v4453
      %v4479 = vpack.c.b16 %v4456, %v4455
      %v4480 = vpack.c.b16 %v4458, %v4457
      %v4481 = vpack.c.b16 %v4460, %v4459
      %v4482 = vpack.c.b16 %v4462, %v4461
      %v4483 = vpack.c.b16 %v4464, %v4463
      %v4484 = vpack.c.b16 %v4466, %v4465
      %v4485 = vpack.c.b16 %v4468, %v4467
      %v4486 = vpack.c.b16 %v4470, %v4469
      %v4488 = vsel %vm658, %v4471, 0
      %v4491 = vsel %vm658, %v4472, 0
      %v4494 = vsel %vm658, %v4473, 0
      %v4497 = vsel %vm658, %v4474, 0
      %v4500 = vsel %vm658, %v4475, 0
      %v4503 = vsel %vm658, %v4476, 0
      %v4506 = vsel %vm658, %v4477, 0
      %v4509 = vsel %vm658, %v4478, 0
      %v4512 = vsel %vm658, %v4479, 0
      %v4515 = vsel %vm658, %v4480, 0
      %v4518 = vsel %vm658, %v4481, 0
      %v4521 = vsel %vm658, %v4482, 0
      %v4524 = vsel %vm658, %v4483, 0
      %v4527 = vsel %vm658, %v4484, 0
      %v4530 = vsel %vm658, %v4485, 0
      %v4533 = vsel %vm658, %v4486, 0
      %v4536 = vsel %vm707, %v4438, 0
      %4538 = vmatprep.subr.bf16.mxu0 0
      %4539 = vmatpush1.bf16.msra.mxu0 %v4536
      %4540 = vmatprep.subr.bf16.mxu0 0
      %4541 = vmatpush1.bf16.msra.mxu0 0
      %4542 = vmatprep.subr.bf16.mxu0 0
      %4543 = vmatpush1.bf16.msra.mxu0 0
      %4544 = vmatprep.subr.bf16.mxu0 0
      %4545 = vmatpush1.bf16.msra.mxu0 0
      %4546 = vmatprep.subr.bf16.mxu0 0
      %4547 = vmatpush1.bf16.msra.mxu0 0
      %4548 = vmatprep.subr.bf16.mxu0 0
      %4549 = vmatpush1.bf16.msra.mxu0 0
      %4550 = vmatprep.subr.bf16.mxu0 0
      %4551 = vmatpush1.bf16.msra.mxu0 0
      %4552 = vmatprep.subr.bf16.mxu0 0
      %4553 = vmatpush1.bf16.msra.mxu0 0
      %4554 = vmatprep.subr.bf16.mxu0 0
      %4555 = vmatpush1.bf16.msra.mxu0 0
      %4556 = vmatprep.subr.bf16.mxu0 0
      %4557 = vmatpush1.bf16.msra.mxu0 0
      %4558 = vmatprep.subr.bf16.mxu0 0
      %4559 = vmatpush1.bf16.msra.mxu0 0
      %4560 = vmatprep.subr.bf16.mxu0 0
      %4561 = vmatpush1.bf16.msra.mxu0 0
      %4562 = vmatprep.subr.bf16.mxu0 0
      %4563 = vmatpush1.bf16.msra.mxu0 0
      %4564 = vmatprep.subr.bf16.mxu0 0
      %4565 = vmatpush1.bf16.msra.mxu0 0
      %4566 = vmatprep.subr.bf16.mxu0 0
      %4567 = vmatpush1.bf16.msra.mxu0 0
      %4568 = vmatprep.subr.bf16.mxu0 0
      %4569 = vmatpush1.bf16.msra.mxu0 0
      %4570 = vmatprep.mubr.bf16.mxu0 0
      %4571 = vmatmul.mubr.bf16.gmra.mrb[0].mxu0 %v4488
      %v4572 = vpop.f32.mrb[0].mxu0
      %v4573 = vadd.f32 0.0, %v4572
      %v4574 = vpop.f32.mrb[0].mxu0
      %v4575 = vpop.f32.mrb[0].mxu0
      %v4576 = vadd.f32 0.0, %v4575
      %v4577 = vpop.f32.mrb[0].mxu0
      %4578 = vmatprep.mubr.bf16.mxu0 0
      %4579 = vmatmul.mubr.bf16.gmra.mrb[0].mxu0 %v4491
      %v4580 = vpop.f32.mrb[0].mxu0
      %v4581 = vadd.f32 0.0, %v4580
      %v4582 = vpop.f32.mrb[0].mxu0
      %v4583 = vpop.f32.mrb[0].mxu0
      %v4584 = vadd.f32 0.0, %v4583
      %v4585 = vpop.f32.mrb[0].mxu0
      %4586 = vmatprep.mubr.bf16.mxu0 0
      %4587 = vmatmul.mubr.bf16.gmra.mrb[0].mxu0 %v4494
      %v4588 = vpop.f32.mrb[0].mxu0
      %v4589 = vadd.f32 0.0, %v4588
      %v4590 = vpop.f32.mrb[0].mxu0
      %v4591 = vpop.f32.mrb[0].mxu0
      %v4592 = vadd.f32 0.0, %v4591
      %v4593 = vpop.f32.mrb[0].mxu0
      %4594 = vmatprep.mubr.bf16.mxu0 0
      %4595 = vmatmul.mubr.bf16.gmra.mrb[0].mxu0 %v4497
      %v4596 = vpop.f32.mrb[0].mxu0
      %v4597 = vadd.f32 0.0, %v4596
      %v4598 = vpop.f32.mrb[0].mxu0
      %v4599 = vpop.f32.mrb[0].mxu0
      %v4600 = vadd.f32 0.0, %v4599
      %v4601 = vpop.f32.mrb[0].mxu0
      %4602 = vmatprep.mubr.bf16.mxu0 0
      %4603 = vmatmul.mubr.bf16.gmra.mrb[0].mxu0 %v4500
      %v4604 = vpop.f32.mrb[0].mxu0
      %v4605 = vadd.f32 0.0, %v4604
      %v4606 = vpop.f32.mrb[0].mxu0
      %v4607 = vpop.f32.mrb[0].mxu0
      %v4608 = vadd.f32 0.0, %v4607
      %v4609 = vpop.f32.mrb[0].mxu0
      %4610 = vmatprep.mubr.bf16.mxu0 0
      %4611 = vmatmul.mubr.bf16.gmra.mrb[0].mxu0 %v4503
      %v4612 = vpop.f32.mrb[0].mxu0
      %v4613 = vadd.f32 0.0, %v4612
      %v4614 = vpop.f32.mrb[0].mxu0
      %v4615 = vpop.f32.mrb[0].mxu0
      %v4616 = vadd.f32 0.0, %v4615
      %v4617 = vpop.f32.mrb[0].mxu0
      %4618 = vmatprep.mubr.bf16.mxu0 0
      %4619 = vmatmul.mubr.bf16.gmra.mrb[0].mxu0 %v4506
      %v4620 = vpop.f32.mrb[0].mxu0
      %v4621 = vadd.f32 0.0, %v4620
      %v4622 = vpop.f32.mrb[0].mxu0
      %v4623 = vpop.f32.mrb[0].mxu0
      %v4624 = vadd.f32 0.0, %v4623
      %v4625 = vpop.f32.mrb[0].mxu0
      %4626 = vmatprep.mubr.bf16.mxu0 0
      %4627 = vmatmul.mubr.bf16.gmra.mrb[0].mxu0 %v4509
      %v4628 = vpop.f32.mrb[0].mxu0
      %v4629 = vadd.f32 0.0, %v4628
      %v4630 = vpop.f32.mrb[0].mxu0
      %v4631 = vpop.f32.mrb[0].mxu0
      %v4632 = vadd.f32 0.0, %v4631
      %v4633 = vpop.f32.mrb[0].mxu0
      %4634 = vmatprep.mubr.bf16.mxu0 0
      %4635 = vmatmul.mubr.bf16.gmra.mrb[0].mxu0 %v4512
      %v4636 = vpop.f32.mrb[0].mxu0
      %v4637 = vadd.f32 0.0, %v4636
      %v4638 = vpop.f32.mrb[0].mxu0
      %v4639 = vpop.f32.mrb[0].mxu0
      %v4640 = vadd.f32 0.0, %v4639
      %v4641 = vpop.f32.mrb[0].mxu0
      %4642 = vmatprep.mubr.bf16.mxu0 0
      %4643 = vmatmul.mubr.bf16.gmra.mrb[0].mxu0 %v4515
      %v4644 = vpop.f32.mrb[0].mxu0
      %v4645 = vadd.f32 0.0, %v4644
      %v4646 = vpop.f32.mrb[0].mxu0
      %v4647 = vpop.f32.mrb[0].mxu0
      %v4648 = vadd.f32 0.0, %v4647
      %v4649 = vpop.f32.mrb[0].mxu0
      %4650 = vmatprep.mubr.bf16.mxu0 0
      %4651 = vmatmul.mubr.bf16.gmra.mrb[0].mxu0 %v4518
      %v4652 = vpop.f32.mrb[0].mxu0
      %v4653 = vadd.f32 0.0, %v4652
      %v4654 = vpop.f32.mrb[0].mxu0
      %v4655 = vpop.f32.mrb[0].mxu0
      %v4656 = vadd.f32 0.0, %v4655
      %v4657 = vpop.f32.mrb[0].mxu0
      %4658 = vmatprep.mubr.bf16.mxu0 0
      %4659 = vmatmul.mubr.bf16.gmra.mrb[0].mxu0 %v4521
      %v4660 = vpop.f32.mrb[0].mxu0
      %v4661 = vadd.f32 0.0, %v4660
      %v4662 = vpop.f32.mrb[0].mxu0
      %v4663 = vpop.f32.mrb[0].mxu0
      %v4664 = vadd.f32 0.0, %v4663
      %v4665 = vpop.f32.mrb[0].mxu0
      %4666 = vmatprep.mubr.bf16.mxu0 0
      %4667 = vmatmul.mubr.bf16.gmra.mrb[0].mxu0 %v4524
      %v4668 = vpop.f32.mrb[0].mxu0
      %v4669 = vadd.f32 0.0, %v4668
      %v4670 = vpop.f32.mrb[0].mxu0
      %v4671 = vpop.f32.mrb[0].mxu0
      %v4672 = vadd.f32 0.0, %v4671
      %v4673 = vpop.f32.mrb[0].mxu0
      %4674 = vmatprep.mubr.bf16.mxu0 0
      %4675 = vmatmul.mubr.bf16.gmra.mrb[0].mxu0 %v4527
      %v4676 = vpop.f32.mrb[0].mxu0
      %v4677 = vadd.f32 0.0, %v4676
      %v4678 = vpop.f32.mrb[0].mxu0
      %v4679 = vpop.f32.mrb[0].mxu0
      %v4680 = vadd.f32 0.0, %v4679
      %v4681 = vpop.f32.mrb[0].mxu0
      %4682 = vmatprep.mubr.bf16.mxu0 0
      %4683 = vmatmul.mubr.bf16.gmra.mrb[0].mxu0 %v4530
      %v4684 = vpop.f32.mrb[0].mxu0
      %v4685 = vadd.f32 0.0, %v4684
      %v4686 = vpop.f32.mrb[0].mxu0
      %v4687 = vpop.f32.mrb[0].mxu0
      %v4688 = vadd.f32 0.0, %v4687
      %v4689 = vpop.f32.mrb[0].mxu0
      %4690 = vmatprep.mubr.bf16.mxu0 0
      %4691 = vmatmul.mubr.bf16.gmra.mrb[0].mxu0 %v4533
      %v4692 = vpop.f32.mrb[0].mxu0
      %v4693 = vadd.f32 0.0, %v4692
      %v4694 = vpop.f32.mrb[0].mxu0
      %v4695 = vpop.f32.mrb[0].mxu0
      %v4696 = vadd.f32 0.0, %v4695
      %v4697 = vpop.f32.mrb[0].mxu0
      %4698 = vdwg.mxu0
      %v4699 = vadd.f32 %v4229, %v4573
      %v4700 = vadd.f32 %v4230, %v4576
      %v4701 = vadd.f32 %v4231, %v4581
      %v4702 = vadd.f32 %v4232, %v4584
      %v4703 = vadd.f32 %v4233, %v4589
      %v4704 = vadd.f32 %v4234, %v4592
      %v4705 = vadd.f32 %v4235, %v4597
      %v4706 = vadd.f32 %v4236, %v4600
      %v4707 = vadd.f32 %v4237, %v4605
      %v4708 = vadd.f32 %v4238, %v4608
      %v4709 = vadd.f32 %v4239, %v4613
      %v4710 = vadd.f32 %v4240, %v4616
      %v4711 = vadd.f32 %v4241, %v4621
      %v4712 = vadd.f32 %v4242, %v4624
      %v4713 = vadd.f32 %v4243, %v4629
      %v4714 = vadd.f32 %v4244, %v4632
      %v4715 = vadd.f32 %v4245, %v4637
      %v4716 = vadd.f32 %v4246, %v4640
      %v4717 = vadd.f32 %v4247, %v4645
      %v4718 = vadd.f32 %v4248, %v4648
      %v4719 = vadd.f32 %v4249, %v4653
      %v4720 = vadd.f32 %v4250, %v4656
      %v4721 = vadd.f32 %v4251, %v4661
      %v4722 = vadd.f32 %v4252, %v4664
      %v4723 = vadd.f32 %v4253, %v4669
      %v4724 = vadd.f32 %v4254, %v4672
      %v4725 = vadd.f32 %v4255, %v4677
      %v4726 = vadd.f32 %v4256, %v4680
      %v4727 = vadd.f32 %v4257, %v4685
      %v4728 = vadd.f32 %v4258, %v4688
      %v4729 = vadd.f32 %v4259, %v4693
      %v4730 = vadd.f32 %v4260, %v4696
      %v4731 = vld [vmem:[%s2] sm:$0x1]
      %v4733 = vlaneseq
      %v4734 = vshrl.u32 %v4733, 7
      %v4735 = vsub.s32 0, %v4734
      %v4736 = vrot.slane %v4731, %v4735
      %v4738 = vadd.f32 %v4699, %v4736
      %v4739 = vadd.f32 %v4700, %v4736
      %v4740 = vadd.f32 %v4701, %v4736
      %v4741 = vadd.f32 %v4702, %v4736
      %v4742 = vadd.f32 %v4703, %v4736
      %v4743 = vadd.f32 %v4704, %v4736
      %v4744 = vadd.f32 %v4705, %v4736
      %v4745 = vadd.f32 %v4706, %v4736
      %v4746 = vadd.f32 %v4707, %v4736
      %v4747 = vadd.f32 %v4708, %v4736
      %v4748 = vadd.f32 %v4709, %v4736
      %v4749 = vadd.f32 %v4710, %v4736
      %v4750 = vadd.f32 %v4711, %v4736
      %v4751 = vadd.f32 %v4712, %v4736
      %v4752 = vadd.f32 %v4713, %v4736
      %v4753 = vadd.f32 %v4714, %v4736
      %v4754 = vadd.f32 %v4715, %v4736
      %v4755 = vadd.f32 %v4716, %v4736
      %v4756 = vadd.f32 %v4717, %v4736
      %v4757 = vadd.f32 %v4718, %v4736
      %v4758 = vadd.f32 %v4719, %v4736
      %v4759 = vadd.f32 %v4720, %v4736
      %v4760 = vadd.f32 %v4721, %v4736
      %v4761 = vadd.f32 %v4722, %v4736
      %v4762 = vadd.f32 %v4723, %v4736
      %v4763 = vadd.f32 %v4724, %v4736
      %v4764 = vadd.f32 %v4725, %v4736
      %v4765 = vadd.f32 %v4726, %v4736
      %v4766 = vadd.f32 %v4727, %v4736
      %v4767 = vadd.f32 %v4728, %v4736
      %v4768 = vadd.f32 %v4729, %v4736
      %v4769 = vadd.f32 %v4730, %v4736
      %v4770 = vmax.f32 %v4738, 0.0
      %v4771 = vmax.f32 %v4739, 0.0
      %v4772 = vmax.f32 %v4740, 0.0
      %v4773 = vmax.f32 %v4741, 0.0
      %v4774 = vmax.f32 %v4742, 0.0
      %v4775 = vmax.f32 %v4743, 0.0
      %v4776 = vmax.f32 %v4744, 0.0
      %v4777 = vmax.f32 %v4745, 0.0
      %v4778 = vmax.f32 %v4746, 0.0
      %v4779 = vmax.f32 %v4747, 0.0
      %v4780 = vmax.f32 %v4748, 0.0
      %v4781 = vmax.f32 %v4749, 0.0
      %v4782 = vmax.f32 %v4750, 0.0
      %v4783 = vmax.f32 %v4751, 0.0
      %v4784 = vmax.f32 %v4752, 0.0
      %v4785 = vmax.f32 %v4753, 0.0
      %v4786 = vmax.f32 %v4754, 0.0
      %v4787 = vmax.f32 %v4755, 0.0
      %v4788 = vmax.f32 %v4756, 0.0
      %v4789 = vmax.f32 %v4757, 0.0
      %v4790 = vmax.f32 %v4758, 0.0
      %v4791 = vmax.f32 %v4759, 0.0
      %v4792 = vmax.f32 %v4760, 0.0
      %v4793 = vmax.f32 %v4761, 0.0
      %v4794 = vmax.f32 %v4762, 0.0
      %v4795 = vmax.f32 %v4763, 0.0
      %v4796 = vmax.f32 %v4764, 0.0
      %v4797 = vmax.f32 %v4765, 0.0
      %v4798 = vmax.f32 %v4766, 0.0
      %v4799 = vmax.f32 %v4767, 0.0
      %v4800 = vmax.f32 %v4768, 0.0
      %v4801 = vmax.f32 %v4769, 0.0
      %vm4802 = vcmask 261120
      %4803 = vst.msk [vmem:[%s170] sm:$0xff] %vm4802, %v4770
      %4804 = vst.msk [vmem:[%s170 + $0x8] sm:$0xff] %vm4802, %v4771
      %4805 = vst.msk [vmem:[%s170 + $0x10] sm:$0xff] %vm4802, %v4772
      %4806 = vst.msk [vmem:[%s170 + $0x18] sm:$0xff] %vm4802, %v4773
      %4807 = vst.msk [vmem:[%s170 + $0x20] sm:$0xff] %vm4802, %v4774
      %4808 = vst.msk [vmem:[%s170 + $0x28] sm:$0xff] %vm4802, %v4775
      %4809 = vst.msk [vmem:[%s170 + $0x30] sm:$0xff] %vm4802, %v4776
      %4810 = vst.msk [vmem:[%s170 + $0x38] sm:$0xff] %vm4802, %v4777
      %4811 = vst.msk [vmem:[%s170 + $0x40] sm:$0xff] %vm4802, %v4778
      %4812 = vst.msk [vmem:[%s170 + $0x48] sm:$0xff] %vm4802, %v4779
      %4813 = vst.msk [vmem:[%s170 + $0x50] sm:$0xff] %vm4802, %v4780
      %4814 = vst.msk [vmem:[%s170 + $0x58] sm:$0xff] %vm4802, %v4781
      %4815 = vst.msk [vmem:[%s170 + $0x60] sm:$0xff] %vm4802, %v4782
      %4816 = vst.msk [vmem:[%s170 + $0x68] sm:$0xff] %vm4802, %v4783
      %4817 = vst.msk [vmem:[%s170 + $0x70] sm:$0xff] %vm4802, %v4784
      %4818 = vst.msk [vmem:[%s170 + $0x78] sm:$0xff] %vm4802, %v4785
      %4819 = vst.msk [vmem:[%s170 + $0x80] sm:$0xff] %vm4802, %v4786
      %4820 = vst.msk [vmem:[%s170 + $0x88] sm:$0xff] %vm4802, %v4787
      %4821 = vst.msk [vmem:[%s170 + $0x90] sm:$0xff] %vm4802, %v4788
      %4822 = vst.msk [vmem:[%s170 + $0x98] sm:$0xff] %vm4802, %v4789
      %4823 = vst.msk [vmem:[%s170 + $0xa0] sm:$0xff] %vm4802, %v4790
      %4824 = vst.msk [vmem:[%s170 + $0xa8] sm:$0xff] %vm4802, %v4791
      %4825 = vst.msk [vmem:[%s170 + $0xb0] sm:$0xff] %vm4802, %v4792
      %4826 = vst.msk [vmem:[%s170 + $0xb8] sm:$0xff] %vm4802, %v4793
      %4827 = vst.msk [vmem:[%s170 + $0xc0] sm:$0xff] %vm4802, %v4794
      %4828 = vst.msk [vmem:[%s170 + $0xc8] sm:$0xff] %vm4802, %v4795
      %4829 = vst.msk [vmem:[%s170 + $0xd0] sm:$0xff] %vm4802, %v4796
      %4830 = vst.msk [vmem:[%s170 + $0xd8] sm:$0xff] %vm4802, %v4797
      %4831 = vst.msk [vmem:[%s170 + $0xe0] sm:$0xff] %vm4802, %v4798
      %4832 = vst.msk [vmem:[%s170 + $0xe8] sm:$0xff] %vm4802, %v4799
      %4833 = vst.msk [vmem:[%s170 + $0xf0] sm:$0xff] %vm4802, %v4800
      %4834 = vst.msk [vmem:[%s170 + $0xf8] sm:$0xff] %vm4802, %v4801
      %p4835 = scmp.lt.s32.totalorder %s14, 1
      %s4836 = scalar_select %p4835, %s14, 1
      %s4837 = smul.addr %s4836, 32
      %s4838 = smul.addr %s4837, 8
      %s4839 = scalar_lea.vmem %s3, %s4838
      // Predicated region
      $region33: #{deconv_block_forward.3} parent=31 // pred_check
        %p4840 = pneg %p100
      $region34: #{deconv_block_forward.3} parent=31 // pred_check_branch
        %4842 = sbr.rel (%p4840) target = $region36
      $region35: #{deconv_block_forward.3} parent=31 // pred_region
        _
      $region36: #{deconv_block_forward.3} parent=31 // pred_fallthru
        _
    $region32: #{deconv_block_forward.3} parent=5 // pred_fallthru
      _
    %p4843 = scmp.le.s32.totalorder 2, %s9
    // Predicated region
    $region37: #{deconv_block_forward.3} parent=5 // pred_check
      %p4844 = pneg %p4843
    $region38: #{deconv_block_forward.3} parent=5 // pred_check_branch
      %4846 = sbr.rel (%p4844) target = $region40
    $region39: #{deconv_block_forward.3} parent=5 // pred_region
      %s4847 = ssub.s32 %s9, 2
      // Predicated region
      $region41: #{deconv_block_forward.3} parent=39 // pred_check
        %p4848 = pneg %p106
      $region42: #{deconv_block_forward.3} parent=39 // pred_check_branch
        %4850 = sbr.rel (%p4848) target = $region44
      $region43: #{deconv_block_forward.3} parent=39 // pred_region
        %p4851 = scmp.lt.s32.totalorder %s15, 1
        %s4852 = scalar_select %p4851, %s15, 1
        %s4853 = smul.addr %s4852, 32
        %s4854 = smul.addr %s4853, 8
        %s4855 = scalar_lea.vmem %s3, %s4854
      $region44: #{deconv_block_forward.3} parent=39 // pred_fallthru
        _
    $region40: #{deconv_block_forward.3} parent=5 // pred_fallthru
      _
  $region6: #{deconv_block_forward.3} parent=0 // loop_footer
    %s13 = sadd.s32 1, %s9
  $region7: #{deconv_block_forward.3} parent=0 // loop_footer_branch
    %8 = sbr.rel target = $region3
  $region8: #{deconv_block_forward.3} parent=0 // loop_exit
    _

// kernel: deconv_block_forward.2
$region0: #{deconv_block_forward.2}
  #allocation0 [shape = 'u32[]', space=smem, size = 0x4, offset = 0x4, fixed_abs, tag = 'smem constant byte address 0x4 - core index']
  #allocation1 [shape = 'u32[144,128]{1,0:T(1,128)}', space=vmem, size = 0x12000, scoped, tag = 'internal scratch']
  %s0 = inlined_call_operand.vmem [shape: bf16[2,18,18,4], index: 0, kind: input, shape index: {}]
  %s1 = inlined_call_operand.vmem [shape: bf16[9,4,32], index: 1, kind: input, shape index: {}]
  %s2 = inlined_call_operand.vmem [shape: f32[2,8,32], index: 2, kind: output, shape index: {}]
  %s3 = sld [smem:[#allocation0]]
  $region41: #{deconv_block_forward.2} parent=0
    _
  %s5 = ssub.s32 1, %s3
  %s6 = scalar_select 0, %s5, %s3
  loop: start=0, step=1, limit=4
  $region2: #{deconv_block_forward.2} parent=0 // loop_pre_header
    _
  $region3: #{deconv_block_forward.2} parent=0 // loop_header
    %s8 = sphi 0, %s12
    %p9 = scmp.ge.s32.totalorder %s8, 4
    %s18 = sphi 0, %s20
    %s21 = sphi 0, %s18
    %s22 = sphi 0, %s21
    %s38 = sphi 0, %s22
    %s42 = sphi 0, %s42
    %s44 = sphi 0, %s42
    %s45 = sphi 0, %s44
    %s59 = sphi 0, %s45
    %s65 = sphi 0, %s67
    %s68 = sphi 0, %s65
    %s69 = sphi 0, %s68
    %s85 = sphi 0, %s69
  $region4: #{deconv_block_forward.2} parent=0 // loop_header_branch
    %11 = sbr.rel (%p9) target = $region8
  $region5: #{deconv_block_forward.2} parent=0 // loop_body
    %s13 = ssub.s32 %s8, 1
    %s14 = ssub.s32 %s8, 2
    %s15 = sadd.s32 %s8, 1
    %s16 = ssub.s32 %s8, %s15
    %p17 = scmp.eq.s32.totalorder %s16, 0
    %s19 = sadd.s32 %s18, 1
    %s20 = scalar_select %p17, %s18, %s19
    %p23 = pneg %p17
    %p24 = scmp.eq.s32.totalorder %s8, 1
    %p25 = por %p23, %p24
    %p26 = scmp.ne.s32.totalorder %s18, %s21
    %p27 = scmp.eq.s32.totalorder %s8, 0
    %p28 = por %p26, %p27
    %p29 = scmp.ne.s32.totalorder %s18, %s21
    %p30 = scmp.eq.s32.totalorder %s13, 1
    %p31 = por %p29, %p30
    %p32 = scmp.ne.s32.totalorder %s21, %s22
    %p33 = scmp.eq.s32.totalorder %s13, 0
    %p34 = por %p32, %p33
    %p35 = scmp.ne.s32.totalorder %s21, %s22
    %p36 = scmp.eq.s32.totalorder %s14, 1
    %p37 = por %p35, %p36
    %p39 = scmp.ne.s32.totalorder %s22, %s38
    %p40 = scmp.eq.s32.totalorder %s14, 0
    %p41 = por %p39, %p40
    %s43 = sadd.s32 %s42, 1
    %p46 = scmp.eq.s32.totalorder %s8, 1
    %p47 = scmp.ne.s32.totalorder %s42, %s44
    %p48 = scmp.eq.s32.totalorder %s8, 0
    %p49 = por %p47, %p48
    %p50 = scmp.ne.s32.totalorder %s42, %s44
    %p51 = scmp.eq.s32.totalorder %s13, 1
    %p52 = por %p50, %p51
    %p53 = scmp.ne.s32.totalorder %s44, %s45
    %p54 = scmp.eq.s32.totalorder %s13, 0
    %p55 = por %p53, %p54
    %p56 = scmp.ne.s32.totalorder %s44, %s45
    %p57 = scmp.eq.s32.totalorder %s14, 1
    %p58 = por %p56, %p57
    %p60 = scmp.ne.s32.totalorder %s45, %s59
    %p61 = scmp.eq.s32.totalorder %s14, 0
    %p62 = por %p60, %p61
    %s63 = ssub.s32 %s8, %s15
    %p64 = scmp.eq.s32.totalorder %s63, 0
    %s66 = sadd.s32 %s65, 1
    %s67 = scalar_select %p64, %s65, %s66
    %p70 = pneg %p64
    %p71 = scmp.eq.s32.totalorder %s8, 1
    %p72 = por %p70, %p71
    %p73 = scmp.ne.s32.totalorder %s65, %s68
    %p74 = scmp.eq.s32.totalorder %s8, 0
    %p75 = por %p73, %p74
    %p76 = scmp.ne.s32.totalorder %s65, %s68
    %p77 = scmp.eq.s32.totalorder %s13, 1
    %p78 = por %p76, %p77
    %p79 = scmp.ne.s32.totalorder %s68, %s69
    %p80 = scmp.eq.s32.totalorder %s13, 0
    %p81 = por %p79, %p80
    %p82 = scmp.ne.s32.totalorder %s68, %s69
    %p83 = scmp.eq.s32.totalorder %s14, 1
    %p84 = por %p82, %p83
    %p86 = scmp.ne.s32.totalorder %s69, %s85
    %p87 = scmp.eq.s32.totalorder %s14, 0
    %p88 = por %p86, %p87
    %p89 = scmp.le.s32.totalorder 1, %s8
    %p90 = scmp.lt.s32.totalorder %s8, 3
    %p91 = pnand %p89, %p90
    %p92 = pneg %p91
    // Predicated region
    $region9: #{deconv_block_forward.2} parent=5 // pred_check
      _
    $region10: #{deconv_block_forward.2} parent=5 // pred_check_branch
      %94 = sbr.rel (%p91) target = $region12
    $region11: #{deconv_block_forward.2} parent=5 // pred_region
      %s95 = ssub.s32 %s8, 1
      // Predicated region
      $region13: #{deconv_block_forward.2} parent=11 // pred_check
        %p96 = pneg %p55
      $region14: #{deconv_block_forward.2} parent=11 // pred_check_branch
        %98 = sbr.rel (%p96) target = $region16
      $region15: #{deconv_block_forward.2} parent=11 // pred_region
        _
      $region16: #{deconv_block_forward.2} parent=11 // pred_fallthru
        _
    $region12: #{deconv_block_forward.2} parent=5 // pred_fallthru
      _
    %p99 = scmp.lt.s32.totalorder %s8, 2
    // Predicated region
    $region17: #{deconv_block_forward.2} parent=5 // pred_check
      %p100 = pneg %p99
    $region18: #{deconv_block_forward.2} parent=5 // pred_check_branch
      %102 = sbr.rel (%p100) target = $region20
    $region19: #{deconv_block_forward.2} parent=5 // pred_region
      // Predicated region
      $region21: #{deconv_block_forward.2} parent=19 // pred_check
        %p103 = pneg %p28
      $region22: #{deconv_block_forward.2} parent=19 // pred_check_branch
        %105 = sbr.rel (%p103) target = $region24
      $region23: #{deconv_block_forward.2} parent=19 // pred_region
        %p106 = scmp.lt.s32.totalorder %s8, 1
        %s107 = scalar_select %p106, %s8, 1
        %s108 = smul.addr %s107, 54
        %s109 = smul.addr %s108, 4
        %s110 = scalar_lea.vmem %s0, %s109
      $region24: #{deconv_block_forward.2} parent=19 // pred_fallthru
        _
    $region20: #{deconv_block_forward.2} parent=5 // pred_fallthru
      _
    %p111 = scmp.le.s32.totalorder 1, %s8
    %p112 = scmp.lt.s32.totalorder %s8, 3
    %p113 = pnand %p111, %p112
    %p114 = pneg %p113
    // Predicated region
    $region25: #{deconv_block_forward.2} parent=5 // pred_check
      _
    $region26: #{deconv_block_forward.2} parent=5 // pred_check_branch
      %116 = sbr.rel (%p113) target = $region28
    $region27: #{deconv_block_forward.2} parent=5 // pred_region
      %s117 = ssub.s32 %s8, 1
      %p118 = scmp.lt.s32.totalorder %s13, 1
      %s119 = scalar_select %p118, %s13, 1
      %s120 = smul.addr %s119, 54
      %s121 = smul.addr %s120, 4
      %s122 = scalar_lea.vmem %s0, %s121
      %p123 = pneg %p34
      %p124 = pneg %p31
      %p125 = pneg %p55
      %p126 = pneg %p52
      %p127 = pneg %p81
      %p128 = pneg %p78
      %p129 = scmp.lt.s32.totalorder %s13, 1
      %s130 = scalar_select %p129, %s13, 1
      %s131 = smul.addr %s130, 8
      %s132 = scalar_lea.vmem %s2, %s131
      %p133 = scmp.lt.s32.totalorder %s13, 1
      %s134 = scalar_select %p133, %s13, 1
      %s135 = smul.addr %s134, 54
      %s136 = smul.addr %s135, 4
      %s137 = scalar_lea.vmem %s0, %s136
      %p138 = scmp.lt.s32.totalorder %s13, 1
      %s139 = scalar_select %p138, %s13, 1
      %s140 = smul.addr %s139, 8
      %s141 = scalar_lea.vmem %s2, %s140
      %v143 = vld [vmem:[%s137] sm:$0xf]
      %v144 = vld [vmem:[%s137 + $0x4] sm:$0xf]
      %v145 = vld [vmem:[%s137 + $0xc] sm:$0xf]
      %v146 = vld [vmem:[%s137 + $0x10] sm:$0xf]
      %v147 = vld [vmem:[%s137 + $0x18] sm:$0xf]
      %v148 = vld [vmem:[%s137 + $0x1c] sm:$0xf]
      %v149 = vld [vmem:[%s137 + $0x24] sm:$0xf]
      %v150 = vld [vmem:[%s137 + $0x28] sm:$0xf]
      %v151 = vld [vmem:[%s137 + $0x30] sm:$0xf]
      %v152 = vld [vmem:[%s137 + $0x34] sm:$0xf]
      %v153 = vld [vmem:[%s137 + $0x3c] sm:$0xf]
      %v154 = vld [vmem:[%s137 + $0x40] sm:$0xf]
      %v155 = vld [vmem:[%s137 + $0x48] sm:$0xf]
      %v156 = vld [vmem:[%s137 + $0x4c] sm:$0xf]
      %v157 = vld [vmem:[%s137 + $0x54] sm:$0xf]
      %v158 = vld [vmem:[%s137 + $0x58] sm:$0xf]
      %v159 = vld [vmem:[%s137 + $0x60] sm:$0xf]
      %v160 = vld [vmem:[%s137 + $0x64] sm:$0xf]
      %v161 = vld [vmem:[%s137 + $0x6c] sm:$0xf]
      %v162 = vld [vmem:[%s137 + $0x70] sm:$0xf]
      %v163 = vld [vmem:[%s137 + $0x78] sm:$0xf]
      %v164 = vld [vmem:[%s137 + $0x7c] sm:$0xf]
      %v165 = vld [vmem:[%s137 + $0x84] sm:$0xf]
      %v166 = vld [vmem:[%s137 + $0x88] sm:$0xf]
      %v167 = vld [vmem:[%s137 + $0x90] sm:$0xf]
      %v168 = vld [vmem:[%s137 + $0x94] sm:$0xf]
      %v169 = vld [vmem:[%s137 + $0x9c] sm:$0xf]
      %v170 = vld [vmem:[%s137 + $0xa0] sm:$0xf]
      %v171 = vld [vmem:[%s137 + $0xa8] sm:$0xf]
      %v172 = vld [vmem:[%s137 + $0xac] sm:$0xf]
      %v173 = vld [vmem:[%s137 + $0xb4] sm:$0xf]
      %v174 = vld [vmem:[%s137 + $0xb8] sm:$0xf]
      %v175 = vld [vmem:[%s1] sm:$0x3]
      %v176 = vld [vmem:[%s137 + $0x8] sm:$0x1]
      %v177 = vld [vmem:[%s137 + $0x14] sm:$0x1]
      %v178 = vld [vmem:[%s137 + $0x20] sm:$0x1]
      %v179 = vld [vmem:[%s137 + $0x2c] sm:$0x1]
      %v180 = vld [vmem:[%s137 + $0x38] sm:$0x1]
      %v181 = vld [vmem:[%s137 + $0x44] sm:$0x1]
      %v182 = vld [vmem:[%s137 + $0x50] sm:$0x1]
      %v183 = vld [vmem:[%s137 + $0x5c] sm:$0x1]
      %v184 = vld [vmem:[%s137 + $0x68] sm:$0x1]
      %v185 = vld [vmem:[%s137 + $0x74] sm:$0x1]
      %v186 = vld [vmem:[%s137 + $0x80] sm:$0x1]
      %v187 = vld [vmem:[%s137 + $0x8c] sm:$0x1]
      %v188 = vld [vmem:[%s137 + $0x98] sm:$0x1]
      %v189 = vld [vmem:[%s137 + $0xa4] sm:$0x1]
      %v190 = vld [vmem:[%s137 + $0xb0] sm:$0x1]
      %v191 = vld [vmem:[%s137 + $0xbc] sm:$0x1]
      %vm192 = vsmask.f32 3328
      %vm193 = vsmask.f32 7440
      %vm194 = vmor %vm192, %vm193
      %v196 = vshrl.u32 %v143, 16
      %v198 = vrot.slane %v196, 4
      %v199 = vshll.u32 %v143, 16
      %v201 = vrot.slane %v199, 5
      %v202 = vor.u32 %v198, %v201
      %v203 = vrot.slane %v202, 4
      %v205 = vshll.u32 %v144, 16
      %v207 = vrot.slane %v205, 5
      %v208 = vsel %vm194, %v203, %v207
      %v209 = vshrl.u32 %v144, 16
      %v211 = vrot.slane %v209, 4
      %v212 = vor.u32 %v211, %v207
      %v213 = vrot.slane %v212, 4
      %v215 = vshll.u32 %v176, 16
      %v217 = vrot.slane %v215, 5
      %v218 = vsel %vm194, %v213, %v217
      %v220 = vshrl.u32 %v145, 16
      %v222 = vrot.slane %v220, 4
      %v223 = vshll.u32 %v145, 16
      %v225 = vrot.slane %v223, 5
      %v226 = vor.u32 %v222, %v225
      %v227 = vrot.slane %v226, 4
      %v229 = vshll.u32 %v146, 16
      %v231 = vrot.slane %v229, 5
      %v232 = vsel %vm194, %v227, %v231
      %v233 = vshrl.u32 %v146, 16
      %v235 = vrot.slane %v233, 4
      %v236 = vor.u32 %v235, %v231
      %v237 = vrot.slane %v236, 4
      %v239 = vshll.u32 %v177, 16
      %v241 = vrot.slane %v239, 5
      %v242 = vsel %vm194, %v237, %v241
      %v244 = vshrl.u32 %v147, 16
      %v246 = vrot.slane %v244, 4
      %v247 = vshll.u32 %v147, 16
      %v249 = vrot.slane %v247, 5
      %v250 = vor.u32 %v246, %v249
      %v251 = vrot.slane %v250, 4
      %v253 = vshll.u32 %v148, 16
      %v255 = vrot.slane %v253, 5
      %v256 = vsel %vm194, %v251, %v255
      %v257 = vshrl.u32 %v148, 16
      %v259 = vrot.slane %v257, 4
      %v260 = vor.u32 %v259, %v255
      %v261 = vrot.slane %v260, 4
      %v263 = vshll.u32 %v178, 16
      %v265 = vrot.slane %v263, 5
      %v266 = vsel %vm194, %v261, %v265
      %v268 = vshrl.u32 %v149, 16
      %v270 = vrot.slane %v268, 4
      %v271 = vshll.u32 %v149, 16
      %v273 = vrot.slane %v271, 5
      %v274 = vor.u32 %v270, %v273
      %v275 = vrot.slane %v274, 4
      %v277 = vshll.u32 %v150, 16
      %v279 = vrot.slane %v277, 5
      %v280 = vsel %vm194, %v275, %v279
      %v281 = vshrl.u32 %v150, 16
      %v283 = vrot.slane %v281, 4
      %v284 = vor.u32 %v283, %v279
      %v285 = vrot.slane %v284, 4
      %v287 = vshll.u32 %v179, 16
      %v289 = vrot.slane %v287, 5
      %v290 = vsel %vm194, %v285, %v289
      %v292 = vshrl.u32 %v151, 16
      %v294 = vrot.slane %v292, 4
      %v295 = vshll.u32 %v151, 16
      %v297 = vrot.slane %v295, 5
      %v298 = vor.u32 %v294, %v297
      %v299 = vrot.slane %v298, 4
      %v301 = vshll.u32 %v152, 16
      %v303 = vrot.slane %v301, 5
      %v304 = vsel %vm194, %v299, %v303
      %v305 = vshrl.u32 %v152, 16
      %v307 = vrot.slane %v305, 4
      %v308 = vor.u32 %v307, %v303
      %v309 = vrot.slane %v308, 4
      %v311 = vshll.u32 %v180, 16
      %v313 = vrot.slane %v311, 5
      %v314 = vsel %vm194, %v309, %v313
      %v316 = vshrl.u32 %v153, 16
      %v318 = vrot.slane %v316, 4
      %v319 = vshll.u32 %v153, 16
      %v321 = vrot.slane %v319, 5
      %v322 = vor.u32 %v318, %v321
      %v323 = vrot.slane %v322, 4
      %v325 = vshll.u32 %v154, 16
      %v327 = vrot.slane %v325, 5
      %v328 = vsel %vm194, %v323, %v327
      %v329 = vshrl.u32 %v154, 16
      %v331 = vrot.slane %v329, 4
      %v332 = vor.u32 %v331, %v327
      %v333 = vrot.slane %v332, 4
      %v335 = vshll.u32 %v181, 16
      %v337 = vrot.slane %v335, 5
      %v338 = vsel %vm194, %v333, %v337
      %v340 = vshrl.u32 %v155, 16
      %v342 = vrot.slane %v340, 4
      %v343 = vshll.u32 %v155, 16
      %v345 = vrot.slane %v343, 5
      %v346 = vor.u32 %v342, %v345
      %v347 = vrot.slane %v346, 4
      %v349 = vshll.u32 %v156, 16
      %v351 = vrot.slane %v349, 5
      %v352 = vsel %vm194, %v347, %v351
      %v353 = vshrl.u32 %v156, 16
      %v355 = vrot.slane %v353, 4
      %v356 = vor.u32 %v355, %v351
      %v357 = vrot.slane %v356, 4
      %v359 = vshll.u32 %v182, 16
      %v361 = vrot.slane %v359, 5
      %v362 = vsel %vm194, %v357, %v361
      %v364 = vshrl.u32 %v157, 16
      %v366 = vrot.slane %v364, 4
      %v367 = vshll.u32 %v157, 16
      %v369 = vrot.slane %v367, 5
      %v370 = vor.u32 %v366, %v369
      %v371 = vrot.slane %v370, 4
      %v373 = vshll.u32 %v158, 16
      %v375 = vrot.slane %v373, 5
      %v376 = vsel %vm194, %v371, %v375
      %v377 = vshrl.u32 %v158, 16
      %v379 = vrot.slane %v377, 4
      %v380 = vor.u32 %v379, %v375
      %v381 = vrot.slane %v380, 4
      %v383 = vshll.u32 %v183, 16
      %v385 = vrot.slane %v383, 5
      %v386 = vsel %vm194, %v381, %v385
      %v388 = vshrl.u32 %v159, 16
      %v390 = vrot.slane %v388, 4
      %v391 = vshll.u32 %v159, 16
      %v393 = vrot.slane %v391, 5
      %v394 = vor.u32 %v390, %v393
      %v395 = vrot.slane %v394, 4
      %v397 = vshll.u32 %v160, 16
      %v399 = vrot.slane %v397, 5
      %v400 = vsel %vm194, %v395, %v399
      %v401 = vshrl.u32 %v160, 16
      %v403 = vrot.slane %v401, 4
      %v404 = vor.u32 %v403, %v399
      %v405 = vrot.slane %v404, 4
      %v407 = vshll.u32 %v184, 16
      %v409 = vrot.slane %v407, 5
      %v410 = vsel %vm194, %v405, %v409
      %v412 = vshrl.u32 %v161, 16
      %v414 = vrot.slane %v412, 4
      %v415 = vshll.u32 %v161, 16
      %v417 = vrot.slane %v415, 5
      %v418 = vor.u32 %v414, %v417
      %v419 = vrot.slane %v418, 4
      %v421 = vshll.u32 %v162, 16
      %v423 = vrot.slane %v421, 5
      %v424 = vsel %vm194, %v419, %v423
      %v425 = vshrl.u32 %v162, 16
      %v427 = vrot.slane %v425, 4
      %v428 = vor.u32 %v427, %v423
      %v429 = vrot.slane %v428, 4
      %v431 = vshll.u32 %v185, 16
      %v433 = vrot.slane %v431, 5
      %v434 = vsel %vm194, %v429, %v433
      %v436 = vshrl.u32 %v163, 16
      %v438 = vrot.slane %v436, 4
      %v439 = vshll.u32 %v163, 16
      %v441 = vrot.slane %v439, 5
      %v442 = vor.u32 %v438, %v441
      %v443 = vrot.slane %v442, 4
      %v445 = vshll.u32 %v164, 16
      %v447 = vrot.slane %v445, 5
      %v448 = vsel %vm194, %v443, %v447
      %v449 = vshrl.u32 %v164, 16
      %v451 = vrot.slane %v449, 4
      %v452 = vor.u32 %v451, %v447
      %v453 = vrot.slane %v452, 4
      %v455 = vshll.u32 %v186, 16
      %v457 = vrot.slane %v455, 5
      %v458 = vsel %vm194, %v453, %v457
      %v460 = vshrl.u32 %v165, 16
      %v462 = vrot.slane %v460, 4
      %v463 = vshll.u32 %v165, 16
      %v465 = vrot.slane %v463, 5
      %v466 = vor.u32 %v462, %v465
      %v467 = vrot.slane %v466, 4
      %v469 = vshll.u32 %v166, 16
      %v471 = vrot.slane %v469, 5
      %v472 = vsel %vm194, %v467, %v471
      %v473 = vshrl.u32 %v166, 16
      %v475 = vrot.slane %v473, 4
      %v476 = vor.u32 %v475, %v471
      %v477 = vrot.slane %v476, 4
      %v479 = vshll.u32 %v187, 16
      %v481 = vrot.slane %v479, 5
      %v482 = vsel %vm194, %v477, %v481
      %v484 = vshrl.u32 %v167, 16
      %v486 = vrot.slane %v484, 4
      %v487 = vshll.u32 %v167, 16
      %v489 = vrot.slane %v487, 5
      %v490 = vor.u32 %v486, %v489
      %v491 = vrot.slane %v490, 4
      %v493 = vshll.u32 %v168, 16
      %v495 = vrot.slane %v493, 5
      %v496 = vsel %vm194, %v491, %v495
      %v497 = vshrl.u32 %v168, 16
      %v499 = vrot.slane %v497, 4
      %v500 = vor.u32 %v499, %v495
      %v501 = vrot.slane %v500, 4
      %v503 = vshll.u32 %v188, 16
      %v505 = vrot.slane %v503, 5
      %v506 = vsel %vm194, %v501, %v505
      %v508 = vshrl.u32 %v169, 16
      %v510 = vrot.slane %v508, 4
      %v511 = vshll.u32 %v169, 16
      %v513 = vrot.slane %v511, 5
      %v514 = vor.u32 %v510, %v513
      %v515 = vrot.slane %v514, 4
      %v517 = vshll.u32 %v170, 16
      %v519 = vrot.slane %v517, 5
      %v520 = vsel %vm194, %v515, %v519
      %v521 = vshrl.u32 %v170, 16
      %v523 = vrot.slane %v521, 4
      %v524 = vor.u32 %v523, %v519
      %v525 = vrot.slane %v524, 4
      %v527 = vshll.u32 %v189, 16
      %v529 = vrot.slane %v527, 5
      %v530 = vsel %vm194, %v525, %v529
      %v532 = vshrl.u32 %v171, 16
      %v534 = vrot.slane %v532, 4
      %v535 = vshll.u32 %v171, 16
      %v537 = vrot.slane %v535, 5
      %v538 = vor.u32 %v534, %v537
      %v539 = vrot.slane %v538, 4
      %v541 = vshll.u32 %v172, 16
      %v543 = vrot.slane %v541, 5
      %v544 = vsel %vm194, %v539, %v543
      %v545 = vshrl.u32 %v172, 16
      %v547 = vrot.slane %v545, 4
      %v548 = vor.u32 %v547, %v543
      %v549 = vrot.slane %v548, 4
      %v551 = vshll.u32 %v190, 16
      %v553 = vrot.slane %v551, 5
      %v554 = vsel %vm194, %v549, %v553
      %v556 = vshrl.u32 %v173, 16
      %v558 = vrot.slane %v556, 4
      %v559 = vshll.u32 %v173, 16
      %v561 = vrot.slane %v559, 5
      %v562 = vor.u32 %v558, %v561
      %v563 = vrot.slane %v562, 4
      %v565 = vshll.u32 %v174, 16
      %v567 = vrot.slane %v565, 5
      %v568 = vsel %vm194, %v563, %v567
      %v569 = vshrl.u32 %v174, 16
      %v571 = vrot.slane %v569, 4
      %v572 = vor.u32 %v571, %v567
      %v573 = vrot.slane %v572, 4
      %v575 = vshll.u32 %v191, 16
      %v577 = vrot.slane %v575, 5
      %v578 = vsel %vm194, %v573, %v577
      %s579 = scalar_lea.vmem %s1, 2
      %v580 = vld [vmem:[%s579] sm:$0x3]
      %v581 = vunpack.c.l.b16 %v208
      %v582 = vunpack.c.l.b16 %v218
      %v583 = vunpack.c.l.b16 %v232
      %v584 = vunpack.c.l.b16 %v242
      %v585 = vunpack.c.l.b16 %v256
      %v586 = vunpack.c.l.b16 %v266
      %v587 = vunpack.c.l.b16 %v280
      %v588 = vunpack.c.l.b16 %v290
      %v589 = vunpack.c.l.b16 %v304
      %v590 = vunpack.c.l.b16 %v314
      %v591 = vunpack.c.l.b16 %v328
      %v592 = vunpack.c.l.b16 %v338
      %v593 = vunpack.c.l.b16 %v352
      %v594 = vunpack.c.l.b16 %v362
      %v595 = vunpack.c.l.b16 %v376
      %v596 = vunpack.c.l.b16 %v386
      %v597 = vunpack.c.l.b16 %v400
      %v598 = vunpack.c.l.b16 %v410
      %v599 = vunpack.c.l.b16 %v424
      %v600 = vunpack.c.l.b16 %v434
      %v601 = vunpack.c.l.b16 %v448
      %v602 = vunpack.c.l.b16 %v458
      %v603 = vunpack.c.l.b16 %v472
      %v604 = vunpack.c.l.b16 %v482
      %v605 = vunpack.c.l.b16 %v496
      %v606 = vunpack.c.l.b16 %v506
      %v607 = vunpack.c.l.b16 %v520
      %v608 = vunpack.c.l.b16 %v530
      %v609 = vunpack.c.l.b16 %v544
      %v610 = vunpack.c.l.b16 %v554
      %v611 = vunpack.c.l.b16 %v568
      %v612 = vunpack.c.l.b16 %v578
      %v613 = vpack.c.b16 %v582, %v581
      %v614 = vpack.c.b16 %v584, %v583
      %v615 = vpack.c.b16 %v586, %v585
      %v616 = vpack.c.b16 %v588, %v587
      %v617 = vpack.c.b16 %v590, %v589
      %v618 = vpack.c.b16 %v592, %v591
      %v619 = vpack.c.b16 %v594, %v593
      %v620 = vpack.c.b16 %v596, %v595
      %v621 = vpack.c.b16 %v598, %v597
      %v622 = vpack.c.b16 %v600, %v599
      %v623 = vpack.c.b16 %v602, %v601
      %v624 = vpack.c.b16 %v604, %v603
      %v625 = vpack.c.b16 %v606, %v605
      %v626 = vpack.c.b16 %v608, %v607
      %v627 = vpack.c.b16 %v610, %v609
      %v628 = vpack.c.b16 %v612, %v611
      %vm629 = vcmask 31744
      %v631 = vsel %vm629, %v613, 0
      %v634 = vsel %vm629, %v614, 0
      %v637 = vsel %vm629, %v615, 0
      %v640 = vsel %vm629, %v616, 0
      %v643 = vsel %vm629, %v617, 0
      %v646 = vsel %vm629, %v618, 0
      %v649 = vsel %vm629, %v619, 0
      %v652 = vsel %vm629, %v620, 0
      %v655 = vsel %vm629, %v621, 0
      %v658 = vsel %vm629, %v622, 0
      %v661 = vsel %vm629, %v623, 0
      %v664 = vsel %vm629, %v624, 0
      %v667 = vsel %vm629, %v625, 0
      %v670 = vsel %vm629, %v626, 0
      %v673 = vsel %vm629, %v627, 0
      %v676 = vsel %vm629, %v628, 0
      %vm678 = vcmask 1041408
      %v680 = vsel %vm678, %v580, 0
      %682 = vmatprep.subr.bf16.mxu0 0
      %683 = vmatpush1.bf16.msra.mxu0 %v680
      %684 = vmatprep.subr.bf16.mxu0 0
      %685 = vmatpush1.bf16.msra.mxu0 0
      %686 = vmatprep.subr.bf16.mxu0 0
      %687 = vmatpush1.bf16.msra.mxu0 0
      %688 = vmatprep.subr.bf16.mxu0 0
      %689 = vmatpush1.bf16.msra.mxu0 0
      %690 = vmatprep.subr.bf16.mxu0 0
      %691 = vmatpush1.bf16.msra.mxu0 0
      %692 = vmatprep.subr.bf16.mxu0 0
      %693 = vmatpush1.bf16.msra.mxu0 0
      %694 = vmatprep.subr.bf16.mxu0 0
      %695 = vmatpush1.bf16.msra.mxu0 0
      %696 = vmatprep.subr.bf16.mxu0 0
      %697 = vmatpush1.bf16.msra.mxu0 0
      %698 = vmatprep.subr.bf16.mxu0 0
      %699 = vmatpush1.bf16.msra.mxu0 0
      %700 = vmatprep.subr.bf16.mxu0 0
      %701 = vmatpush1.bf16.msra.mxu0 0
      %702 = vmatprep.subr.bf16.mxu0 0
      %703 = vmatpush1.bf16.msra.mxu0 0
      %704 = vmatprep.subr.bf16.mxu0 0
      %705 = vmatpush1.bf16.msra.mxu0 0
      %706 = vmatprep.subr.bf16.mxu0 0
      %707 = vmatpush1.bf16.msra.mxu0 0
      %708 = vmatprep.subr.bf16.mxu0 0
      %709 = vmatpush1.bf16.msra.mxu0 0
      %710 = vmatprep.subr.bf16.mxu0 0
      %711 = vmatpush1.bf16.msra.mxu0 0
      %712 = vmatprep.subr.bf16.mxu0 0
      %713 = vmatpush1.bf16.msra.mxu0 0
      %714 = vmatprep.mubr.bf16.mxu0 0
      %715 = vmatmul.mubr.bf16.gmra.mrb[0].mxu0 %v631
      %v716 = vpop.f32.mrb[0].mxu0
      %v717 = vadd.f32 0.0, %v716
      %v718 = vpop.f32.mrb[0].mxu0
      %v719 = vpop.f32.mrb[0].mxu0
      %v720 = vadd.f32 0.0, %v719
      %v721 = vpop.f32.mrb[0].mxu0
      %722 = vmatprep.mubr.bf16.mxu0 0
      %723 = vmatmul.mubr.bf16.gmra.mrb[0].mxu0 %v634
      %v724 = vpop.f32.mrb[0].mxu0
      %v725 = vadd.f32 0.0, %v724
      %v726 = vpop.f32.mrb[0].mxu0
      %v727 = vpop.f32.mrb[0].mxu0
      %v728 = vadd.f32 0.0, %v727
      %v729 = vpop.f32.mrb[0].mxu0
      %730 = vmatprep.mubr.bf16.mxu0 0
      %731 = vmatmul.mubr.bf16.gmra.mrb[0].mxu0 %v637
      %v732 = vpop.f32.mrb[0].mxu0
      %v733 = vadd.f32 0.0, %v732
      %v734 = vpop.f32.mrb[0].mxu0
      %v735 = vpop.f32.mrb[0].mxu0
      %v736 = vadd.f32 0.0, %v735
      %v737 = vpop.f32.mrb[0].mxu0
      %738 = vmatprep.mubr.bf16.mxu0 0
      %739 = vmatmul.mubr.bf16.gmra.mrb[0].mxu0 %v640
      %v740 = vpop.f32.mrb[0].mxu0
      %v741 = vadd.f32 0.0, %v740
      %v742 = vpop.f32.mrb[0].mxu0
      %v743 = vpop.f32.mrb[0].mxu0
      %v744 = vadd.f32 0.0, %v743
      %v745 = vpop.f32.mrb[0].mxu0
      %746 = vmatprep.mubr.bf16.mxu0 0
      %747 = vmatmul.mubr.bf16.gmra.mrb[0].mxu0 %v643
      %v748 = vpop.f32.mrb[0].mxu0
      %v749 = vadd.f32 0.0, %v748
      %v750 = vpop.f32.mrb[0].mxu0
      %v751 = vpop.f32.mrb[0].mxu0
      %v752 = vadd.f32 0.0, %v751
      %v753 = vpop.f32.mrb[0].mxu0
      %754 = vmatprep.mubr.bf16.mxu0 0
      %755 = vmatmul.mubr.bf16.gmra.mrb[0].mxu0 %v646
      %v756 = vpop.f32.mrb[0].mxu0
      %v757 = vadd.f32 0.0, %v756
      %v758 = vpop.f32.mrb[0].mxu0
      %v759 = vpop.f32.mrb[0].mxu0
      %v760 = vadd.f32 0.0, %v759
      %v761 = vpop.f32.mrb[0].mxu0
      %762 = vmatprep.mubr.bf16.mxu0 0
      %763 = vmatmul.mubr.bf16.gmra.mrb[0].mxu0 %v649
      %v764 = vpop.f32.mrb[0].mxu0
      %v765 = vadd.f32 0.0, %v764
      %v766 = vpop.f32.mrb[0].mxu0
      %v767 = vpop.f32.mrb[0].mxu0
      %v768 = vadd.f32 0.0, %v767
      %v769 = vpop.f32.mrb[0].mxu0
      %770 = vmatprep.mubr.bf16.mxu0 0
      %771 = vmatmul.mubr.bf16.gmra.mrb[0].mxu0 %v652
      %v772 = vpop.f32.mrb[0].mxu0
      %v773 = vadd.f32 0.0, %v772
      %v774 = vpop.f32.mrb[0].mxu0
      %v775 = vpop.f32.mrb[0].mxu0
      %v776 = vadd.f32 0.0, %v775
      %v777 = vpop.f32.mrb[0].mxu0
      %778 = vmatprep.mubr.bf16.mxu0 0
      %779 = vmatmul.mubr.bf16.gmra.mrb[0].mxu0 %v655
      %v780 = vpop.f32.mrb[0].mxu0
      %v781 = vadd.f32 0.0, %v780
      %v782 = vpop.f32.mrb[0].mxu0
      %v783 = vpop.f32.mrb[0].mxu0
      %v784 = vadd.f32 0.0, %v783
      %v785 = vpop.f32.mrb[0].mxu0
      %786 = vmatprep.mubr.bf16.mxu0 0
      %787 = vmatmul.mubr.bf16.gmra.mrb[0].mxu0 %v658
      %v788 = vpop.f32.mrb[0].mxu0
      %v789 = vadd.f32 0.0, %v788
      %v790 = vpop.f32.mrb[0].mxu0
      %v791 = vpop.f32.mrb[0].mxu0
      %v792 = vadd.f32 0.0, %v791
      %v793 = vpop.f32.mrb[0].mxu0
      %794 = vmatprep.mubr.bf16.mxu0 0
      %795 = vmatmul.mubr.bf16.gmra.mrb[0].mxu0 %v661
      %v796 = vpop.f32.mrb[0].mxu0
      %v797 = vadd.f32 0.0, %v796
      %v798 = vpop.f32.mrb[0].mxu0
      %v799 = vpop.f32.mrb[0].mxu0
      %v800 = vadd.f32 0.0, %v799
      %v801 = vpop.f32.mrb[0].mxu0
      %802 = vmatprep.mubr.bf16.mxu0 0
      %803 = vmatmul.mubr.bf16.gmra.mrb[0].mxu0 %v664
      %v804 = vpop.f32.mrb[0].mxu0
      %v805 = vadd.f32 0.0, %v804
      %v806 = vpop.f32.mrb[0].mxu0
      %v807 = vpop.f32.mrb[0].mxu0
      %v808 = vadd.f32 0.0, %v807
      %v809 = vpop.f32.mrb[0].mxu0
      %810 = vmatprep.mubr.bf16.mxu0 0
      %811 = vmatmul.mubr.bf16.gmra.mrb[0].mxu0 %v667
      %v812 = vpop.f32.mrb[0].mxu0
      %v813 = vadd.f32 0.0, %v812
      %v814 = vpop.f32.mrb[0].mxu0
      %v815 = vpop.f32.mrb[0].mxu0
      %v816 = vadd.f32 0.0, %v815
      %v817 = vpop.f32.mrb[0].mxu0
      %818 = vmatprep.mubr.bf16.mxu0 0
      %819 = vmatmul.mubr.bf16.gmra.mrb[0].mxu0 %v670
      %v820 = vpop.f32.mrb[0].mxu0
      %v821 = vadd.f32 0.0, %v820
      %v822 = vpop.f32.mrb[0].mxu0
      %v823 = vpop.f32.mrb[0].mxu0
      %v824 = vadd.f32 0.0, %v823
      %v825 = vpop.f32.mrb[0].mxu0
      %826 = vmatprep.mubr.bf16.mxu0 0
      %827 = vmatmul.mubr.bf16.gmra.mrb[0].mxu0 %v673
      %v828 = vpop.f32.mrb[0].mxu0
      %v829 = vadd.f32 0.0, %v828
      %v830 = vpop.f32.mrb[0].mxu0
      %v831 = vpop.f32.mrb[0].mxu0
      %v832 = vadd.f32 0.0, %v831
      %v833 = vpop.f32.mrb[0].mxu0
      %834 = vmatprep.mubr.bf16.mxu0 0
      %835 = vmatmul.mubr.bf16.gmra.mrb[0].mxu0 %v676
      %v836 = vpop.f32.mrb[0].mxu0
      %v837 = vadd.f32 0.0, %v836
      %v838 = vpop.f32.mrb[0].mxu0
      %v839 = vpop.f32.mrb[0].mxu0
      %v840 = vadd.f32 0.0, %v839
      %v841 = vpop.f32.mrb[0].mxu0
      %842 = vdwg.mxu0
      %v875 = vunpack.c.l.b16 %v143
      %v876 = vunpack.c.l.b16 %v144
      %v877 = vunpack.c.l.b16 %v145
      %v878 = vunpack.c.l.b16 %v146
      %v879 = vunpack.c.l.b16 %v147
      %v880 = vunpack.c.l.b16 %v148
      %v881 = vunpack.c.l.b16 %v149
      %v882 = vunpack.c.l.b16 %v150
      %v883 = vunpack.c.l.b16 %v151
      %v884 = vunpack.c.l.b16 %v152
      %v885 = vunpack.c.l.b16 %v153
      %v886 = vunpack.c.l.b16 %v154
      %v887 = vunpack.c.l.b16 %v155
      %v888 = vunpack.c.l.b16 %v156
      %v889 = vunpack.c.l.b16 %v157
      %v890 = vunpack.c.l.b16 %v158
      %v891 = vunpack.c.l.b16 %v159
      %v892 = vunpack.c.l.b16 %v160
      %v893 = vunpack.c.l.b16 %v161
      %v894 = vunpack.c.l.b16 %v162
      %v895 = vunpack.c.l.b16 %v163
      %v896 = vunpack.c.l.b16 %v164
      %v897 = vunpack.c.l.b16 %v165
      %v898 = vunpack.c.l.b16 %v166
      %v899 = vunpack.c.l.b16 %v167
      %v900 = vunpack.c.l.b16 %v168
      %v901 = vunpack.c.l.b16 %v169
      %v902 = vunpack.c.l.b16 %v170
      %v903 = vunpack.c.l.b16 %v171
      %v904 = vunpack.c.l.b16 %v172
      %v905 = vunpack.c.l.b16 %v173
      %v906 = vunpack.c.l.b16 %v174
      %v907 = vpack.c.b16 %v876, %v875
      %v908 = vpack.c.b16 %v878, %v877
      %v909 = vpack.c.b16 %v880, %v879
      %v910 = vpack.c.b16 %v882, %v881
      %v911 = vpack.c.b16 %v884, %v883
      %v912 = vpack.c.b16 %v886, %v885
      %v913 = vpack.c.b16 %v888, %v887
      %v914 = vpack.c.b16 %v890, %v889
      %v915 = vpack.c.b16 %v892, %v891
      %v916 = vpack.c.b16 %v894, %v893
      %v917 = vpack.c.b16 %v896, %v895
      %v918 = vpack.c.b16 %v898, %v897
      %v919 = vpack.c.b16 %v900, %v899
      %v920 = vpack.c.b16 %v902, %v901
      %v921 = vpack.c.b16 %v904, %v903
      %v922 = vpack.c.b16 %v906, %v905
      %v924 = vsel %vm629, %v907, 0
      %v927 = vsel %vm629, %v908, 0
      %v930 = vsel %vm629, %v909, 0
      %v933 = vsel %vm629, %v910, 0
      %v936 = vsel %vm629, %v911, 0
      %v939 = vsel %vm629, %v912, 0
      %v942 = vsel %vm629, %v913, 0
      %v945 = vsel %vm629, %v914, 0
      %v948 = vsel %vm629, %v915, 0
      %v951 = vsel %vm629, %v916, 0
      %v954 = vsel %vm629, %v917, 0
      %v957 = vsel %vm629, %v918, 0
      %v960 = vsel %vm629, %v919, 0
      %v963 = vsel %vm629, %v920, 0
      %v966 = vsel %vm629, %v921, 0
      %v969 = vsel %vm629, %v922, 0
      %v972 = vsel %vm678, %v175, 0
      %974 = vmatprep.subr.bf16.mxu0 0
      %975 = vmatpush1.bf16.msra.mxu0 %v972
      %976 = vmatprep.subr.bf16.mxu0 0
      %977 = vmatpush1.bf16.msra.mxu0 0
      %978 = vmatprep.subr.bf16.mxu0 0
      %979 = vmatpush1.bf16.msra.mxu0 0
      %980 = vmatprep.subr.bf16.mxu0 0
      %981 = vmatpush1.bf16.msra.mxu0 0
      %982 = vmatprep.subr.bf16.mxu0 0
      %983 = vmatpush1.bf16.msra.mxu0 0
      %984 = vmatprep.subr.bf16.mxu0 0
      %985 = vmatpush1.bf16.msra.mxu0 0
      %986 = vmatprep.subr.bf16.mxu0 0
      %987 = vmatpush1.bf16.msra.mxu0 0
      %988 = vmatprep.subr.bf16.mxu0 0
      %989 = vmatpush1.bf16.msra.mxu0 0
      %990 = vmatprep.subr.bf16.mxu0 0
      %991 = vmatpush1.bf16.msra.mxu0 0
      %992 = vmatprep.subr.bf16.mxu0 0
      %993 = vmatpush1.bf16.msra.mxu0 0
      %994 = vmatprep.subr.bf16.mxu0 0
      %995 = vmatpush1.bf16.msra.mxu0 0
      %996 = vmatprep.subr.bf16.mxu0 0
      %997 = vmatpush1.bf16.msra.mxu0 0
      %998 = vmatprep.subr.bf16.mxu0 0
      %999 = vmatpush1.bf16.msra.mxu0 0
      %1000 = vmatprep.subr.bf16.mxu0 0
      %1001 = vmatpush1.bf16.msra.mxu0 0
      %1002 = vmatprep.subr.bf16.mxu0 0
      %1003 = vmatpush1.bf16.msra.mxu0 0
      %1004 = vmatprep.subr.bf16.mxu0 0
      %1005 = vmatpush1.bf16.msra.mxu0 0
      %1006 = vmatprep.mubr.bf16.mxu0 0
      %1007 = vmatmul.mubr.bf16.gmra.mrb[0].mxu0 %v924
      %v1008 = vpop.f32.mrb[0].mxu0
      %v1009 = vadd.f32 %v717, %v1008
      %v1010 = vpop.f32.mrb[0].mxu0
      %v1011 = vpop.f32.mrb[0].mxu0
      %v1012 = vadd.f32 %v720, %v1011
      %v1013 = vpop.f32.mrb[0].mxu0
      %1014 = vmatprep.mubr.bf16.mxu0 0
      %1015 = vmatmul.mubr.bf16.gmra.mrb[0].mxu0 %v927
      %v1016 = vpop.f32.mrb[0].mxu0
      %v1017 = vadd.f32 %v725, %v1016
      %v1018 = vpop.f32.mrb[0].mxu0
      %v1019 = vpop.f32.mrb[0].mxu0
      %v1020 = vadd.f32 %v728, %v1019
      %v1021 = vpop.f32.mrb[0].mxu0
      %1022 = vmatprep.mubr.bf16.mxu0 0
      %1023 = vmatmul.mubr.bf16.gmra.mrb[0].mxu0 %v930
      %v1024 = vpop.f32.mrb[0].mxu0
      %v1025 = vadd.f32 %v733, %v1024
      %v1026 = vpop.f32.mrb[0].mxu0
      %v1027 = vpop.f32.mrb[0].mxu0
      %v1028 = vadd.f32 %v736, %v1027
      %v1029 = vpop.f32.mrb[0].mxu0
      %1030 = vmatprep.mubr.bf16.mxu0 0
      %1031 = vmatmul.mubr.bf16.gmra.mrb[0].mxu0 %v933
      %v1032 = vpop.f32.mrb[0].mxu0
      %v1033 = vadd.f32 %v741, %v1032
      %v1034 = vpop.f32.mrb[0].mxu0
      %v1035 = vpop.f32.mrb[0].mxu0
      %v1036 = vadd.f32 %v744, %v1035
      %v1037 = vpop.f32.mrb[0].mxu0
      %1038 = vmatprep.mubr.bf16.mxu0 0
      %1039 = vmatmul.mubr.bf16.gmra.mrb[0].mxu0 %v936
      %v1040 = vpop.f32.mrb[0].mxu0
      %v1041 = vadd.f32 %v749, %v1040
      %v1042 = vpop.f32.mrb[0].mxu0
      %v1043 = vpop.f32.mrb[0].mxu0
      %v1044 = vadd.f32 %v752, %v1043
      %v1045 = vpop.f32.mrb[0].mxu0
      %1046 = vmatprep.mubr.bf16.mxu0 0
      %1047 = vmatmul.mubr.bf16.gmra.mrb[0].mxu0 %v939
      %v1048 = vpop.f32.mrb[0].mxu0
      %v1049 = vadd.f32 %v757, %v1048
      %v1050 = vpop.f32.mrb[0].mxu0
      %v1051 = vpop.f32.mrb[0].mxu0
      %v1052 = vadd.f32 %v760, %v1051
      %v1053 = vpop.f32.mrb[0].mxu0
      %1054 = vmatprep.mubr.bf16.mxu0 0
      %1055 = vmatmul.mubr.bf16.gmra.mrb[0].mxu0 %v942
      %v1056 = vpop.f32.mrb[0].mxu0
      %v1057 = vadd.f32 %v765, %v1056
      %v1058 = vpop.f32.mrb[0].mxu0
      %v1059 = vpop.f32.mrb[0].mxu0
      %v1060 = vadd.f32 %v768, %v1059
      %v1061 = vpop.f32.mrb[0].mxu0
      %1062 = vmatprep.mubr.bf16.mxu0 0
      %1063 = vmatmul.mubr.bf16.gmra.mrb[0].mxu0 %v945
      %v1064 = vpop.f32.mrb[0].mxu0
      %v1065 = vadd.f32 %v773, %v1064
      %v1066 = vpop.f32.mrb[0].mxu0
      %v1067 = vpop.f32.mrb[0].mxu0
      %v1068 = vadd.f32 %v776, %v1067
      %v1069 = vpop.f32.mrb[0].mxu0
      %1070 = vmatprep.mubr.bf16.mxu0 0
      %1071 = vmatmul.mubr.bf16.gmra.mrb[0].mxu0 %v948
      %v1072 = vpop.f32.mrb[0].mxu0
      %v1073 = vadd.f32 %v781, %v1072
      %v1074 = vpop.f32.mrb[0].mxu0
      %v1075 = vpop.f32.mrb[0].mxu0
      %v1076 = vadd.f32 %v784, %v1075
      %v1077 = vpop.f32.mrb[0].mxu0
      %1078 = vmatprep.mubr.bf16.mxu0 0
      %1079 = vmatmul.mubr.bf16.gmra.mrb[0].mxu0 %v951
      %v1080 = vpop.f32.mrb[0].mxu0
      %v1081 = vadd.f32 %v789, %v1080
      %v1082 = vpop.f32.mrb[0].mxu0
      %v1083 = vpop.f32.mrb[0].mxu0
      %v1084 = vadd.f32 %v792, %v1083
      %v1085 = vpop.f32.mrb[0].mxu0
      %1086 = vmatprep.mubr.bf16.mxu0 0
      %1087 = vmatmul.mubr.bf16.gmra.mrb[0].mxu0 %v954
      %v1088 = vpop.f32.mrb[0].mxu0
      %v1089 = vadd.f32 %v797, %v1088
      %v1090 = vpop.f32.mrb[0].mxu0
      %v1091 = vpop.f32.mrb[0].mxu0
      %v1092 = vadd.f32 %v800, %v1091
      %v1093 = vpop.f32.mrb[0].mxu0
      %1094 = vmatprep.mubr.bf16.mxu0 0
      %1095 = vmatmul.mubr.bf16.gmra.mrb[0].mxu0 %v957
      %v1096 = vpop.f32.mrb[0].mxu0
      %v1097 = vadd.f32 %v805, %v1096
      %v1098 = vpop.f32.mrb[0].mxu0
      %v1099 = vpop.f32.mrb[0].mxu0
      %v1100 = vadd.f32 %v808, %v1099
      %v1101 = vpop.f32.mrb[0].mxu0
      %1102 = vmatprep.mubr.bf16.mxu0 0
      %1103 = vmatmul.mubr.bf16.gmra.mrb[0].mxu0 %v960
      %v1104 = vpop.f32.mrb[0].mxu0
      %v1105 = vadd.f32 %v813, %v1104
      %v1106 = vpop.f32.mrb[0].mxu0
      %v1107 = vpop.f32.mrb[0].mxu0
      %v1108 = vadd.f32 %v816, %v1107
      %v1109 = vpop.f32.mrb[0].mxu0
      %1110 = vmatprep.mubr.bf16.mxu0 0
      %1111 = vmatmul.mubr.bf16.gmra.mrb[0].mxu0 %v963
      %v1112 = vpop.f32.mrb[0].mxu0
      %v1113 = vadd.f32 %v821, %v1112
      %v1114 = vpop.f32.mrb[0].mxu0
      %v1115 = vpop.f32.mrb[0].mxu0
      %v1116 = vadd.f32 %v824, %v1115
      %v1117 = vpop.f32.mrb[0].mxu0
      %1118 = vmatprep.mubr.bf16.mxu0 0
      %1119 = vmatmul.mubr.bf16.gmra.mrb[0].mxu0 %v966
      %v1120 = vpop.f32.mrb[0].mxu0
      %v1121 = vadd.f32 %v829, %v1120
      %v1122 = vpop.f32.mrb[0].mxu0
      %v1123 = vpop.f32.mrb[0].mxu0
      %v1124 = vadd.f32 %v832, %v1123
      %v1125 = vpop.f32.mrb[0].mxu0
      %1126 = vmatprep.mubr.bf16.mxu0 0
      %1127 = vmatmul.mubr.bf16.gmra.mrb[0].mxu0 %v969
      %v1128 = vpop.f32.mrb[0].mxu0
      %v1129 = vadd.f32 %v837, %v1128
      %v1130 = vpop.f32.mrb[0].mxu0
      %v1131 = vpop.f32.mrb[0].mxu0
      %v1132 = vadd.f32 %v840, %v1131
      %v1133 = vpop.f32.mrb[0].mxu0
      %1134 = vdwg.mxu0
      %v1135 = vld [vmem:[%s137] sm:$0xe]
      %v1136 = vld [vmem:[%s137 + $0xc] sm:$0xe]
      %v1137 = vld [vmem:[%s137 + $0x18] sm:$0xe]
      %v1138 = vld [vmem:[%s137 + $0x24] sm:$0xe]
      %v1139 = vld [vmem:[%s137 + $0x30] sm:$0xe]
      %v1140 = vld [vmem:[%s137 + $0x3c] sm:$0xe]
      %v1141 = vld [vmem:[%s137 + $0x48] sm:$0xe]
      %v1142 = vld [vmem:[%s137 + $0x54] sm:$0xe]
      %v1143 = vld [vmem:[%s137 + $0x60] sm:$0xe]
      %v1144 = vld [vmem:[%s137 + $0x6c] sm:$0xe]
      %v1145 = vld [vmem:[%s137 + $0x78] sm:$0xe]
      %v1146 = vld [vmem:[%s137 + $0x84] sm:$0xe]
      %v1147 = vld [vmem:[%s137 + $0x90] sm:$0xe]
      %v1148 = vld [vmem:[%s137 + $0x9c] sm:$0xe]
      %v1149 = vld [vmem:[%s137 + $0xa8] sm:$0xe]
      %v1150 = vld [vmem:[%s137 + $0xb4] sm:$0xe]
      %vm1183 = vcmask 1042432
      %vm1184 = vcmask 1046532
      %vm1185 = vmor %vm1183, %vm1184
      %v1186 = vrot.slane %v1135, 5
      %v1187 = vrot.slane %v1186, 4
      %v1188 = vrot.slane %v144, 5
      %v1189 = vsel %vm1185, %v1187, %v1188
      %v1190 = vrot.slane %v1188, 4
      %v1191 = vrot.slane %v176, 5
      %v1192 = vsel %vm1185, %v1190, %v1191
      %v1193 = vrot.slane %v1136, 5
      %v1194 = vrot.slane %v1193, 4
      %v1195 = vrot.slane %v146, 5
      %v1196 = vsel %vm1185, %v1194, %v1195
      %v1197 = vrot.slane %v1195, 4
      %v1198 = vrot.slane %v177, 5
      %v1199 = vsel %vm1185, %v1197, %v1198
      %v1200 = vrot.slane %v1137, 5
      %v1201 = vrot.slane %v1200, 4
      %v1202 = vrot.slane %v148, 5
      %v1203 = vsel %vm1185, %v1201, %v1202
      %v1204 = vrot.slane %v1202, 4
      %v1205 = vrot.slane %v178, 5
      %v1206 = vsel %vm1185, %v1204, %v1205
      %v1207 = vrot.slane %v1138, 5
      %v1208 = vrot.slane %v1207, 4
      %v1209 = vrot.slane %v150, 5
      %v1210 = vsel %vm1185, %v1208, %v1209
      %v1211 = vrot.slane %v1209, 4
      %v1212 = vrot.slane %v179, 5
      %v1213 = vsel %vm1185, %v1211, %v1212
      %v1214 = vrot.slane %v1139, 5
      %v1215 = vrot.slane %v1214, 4
      %v1216 = vrot.slane %v152, 5
      %v1217 = vsel %vm1185, %v1215, %v1216
      %v1218 = vrot.slane %v1216, 4
      %v1219 = vrot.slane %v180, 5
      %v1220 = vsel %vm1185, %v1218, %v1219
      %v1221 = vrot.slane %v1140, 5
      %v1222 = vrot.slane %v1221, 4
      %v1223 = vrot.slane %v154, 5
      %v1224 = vsel %vm1185, %v1222, %v1223
      %v1225 = vrot.slane %v1223, 4
      %v1226 = vrot.slane %v181, 5
      %v1227 = vsel %vm1185, %v1225, %v1226
      %v1228 = vrot.slane %v1141, 5
      %v1229 = vrot.slane %v1228, 4
      %v1230 = vrot.slane %v156, 5
      %v1231 = vsel %vm1185, %v1229, %v1230
      %v1232 = vrot.slane %v1230, 4
      %v1233 = vrot.slane %v182, 5
      %v1234 = vsel %vm1185, %v1232, %v1233
      %v1235 = vrot.slane %v1142, 5
      %v1236 = vrot.slane %v1235, 4
      %v1237 = vrot.slane %v158, 5
      %v1238 = vsel %vm1185, %v1236, %v1237
      %v1239 = vrot.slane %v1237, 4
      %v1240 = vrot.slane %v183, 5
      %v1241 = vsel %vm1185, %v1239, %v1240
      %v1242 = vrot.slane %v1143, 5
      %v1243 = vrot.slane %v1242, 4
      %v1244 = vrot.slane %v160, 5
      %v1245 = vsel %vm1185, %v1243, %v1244
      %v1246 = vrot.slane %v1244, 4
      %v1247 = vrot.slane %v184, 5
      %v1248 = vsel %vm1185, %v1246, %v1247
      %v1249 = vrot.slane %v1144, 5
      %v1250 = vrot.slane %v1249, 4
      %v1251 = vrot.slane %v162, 5
      %v1252 = vsel %vm1185, %v1250, %v1251
      %v1253 = vrot.slane %v1251, 4
      %v1254 = vrot.slane %v185, 5
      %v1255 = vsel %vm1185, %v1253, %v1254
      %v1256 = vrot.slane %v1145, 5
      %v1257 = vrot.slane %v1256, 4
      %v1258 = vrot.slane %v164, 5
      %v1259 = vsel %vm1185, %v1257, %v1258
      %v1260 = vrot.slane %v1258, 4
      %v1261 = vrot.slane %v186, 5
      %v1262 = vsel %vm1185, %v1260, %v1261
      %v1263 = vrot.slane %v1146, 5
      %v1264 = vrot.slane %v1263, 4
      %v1265 = vrot.slane %v166, 5
      %v1266 = vsel %vm1185, %v1264, %v1265
      %v1267 = vrot.slane %v1265, 4
      %v1268 = vrot.slane %v187, 5
      %v1269 = vsel %vm1185, %v1267, %v1268
      %v1270 = vrot.slane %v1147, 5
      %v1271 = vrot.slane %v1270, 4
      %v1272 = vrot.slane %v168, 5
      %v1273 = vsel %vm1185, %v1271, %v1272
      %v1274 = vrot.slane %v1272, 4
      %v1275 = vrot.slane %v188, 5
      %v1276 = vsel %vm1185, %v1274, %v1275
      %v1277 = vrot.slane %v1148, 5
      %v1278 = vrot.slane %v1277, 4
      %v1279 = vrot.slane %v170, 5
      %v1280 = vsel %vm1185, %v1278, %v1279
      %v1281 = vrot.slane %v1279, 4
      %v1282 = vrot.slane %v189, 5
      %v1283 = vsel %vm1185, %v1281, %v1282
      %v1284 = vrot.slane %v1149, 5
      %v1285 = vrot.slane %v1284, 4
      %v1286 = vrot.slane %v172, 5
      %v1287 = vsel %vm1185, %v1285, %v1286
      %v1288 = vrot.slane %v1286, 4
      %v1289 = vrot.slane %v190, 5
      %v1290 = vsel %vm1185, %v1288, %v1289
      %v1291 = vrot.slane %v1150, 5
      %v1292 = vrot.slane %v1291, 4
      %v1293 = vrot.slane %v174, 5
      %v1294 = vsel %vm1185, %v1292, %v1293
      %v1295 = vrot.slane %v1293, 4
      %v1296 = vrot.slane %v191, 5
      %v1297 = vsel %vm1185, %v1295, %v1296
      %s1298 = scalar_lea.vmem %s1, 4
      %v1299 = vld [vmem:[%s1298] sm:$0x3]
      %v1300 = vunpack.c.l.b16 %v1189
      %v1301 = vunpack.c.l.b16 %v1192
      %v1302 = vunpack.c.l.b16 %v1196
      %v1303 = vunpack.c.l.b16 %v1199
      %v1304 = vunpack.c.l.b16 %v1203
      %v1305 = vunpack.c.l.b16 %v1206
      %v1306 = vunpack.c.l.b16 %v1210
      %v1307 = vunpack.c.l.b16 %v1213
      %v1308 = vunpack.c.l.b16 %v1217
      %v1309 = vunpack.c.l.b16 %v1220
      %v1310 = vunpack.c.l.b16 %v1224
      %v1311 = vunpack.c.l.b16 %v1227
      %v1312 = vunpack.c.l.b16 %v1231
      %v1313 = vunpack.c.l.b16 %v1234
      %v1314 = vunpack.c.l.b16 %v1238
      %v1315 = vunpack.c.l.b16 %v1241
      %v1316 = vunpack.c.l.b16 %v1245
      %v1317 = vunpack.c.l.b16 %v1248
      %v1318 = vunpack.c.l.b16 %v1252
      %v1319 = vunpack.c.l.b16 %v1255
      %v1320 = vunpack.c.l.b16 %v1259
      %v1321 = vunpack.c.l.b16 %v1262
      %v1322 = vunpack.c.l.b16 %v1266
      %v1323 = vunpack.c.l.b16 %v1269
      %v1324 = vunpack.c.l.b16 %v1273
      %v1325 = vunpack.c.l.b16 %v1276
      %v1326 = vunpack.c.l.b16 %v1280
      %v1327 = vunpack.c.l.b16 %v1283
      %v1328 = vunpack.c.l.b16 %v1287
      %v1329 = vunpack.c.l.b16 %v1290
      %v1330 = vunpack.c.l.b16 %v1294
      %v1331 = vunpack.c.l.b16 %v1297
      %v1332 = vpack.c.b16 %v1301, %v1300
      %v1333 = vpack.c.b16 %v1303, %v1302
      %v1334 = vpack.c.b16 %v1305, %v1304
      %v1335 = vpack.c.b16 %v1307, %v1306
      %v1336 = vpack.c.b16 %v1309, %v1308
      %v1337 = vpack.c.b16 %v1311, %v1310
      %v1338 = vpack.c.b16 %v1313, %v1312
      %v1339 = vpack.c.b16 %v1315, %v1314
      %v1340 = vpack.c.b16 %v1317, %v1316
      %v1341 = vpack.c.b16 %v1319, %v1318
      %v1342 = vpack.c.b16 %v1321, %v1320
      %v1343 = vpack.c.b16 %v1323, %v1322
      %v1344 = vpack.c.b16 %v1325, %v1324
      %v1345 = vpack.c.b16 %v1327, %v1326
      %v1346 = vpack.c.b16 %v1329, %v1328
      %v1347 = vpack.c.b16 %v1331, %v1330
      %v1349 = vsel %vm629, %v1332, 0
      %v1352 = vsel %vm629, %v1333, 0
      %v1355 = vsel %vm629, %v1334, 0
      %v1358 = vsel %vm629, %v1335, 0
      %v1361 = vsel %vm629, %v1336, 0
      %v1364 = vsel %vm629, %v1337, 0
      %v1367 = vsel %vm629, %v1338, 0
      %v1370 = vsel %vm629, %v1339, 0
      %v1373 = vsel %vm629, %v1340, 0
      %v1376 = vsel %vm629, %v1341, 0
      %v1379 = vsel %vm629, %v1342, 0
      %v1382 = vsel %vm629, %v1343, 0
      %v1385 = vsel %vm629, %v1344, 0
      %v1388 = vsel %vm629, %v1345, 0
      %v1391 = vsel %vm629, %v1346, 0
      %v1394 = vsel %vm629, %v1347, 0
      %v1397 = vsel %vm678, %v1299, 0
      %1399 = vmatprep.subr.bf16.mxu0 0
      %1400 = vmatpush1.bf16.msra.mxu0 %v1397
      %1401 = vmatprep.subr.bf16.mxu0 0
      %1402 = vmatpush1.bf16.msra.mxu0 0
      %1403 = vmatprep.subr.bf16.mxu0 0
      %1404 = vmatpush1.bf16.msra.mxu0 0
      %1405 = vmatprep.subr.bf16.mxu0 0
      %1406 = vmatpush1.bf16.msra.mxu0 0
      %1407 = vmatprep.subr.bf16.mxu0 0
      %1408 = vmatpush1.bf16.msra.mxu0 0
      %1409 = vmatprep.subr.bf16.mxu0 0
      %1410 = vmatpush1.bf16.msra.mxu0 0
      %1411 = vmatprep.subr.bf16.mxu0 0
      %1412 = vmatpush1.bf16.msra.mxu0 0
      %1413 = vmatprep.subr.bf16.mxu0 0
      %1414 = vmatpush1.bf16.msra.mxu0 0
      %1415 = vmatprep.subr.bf16.mxu0 0
      %1416 = vmatpush1.bf16.msra.mxu0 0
      %1417 = vmatprep.subr.bf16.mxu0 0
      %1418 = vmatpush1.bf16.msra.mxu0 0
      %1419 = vmatprep.subr.bf16.mxu0 0
      %1420 = vmatpush1.bf16.msra.mxu0 0
      %1421 = vmatprep.subr.bf16.mxu0 0
      %1422 = vmatpush1.bf16.msra.mxu0 0
      %1423 = vmatprep.subr.bf16.mxu0 0
      %1424 = vmatpush1.bf16.msra.mxu0 0
      %1425 = vmatprep.subr.bf16.mxu0 0
      %1426 = vmatpush1.bf16.msra.mxu0 0
      %1427 = vmatprep.subr.bf16.mxu0 0
      %1428 = vmatpush1.bf16.msra.mxu0 0
      %1429 = vmatprep.subr.bf16.mxu0 0
      %1430 = vmatpush1.bf16.msra.mxu0 0
      %1431 = vmatprep.mubr.bf16.mxu0 0
      %1432 = vmatmul.mubr.bf16.gmra.mrb[0].mxu0 %v1349
      %v1433 = vpop.f32.mrb[0].mxu0
      %v1434 = vadd.f32 0.0, %v1433
      %v1435 = vpop.f32.mrb[0].mxu0
      %v1436 = vpop.f32.mrb[0].mxu0
      %v1437 = vadd.f32 0.0, %v1436
      %v1438 = vpop.f32.mrb[0].mxu0
      %1439 = vmatprep.mubr.bf16.mxu0 0
      %1440 = vmatmul.mubr.bf16.gmra.mrb[0].mxu0 %v1352
      %v1441 = vpop.f32.mrb[0].mxu0
      %v1442 = vadd.f32 0.0, %v1441
      %v1443 = vpop.f32.mrb[0].mxu0
      %v1444 = vpop.f32.mrb[0].mxu0
      %v1445 = vadd.f32 0.0, %v1444
      %v1446 = vpop.f32.mrb[0].mxu0
      %1447 = vmatprep.mubr.bf16.mxu0 0
      %1448 = vmatmul.mubr.bf16.gmra.mrb[0].mxu0 %v1355
      %v1449 = vpop.f32.mrb[0].mxu0
      %v1450 = vadd.f32 0.0, %v1449
      %v1451 = vpop.f32.mrb[0].mxu0
      %v1452 = vpop.f32.mrb[0].mxu0
      %v1453 = vadd.f32 0.0, %v1452
      %v1454 = vpop.f32.mrb[0].mxu0
      %1455 = vmatprep.mubr.bf16.mxu0 0
      %1456 = vmatmul.mubr.bf16.gmra.mrb[0].mxu0 %v1358
      %v1457 = vpop.f32.mrb[0].mxu0
      %v1458 = vadd.f32 0.0, %v1457
      %v1459 = vpop.f32.mrb[0].mxu0
      %v1460 = vpop.f32.mrb[0].mxu0
      %v1461 = vadd.f32 0.0, %v1460
      %v1462 = vpop.f32.mrb[0].mxu0
      %1463 = vmatprep.mubr.bf16.mxu0 0
      %1464 = vmatmul.mubr.bf16.gmra.mrb[0].mxu0 %v1361
      %v1465 = vpop.f32.mrb[0].mxu0
      %v1466 = vadd.f32 0.0, %v1465
      %v1467 = vpop.f32.mrb[0].mxu0
      %v1468 = vpop.f32.mrb[0].mxu0
      %v1469 = vadd.f32 0.0, %v1468
      %v1470 = vpop.f32.mrb[0].mxu0
      %1471 = vmatprep.mubr.bf16.mxu0 0
      %1472 = vmatmul.mubr.bf16.gmra.mrb[0].mxu0 %v1364
      %v1473 = vpop.f32.mrb[0].mxu0
      %v1474 = vadd.f32 0.0, %v1473
      %v1475 = vpop.f32.mrb[0].mxu0
      %v1476 = vpop.f32.mrb[0].mxu0
      %v1477 = vadd.f32 0.0, %v1476
      %v1478 = vpop.f32.mrb[0].mxu0
      %1479 = vmatprep.mubr.bf16.mxu0 0
      %1480 = vmatmul.mubr.bf16.gmra.mrb[0].mxu0 %v1367
      %v1481 = vpop.f32.mrb[0].mxu0
      %v1482 = vadd.f32 0.0, %v1481
      %v1483 = vpop.f32.mrb[0].mxu0
      %v1484 = vpop.f32.mrb[0].mxu0
      %v1485 = vadd.f32 0.0, %v1484
      %v1486 = vpop.f32.mrb[0].mxu0
      %1487 = vmatprep.mubr.bf16.mxu0 0
      %1488 = vmatmul.mubr.bf16.gmra.mrb[0].mxu0 %v1370
      %v1489 = vpop.f32.mrb[0].mxu0
      %v1490 = vadd.f32 0.0, %v1489
      %v1491 = vpop.f32.mrb[0].mxu0
      %v1492 = vpop.f32.mrb[0].mxu0
      %v1493 = vadd.f32 0.0, %v1492
      %v1494 = vpop.f32.mrb[0].mxu0
      %1495 = vmatprep.mubr.bf16.mxu0 0
      %1496 = vmatmul.mubr.bf16.gmra.mrb[0].mxu0 %v1373
      %v1497 = vpop.f32.mrb[0].mxu0
      %v1498 = vadd.f32 0.0, %v1497
      %v1499 = vpop.f32.mrb[0].mxu0
      %v1500 = vpop.f32.mrb[0].mxu0
      %v1501 = vadd.f32 0.0, %v1500
      %v1502 = vpop.f32.mrb[0].mxu0
      %1503 = vmatprep.mubr.bf16.mxu0 0
      %1504 = vmatmul.mubr.bf16.gmra.mrb[0].mxu0 %v1376
      %v1505 = vpop.f32.mrb[0].mxu0
      %v1506 = vadd.f32 0.0, %v1505
      %v1507 = vpop.f32.mrb[0].mxu0
      %v1508 = vpop.f32.mrb[0].mxu0
      %v1509 = vadd.f32 0.0, %v1508
      %v1510 = vpop.f32.mrb[0].mxu0
      %1511 = vmatprep.mubr.bf16.mxu0 0
      %1512 = vmatmul.mubr.bf16.gmra.mrb[0].mxu0 %v1379
      %v1513 = vpop.f32.mrb[0].mxu0
      %v1514 = vadd.f32 0.0, %v1513
      %v1515 = vpop.f32.mrb[0].mxu0
      %v1516 = vpop.f32.mrb[0].mxu0
      %v1517 = vadd.f32 0.0, %v1516
      %v1518 = vpop.f32.mrb[0].mxu0
      %1519 = vmatprep.mubr.bf16.mxu0 0
      %1520 = vmatmul.mubr.bf16.gmra.mrb[0].mxu0 %v1382
      %v1521 = vpop.f32.mrb[0].mxu0
      %v1522 = vadd.f32 0.0, %v1521
      %v1523 = vpop.f32.mrb[0].mxu0
      %v1524 = vpop.f32.mrb[0].mxu0
      %v1525 = vadd.f32 0.0, %v1524
      %v1526 = vpop.f32.mrb[0].mxu0
      %1527 = vmatprep.mubr.bf16.mxu0 0
      %1528 = vmatmul.mubr.bf16.gmra.mrb[0].mxu0 %v1385
      %v1529 = vpop.f32.mrb[0].mxu0
      %v1530 = vadd.f32 0.0, %v1529
      %v1531 = vpop.f32.mrb[0].mxu0
      %v1532 = vpop.f32.mrb[0].mxu0
      %v1533 = vadd.f32 0.0, %v1532
      %v1534 = vpop.f32.mrb[0].mxu0
      %1535 = vmatprep.mubr.bf16.mxu0 0
      %1536 = vmatmul.mubr.bf16.gmra.mrb[0].mxu0 %v1388
      %v1537 = vpop.f32.mrb[0].mxu0
      %v1538 = vadd.f32 0.0, %v1537
      %v1539 = vpop.f32.mrb[0].mxu0
      %v1540 = vpop.f32.mrb[0].mxu0
      %v1541 = vadd.f32 0.0, %v1540
      %v1542 = vpop.f32.mrb[0].mxu0
      %1543 = vmatprep.mubr.bf16.mxu0 0
      %1544 = vmatmul.mubr.bf16.gmra.mrb[0].mxu0 %v1391
      %v1545 = vpop.f32.mrb[0].mxu0
      %v1546 = vadd.f32 0.0, %v1545
      %v1547 = vpop.f32.mrb[0].mxu0
      %v1548 = vpop.f32.mrb[0].mxu0
      %v1549 = vadd.f32 0.0, %v1548
      %v1550 = vpop.f32.mrb[0].mxu0
      %1551 = vmatprep.mubr.bf16.mxu0 0
      %1552 = vmatmul.mubr.bf16.gmra.mrb[0].mxu0 %v1394
      %v1553 = vpop.f32.mrb[0].mxu0
      %v1554 = vadd.f32 0.0, %v1553
      %v1555 = vpop.f32.mrb[0].mxu0
      %v1556 = vpop.f32.mrb[0].mxu0
      %v1557 = vadd.f32 0.0, %v1556
      %v1558 = vpop.f32.mrb[0].mxu0
      %1559 = vdwg.mxu0
      %v1560 = vadd.f32 %v1009, %v1434
      %v1561 = vadd.f32 %v1012, %v1437
      %v1562 = vadd.f32 %v1017, %v1442
      %v1563 = vadd.f32 %v1020, %v1445
      %v1564 = vadd.f32 %v1025, %v1450
      %v1565 = vadd.f32 %v1028, %v1453
      %v1566 = vadd.f32 %v1033, %v1458
      %v1567 = vadd.f32 %v1036, %v1461
      %v1568 = vadd.f32 %v1041, %v1466
      %v1569 = vadd.f32 %v1044, %v1469
      %v1570 = vadd.f32 %v1049, %v1474
      %v1571 = vadd.f32 %v1052, %v1477
      %v1572 = vadd.f32 %v1057, %v1482
      %v1573 = vadd.f32 %v1060, %v1485
      %v1574 = vadd.f32 %v1065, %v1490
      %v1575 = vadd.f32 %v1068, %v1493
      %v1576 = vadd.f32 %v1073, %v1498
      %v1577 = vadd.f32 %v1076, %v1501
      %v1578 = vadd.f32 %v1081, %v1506
      %v1579 = vadd.f32 %v1084, %v1509
      %v1580 = vadd.f32 %v1089, %v1514
      %v1581 = vadd.f32 %v1092, %v1517
      %v1582 = vadd.f32 %v1097, %v1522
      %v1583 = vadd.f32 %v1100, %v1525
      %v1584 = vadd.f32 %v1105, %v1530
      %v1585 = vadd.f32 %v1108, %v1533
      %v1586 = vadd.f32 %v1113, %v1538
      %v1587 = vadd.f32 %v1116, %v1541
      %v1588 = vadd.f32 %v1121, %v1546
      %v1589 = vadd.f32 %v1124, %v1549
      %v1590 = vadd.f32 %v1129, %v1554
      %v1591 = vadd.f32 %v1132, %v1557
      %s1592 = scalar_lea.vmem %s137, 12
      %v1593 = vld [vmem:[%s1592] sm:$0xf]
      %v1594 = vld [vmem:[%s1592 + $0x4] sm:$0xf]
      %v1595 = vld [vmem:[%s1592 + $0xc] sm:$0xf]
      %v1596 = vld [vmem:[%s1592 + $0x10] sm:$0xf]
      %v1597 = vld [vmem:[%s1592 + $0x18] sm:$0xf]
      %v1598 = vld [vmem:[%s1592 + $0x1c] sm:$0xf]
      %v1599 = vld [vmem:[%s1592 + $0x24] sm:$0xf]
      %v1600 = vld [vmem:[%s1592 + $0x28] sm:$0xf]
      %v1601 = vld [vmem:[%s1592 + $0x30] sm:$0xf]
      %v1602 = vld [vmem:[%s1592 + $0x34] sm:$0xf]
      %v1603 = vld [vmem:[%s1592 + $0x3c] sm:$0xf]
      %v1604 = vld [vmem:[%s1592 + $0x40] sm:$0xf]
      %v1605 = vld [vmem:[%s1592 + $0x48] sm:$0xf]
      %v1606 = vld [vmem:[%s1592 + $0x4c] sm:$0xf]
      %v1607 = vld [vmem:[%s1592 + $0x54] sm:$0xf]
      %v1608 = vld [vmem:[%s1592 + $0x58] sm:$0xf]
      %v1609 = vld [vmem:[%s1592 + $0x60] sm:$0xf]
      %v1610 = vld [vmem:[%s1592 + $0x64] sm:$0xf]
      %v1611 = vld [vmem:[%s1592 + $0x6c] sm:$0xf]
      %v1612 = vld [vmem:[%s1592 + $0x70] sm:$0xf]
      %v1613 = vld [vmem:[%s1592 + $0x78] sm:$0xf]
      %v1614 = vld [vmem:[%s1592 + $0x7c] sm:$0xf]
      %v1615 = vld [vmem:[%s1592 + $0x84] sm:$0xf]
      %v1616 = vld [vmem:[%s1592 + $0x88] sm:$0xf]
      %v1617 = vld [vmem:[%s1592 + $0x90] sm:$0xf]
      %v1618 = vld [vmem:[%s1592 + $0x94] sm:$0xf]
      %v1619 = vld [vmem:[%s1592 + $0x9c] sm:$0xf]
      %v1620 = vld [vmem:[%s1592 + $0xa0] sm:$0xf]
      %v1621 = vld [vmem:[%s1592 + $0xa8] sm:$0xf]
      %v1622 = vld [vmem:[%s1592 + $0xac] sm:$0xf]
      %v1623 = vld [vmem:[%s1592 + $0xb4] sm:$0xf]
      %v1624 = vld [vmem:[%s1592 + $0xb8] sm:$0xf]
      %s1625 = scalar_lea.vmem %s1, 6
      %v1626 = vld [vmem:[%s1625] sm:$0x3]
      %v1659 = vunpack.c.l.b16 %v1593
      %v1660 = vunpack.c.l.b16 %v1594
      %v1661 = vunpack.c.l.b16 %v1595
      %v1662 = vunpack.c.l.b16 %v1596
      %v1663 = vunpack.c.l.b16 %v1597
      %v1664 = vunpack.c.l.b16 %v1598
      %v1665 = vunpack.c.l.b16 %v1599
      %v1666 = vunpack.c.l.b16 %v1600
      %v1667 = vunpack.c.l.b16 %v1601
      %v1668 = vunpack.c.l.b16 %v1602
      %v1669 = vunpack.c.l.b16 %v1603
      %v1670 = vunpack.c.l.b16 %v1604
      %v1671 = vunpack.c.l.b16 %v1605
      %v1672 = vunpack.c.l.b16 %v1606
      %v1673 = vunpack.c.l.b16 %v1607
      %v1674 = vunpack.c.l.b16 %v1608
      %v1675 = vunpack.c.l.b16 %v1609
      %v1676 = vunpack.c.l.b16 %v1610
      %v1677 = vunpack.c.l.b16 %v1611
      %v1678 = vunpack.c.l.b16 %v1612
      %v1679 = vunpack.c.l.b16 %v1613
      %v1680 = vunpack.c.l.b16 %v1614
      %v1681 = vunpack.c.l.b16 %v1615
      %v1682 = vunpack.c.l.b16 %v1616
      %v1683 = vunpack.c.l.b16 %v1617
      %v1684 = vunpack.c.l.b16 %v1618
      %v1685 = vunpack.c.l.b16 %v1619
      %v1686 = vunpack.c.l.b16 %v1620
      %v1687 = vunpack.c.l.b16 %v1621
      %v1688 = vunpack.c.l.b16 %v1622
      %v1689 = vunpack.c.l.b16 %v1623
      %v1690 = vunpack.c.l.b16 %v1624
      %v1691 = vpack.c.b16 %v1660, %v1659
      %v1692 = vpack.c.b16 %v1662, %v1661
      %v1693 = vpack.c.b16 %v1664, %v1663
      %v1694 = vpack.c.b16 %v1666, %v1665
      %v1695 = vpack.c.b16 %v1668, %v1667
      %v1696 = vpack.c.b16 %v1670, %v1669
      %v1697 = vpack.c.b16 %v1672, %v1671
      %v1698 = vpack.c.b16 %v1674, %v1673
      %v1699 = vpack.c.b16 %v1676, %v1675
      %v1700 = vpack.c.b16 %v1678, %v1677
      %v1701 = vpack.c.b16 %v1680, %v1679
      %v1702 = vpack.c.b16 %v1682, %v1681
      %v1703 = vpack.c.b16 %v1684, %v1683
      %v1704 = vpack.c.b16 %v1686, %v1685
      %v1705 = vpack.c.b16 %v1688, %v1687
      %v1706 = vpack.c.b16 %v1690, %v1689
      %v1708 = vsel %vm629, %v1691, 0
      %v1711 = vsel %vm629, %v1692, 0
      %v1714 = vsel %vm629, %v1693, 0
      %v1717 = vsel %vm629, %v1694, 0
      %v1720 = vsel %vm629, %v1695, 0
      %v1723 = vsel %vm629, %v1696, 0
      %v1726 = vsel %vm629, %v1697, 0
      %v1729 = vsel %vm629, %v1698, 0
      %v1732 = vsel %vm629, %v1699, 0
      %v1735 = vsel %vm629, %v1700, 0
      %v1738 = vsel %vm629, %v1701, 0
      %v1741 = vsel %vm629, %v1702, 0
      %v1744 = vsel %vm629, %v1703, 0
      %v1747 = vsel %vm629, %v1704, 0
      %v1750 = vsel %vm629, %v1705, 0
      %v1753 = vsel %vm629, %v1706, 0
      %v1756 = vsel %vm678, %v1626, 0
      %1758 = vmatprep.subr.bf16.mxu0 0
      %1759 = vmatpush1.bf16.msra.mxu0 %v1756
      %1760 = vmatprep.subr.bf16.mxu0 0
      %1761 = vmatpush1.bf16.msra.mxu0 0
      %1762 = vmatprep.subr.bf16.mxu0 0
      %1763 = vmatpush1.bf16.msra.mxu0 0
      %1764 = vmatprep.subr.bf16.mxu0 0
      %1765 = vmatpush1.bf16.msra.mxu0 0
      %1766 = vmatprep.subr.bf16.mxu0 0
      %1767 = vmatpush1.bf16.msra.mxu0 0
      %1768 = vmatprep.subr.bf16.mxu0 0
      %1769 = vmatpush1.bf16.msra.mxu0 0
      %1770 = vmatprep.subr.bf16.mxu0 0
      %1771 = vmatpush1.bf16.msra.mxu0 0
      %1772 = vmatprep.subr.bf16.mxu0 0
      %1773 = vmatpush1.bf16.msra.mxu0 0
      %1774 = vmatprep.subr.bf16.mxu0 0
      %1775 = vmatpush1.bf16.msra.mxu0 0
      %1776 = vmatprep.subr.bf16.mxu0 0
      %1777 = vmatpush1.bf16.msra.mxu0 0
      %1778 = vmatprep.subr.bf16.mxu0 0
      %1779 = vmatpush1.bf16.msra.mxu0 0
      %1780 = vmatprep.subr.bf16.mxu0 0
      %1781 = vmatpush1.bf16.msra.mxu0 0
      %1782 = vmatprep.subr.bf16.mxu0 0
      %1783 = vmatpush1.bf16.msra.mxu0 0
      %1784 = vmatprep.subr.bf16.mxu0 0
      %1785 = vmatpush1.bf16.msra.mxu0 0
      %1786 = vmatprep.subr.bf16.mxu0 0
      %1787 = vmatpush1.bf16.msra.mxu0 0
      %1788 = vmatprep.subr.bf16.mxu0 0
      %1789 = vmatpush1.bf16.msra.mxu0 0
      %1790 = vmatprep.mubr.bf16.mxu0 0
      %1791 = vmatmul.mubr.bf16.gmra.mrb[0].mxu0 %v1708
      %v1792 = vpop.f32.mrb[0].mxu0
      %v1793 = vadd.f32 0.0, %v1792
      %v1794 = vpop.f32.mrb[0].mxu0
      %v1795 = vpop.f32.mrb[0].mxu0
      %v1796 = vadd.f32 0.0, %v1795
      %v1797 = vpop.f32.mrb[0].mxu0
      %1798 = vmatprep.mubr.bf16.mxu0 0
      %1799 = vmatmul.mubr.bf16.gmra.mrb[0].mxu0 %v1711
      %v1800 = vpop.f32.mrb[0].mxu0
      %v1801 = vadd.f32 0.0, %v1800
      %v1802 = vpop.f32.mrb[0].mxu0
      %v1803 = vpop.f32.mrb[0].mxu0
      %v1804 = vadd.f32 0.0, %v1803
      %v1805 = vpop.f32.mrb[0].mxu0
      %1806 = vmatprep.mubr.bf16.mxu0 0
      %1807 = vmatmul.mubr.bf16.gmra.mrb[0].mxu0 %v1714
      %v1808 = vpop.f32.mrb[0].mxu0
      %v1809 = vadd.f32 0.0, %v1808
      %v1810 = vpop.f32.mrb[0].mxu0
      %v1811 = vpop.f32.mrb[0].mxu0
      %v1812 = vadd.f32 0.0, %v1811
      %v1813 = vpop.f32.mrb[0].mxu0
      %1814 = vmatprep.mubr.bf16.mxu0 0
      %1815 = vmatmul.mubr.bf16.gmra.mrb[0].mxu0 %v1717
      %v1816 = vpop.f32.mrb[0].mxu0
      %v1817 = vadd.f32 0.0, %v1816
      %v1818 = vpop.f32.mrb[0].mxu0
      %v1819 = vpop.f32.mrb[0].mxu0
      %v1820 = vadd.f32 0.0, %v1819
      %v1821 = vpop.f32.mrb[0].mxu0
      %1822 = vmatprep.mubr.bf16.mxu0 0
      %1823 = vmatmul.mubr.bf16.gmra.mrb[0].mxu0 %v1720
      %v1824 = vpop.f32.mrb[0].mxu0
      %v1825 = vadd.f32 0.0, %v1824
      %v1826 = vpop.f32.mrb[0].mxu0
      %v1827 = vpop.f32.mrb[0].mxu0
      %v1828 = vadd.f32 0.0, %v1827
      %v1829 = vpop.f32.mrb[0].mxu0
      %1830 = vmatprep.mubr.bf16.mxu0 0
      %1831 = vmatmul.mubr.bf16.gmra.mrb[0].mxu0 %v1723
      %v1832 = vpop.f32.mrb[0].mxu0
      %v1833 = vadd.f32 0.0, %v1832
      %v1834 = vpop.f32.mrb[0].mxu0
      %v1835 = vpop.f32.mrb[0].mxu0
      %v1836 = vadd.f32 0.0, %v1835
      %v1837 = vpop.f32.mrb[0].mxu0
      %1838 = vmatprep.mubr.bf16.mxu0 0
      %1839 = vmatmul.mubr.bf16.gmra.mrb[0].mxu0 %v1726
      %v1840 = vpop.f32.mrb[0].mxu0
      %v1841 = vadd.f32 0.0, %v1840
      %v1842 = vpop.f32.mrb[0].mxu0
      %v1843 = vpop.f32.mrb[0].mxu0
      %v1844 = vadd.f32 0.0, %v1843
      %v1845 = vpop.f32.mrb[0].mxu0
      %1846 = vmatprep.mubr.bf16.mxu0 0
      %1847 = vmatmul.mubr.bf16.gmra.mrb[0].mxu0 %v1729
      %v1848 = vpop.f32.mrb[0].mxu0
      %v1849 = vadd.f32 0.0, %v1848
      %v1850 = vpop.f32.mrb[0].mxu0
      %v1851 = vpop.f32.mrb[0].mxu0
      %v1852 = vadd.f32 0.0, %v1851
      %v1853 = vpop.f32.mrb[0].mxu0
      %1854 = vmatprep.mubr.bf16.mxu0 0
      %1855 = vmatmul.mubr.bf16.gmra.mrb[0].mxu0 %v1732
      %v1856 = vpop.f32.mrb[0].mxu0
      %v1857 = vadd.f32 0.0, %v1856
      %v1858 = vpop.f32.mrb[0].mxu0
      %v1859 = vpop.f32.mrb[0].mxu0
      %v1860 = vadd.f32 0.0, %v1859
      %v1861 = vpop.f32.mrb[0].mxu0
      %1862 = vmatprep.mubr.bf16.mxu0 0
      %1863 = vmatmul.mubr.bf16.gmra.mrb[0].mxu0 %v1735
      %v1864 = vpop.f32.mrb[0].mxu0
      %v1865 = vadd.f32 0.0, %v1864
      %v1866 = vpop.f32.mrb[0].mxu0
      %v1867 = vpop.f32.mrb[0].mxu0
      %v1868 = vadd.f32 0.0, %v1867
      %v1869 = vpop.f32.mrb[0].mxu0
      %1870 = vmatprep.mubr.bf16.mxu0 0
      %1871 = vmatmul.mubr.bf16.gmra.mrb[0].mxu0 %v1738
      %v1872 = vpop.f32.mrb[0].mxu0
      %v1873 = vadd.f32 0.0, %v1872
      %v1874 = vpop.f32.mrb[0].mxu0
      %v1875 = vpop.f32.mrb[0].mxu0
      %v1876 = vadd.f32 0.0, %v1875
      %v1877 = vpop.f32.mrb[0].mxu0
      %1878 = vmatprep.mubr.bf16.mxu0 0
      %1879 = vmatmul.mubr.bf16.gmra.mrb[0].mxu0 %v1741
      %v1880 = vpop.f32.mrb[0].mxu0
      %v1881 = vadd.f32 0.0, %v1880
      %v1882 = vpop.f32.mrb[0].mxu0
      %v1883 = vpop.f32.mrb[0].mxu0
      %v1884 = vadd.f32 0.0, %v1883
      %v1885 = vpop.f32.mrb[0].mxu0
      %1886 = vmatprep.mubr.bf16.mxu0 0
      %1887 = vmatmul.mubr.bf16.gmra.mrb[0].mxu0 %v1744
      %v1888 = vpop.f32.mrb[0].mxu0
      %v1889 = vadd.f32 0.0, %v1888
      %v1890 = vpop.f32.mrb[0].mxu0
      %v1891 = vpop.f32.mrb[0].mxu0
      %v1892 = vadd.f32 0.0, %v1891
      %v1893 = vpop.f32.mrb[0].mxu0
      %1894 = vmatprep.mubr.bf16.mxu0 0
      %1895 = vmatmul.mubr.bf16.gmra.mrb[0].mxu0 %v1747
      %v1896 = vpop.f32.mrb[0].mxu0
      %v1897 = vadd.f32 0.0, %v1896
      %v1898 = vpop.f32.mrb[0].mxu0
      %v1899 = vpop.f32.mrb[0].mxu0
      %v1900 = vadd.f32 0.0, %v1899
      %v1901 = vpop.f32.mrb[0].mxu0
      %1902 = vmatprep.mubr.bf16.mxu0 0
      %1903 = vmatmul.mubr.bf16.gmra.mrb[0].mxu0 %v1750
      %v1904 = vpop.f32.mrb[0].mxu0
      %v1905 = vadd.f32 0.0, %v1904
      %v1906 = vpop.f32.mrb[0].mxu0
      %v1907 = vpop.f32.mrb[0].mxu0
      %v1908 = vadd.f32 0.0, %v1907
      %v1909 = vpop.f32.mrb[0].mxu0
      %1910 = vmatprep.mubr.bf16.mxu0 0
      %1911 = vmatmul.mubr.bf16.gmra.mrb[0].mxu0 %v1753
      %v1912 = vpop.f32.mrb[0].mxu0
      %v1913 = vadd.f32 0.0, %v1912
      %v1914 = vpop.f32.mrb[0].mxu0
      %v1915 = vpop.f32.mrb[0].mxu0
      %v1916 = vadd.f32 0.0, %v1915
      %v1917 = vpop.f32.mrb[0].mxu0
      %1918 = vdwg.mxu0
      %v1919 = vadd.f32 %v1560, %v1793
      %v1920 = vadd.f32 %v1561, %v1796
      %v1921 = vadd.f32 %v1562, %v1801
      %v1922 = vadd.f32 %v1563, %v1804
      %v1923 = vadd.f32 %v1564, %v1809
      %v1924 = vadd.f32 %v1565, %v1812
      %v1925 = vadd.f32 %v1566, %v1817
      %v1926 = vadd.f32 %v1567, %v1820
      %v1927 = vadd.f32 %v1568, %v1825
      %v1928 = vadd.f32 %v1569, %v1828
      %v1929 = vadd.f32 %v1570, %v1833
      %v1930 = vadd.f32 %v1571, %v1836
      %v1931 = vadd.f32 %v1572, %v1841
      %v1932 = vadd.f32 %v1573, %v1844
      %v1933 = vadd.f32 %v1574, %v1849
      %v1934 = vadd.f32 %v1575, %v1852
      %v1935 = vadd.f32 %v1576, %v1857
      %v1936 = vadd.f32 %v1577, %v1860
      %v1937 = vadd.f32 %v1578, %v1865
      %v1938 = vadd.f32 %v1579, %v1868
      %v1939 = vadd.f32 %v1580, %v1873
      %v1940 = vadd.f32 %v1581, %v1876
      %v1941 = vadd.f32 %v1582, %v1881
      %v1942 = vadd.f32 %v1583, %v1884
      %v1943 = vadd.f32 %v1584, %v1889
      %v1944 = vadd.f32 %v1585, %v1892
      %v1945 = vadd.f32 %v1586, %v1897
      %v1946 = vadd.f32 %v1587, %v1900
      %v1947 = vadd.f32 %v1588, %v1905
      %v1948 = vadd.f32 %v1589, %v1908
      %v1949 = vadd.f32 %v1590, %v1913
      %v1950 = vadd.f32 %v1591, %v1916
      %v1951 = vld [vmem:[%s1592] sm:$0xf]
      %v1952 = vld [vmem:[%s1592 + $0x4] sm:$0xf]
      %v1953 = vld [vmem:[%s1592 + $0x8] sm:$0x1]
      %v1954 = vld [vmem:[%s1592 + $0xc] sm:$0xf]
      %v1955 = vld [vmem:[%s1592 + $0x10] sm:$0xf]
      %v1956 = vld [vmem:[%s1592 + $0x14] sm:$0x1]
      %v1957 = vld [vmem:[%s1592 + $0x18] sm:$0xf]
      %v1958 = vld [vmem:[%s1592 + $0x1c] sm:$0xf]
      %v1959 = vld [vmem:[%s1592 + $0x20] sm:$0x1]
      %v1960 = vld [vmem:[%s1592 + $0x24] sm:$0xf]
      %v1961 = vld [vmem:[%s1592 + $0x28] sm:$0xf]
      %v1962 = vld [vmem:[%s1592 + $0x2c] sm:$0x1]
      %v1963 = vld [vmem:[%s1592 + $0x30] sm:$0xf]
      %v1964 = vld [vmem:[%s1592 + $0x34] sm:$0xf]
      %v1965 = vld [vmem:[%s1592 + $0x38] sm:$0x1]
      %v1966 = vld [vmem:[%s1592 + $0x3c] sm:$0xf]
      %v1967 = vld [vmem:[%s1592 + $0x40] sm:$0xf]
      %v1968 = vld [vmem:[%s1592 + $0x44] sm:$0x1]
      %v1969 = vld [vmem:[%s1592 + $0x48] sm:$0xf]
      %v1970 = vld [vmem:[%s1592 + $0x4c] sm:$0xf]
      %v1971 = vld [vmem:[%s1592 + $0x50] sm:$0x1]
      %v1972 = vld [vmem:[%s1592 + $0x54] sm:$0xf]
      %v1973 = vld [vmem:[%s1592 + $0x58] sm:$0xf]
      %v1974 = vld [vmem:[%s1592 + $0x5c] sm:$0x1]
      %v1975 = vld [vmem:[%s1592 + $0x60] sm:$0xf]
      %v1976 = vld [vmem:[%s1592 + $0x64] sm:$0xf]
      %v1977 = vld [vmem:[%s1592 + $0x68] sm:$0x1]
      %v1978 = vld [vmem:[%s1592 + $0x6c] sm:$0xf]
      %v1979 = vld [vmem:[%s1592 + $0x70] sm:$0xf]
      %v1980 = vld [vmem:[%s1592 + $0x74] sm:$0x1]
      %v1981 = vld [vmem:[%s1592 + $0x78] sm:$0xf]
      %v1982 = vld [vmem:[%s1592 + $0x7c] sm:$0xf]
      %v1983 = vld [vmem:[%s1592 + $0x80] sm:$0x1]
      %v1984 = vld [vmem:[%s1592 + $0x84] sm:$0xf]
      %v1985 = vld [vmem:[%s1592 + $0x88] sm:$0xf]
      %v1986 = vld [vmem:[%s1592 + $0x8c] sm:$0x1]
      %v1987 = vld [vmem:[%s1592 + $0x90] sm:$0xf]
      %v1988 = vld [vmem:[%s1592 + $0x94] sm:$0xf]
      %v1989 = vld [vmem:[%s1592 + $0x98] sm:$0x1]
      %v1990 = vld [vmem:[%s1592 + $0x9c] sm:$0xf]
      %v1991 = vld [vmem:[%s1592 + $0xa0] sm:$0xf]
      %v1992 = vld [vmem:[%s1592 + $0xa4] sm:$0x1]
      %v1993 = vld [vmem:[%s1592 + $0xa8] sm:$0xf]
      %v1994 = vld [vmem:[%s1592 + $0xac] sm:$0xf]
      %v1995 = vld [vmem:[%s1592 + $0xb0] sm:$0x1]
      %v1996 = vld [vmem:[%s1592 + $0xb4] sm:$0xf]
      %v1997 = vld [vmem:[%s1592 + $0xb8] sm:$0xf]
      %v1998 = vld [vmem:[%s1592 + $0xbc] sm:$0x1]
      %v2000 = vshrl.u32 %v1951, 16
      %v2002 = vrot.slane %v2000, 4
      %v2003 = vshll.u32 %v1951, 16
      %v2005 = vrot.slane %v2003, 5
      %v2006 = vor.u32 %v2002, %v2005
      %v2007 = vrot.slane %v2006, 4
      %v2009 = vshll.u32 %v1952, 16
      %v2011 = vrot.slane %v2009, 5
      %v2012 = vsel %vm194, %v2007, %v2011
      %v2013 = vshrl.u32 %v1952, 16
      %v2015 = vrot.slane %v2013, 4
      %v2016 = vor.u32 %v2015, %v2011
      %v2017 = vrot.slane %v2016, 4
      %v2019 = vshll.u32 %v1953, 16
      %v2021 = vrot.slane %v2019, 5
      %v2022 = vsel %vm194, %v2017, %v2021
      %v2024 = vshrl.u32 %v1954, 16
      %v2026 = vrot.slane %v2024, 4
      %v2027 = vshll.u32 %v1954, 16
      %v2029 = vrot.slane %v2027, 5
      %v2030 = vor.u32 %v2026, %v2029
      %v2031 = vrot.slane %v2030, 4
      %v2033 = vshll.u32 %v1955, 16
      %v2035 = vrot.slane %v2033, 5
      %v2036 = vsel %vm194, %v2031, %v2035
      %v2037 = vshrl.u32 %v1955, 16
      %v2039 = vrot.slane %v2037, 4
      %v2040 = vor.u32 %v2039, %v2035
      %v2041 = vrot.slane %v2040, 4
      %v2043 = vshll.u32 %v1956, 16
      %v2045 = vrot.slane %v2043, 5
      %v2046 = vsel %vm194, %v2041, %v2045
      %v2048 = vshrl.u32 %v1957, 16
      %v2050 = vrot.slane %v2048, 4
      %v2051 = vshll.u32 %v1957, 16
      %v2053 = vrot.slane %v2051, 5
      %v2054 = vor.u32 %v2050, %v2053
      %v2055 = vrot.slane %v2054, 4
      %v2057 = vshll.u32 %v1958, 16
      %v2059 = vrot.slane %v2057, 5
      %v2060 = vsel %vm194, %v2055, %v2059
      %v2061 = vshrl.u32 %v1958, 16
      %v2063 = vrot.slane %v2061, 4
      %v2064 = vor.u32 %v2063, %v2059
      %v2065 = vrot.slane %v2064, 4
      %v2067 = vshll.u32 %v1959, 16
      %v2069 = vrot.slane %v2067, 5
      %v2070 = vsel %vm194, %v2065, %v2069
      %v2072 = vshrl.u32 %v1960, 16
      %v2074 = vrot.slane %v2072, 4
      %v2075 = vshll.u32 %v1960, 16
      %v2077 = vrot.slane %v2075, 5
      %v2078 = vor.u32 %v2074, %v2077
      %v2079 = vrot.slane %v2078, 4
      %v2081 = vshll.u32 %v1961, 16
      %v2083 = vrot.slane %v2081, 5
      %v2084 = vsel %vm194, %v2079, %v2083
      %v2085 = vshrl.u32 %v1961, 16
      %v2087 = vrot.slane %v2085, 4
      %v2088 = vor.u32 %v2087, %v2083
      %v2089 = vrot.slane %v2088, 4
      %v2091 = vshll.u32 %v1962, 16
      %v2093 = vrot.slane %v2091, 5
      %v2094 = vsel %vm194, %v2089, %v2093
      %v2096 = vshrl.u32 %v1963, 16
      %v2098 = vrot.slane %v2096, 4
      %v2099 = vshll.u32 %v1963, 16
      %v2101 = vrot.slane %v2099, 5
      %v2102 = vor.u32 %v2098, %v2101
      %v2103 = vrot.slane %v2102, 4
      %v2105 = vshll.u32 %v1964, 16
      %v2107 = vrot.slane %v2105, 5
      %v2108 = vsel %vm194, %v2103, %v2107
      %v2109 = vshrl.u32 %v1964, 16
      %v2111 = vrot.slane %v2109, 4
      %v2112 = vor.u32 %v2111, %v2107
      %v2113 = vrot.slane %v2112, 4
      %v2115 = vshll.u32 %v1965, 16
      %v2117 = vrot.slane %v2115, 5
      %v2118 = vsel %vm194, %v2113, %v2117
      %v2120 = vshrl.u32 %v1966, 16
      %v2122 = vrot.slane %v2120, 4
      %v2123 = vshll.u32 %v1966, 16
      %v2125 = vrot.slane %v2123, 5
      %v2126 = vor.u32 %v2122, %v2125
      %v2127 = vrot.slane %v2126, 4
      %v2129 = vshll.u32 %v1967, 16
      %v2131 = vrot.slane %v2129, 5
      %v2132 = vsel %vm194, %v2127, %v2131
      %v2133 = vshrl.u32 %v1967, 16
      %v2135 = vrot.slane %v2133, 4
      %v2136 = vor.u32 %v2135, %v2131
      %v2137 = vrot.slane %v2136, 4
      %v2139 = vshll.u32 %v1968, 16
      %v2141 = vrot.slane %v2139, 5
      %v2142 = vsel %vm194, %v2137, %v2141
      %v2144 = vshrl.u32 %v1969, 16
      %v2146 = vrot.slane %v2144, 4
      %v2147 = vshll.u32 %v1969, 16
      %v2149 = vrot.slane %v2147, 5
      %v2150 = vor.u32 %v2146, %v2149
      %v2151 = vrot.slane %v2150, 4
      %v2153 = vshll.u32 %v1970, 16
      %v2155 = vrot.slane %v2153, 5
      %v2156 = vsel %vm194, %v2151, %v2155
      %v2157 = vshrl.u32 %v1970, 16
      %v2159 = vrot.slane %v2157, 4
      %v2160 = vor.u32 %v2159, %v2155
      %v2161 = vrot.slane %v2160, 4
      %v2163 = vshll.u32 %v1971, 16
      %v2165 = vrot.slane %v2163, 5
      %v2166 = vsel %vm194, %v2161, %v2165
      %v2168 = vshrl.u32 %v1972, 16
      %v2170 = vrot.slane %v2168, 4
      %v2171 = vshll.u32 %v1972, 16
      %v2173 = vrot.slane %v2171, 5
      %v2174 = vor.u32 %v2170, %v2173
      %v2175 = vrot.slane %v2174, 4
      %v2177 = vshll.u32 %v1973, 16
      %v2179 = vrot.slane %v2177, 5
      %v2180 = vsel %vm194, %v2175, %v2179
      %v2181 = vshrl.u32 %v1973, 16
      %v2183 = vrot.slane %v2181, 4
      %v2184 = vor.u32 %v2183, %v2179
      %v2185 = vrot.slane %v2184, 4
      %v2187 = vshll.u32 %v1974, 16
      %v2189 = vrot.slane %v2187, 5
      %v2190 = vsel %vm194, %v2185, %v2189
      %v2192 = vshrl.u32 %v1975, 16
      %v2194 = vrot.slane %v2192, 4
      %v2195 = vshll.u32 %v1975, 16
      %v2197 = vrot.slane %v2195, 5
      %v2198 = vor.u32 %v2194, %v2197
      %v2199 = vrot.slane %v2198, 4
      %v2201 = vshll.u32 %v1976, 16
      %v2203 = vrot.slane %v2201, 5
      %v2204 = vsel %vm194, %v2199, %v2203
      %v2205 = vshrl.u32 %v1976, 16
      %v2207 = vrot.slane %v2205, 4
      %v2208 = vor.u32 %v2207, %v2203
      %v2209 = vrot.slane %v2208, 4
      %v2211 = vshll.u32 %v1977, 16
      %v2213 = vrot.slane %v2211, 5
      %v2214 = vsel %vm194, %v2209, %v2213
      %v2216 = vshrl.u32 %v1978, 16
      %v2218 = vrot.slane %v2216, 4
      %v2219 = vshll.u32 %v1978, 16
      %v2221 = vrot.slane %v2219, 5
      %v2222 = vor.u32 %v2218, %v2221
      %v2223 = vrot.slane %v2222, 4
      %v2225 = vshll.u32 %v1979, 16
      %v2227 = vrot.slane %v2225, 5
      %v2228 = vsel %vm194, %v2223, %v2227
      %v2229 = vshrl.u32 %v1979, 16
      %v2231 = vrot.slane %v2229, 4
      %v2232 = vor.u32 %v2231, %v2227
      %v2233 = vrot.slane %v2232, 4
      %v2235 = vshll.u32 %v1980, 16
      %v2237 = vrot.slane %v2235, 5
      %v2238 = vsel %vm194, %v2233, %v2237
      %v2240 = vshrl.u32 %v1981, 16
      %v2242 = vrot.slane %v2240, 4
      %v2243 = vshll.u32 %v1981, 16
      %v2245 = vrot.slane %v2243, 5
      %v2246 = vor.u32 %v2242, %v2245
      %v2247 = vrot.slane %v2246, 4
      %v2249 = vshll.u32 %v1982, 16
      %v2251 = vrot.slane %v2249, 5
      %v2252 = vsel %vm194, %v2247, %v2251
      %v2253 = vshrl.u32 %v1982, 16
      %v2255 = vrot.slane %v2253, 4
      %v2256 = vor.u32 %v2255, %v2251
      %v2257 = vrot.slane %v2256, 4
      %v2259 = vshll.u32 %v1983, 16
      %v2261 = vrot.slane %v2259, 5
      %v2262 = vsel %vm194, %v2257, %v2261
      %v2264 = vshrl.u32 %v1984, 16
      %v2266 = vrot.slane %v2264, 4
      %v2267 = vshll.u32 %v1984, 16
      %v2269 = vrot.slane %v2267, 5
      %v2270 = vor.u32 %v2266, %v2269
      %v2271 = vrot.slane %v2270, 4
      %v2273 = vshll.u32 %v1985, 16
      %v2275 = vrot.slane %v2273, 5
      %v2276 = vsel %vm194, %v2271, %v2275
      %v2277 = vshrl.u32 %v1985, 16
      %v2279 = vrot.slane %v2277, 4
      %v2280 = vor.u32 %v2279, %v2275
      %v2281 = vrot.slane %v2280, 4
      %v2283 = vshll.u32 %v1986, 16
      %v2285 = vrot.slane %v2283, 5
      %v2286 = vsel %vm194, %v2281, %v2285
      %v2288 = vshrl.u32 %v1987, 16
      %v2290 = vrot.slane %v2288, 4
      %v2291 = vshll.u32 %v1987, 16
      %v2293 = vrot.slane %v2291, 5
      %v2294 = vor.u32 %v2290, %v2293
      %v2295 = vrot.slane %v2294, 4
      %v2297 = vshll.u32 %v1988, 16
      %v2299 = vrot.slane %v2297, 5
      %v2300 = vsel %vm194, %v2295, %v2299
      %v2301 = vshrl.u32 %v1988, 16
      %v2303 = vrot.slane %v2301, 4
      %v2304 = vor.u32 %v2303, %v2299
      %v2305 = vrot.slane %v2304, 4
      %v2307 = vshll.u32 %v1989, 16
      %v2309 = vrot.slane %v2307, 5
      %v2310 = vsel %vm194, %v2305, %v2309
      %v2312 = vshrl.u32 %v1990, 16
      %v2314 = vrot.slane %v2312, 4
      %v2315 = vshll.u32 %v1990, 16
      %v2317 = vrot.slane %v2315, 5
      %v2318 = vor.u32 %v2314, %v2317
      %v2319 = vrot.slane %v2318, 4
      %v2321 = vshll.u32 %v1991, 16
      %v2323 = vrot.slane %v2321, 5
      %v2324 = vsel %vm194, %v2319, %v2323
      %v2325 = vshrl.u32 %v1991, 16
      %v2327 = vrot.slane %v2325, 4
      %v2328 = vor.u32 %v2327, %v2323
      %v2329 = vrot.slane %v2328, 4
      %v2331 = vshll.u32 %v1992, 16
      %v2333 = vrot.slane %v2331, 5
      %v2334 = vsel %vm194, %v2329, %v2333
      %v2336 = vshrl.u32 %v1993, 16
      %v2338 = vrot.slane %v2336, 4
      %v2339 = vshll.u32 %v1993, 16
      %v2341 = vrot.slane %v2339, 5
      %v2342 = vor.u32 %v2338, %v2341
      %v2343 = vrot.slane %v2342, 4
      %v2345 = vshll.u32 %v1994, 16
      %v2347 = vrot.slane %v2345, 5
      %v2348 = vsel %vm194, %v2343, %v2347
      %v2349 = vshrl.u32 %v1994, 16
      %v2351 = vrot.slane %v2349, 4
      %v2352 = vor.u32 %v2351, %v2347
      %v2353 = vrot.slane %v2352, 4
      %v2355 = vshll.u32 %v1995, 16
      %v2357 = vrot.slane %v2355, 5
      %v2358 = vsel %vm194, %v2353, %v2357
      %v2360 = vshrl.u32 %v1996, 16
      %v2362 = vrot.slane %v2360, 4
      %v2363 = vshll.u32 %v1996, 16
      %v2365 = vrot.slane %v2363, 5
      %v2366 = vor.u32 %v2362, %v2365
      %v2367 = vrot.slane %v2366, 4
      %v2369 = vshll.u32 %v1997, 16
      %v2371 = vrot.slane %v2369, 5
      %v2372 = vsel %vm194, %v2367, %v2371
      %v2373 = vshrl.u32 %v1997, 16
      %v2375 = vrot.slane %v2373, 4
      %v2376 = vor.u32 %v2375, %v2371
      %v2377 = vrot.slane %v2376, 4
      %v2379 = vshll.u32 %v1998, 16
      %v2381 = vrot.slane %v2379, 5
      %v2382 = vsel %vm194, %v2377, %v2381
      %s2383 = scalar_lea.vmem %s1, 8
      %v2384 = vld [vmem:[%s2383] sm:$0x3]
      %v2385 = vunpack.c.l.b16 %v2012
      %v2386 = vunpack.c.l.b16 %v2022
      %v2387 = vunpack.c.l.b16 %v2036
      %v2388 = vunpack.c.l.b16 %v2046
      %v2389 = vunpack.c.l.b16 %v2060
      %v2390 = vunpack.c.l.b16 %v2070
      %v2391 = vunpack.c.l.b16 %v2084
      %v2392 = vunpack.c.l.b16 %v2094
      %v2393 = vunpack.c.l.b16 %v2108
      %v2394 = vunpack.c.l.b16 %v2118
      %v2395 = vunpack.c.l.b16 %v2132
      %v2396 = vunpack.c.l.b16 %v2142
      %v2397 = vunpack.c.l.b16 %v2156
      %v2398 = vunpack.c.l.b16 %v2166
      %v2399 = vunpack.c.l.b16 %v2180
      %v2400 = vunpack.c.l.b16 %v2190
      %v2401 = vunpack.c.l.b16 %v2204
      %v2402 = vunpack.c.l.b16 %v2214
      %v2403 = vunpack.c.l.b16 %v2228
      %v2404 = vunpack.c.l.b16 %v2238
      %v2405 = vunpack.c.l.b16 %v2252
      %v2406 = vunpack.c.l.b16 %v2262
      %v2407 = vunpack.c.l.b16 %v2276
      %v2408 = vunpack.c.l.b16 %v2286
      %v2409 = vunpack.c.l.b16 %v2300
      %v2410 = vunpack.c.l.b16 %v2310
      %v2411 = vunpack.c.l.b16 %v2324
      %v2412 = vunpack.c.l.b16 %v2334
      %v2413 = vunpack.c.l.b16 %v2348
      %v2414 = vunpack.c.l.b16 %v2358
      %v2415 = vunpack.c.l.b16 %v2372
      %v2416 = vunpack.c.l.b16 %v2382
      %v2417 = vpack.c.b16 %v2386, %v2385
      %v2418 = vpack.c.b16 %v2388, %v2387
      %v2419 = vpack.c.b16 %v2390, %v2389
      %v2420 = vpack.c.b16 %v2392, %v2391
      %v2421 = vpack.c.b16 %v2394, %v2393
      %v2422 = vpack.c.b16 %v2396, %v2395
      %v2423 = vpack.c.b16 %v2398, %v2397
      %v2424 = vpack.c.b16 %v2400, %v2399
      %v2425 = vpack.c.b16 %v2402, %v2401
      %v2426 = vpack.c.b16 %v2404, %v2403
      %v2427 = vpack.c.b16 %v2406, %v2405
      %v2428 = vpack.c.b16 %v2408, %v2407
      %v2429 = vpack.c.b16 %v2410, %v2409
      %v2430 = vpack.c.b16 %v2412, %v2411
      %v2431 = vpack.c.b16 %v2414, %v2413
      %v2432 = vpack.c.b16 %v2416, %v2415
      %v2434 = vsel %vm629, %v2417, 0
      %v2437 = vsel %vm629, %v2418, 0
      %v2440 = vsel %vm629, %v2419, 0
      %v2443 = vsel %vm629, %v2420, 0
      %v2446 = vsel %vm629, %v2421, 0
      %v2449 = vsel %vm629, %v2422, 0
      %v2452 = vsel %vm629, %v2423, 0
      %v2455 = vsel %vm629, %v2424, 0
      %v2458 = vsel %vm629, %v2425, 0
      %v2461 = vsel %vm629, %v2426, 0
      %v2464 = vsel %vm629, %v2427, 0
      %v2467 = vsel %vm629, %v2428, 0
      %v2470 = vsel %vm629, %v2429, 0
      %v2473 = vsel %vm629, %v2430, 0
      %v2476 = vsel %vm629, %v2431, 0
      %v2479 = vsel %vm629, %v2432, 0
      %v2482 = vsel %vm678, %v2384, 0
      %2484 = vmatprep.subr.bf16.mxu0 0
      %2485 = vmatpush1.bf16.msra.mxu0 %v2482
      %2486 = vmatprep.subr.bf16.mxu0 0
      %2487 = vmatpush1.bf16.msra.mxu0 0
      %2488 = vmatprep.subr.bf16.mxu0 0
      %2489 = vmatpush1.bf16.msra.mxu0 0
      %2490 = vmatprep.subr.bf16.mxu0 0
      %2491 = vmatpush1.bf16.msra.mxu0 0
      %2492 = vmatprep.subr.bf16.mxu0 0
      %2493 = vmatpush1.bf16.msra.mxu0 0
      %2494 = vmatprep.subr.bf16.mxu0 0
      %2495 = vmatpush1.bf16.msra.mxu0 0
      %2496 = vmatprep.subr.bf16.mxu0 0
      %2497 = vmatpush1.bf16.msra.mxu0 0
      %2498 = vmatprep.subr.bf16.mxu0 0
      %2499 = vmatpush1.bf16.msra.mxu0 0
      %2500 = vmatprep.subr.bf16.mxu0 0
      %2501 = vmatpush1.bf16.msra.mxu0 0
      %2502 = vmatprep.subr.bf16.mxu0 0
      %2503 = vmatpush1.bf16.msra.mxu0 0
      %2504 = vmatprep.subr.bf16.mxu0 0
      %2505 = vmatpush1.bf16.msra.mxu0 0
      %2506 = vmatprep.subr.bf16.mxu0 0
      %2507 = vmatpush1.bf16.msra.mxu0 0
      %2508 = vmatprep.subr.bf16.mxu0 0
      %2509 = vmatpush1.bf16.msra.mxu0 0
      %2510 = vmatprep.subr.bf16.mxu0 0
      %2511 = vmatpush1.bf16.msra.mxu0 0
      %2512 = vmatprep.subr.bf16.mxu0 0
      %2513 = vmatpush1.bf16.msra.mxu0 0
      %2514 = vmatprep.subr.bf16.mxu0 0
      %2515 = vmatpush1.bf16.msra.mxu0 0
      %2516 = vmatprep.mubr.bf16.mxu0 0
      %2517 = vmatmul.mubr.bf16.gmra.mrb[0].mxu0 %v2434
      %v2518 = vpop.f32.mrb[0].mxu0
      %v2519 = vadd.f32 0.0, %v2518
      %v2520 = vpop.f32.mrb[0].mxu0
      %v2521 = vpop.f32.mrb[0].mxu0
      %v2522 = vadd.f32 0.0, %v2521
      %v2523 = vpop.f32.mrb[0].mxu0
      %2524 = vmatprep.mubr.bf16.mxu0 0
      %2525 = vmatmul.mubr.bf16.gmra.mrb[0].mxu0 %v2437
      %v2526 = vpop.f32.mrb[0].mxu0
      %v2527 = vadd.f32 0.0, %v2526
      %v2528 = vpop.f32.mrb[0].mxu0
      %v2529 = vpop.f32.mrb[0].mxu0
      %v2530 = vadd.f32 0.0, %v2529
      %v2531 = vpop.f32.mrb[0].mxu0
      %2532 = vmatprep.mubr.bf16.mxu0 0
      %2533 = vmatmul.mubr.bf16.gmra.mrb[0].mxu0 %v2440
      %v2534 = vpop.f32.mrb[0].mxu0
      %v2535 = vadd.f32 0.0, %v2534
      %v2536 = vpop.f32.mrb[0].mxu0
      %v2537 = vpop.f32.mrb[0].mxu0
      %v2538 = vadd.f32 0.0, %v2537
      %v2539 = vpop.f32.mrb[0].mxu0
      %2540 = vmatprep.mubr.bf16.mxu0 0
      %2541 = vmatmul.mubr.bf16.gmra.mrb[0].mxu0 %v2443
      %v2542 = vpop.f32.mrb[0].mxu0
      %v2543 = vadd.f32 0.0, %v2542
      %v2544 = vpop.f32.mrb[0].mxu0
      %v2545 = vpop.f32.mrb[0].mxu0
      %v2546 = vadd.f32 0.0, %v2545
      %v2547 = vpop.f32.mrb[0].mxu0
      %2548 = vmatprep.mubr.bf16.mxu0 0
      %2549 = vmatmul.mubr.bf16.gmra.mrb[0].mxu0 %v2446
      %v2550 = vpop.f32.mrb[0].mxu0
      %v2551 = vadd.f32 0.0, %v2550
      %v2552 = vpop.f32.mrb[0].mxu0
      %v2553 = vpop.f32.mrb[0].mxu0
      %v2554 = vadd.f32 0.0, %v2553
      %v2555 = vpop.f32.mrb[0].mxu0
      %2556 = vmatprep.mubr.bf16.mxu0 0
      %2557 = vmatmul.mubr.bf16.gmra.mrb[0].mxu0 %v2449
      %v2558 = vpop.f32.mrb[0].mxu0
      %v2559 = vadd.f32 0.0, %v2558
      %v2560 = vpop.f32.mrb[0].mxu0
      %v2561 = vpop.f32.mrb[0].mxu0
      %v2562 = vadd.f32 0.0, %v2561
      %v2563 = vpop.f32.mrb[0].mxu0
      %2564 = vmatprep.mubr.bf16.mxu0 0
      %2565 = vmatmul.mubr.bf16.gmra.mrb[0].mxu0 %v2452
      %v2566 = vpop.f32.mrb[0].mxu0
      %v2567 = vadd.f32 0.0, %v2566
      %v2568 = vpop.f32.mrb[0].mxu0
      %v2569 = vpop.f32.mrb[0].mxu0
      %v2570 = vadd.f32 0.0, %v2569
      %v2571 = vpop.f32.mrb[0].mxu0
      %2572 = vmatprep.mubr.bf16.mxu0 0
      %2573 = vmatmul.mubr.bf16.gmra.mrb[0].mxu0 %v2455
      %v2574 = vpop.f32.mrb[0].mxu0
      %v2575 = vadd.f32 0.0, %v2574
      %v2576 = vpop.f32.mrb[0].mxu0
      %v2577 = vpop.f32.mrb[0].mxu0
      %v2578 = vadd.f32 0.0, %v2577
      %v2579 = vpop.f32.mrb[0].mxu0
      %2580 = vmatprep.mubr.bf16.mxu0 0
      %2581 = vmatmul.mubr.bf16.gmra.mrb[0].mxu0 %v2458
      %v2582 = vpop.f32.mrb[0].mxu0
      %v2583 = vadd.f32 0.0, %v2582
      %v2584 = vpop.f32.mrb[0].mxu0
      %v2585 = vpop.f32.mrb[0].mxu0
      %v2586 = vadd.f32 0.0, %v2585
      %v2587 = vpop.f32.mrb[0].mxu0
      %2588 = vmatprep.mubr.bf16.mxu0 0
      %2589 = vmatmul.mubr.bf16.gmra.mrb[0].mxu0 %v2461
      %v2590 = vpop.f32.mrb[0].mxu0
      %v2591 = vadd.f32 0.0, %v2590
      %v2592 = vpop.f32.mrb[0].mxu0
      %v2593 = vpop.f32.mrb[0].mxu0
      %v2594 = vadd.f32 0.0, %v2593
      %v2595 = vpop.f32.mrb[0].mxu0
      %2596 = vmatprep.mubr.bf16.mxu0 0
      %2597 = vmatmul.mubr.bf16.gmra.mrb[0].mxu0 %v2464
      %v2598 = vpop.f32.mrb[0].mxu0
      %v2599 = vadd.f32 0.0, %v2598
      %v2600 = vpop.f32.mrb[0].mxu0
      %v2601 = vpop.f32.mrb[0].mxu0
      %v2602 = vadd.f32 0.0, %v2601
      %v2603 = vpop.f32.mrb[0].mxu0
      %2604 = vmatprep.mubr.bf16.mxu0 0
      %2605 = vmatmul.mubr.bf16.gmra.mrb[0].mxu0 %v2467
      %v2606 = vpop.f32.mrb[0].mxu0
      %v2607 = vadd.f32 0.0, %v2606
      %v2608 = vpop.f32.mrb[0].mxu0
      %v2609 = vpop.f32.mrb[0].mxu0
      %v2610 = vadd.f32 0.0, %v2609
      %v2611 = vpop.f32.mrb[0].mxu0
      %2612 = vmatprep.mubr.bf16.mxu0 0
      %2613 = vmatmul.mubr.bf16.gmra.mrb[0].mxu0 %v2470
      %v2614 = vpop.f32.mrb[0].mxu0
      %v2615 = vadd.f32 0.0, %v2614
      %v2616 = vpop.f32.mrb[0].mxu0
      %v2617 = vpop.f32.mrb[0].mxu0
      %v2618 = vadd.f32 0.0, %v2617
      %v2619 = vpop.f32.mrb[0].mxu0
      %2620 = vmatprep.mubr.bf16.mxu0 0
      %2621 = vmatmul.mubr.bf16.gmra.mrb[0].mxu0 %v2473
      %v2622 = vpop.f32.mrb[0].mxu0
      %v2623 = vadd.f32 0.0, %v2622
      %v2624 = vpop.f32.mrb[0].mxu0
      %v2625 = vpop.f32.mrb[0].mxu0
      %v2626 = vadd.f32 0.0, %v2625
      %v2627 = vpop.f32.mrb[0].mxu0
      %2628 = vmatprep.mubr.bf16.mxu0 0
      %2629 = vmatmul.mubr.bf16.gmra.mrb[0].mxu0 %v2476
      %v2630 = vpop.f32.mrb[0].mxu0
      %v2631 = vadd.f32 0.0, %v2630
      %v2632 = vpop.f32.mrb[0].mxu0
      %v2633 = vpop.f32.mrb[0].mxu0
      %v2634 = vadd.f32 0.0, %v2633
      %v2635 = vpop.f32.mrb[0].mxu0
      %2636 = vmatprep.mubr.bf16.mxu0 0
      %2637 = vmatmul.mubr.bf16.gmra.mrb[0].mxu0 %v2479
      %v2638 = vpop.f32.mrb[0].mxu0
      %v2639 = vadd.f32 0.0, %v2638
      %v2640 = vpop.f32.mrb[0].mxu0
      %v2641 = vpop.f32.mrb[0].mxu0
      %v2642 = vadd.f32 0.0, %v2641
      %v2643 = vpop.f32.mrb[0].mxu0
      %2644 = vdwg.mxu0
      %v2645 = vadd.f32 %v1919, %v2519
      %v2646 = vadd.f32 %v1920, %v2522
      %v2647 = vadd.f32 %v1921, %v2527
      %v2648 = vadd.f32 %v1922, %v2530
      %v2649 = vadd.f32 %v1923, %v2535
      %v2650 = vadd.f32 %v1924, %v2538
      %v2651 = vadd.f32 %v1925, %v2543
      %v2652 = vadd.f32 %v1926, %v2546
      %v2653 = vadd.f32 %v1927, %v2551
      %v2654 = vadd.f32 %v1928, %v2554
      %v2655 = vadd.f32 %v1929, %v2559
      %v2656 = vadd.f32 %v1930, %v2562
      %v2657 = vadd.f32 %v1931, %v2567
      %v2658 = vadd.f32 %v1932, %v2570
      %v2659 = vadd.f32 %v1933, %v2575
      %v2660 = vadd.f32 %v1934, %v2578
      %v2661 = vadd.f32 %v1935, %v2583
      %v2662 = vadd.f32 %v1936, %v2586
      %v2663 = vadd.f32 %v1937, %v2591
      %v2664 = vadd.f32 %v1938, %v2594
      %v2665 = vadd.f32 %v1939, %v2599
      %v2666 = vadd.f32 %v1940, %v2602
      %v2667 = vadd.f32 %v1941, %v2607
      %v2668 = vadd.f32 %v1942, %v2610
      %v2669 = vadd.f32 %v1943, %v2615
      %v2670 = vadd.f32 %v1944, %v2618
      %v2671 = vadd.f32 %v1945, %v2623
      %v2672 = vadd.f32 %v1946, %v2626
      %v2673 = vadd.f32 %v1947, %v2631
      %v2674 = vadd.f32 %v1948, %v2634
      %v2675 = vadd.f32 %v1949, %v2639
      %v2676 = vadd.f32 %v1950, %v2642
      %v2677 = vld [vmem:[%s1592] sm:$0xe]
      %v2678 = vld [vmem:[%s1592 + $0xc] sm:$0xe]
      %v2679 = vld [vmem:[%s1592 + $0x18] sm:$0xe]
      %v2680 = vld [vmem:[%s1592 + $0x24] sm:$0xe]
      %v2681 = vld [vmem:[%s1592 + $0x30] sm:$0xe]
      %v2682 = vld [vmem:[%s1592 + $0x3c] sm:$0xe]
      %v2683 = vld [vmem:[%s1592 + $0x48] sm:$0xe]
      %v2684 = vld [vmem:[%s1592 + $0x54] sm:$0xe]
      %v2685 = vld [vmem:[%s1592 + $0x60] sm:$0xe]
      %v2686 = vld [vmem:[%s1592 + $0x6c] sm:$0xe]
      %v2687 = vld [vmem:[%s1592 + $0x78] sm:$0xe]
      %v2688 = vld [vmem:[%s1592 + $0x84] sm:$0xe]
      %v2689 = vld [vmem:[%s1592 + $0x90] sm:$0xe]
      %v2690 = vld [vmem:[%s1592 + $0x9c] sm:$0xe]
      %v2691 = vld [vmem:[%s1592 + $0xa8] sm:$0xe]
      %v2692 = vld [vmem:[%s1592 + $0xb4] sm:$0xe]
      %v2741 = vrot.slane %v2677, 5
      %v2742 = vrot.slane %v2741, 4
      %v2743 = vrot.slane %v1952, 5
      %v2744 = vsel %vm1185, %v2742, %v2743
      %v2745 = vrot.slane %v2743, 4
      %v2746 = vrot.slane %v1953, 5
      %v2747 = vsel %vm1185, %v2745, %v2746
      %v2748 = vrot.slane %v2678, 5
      %v2749 = vrot.slane %v2748, 4
      %v2750 = vrot.slane %v1955, 5
      %v2751 = vsel %vm1185, %v2749, %v2750
      %v2752 = vrot.slane %v2750, 4
      %v2753 = vrot.slane %v1956, 5
      %v2754 = vsel %vm1185, %v2752, %v2753
      %v2755 = vrot.slane %v2679, 5
      %v2756 = vrot.slane %v2755, 4
      %v2757 = vrot.slane %v1958, 5
      %v2758 = vsel %vm1185, %v2756, %v2757
      %v2759 = vrot.slane %v2757, 4
      %v2760 = vrot.slane %v1959, 5
      %v2761 = vsel %vm1185, %v2759, %v2760
      %v2762 = vrot.slane %v2680, 5
      %v2763 = vrot.slane %v2762, 4
      %v2764 = vrot.slane %v1961, 5
      %v2765 = vsel %vm1185, %v2763, %v2764
      %v2766 = vrot.slane %v2764, 4
      %v2767 = vrot.slane %v1962, 5
      %v2768 = vsel %vm1185, %v2766, %v2767
      %v2769 = vrot.slane %v2681, 5
      %v2770 = vrot.slane %v2769, 4
      %v2771 = vrot.slane %v1964, 5
      %v2772 = vsel %vm1185, %v2770, %v2771
      %v2773 = vrot.slane %v2771, 4
      %v2774 = vrot.slane %v1965, 5
      %v2775 = vsel %vm1185, %v2773, %v2774
      %v2776 = vrot.slane %v2682, 5
      %v2777 = vrot.slane %v2776, 4
      %v2778 = vrot.slane %v1967, 5
      %v2779 = vsel %vm1185, %v2777, %v2778
      %v2780 = vrot.slane %v2778, 4
      %v2781 = vrot.slane %v1968, 5
      %v2782 = vsel %vm1185, %v2780, %v2781
      %v2783 = vrot.slane %v2683, 5
      %v2784 = vrot.slane %v2783, 4
      %v2785 = vrot.slane %v1970, 5
      %v2786 = vsel %vm1185, %v2784, %v2785
      %v2787 = vrot.slane %v2785, 4
      %v2788 = vrot.slane %v1971, 5
      %v2789 = vsel %vm1185, %v2787, %v2788
      %v2790 = vrot.slane %v2684, 5
      %v2791 = vrot.slane %v2790, 4
      %v2792 = vrot.slane %v1973, 5
      %v2793 = vsel %vm1185, %v2791, %v2792
      %v2794 = vrot.slane %v2792, 4
      %v2795 = vrot.slane %v1974, 5
      %v2796 = vsel %vm1185, %v2794, %v2795
      %v2797 = vrot.slane %v2685, 5
      %v2798 = vrot.slane %v2797, 4
      %v2799 = vrot.slane %v1976, 5
      %v2800 = vsel %vm1185, %v2798, %v2799
      %v2801 = vrot.slane %v2799, 4
      %v2802 = vrot.slane %v1977, 5
      %v2803 = vsel %vm1185, %v2801, %v2802
      %v2804 = vrot.slane %v2686, 5
      %v2805 = vrot.slane %v2804, 4
      %v2806 = vrot.slane %v1979, 5
      %v2807 = vsel %vm1185, %v2805, %v2806
      %v2808 = vrot.slane %v2806, 4
      %v2809 = vrot.slane %v1980, 5
      %v2810 = vsel %vm1185, %v2808, %v2809
      %v2811 = vrot.slane %v2687, 5
      %v2812 = vrot.slane %v2811, 4
      %v2813 = vrot.slane %v1982, 5
      %v2814 = vsel %vm1185, %v2812, %v2813
      %v2815 = vrot.slane %v2813, 4
      %v2816 = vrot.slane %v1983, 5
      %v2817 = vsel %vm1185, %v2815, %v2816
      %v2818 = vrot.slane %v2688, 5
      %v2819 = vrot.slane %v2818, 4
      %v2820 = vrot.slane %v1985, 5
      %v2821 = vsel %vm1185, %v2819, %v2820
      %v2822 = vrot.slane %v2820, 4
      %v2823 = vrot.slane %v1986, 5
      %v2824 = vsel %vm1185, %v2822, %v2823
      %v2825 = vrot.slane %v2689, 5
      %v2826 = vrot.slane %v2825, 4
      %v2827 = vrot.slane %v1988, 5
      %v2828 = vsel %vm1185, %v2826, %v2827
      %v2829 = vrot.slane %v2827, 4
      %v2830 = vrot.slane %v1989, 5
      %v2831 = vsel %vm1185, %v2829, %v2830
      %v2832 = vrot.slane %v2690, 5
      %v2833 = vrot.slane %v2832, 4
      %v2834 = vrot.slane %v1991, 5
      %v2835 = vsel %vm1185, %v2833, %v2834
      %v2836 = vrot.slane %v2834, 4
      %v2837 = vrot.slane %v1992, 5
      %v2838 = vsel %vm1185, %v2836, %v2837
      %v2839 = vrot.slane %v2691, 5
      %v2840 = vrot.slane %v2839, 4
      %v2841 = vrot.slane %v1994, 5
      %v2842 = vsel %vm1185, %v2840, %v2841
      %v2843 = vrot.slane %v2841, 4
      %v2844 = vrot.slane %v1995, 5
      %v2845 = vsel %vm1185, %v2843, %v2844
      %v2846 = vrot.slane %v2692, 5
      %v2847 = vrot.slane %v2846, 4
      %v2848 = vrot.slane %v1997, 5
      %v2849 = vsel %vm1185, %v2847, %v2848
      %v2850 = vrot.slane %v2848, 4
      %v2851 = vrot.slane %v1998, 5
      %v2852 = vsel %vm1185, %v2850, %v2851
      %s2853 = scalar_lea.vmem %s1, 10
      %v2854 = vld [vmem:[%s2853] sm:$0x3]
      %v2855 = vunpack.c.l.b16 %v2744
      %v2856 = vunpack.c.l.b16 %v2747
      %v2857 = vunpack.c.l.b16 %v2751
      %v2858 = vunpack.c.l.b16 %v2754
      %v2859 = vunpack.c.l.b16 %v2758
      %v2860 = vunpack.c.l.b16 %v2761
      %v2861 = vunpack.c.l.b16 %v2765
      %v2862 = vunpack.c.l.b16 %v2768
      %v2863 = vunpack.c.l.b16 %v2772
      %v2864 = vunpack.c.l.b16 %v2775
      %v2865 = vunpack.c.l.b16 %v2779
      %v2866 = vunpack.c.l.b16 %v2782
      %v2867 = vunpack.c.l.b16 %v2786
      %v2868 = vunpack.c.l.b16 %v2789
      %v2869 = vunpack.c.l.b16 %v2793
      %v2870 = vunpack.c.l.b16 %v2796
      %v2871 = vunpack.c.l.b16 %v2800
      %v2872 = vunpack.c.l.b16 %v2803
      %v2873 = vunpack.c.l.b16 %v2807
      %v2874 = vunpack.c.l.b16 %v2810
      %v2875 = vunpack.c.l.b16 %v2814
      %v2876 = vunpack.c.l.b16 %v2817
      %v2877 = vunpack.c.l.b16 %v2821
      %v2878 = vunpack.c.l.b16 %v2824
      %v2879 = vunpack.c.l.b16 %v2828
      %v2880 = vunpack.c.l.b16 %v2831
      %v2881 = vunpack.c.l.b16 %v2835
      %v2882 = vunpack.c.l.b16 %v2838
      %v2883 = vunpack.c.l.b16 %v2842
      %v2884 = vunpack.c.l.b16 %v2845
      %v2885 = vunpack.c.l.b16 %v2849
      %v2886 = vunpack.c.l.b16 %v2852
      %v2887 = vpack.c.b16 %v2856, %v2855
      %v2888 = vpack.c.b16 %v2858, %v2857
      %v2889 = vpack.c.b16 %v2860, %v2859
      %v2890 = vpack.c.b16 %v2862, %v2861
      %v2891 = vpack.c.b16 %v2864, %v2863
      %v2892 = vpack.c.b16 %v2866, %v2865
      %v2893 = vpack.c.b16 %v2868, %v2867
      %v2894 = vpack.c.b16 %v2870, %v2869
      %v2895 = vpack.c.b16 %v2872, %v2871
      %v2896 = vpack.c.b16 %v2874, %v2873
      %v2897 = vpack.c.b16 %v2876, %v2875
      %v2898 = vpack.c.b16 %v2878, %v2877
      %v2899 = vpack.c.b16 %v2880, %v2879
      %v2900 = vpack.c.b16 %v2882, %v2881
      %v2901 = vpack.c.b16 %v2884, %v2883
      %v2902 = vpack.c.b16 %v2886, %v2885
      %v2904 = vsel %vm629, %v2887, 0
      %v2907 = vsel %vm629, %v2888, 0
      %v2910 = vsel %vm629, %v2889, 0
      %v2913 = vsel %vm629, %v2890, 0
      %v2916 = vsel %vm629, %v2891, 0
      %v2919 = vsel %vm629, %v2892, 0
      %v2922 = vsel %vm629, %v2893, 0
      %v2925 = vsel %vm629, %v2894, 0
      %v2928 = vsel %vm629, %v2895, 0
      %v2931 = vsel %vm629, %v2896, 0
      %v2934 = vsel %vm629, %v2897, 0
      %v2937 = vsel %vm629, %v2898, 0
      %v2940 = vsel %vm629, %v2899, 0
      %v2943 = vsel %vm629, %v2900, 0
      %v2946 = vsel %vm629, %v2901, 0
      %v2949 = vsel %vm629, %v2902, 0
      %v2952 = vsel %vm678, %v2854, 0
      %2954 = vmatprep.subr.bf16.mxu0 0
      %2955 = vmatpush1.bf16.msra.mxu0 %v2952
      %2956 = vmatprep.subr.bf16.mxu0 0
      %2957 = vmatpush1.bf16.msra.mxu0 0
      %2958 = vmatprep.subr.bf16.mxu0 0
      %2959 = vmatpush1.bf16.msra.mxu0 0
      %2960 = vmatprep.subr.bf16.mxu0 0
      %2961 = vmatpush1.bf16.msra.mxu0 0
      %2962 = vmatprep.subr.bf16.mxu0 0
      %2963 = vmatpush1.bf16.msra.mxu0 0
      %2964 = vmatprep.subr.bf16.mxu0 0
      %2965 = vmatpush1.bf16.msra.mxu0 0
      %2966 = vmatprep.subr.bf16.mxu0 0
      %2967 = vmatpush1.bf16.msra.mxu0 0
      %2968 = vmatprep.subr.bf16.mxu0 0
      %2969 = vmatpush1.bf16.msra.mxu0 0
      %2970 = vmatprep.subr.bf16.mxu0 0
      %2971 = vmatpush1.bf16.msra.mxu0 0
      %2972 = vmatprep.subr.bf16.mxu0 0
      %2973 = vmatpush1.bf16.msra.mxu0 0
      %2974 = vmatprep.subr.bf16.mxu0 0
      %2975 = vmatpush1.bf16.msra.mxu0 0
      %2976 = vmatprep.subr.bf16.mxu0 0
      %2977 = vmatpush1.bf16.msra.mxu0 0
      %2978 = vmatprep.subr.bf16.mxu0 0
      %2979 = vmatpush1.bf16.msra.mxu0 0
      %2980 = vmatprep.subr.bf16.mxu0 0
      %2981 = vmatpush1.bf16.msra.mxu0 0
      %2982 = vmatprep.subr.bf16.mxu0 0
      %2983 = vmatpush1.bf16.msra.mxu0 0
      %2984 = vmatprep.subr.bf16.mxu0 0
      %2985 = vmatpush1.bf16.msra.mxu0 0
      %2986 = vmatprep.mubr.bf16.mxu0 0
      %2987 = vmatmul.mubr.bf16.gmra.mrb[0].mxu0 %v2904
      %v2988 = vpop.f32.mrb[0].mxu0
      %v2989 = vadd.f32 0.0, %v2988
      %v2990 = vpop.f32.mrb[0].mxu0
      %v2991 = vpop.f32.mrb[0].mxu0
      %v2992 = vadd.f32 0.0, %v2991
      %v2993 = vpop.f32.mrb[0].mxu0
      %2994 = vmatprep.mubr.bf16.mxu0 0
      %2995 = vmatmul.mubr.bf16.gmra.mrb[0].mxu0 %v2907
      %v2996 = vpop.f32.mrb[0].mxu0
      %v2997 = vadd.f32 0.0, %v2996
      %v2998 = vpop.f32.mrb[0].mxu0
      %v2999 = vpop.f32.mrb[0].mxu0
      %v3000 = vadd.f32 0.0, %v2999
      %v3001 = vpop.f32.mrb[0].mxu0
      %3002 = vmatprep.mubr.bf16.mxu0 0
      %3003 = vmatmul.mubr.bf16.gmra.mrb[0].mxu0 %v2910
      %v3004 = vpop.f32.mrb[0].mxu0
      %v3005 = vadd.f32 0.0, %v3004
      %v3006 = vpop.f32.mrb[0].mxu0
      %v3007 = vpop.f32.mrb[0].mxu0
      %v3008 = vadd.f32 0.0, %v3007
      %v3009 = vpop.f32.mrb[0].mxu0
      %3010 = vmatprep.mubr.bf16.mxu0 0
      %3011 = vmatmul.mubr.bf16.gmra.mrb[0].mxu0 %v2913
      %v3012 = vpop.f32.mrb[0].mxu0
      %v3013 = vadd.f32 0.0, %v3012
      %v3014 = vpop.f32.mrb[0].mxu0
      %v3015 = vpop.f32.mrb[0].mxu0
      %v3016 = vadd.f32 0.0, %v3015
      %v3017 = vpop.f32.mrb[0].mxu0
      %3018 = vmatprep.mubr.bf16.mxu0 0
      %3019 = vmatmul.mubr.bf16.gmra.mrb[0].mxu0 %v2916
      %v3020 = vpop.f32.mrb[0].mxu0
      %v3021 = vadd.f32 0.0, %v3020
      %v3022 = vpop.f32.mrb[0].mxu0
      %v3023 = vpop.f32.mrb[0].mxu0
      %v3024 = vadd.f32 0.0, %v3023
      %v3025 = vpop.f32.mrb[0].mxu0
      %3026 = vmatprep.mubr.bf16.mxu0 0
      %3027 = vmatmul.mubr.bf16.gmra.mrb[0].mxu0 %v2919
      %v3028 = vpop.f32.mrb[0].mxu0
      %v3029 = vadd.f32 0.0, %v3028
      %v3030 = vpop.f32.mrb[0].mxu0
      %v3031 = vpop.f32.mrb[0].mxu0
      %v3032 = vadd.f32 0.0, %v3031
      %v3033 = vpop.f32.mrb[0].mxu0
      %3034 = vmatprep.mubr.bf16.mxu0 0
      %3035 = vmatmul.mubr.bf16.gmra.mrb[0].mxu0 %v2922
      %v3036 = vpop.f32.mrb[0].mxu0
      %v3037 = vadd.f32 0.0, %v3036
      %v3038 = vpop.f32.mrb[0].mxu0
      %v3039 = vpop.f32.mrb[0].mxu0
      %v3040 = vadd.f32 0.0, %v3039
      %v3041 = vpop.f32.mrb[0].mxu0
      %3042 = vmatprep.mubr.bf16.mxu0 0
      %3043 = vmatmul.mubr.bf16.gmra.mrb[0].mxu0 %v2925
      %v3044 = vpop.f32.mrb[0].mxu0
      %v3045 = vadd.f32 0.0, %v3044
      %v3046 = vpop.f32.mrb[0].mxu0
      %v3047 = vpop.f32.mrb[0].mxu0
      %v3048 = vadd.f32 0.0, %v3047
      %v3049 = vpop.f32.mrb[0].mxu0
      %3050 = vmatprep.mubr.bf16.mxu0 0
      %3051 = vmatmul.mubr.bf16.gmra.mrb[0].mxu0 %v2928
      %v3052 = vpop.f32.mrb[0].mxu0
      %v3053 = vadd.f32 0.0, %v3052
      %v3054 = vpop.f32.mrb[0].mxu0
      %v3055 = vpop.f32.mrb[0].mxu0
      %v3056 = vadd.f32 0.0, %v3055
      %v3057 = vpop.f32.mrb[0].mxu0
      %3058 = vmatprep.mubr.bf16.mxu0 0
      %3059 = vmatmul.mubr.bf16.gmra.mrb[0].mxu0 %v2931
      %v3060 = vpop.f32.mrb[0].mxu0
      %v3061 = vadd.f32 0.0, %v3060
      %v3062 = vpop.f32.mrb[0].mxu0
      %v3063 = vpop.f32.mrb[0].mxu0
      %v3064 = vadd.f32 0.0, %v3063
      %v3065 = vpop.f32.mrb[0].mxu0
      %3066 = vmatprep.mubr.bf16.mxu0 0
      %3067 = vmatmul.mubr.bf16.gmra.mrb[0].mxu0 %v2934
      %v3068 = vpop.f32.mrb[0].mxu0
      %v3069 = vadd.f32 0.0, %v3068
      %v3070 = vpop.f32.mrb[0].mxu0
      %v3071 = vpop.f32.mrb[0].mxu0
      %v3072 = vadd.f32 0.0, %v3071
      %v3073 = vpop.f32.mrb[0].mxu0
      %3074 = vmatprep.mubr.bf16.mxu0 0
      %3075 = vmatmul.mubr.bf16.gmra.mrb[0].mxu0 %v2937
      %v3076 = vpop.f32.mrb[0].mxu0
      %v3077 = vadd.f32 0.0, %v3076
      %v3078 = vpop.f32.mrb[0].mxu0
      %v3079 = vpop.f32.mrb[0].mxu0
      %v3080 = vadd.f32 0.0, %v3079
      %v3081 = vpop.f32.mrb[0].mxu0
      %3082 = vmatprep.mubr.bf16.mxu0 0
      %3083 = vmatmul.mubr.bf16.gmra.mrb[0].mxu0 %v2940
      %v3084 = vpop.f32.mrb[0].mxu0
      %v3085 = vadd.f32 0.0, %v3084
      %v3086 = vpop.f32.mrb[0].mxu0
      %v3087 = vpop.f32.mrb[0].mxu0
      %v3088 = vadd.f32 0.0, %v3087
      %v3089 = vpop.f32.mrb[0].mxu0
      %3090 = vmatprep.mubr.bf16.mxu0 0
      %3091 = vmatmul.mubr.bf16.gmra.mrb[0].mxu0 %v2943
      %v3092 = vpop.f32.mrb[0].mxu0
      %v3093 = vadd.f32 0.0, %v3092
      %v3094 = vpop.f32.mrb[0].mxu0
      %v3095 = vpop.f32.mrb[0].mxu0
      %v3096 = vadd.f32 0.0, %v3095
      %v3097 = vpop.f32.mrb[0].mxu0
      %3098 = vmatprep.mubr.bf16.mxu0 0
      %3099 = vmatmul.mubr.bf16.gmra.mrb[0].mxu0 %v2946
      %v3100 = vpop.f32.mrb[0].mxu0
      %v3101 = vadd.f32 0.0, %v3100
      %v3102 = vpop.f32.mrb[0].mxu0
      %v3103 = vpop.f32.mrb[0].mxu0
      %v3104 = vadd.f32 0.0, %v3103
      %v3105 = vpop.f32.mrb[0].mxu0
      %3106 = vmatprep.mubr.bf16.mxu0 0
      %3107 = vmatmul.mubr.bf16.gmra.mrb[0].mxu0 %v2949
      %v3108 = vpop.f32.mrb[0].mxu0
      %v3109 = vadd.f32 0.0, %v3108
      %v3110 = vpop.f32.mrb[0].mxu0
      %v3111 = vpop.f32.mrb[0].mxu0
      %v3112 = vadd.f32 0.0, %v3111
      %v3113 = vpop.f32.mrb[0].mxu0
      %3114 = vdwg.mxu0
      %v3115 = vadd.f32 %v2645, %v2989
      %v3116 = vadd.f32 %v2646, %v2992
      %v3117 = vadd.f32 %v2647, %v2997
      %v3118 = vadd.f32 %v2648, %v3000
      %v3119 = vadd.f32 %v2649, %v3005
      %v3120 = vadd.f32 %v2650, %v3008
      %v3121 = vadd.f32 %v2651, %v3013
      %v3122 = vadd.f32 %v2652, %v3016
      %v3123 = vadd.f32 %v2653, %v3021
      %v3124 = vadd.f32 %v2654, %v3024
      %v3125 = vadd.f32 %v2655, %v3029
      %v3126 = vadd.f32 %v2656, %v3032
      %v3127 = vadd.f32 %v2657, %v3037
      %v3128 = vadd.f32 %v2658, %v3040
      %v3129 = vadd.f32 %v2659, %v3045
      %v3130 = vadd.f32 %v2660, %v3048
      %v3131 = vadd.f32 %v2661, %v3053
      %v3132 = vadd.f32 %v2662, %v3056
      %v3133 = vadd.f32 %v2663, %v3061
      %v3134 = vadd.f32 %v2664, %v3064
      %v3135 = vadd.f32 %v2665, %v3069
      %v3136 = vadd.f32 %v2666, %v3072
      %v3137 = vadd.f32 %v2667, %v3077
      %v3138 = vadd.f32 %v2668, %v3080
      %v3139 = vadd.f32 %v2669, %v3085
      %v3140 = vadd.f32 %v2670, %v3088
      %v3141 = vadd.f32 %v2671, %v3093
      %v3142 = vadd.f32 %v2672, %v3096
      %v3143 = vadd.f32 %v2673, %v3101
      %v3144 = vadd.f32 %v2674, %v3104
      %v3145 = vadd.f32 %v2675, %v3109
      %v3146 = vadd.f32 %v2676, %v3112
      %s3147 = scalar_lea.vmem %s137, 24
      %v3148 = vld [vmem:[%s3147] sm:$0xf]
      %v3149 = vld [vmem:[%s3147 + $0x4] sm:$0xf]
      %v3150 = vld [vmem:[%s3147 + $0xc] sm:$0xf]
      %v3151 = vld [vmem:[%s3147 + $0x10] sm:$0xf]
      %v3152 = vld [vmem:[%s3147 + $0x18] sm:$0xf]
      %v3153 = vld [vmem:[%s3147 + $0x1c] sm:$0xf]
      %v3154 = vld [vmem:[%s3147 + $0x24] sm:$0xf]
      %v3155 = vld [vmem:[%s3147 + $0x28] sm:$0xf]
      %v3156 = vld [vmem:[%s3147 + $0x30] sm:$0xf]
      %v3157 = vld [vmem:[%s3147 + $0x34] sm:$0xf]
      %v3158 = vld [vmem:[%s3147 + $0x3c] sm:$0xf]
      %v3159 = vld [vmem:[%s3147 + $0x40] sm:$0xf]
      %v3160 = vld [vmem:[%s3147 + $0x48] sm:$0xf]
      %v3161 = vld [vmem:[%s3147 + $0x4c] sm:$0xf]
      %v3162 = vld [vmem:[%s3147 + $0x54] sm:$0xf]
      %v3163 = vld [vmem:[%s3147 + $0x58] sm:$0xf]
      %v3164 = vld [vmem:[%s3147 + $0x60] sm:$0xf]
      %v3165 = vld [vmem:[%s3147 + $0x64] sm:$0xf]
      %v3166 = vld [vmem:[%s3147 + $0x6c] sm:$0xf]
      %v3167 = vld [vmem:[%s3147 + $0x70] sm:$0xf]
      %v3168 = vld [vmem:[%s3147 + $0x78] sm:$0xf]
      %v3169 = vld [vmem:[%s3147 + $0x7c] sm:$0xf]
      %v3170 = vld [vmem:[%s3147 + $0x84] sm:$0xf]
      %v3171 = vld [vmem:[%s3147 + $0x88] sm:$0xf]
      %v3172 = vld [vmem:[%s3147 + $0x90] sm:$0xf]
      %v3173 = vld [vmem:[%s3147 + $0x94] sm:$0xf]
      %v3174 = vld [vmem:[%s3147 + $0x9c] sm:$0xf]
      %v3175 = vld [vmem:[%s3147 + $0xa0] sm:$0xf]
      %v3176 = vld [vmem:[%s3147 + $0xa8] sm:$0xf]
      %v3177 = vld [vmem:[%s3147 + $0xac] sm:$0xf]
      %v3178 = vld [vmem:[%s3147 + $0xb4] sm:$0xf]
      %v3179 = vld [vmem:[%s3147 + $0xb8] sm:$0xf]
      %s3180 = scalar_lea.vmem %s1, 12
      %v3181 = vld [vmem:[%s3180] sm:$0x3]
      %v3214 = vunpack.c.l.b16 %v3148
      %v3215 = vunpack.c.l.b16 %v3149
      %v3216 = vunpack.c.l.b16 %v3150
      %v3217 = vunpack.c.l.b16 %v3151
      %v3218 = vunpack.c.l.b16 %v3152
      %v3219 = vunpack.c.l.b16 %v3153
      %v3220 = vunpack.c.l.b16 %v3154
      %v3221 = vunpack.c.l.b16 %v3155
      %v3222 = vunpack.c.l.b16 %v3156
      %v3223 = vunpack.c.l.b16 %v3157
      %v3224 = vunpack.c.l.b16 %v3158
      %v3225 = vunpack.c.l.b16 %v3159
      %v3226 = vunpack.c.l.b16 %v3160
      %v3227 = vunpack.c.l.b16 %v3161
      %v3228 = vunpack.c.l.b16 %v3162
      %v3229 = vunpack.c.l.b16 %v3163
      %v3230 = vunpack.c.l.b16 %v3164
      %v3231 = vunpack.c.l.b16 %v3165
      %v3232 = vunpack.c.l.b16 %v3166
      %v3233 = vunpack.c.l.b16 %v3167
      %v3234 = vunpack.c.l.b16 %v3168
      %v3235 = vunpack.c.l.b16 %v3169
      %v3236 = vunpack.c.l.b16 %v3170
      %v3237 = vunpack.c.l.b16 %v3171
      %v3238 = vunpack.c.l.b16 %v3172
      %v3239 = vunpack.c.l.b16 %v3173
      %v3240 = vunpack.c.l.b16 %v3174
      %v3241 = vunpack.c.l.b16 %v3175
      %v3242 = vunpack.c.l.b16 %v3176
      %v3243 = vunpack.c.l.b16 %v3177
      %v3244 = vunpack.c.l.b16 %v3178
      %v3245 = vunpack.c.l.b16 %v3179
      %v3246 = vpack.c.b16 %v3215, %v3214
      %v3247 = vpack.c.b16 %v3217, %v3216
      %v3248 = vpack.c.b16 %v3219, %v3218
      %v3249 = vpack.c.b16 %v3221, %v3220
      %v3250 = vpack.c.b16 %v3223, %v3222
      %v3251 = vpack.c.b16 %v3225, %v3224
      %v3252 = vpack.c.b16 %v3227, %v3226
      %v3253 = vpack.c.b16 %v3229, %v3228
      %v3254 = vpack.c.b16 %v3231, %v3230
      %v3255 = vpack.c.b16 %v3233, %v3232
      %v3256 = vpack.c.b16 %v3235, %v3234
      %v3257 = vpack.c.b16 %v3237, %v3236
      %v3258 = vpack.c.b16 %v3239, %v3238
      %v3259 = vpack.c.b16 %v3241, %v3240
      %v3260 = vpack.c.b16 %v3243, %v3242
      %v3261 = vpack.c.b16 %v3245, %v3244
      %v3263 = vsel %vm629, %v3246, 0
      %v3266 = vsel %vm629, %v3247, 0
      %v3269 = vsel %vm629, %v3248, 0
      %v3272 = vsel %vm629, %v3249, 0
      %v3275 = vsel %vm629, %v3250, 0
      %v3278 = vsel %vm629, %v3251, 0
      %v3281 = vsel %vm629, %v3252, 0
      %v3284 = vsel %vm629, %v3253, 0
      %v3287 = vsel %vm629, %v3254, 0
      %v3290 = vsel %vm629, %v3255, 0
      %v3293 = vsel %vm629, %v3256, 0
      %v3296 = vsel %vm629, %v3257, 0
      %v3299 = vsel %vm629, %v3258, 0
      %v3302 = vsel %vm629, %v3259, 0
      %v3305 = vsel %vm629, %v3260, 0
      %v3308 = vsel %vm629, %v3261, 0
      %v3311 = vsel %vm678, %v3181, 0
      %3313 = vmatprep.subr.bf16.mxu0 0
      %3314 = vmatpush1.bf16.msra.mxu0 %v3311
      %3315 = vmatprep.subr.bf16.mxu0 0
      %3316 = vmatpush1.bf16.msra.mxu0 0
      %3317 = vmatprep.subr.bf16.mxu0 0
      %3318 = vmatpush1.bf16.msra.mxu0 0
      %3319 = vmatprep.subr.bf16.mxu0 0
      %3320 = vmatpush1.bf16.msra.mxu0 0
      %3321 = vmatprep.subr.bf16.mxu0 0
      %3322 = vmatpush1.bf16.msra.mxu0 0
      %3323 = vmatprep.subr.bf16.mxu0 0
      %3324 = vmatpush1.bf16.msra.mxu0 0
      %3325 = vmatprep.subr.bf16.mxu0 0
      %3326 = vmatpush1.bf16.msra.mxu0 0
      %3327 = vmatprep.subr.bf16.mxu0 0
      %3328 = vmatpush1.bf16.msra.mxu0 0
      %3329 = vmatprep.subr.bf16.mxu0 0
      %3330 = vmatpush1.bf16.msra.mxu0 0
      %3331 = vmatprep.subr.bf16.mxu0 0
      %3332 = vmatpush1.bf16.msra.mxu0 0
      %3333 = vmatprep.subr.bf16.mxu0 0
      %3334 = vmatpush1.bf16.msra.mxu0 0
      %3335 = vmatprep.subr.bf16.mxu0 0
      %3336 = vmatpush1.bf16.msra.mxu0 0
      %3337 = vmatprep.subr.bf16.mxu0 0
      %3338 = vmatpush1.bf16.msra.mxu0 0
      %3339 = vmatprep.subr.bf16.mxu0 0
      %3340 = vmatpush1.bf16.msra.mxu0 0
      %3341 = vmatprep.subr.bf16.mxu0 0
      %3342 = vmatpush1.bf16.msra.mxu0 0
      %3343 = vmatprep.subr.bf16.mxu0 0
      %3344 = vmatpush1.bf16.msra.mxu0 0
      %3345 = vmatprep.mubr.bf16.mxu0 0
      %3346 = vmatmul.mubr.bf16.gmra.mrb[0].mxu0 %v3263
      %v3347 = vpop.f32.mrb[0].mxu0
      %v3348 = vadd.f32 0.0, %v3347
      %v3349 = vpop.f32.mrb[0].mxu0
      %v3350 = vpop.f32.mrb[0].mxu0
      %v3351 = vadd.f32 0.0, %v3350
      %v3352 = vpop.f32.mrb[0].mxu0
      %3353 = vmatprep.mubr.bf16.mxu0 0
      %3354 = vmatmul.mubr.bf16.gmra.mrb[0].mxu0 %v3266
      %v3355 = vpop.f32.mrb[0].mxu0
      %v3356 = vadd.f32 0.0, %v3355
      %v3357 = vpop.f32.mrb[0].mxu0
      %v3358 = vpop.f32.mrb[0].mxu0
      %v3359 = vadd.f32 0.0, %v3358
      %v3360 = vpop.f32.mrb[0].mxu0
      %3361 = vmatprep.mubr.bf16.mxu0 0
      %3362 = vmatmul.mubr.bf16.gmra.mrb[0].mxu0 %v3269
      %v3363 = vpop.f32.mrb[0].mxu0
      %v3364 = vadd.f32 0.0, %v3363
      %v3365 = vpop.f32.mrb[0].mxu0
      %v3366 = vpop.f32.mrb[0].mxu0
      %v3367 = vadd.f32 0.0, %v3366
      %v3368 = vpop.f32.mrb[0].mxu0
      %3369 = vmatprep.mubr.bf16.mxu0 0
      %3370 = vmatmul.mubr.bf16.gmra.mrb[0].mxu0 %v3272
      %v3371 = vpop.f32.mrb[0].mxu0
      %v3372 = vadd.f32 0.0, %v3371
      %v3373 = vpop.f32.mrb[0].mxu0
      %v3374 = vpop.f32.mrb[0].mxu0
      %v3375 = vadd.f32 0.0, %v3374
      %v3376 = vpop.f32.mrb[0].mxu0
      %3377 = vmatprep.mubr.bf16.mxu0 0
      %3378 = vmatmul.mubr.bf16.gmra.mrb[0].mxu0 %v3275
      %v3379 = vpop.f32.mrb[0].mxu0
      %v3380 = vadd.f32 0.0, %v3379
      %v3381 = vpop.f32.mrb[0].mxu0
      %v3382 = vpop.f32.mrb[0].mxu0
      %v3383 = vadd.f32 0.0, %v3382
      %v3384 = vpop.f32.mrb[0].mxu0
      %3385 = vmatprep.mubr.bf16.mxu0 0
      %3386 = vmatmul.mubr.bf16.gmra.mrb[0].mxu0 %v3278
      %v3387 = vpop.f32.mrb[0].mxu0
      %v3388 = vadd.f32 0.0, %v3387
      %v3389 = vpop.f32.mrb[0].mxu0
      %v3390 = vpop.f32.mrb[0].mxu0
      %v3391 = vadd.f32 0.0, %v3390
      %v3392 = vpop.f32.mrb[0].mxu0
      %3393 = vmatprep.mubr.bf16.mxu0 0
      %3394 = vmatmul.mubr.bf16.gmra.mrb[0].mxu0 %v3281
      %v3395 = vpop.f32.mrb[0].mxu0
      %v3396 = vadd.f32 0.0, %v3395
      %v3397 = vpop.f32.mrb[0].mxu0
      %v3398 = vpop.f32.mrb[0].mxu0
      %v3399 = vadd.f32 0.0, %v3398
      %v3400 = vpop.f32.mrb[0].mxu0
      %3401 = vmatprep.mubr.bf16.mxu0 0
      %3402 = vmatmul.mubr.bf16.gmra.mrb[0].mxu0 %v3284
      %v3403 = vpop.f32.mrb[0].mxu0
      %v3404 = vadd.f32 0.0, %v3403
      %v3405 = vpop.f32.mrb[0].mxu0
      %v3406 = vpop.f32.mrb[0].mxu0
      %v3407 = vadd.f32 0.0, %v3406
      %v3408 = vpop.f32.mrb[0].mxu0
      %3409 = vmatprep.mubr.bf16.mxu0 0
      %3410 = vmatmul.mubr.bf16.gmra.mrb[0].mxu0 %v3287
      %v3411 = vpop.f32.mrb[0].mxu0
      %v3412 = vadd.f32 0.0, %v3411
      %v3413 = vpop.f32.mrb[0].mxu0
      %v3414 = vpop.f32.mrb[0].mxu0
      %v3415 = vadd.f32 0.0, %v3414
      %v3416 = vpop.f32.mrb[0].mxu0
      %3417 = vmatprep.mubr.bf16.mxu0 0
      %3418 = vmatmul.mubr.bf16.gmra.mrb[0].mxu0 %v3290
      %v3419 = vpop.f32.mrb[0].mxu0
      %v3420 = vadd.f32 0.0, %v3419
      %v3421 = vpop.f32.mrb[0].mxu0
      %v3422 = vpop.f32.mrb[0].mxu0
      %v3423 = vadd.f32 0.0, %v3422
      %v3424 = vpop.f32.mrb[0].mxu0
      %3425 = vmatprep.mubr.bf16.mxu0 0
      %3426 = vmatmul.mubr.bf16.gmra.mrb[0].mxu0 %v3293
      %v3427 = vpop.f32.mrb[0].mxu0
      %v3428 = vadd.f32 0.0, %v3427
      %v3429 = vpop.f32.mrb[0].mxu0
      %v3430 = vpop.f32.mrb[0].mxu0
      %v3431 = vadd.f32 0.0, %v3430
      %v3432 = vpop.f32.mrb[0].mxu0
      %3433 = vmatprep.mubr.bf16.mxu0 0
      %3434 = vmatmul.mubr.bf16.gmra.mrb[0].mxu0 %v3296
      %v3435 = vpop.f32.mrb[0].mxu0
      %v3436 = vadd.f32 0.0, %v3435
      %v3437 = vpop.f32.mrb[0].mxu0
      %v3438 = vpop.f32.mrb[0].mxu0
      %v3439 = vadd.f32 0.0, %v3438
      %v3440 = vpop.f32.mrb[0].mxu0
      %3441 = vmatprep.mubr.bf16.mxu0 0
      %3442 = vmatmul.mubr.bf16.gmra.mrb[0].mxu0 %v3299
      %v3443 = vpop.f32.mrb[0].mxu0
      %v3444 = vadd.f32 0.0, %v3443
      %v3445 = vpop.f32.mrb[0].mxu0
      %v3446 = vpop.f32.mrb[0].mxu0
      %v3447 = vadd.f32 0.0, %v3446
      %v3448 = vpop.f32.mrb[0].mxu0
      %3449 = vmatprep.mubr.bf16.mxu0 0
      %3450 = vmatmul.mubr.bf16.gmra.mrb[0].mxu0 %v3302
      %v3451 = vpop.f32.mrb[0].mxu0
      %v3452 = vadd.f32 0.0, %v3451
      %v3453 = vpop.f32.mrb[0].mxu0
      %v3454 = vpop.f32.mrb[0].mxu0
      %v3455 = vadd.f32 0.0, %v3454
      %v3456 = vpop.f32.mrb[0].mxu0
      %3457 = vmatprep.mubr.bf16.mxu0 0
      %3458 = vmatmul.mubr.bf16.gmra.mrb[0].mxu0 %v3305
      %v3459 = vpop.f32.mrb[0].mxu0
      %v3460 = vadd.f32 0.0, %v3459
      %v3461 = vpop.f32.mrb[0].mxu0
      %v3462 = vpop.f32.mrb[0].mxu0
      %v3463 = vadd.f32 0.0, %v3462
      %v3464 = vpop.f32.mrb[0].mxu0
      %3465 = vmatprep.mubr.bf16.mxu0 0
      %3466 = vmatmul.mubr.bf16.gmra.mrb[0].mxu0 %v3308
      %v3467 = vpop.f32.mrb[0].mxu0
      %v3468 = vadd.f32 0.0, %v3467
      %v3469 = vpop.f32.mrb[0].mxu0
      %v3470 = vpop.f32.mrb[0].mxu0
      %v3471 = vadd.f32 0.0, %v3470
      %v3472 = vpop.f32.mrb[0].mxu0
      %3473 = vdwg.mxu0
      %v3474 = vadd.f32 %v3115, %v3348
      %v3475 = vadd.f32 %v3116, %v3351
      %v3476 = vadd.f32 %v3117, %v3356
      %v3477 = vadd.f32 %v3118, %v3359
      %v3478 = vadd.f32 %v3119, %v3364
      %v3479 = vadd.f32 %v3120, %v3367
      %v3480 = vadd.f32 %v3121, %v3372
      %v3481 = vadd.f32 %v3122, %v3375
      %v3482 = vadd.f32 %v3123, %v3380
      %v3483 = vadd.f32 %v3124, %v3383
      %v3484 = vadd.f32 %v3125, %v3388
      %v3485 = vadd.f32 %v3126, %v3391
      %v3486 = vadd.f32 %v3127, %v3396
      %v3487 = vadd.f32 %v3128, %v3399
      %v3488 = vadd.f32 %v3129, %v3404
      %v3489 = vadd.f32 %v3130, %v3407
      %v3490 = vadd.f32 %v3131, %v3412
      %v3491 = vadd.f32 %v3132, %v3415
      %v3492 = vadd.f32 %v3133, %v3420
      %v3493 = vadd.f32 %v3134, %v3423
      %v3494 = vadd.f32 %v3135, %v3428
      %v3495 = vadd.f32 %v3136, %v3431
      %v3496 = vadd.f32 %v3137, %v3436
      %v3497 = vadd.f32 %v3138, %v3439
      %v3498 = vadd.f32 %v3139, %v3444
      %v3499 = vadd.f32 %v3140, %v3447
      %v3500 = vadd.f32 %v3141, %v3452
      %v3501 = vadd.f32 %v3142, %v3455
      %v3502 = vadd.f32 %v3143, %v3460
      %v3503 = vadd.f32 %v3144, %v3463
      %v3504 = vadd.f32 %v3145, %v3468
      %v3505 = vadd.f32 %v3146, %v3471
      %v3506 = vld [vmem:[%s3147] sm:$0xf]
      %v3507 = vld [vmem:[%s3147 + $0x4] sm:$0xf]
      %v3508 = vld [vmem:[%s3147 + $0x8] sm:$0x1]
      %v3509 = vld [vmem:[%s3147 + $0xc] sm:$0xf]
      %v3510 = vld [vmem:[%s3147 + $0x10] sm:$0xf]
      %v3511 = vld [vmem:[%s3147 + $0x14] sm:$0x1]
      %v3512 = vld [vmem:[%s3147 + $0x18] sm:$0xf]
      %v3513 = vld [vmem:[%s3147 + $0x1c] sm:$0xf]
      %v3514 = vld [vmem:[%s3147 + $0x20] sm:$0x1]
      %v3515 = vld [vmem:[%s3147 + $0x24] sm:$0xf]
      %v3516 = vld [vmem:[%s3147 + $0x28] sm:$0xf]
      %v3517 = vld [vmem:[%s3147 + $0x2c] sm:$0x1]
      %v3518 = vld [vmem:[%s3147 + $0x30] sm:$0xf]
      %v3519 = vld [vmem:[%s3147 + $0x34] sm:$0xf]
      %v3520 = vld [vmem:[%s3147 + $0x38] sm:$0x1]
      %v3521 = vld [vmem:[%s3147 + $0x3c] sm:$0xf]
      %v3522 = vld [vmem:[%s3147 + $0x40] sm:$0xf]
      %v3523 = vld [vmem:[%s3147 + $0x44] sm:$0x1]
      %v3524 = vld [vmem:[%s3147 + $0x48] sm:$0xf]
      %v3525 = vld [vmem:[%s3147 + $0x4c] sm:$0xf]
      %v3526 = vld [vmem:[%s3147 + $0x50] sm:$0x1]
      %v3527 = vld [vmem:[%s3147 + $0x54] sm:$0xf]
      %v3528 = vld [vmem:[%s3147 + $0x58] sm:$0xf]
      %v3529 = vld [vmem:[%s3147 + $0x5c] sm:$0x1]
      %v3530 = vld [vmem:[%s3147 + $0x60] sm:$0xf]
      %v3531 = vld [vmem:[%s3147 + $0x64] sm:$0xf]
      %v3532 = vld [vmem:[%s3147 + $0x68] sm:$0x1]
      %v3533 = vld [vmem:[%s3147 + $0x6c] sm:$0xf]
      %v3534 = vld [vmem:[%s3147 + $0x70] sm:$0xf]
      %v3535 = vld [vmem:[%s3147 + $0x74] sm:$0x1]
      %v3536 = vld [vmem:[%s3147 + $0x78] sm:$0xf]
      %v3537 = vld [vmem:[%s3147 + $0x7c] sm:$0xf]
      %v3538 = vld [vmem:[%s3147 + $0x80] sm:$0x1]
      %v3539 = vld [vmem:[%s3147 + $0x84] sm:$0xf]
      %v3540 = vld [vmem:[%s3147 + $0x88] sm:$0xf]
      %v3541 = vld [vmem:[%s3147 + $0x8c] sm:$0x1]
      %v3542 = vld [vmem:[%s3147 + $0x90] sm:$0xf]
      %v3543 = vld [vmem:[%s3147 + $0x94] sm:$0xf]
      %v3544 = vld [vmem:[%s3147 + $0x98] sm:$0x1]
      %v3545 = vld [vmem:[%s3147 + $0x9c] sm:$0xf]
      %v3546 = vld [vmem:[%s3147 + $0xa0] sm:$0xf]
      %v3547 = vld [vmem:[%s3147 + $0xa4] sm:$0x1]
      %v3548 = vld [vmem:[%s3147 + $0xa8] sm:$0xf]
      %v3549 = vld [vmem:[%s3147 + $0xac] sm:$0xf]
      %v3550 = vld [vmem:[%s3147 + $0xb0] sm:$0x1]
      %v3551 = vld [vmem:[%s3147 + $0xb4] sm:$0xf]
      %v3552 = vld [vmem:[%s3147 + $0xb8] sm:$0xf]
      %v3553 = vld [vmem:[%s3147 + $0xbc] sm:$0x1]
      %v3555 = vshrl.u32 %v3506, 16
      %v3557 = vrot.slane %v3555, 4
      %v3558 = vshll.u32 %v3506, 16
      %v3560 = vrot.slane %v3558, 5
      %v3561 = vor.u32 %v3557, %v3560
      %v3562 = vrot.slane %v3561, 4
      %v3564 = vshll.u32 %v3507, 16
      %v3566 = vrot.slane %v3564, 5
      %v3567 = vsel %vm194, %v3562, %v3566
      %v3568 = vshrl.u32 %v3507, 16
      %v3570 = vrot.slane %v3568, 4
      %v3571 = vor.u32 %v3570, %v3566
      %v3572 = vrot.slane %v3571, 4
      %v3574 = vshll.u32 %v3508, 16
      %v3576 = vrot.slane %v3574, 5
      %v3577 = vsel %vm194, %v3572, %v3576
      %v3579 = vshrl.u32 %v3509, 16
      %v3581 = vrot.slane %v3579, 4
      %v3582 = vshll.u32 %v3509, 16
      %v3584 = vrot.slane %v3582, 5
      %v3585 = vor.u32 %v3581, %v3584
      %v3586 = vrot.slane %v3585, 4
      %v3588 = vshll.u32 %v3510, 16
      %v3590 = vrot.slane %v3588, 5
      %v3591 = vsel %vm194, %v3586, %v3590
      %v3592 = vshrl.u32 %v3510, 16
      %v3594 = vrot.slane %v3592, 4
      %v3595 = vor.u32 %v3594, %v3590
      %v3596 = vrot.slane %v3595, 4
      %v3598 = vshll.u32 %v3511, 16
      %v3600 = vrot.slane %v3598, 5
      %v3601 = vsel %vm194, %v3596, %v3600
      %v3603 = vshrl.u32 %v3512, 16
      %v3605 = vrot.slane %v3603, 4
      %v3606 = vshll.u32 %v3512, 16
      %v3608 = vrot.slane %v3606, 5
      %v3609 = vor.u32 %v3605, %v3608
      %v3610 = vrot.slane %v3609, 4
      %v3612 = vshll.u32 %v3513, 16
      %v3614 = vrot.slane %v3612, 5
      %v3615 = vsel %vm194, %v3610, %v3614
      %v3616 = vshrl.u32 %v3513, 16
      %v3618 = vrot.slane %v3616, 4
      %v3619 = vor.u32 %v3618, %v3614
      %v3620 = vrot.slane %v3619, 4
      %v3622 = vshll.u32 %v3514, 16
      %v3624 = vrot.slane %v3622, 5
      %v3625 = vsel %vm194, %v3620, %v3624
      %v3627 = vshrl.u32 %v3515, 16
      %v3629 = vrot.slane %v3627, 4
      %v3630 = vshll.u32 %v3515, 16
      %v3632 = vrot.slane %v3630, 5
      %v3633 = vor.u32 %v3629, %v3632
      %v3634 = vrot.slane %v3633, 4
      %v3636 = vshll.u32 %v3516, 16
      %v3638 = vrot.slane %v3636, 5
      %v3639 = vsel %vm194, %v3634, %v3638
      %v3640 = vshrl.u32 %v3516, 16
      %v3642 = vrot.slane %v3640, 4
      %v3643 = vor.u32 %v3642, %v3638
      %v3644 = vrot.slane %v3643, 4
      %v3646 = vshll.u32 %v3517, 16
      %v3648 = vrot.slane %v3646, 5
      %v3649 = vsel %vm194, %v3644, %v3648
      %v3651 = vshrl.u32 %v3518, 16
      %v3653 = vrot.slane %v3651, 4
      %v3654 = vshll.u32 %v3518, 16
      %v3656 = vrot.slane %v3654, 5
      %v3657 = vor.u32 %v3653, %v3656
      %v3658 = vrot.slane %v3657, 4
      %v3660 = vshll.u32 %v3519, 16
      %v3662 = vrot.slane %v3660, 5
      %v3663 = vsel %vm194, %v3658, %v3662
      %v3664 = vshrl.u32 %v3519, 16
      %v3666 = vrot.slane %v3664, 4
      %v3667 = vor.u32 %v3666, %v3662
      %v3668 = vrot.slane %v3667, 4
      %v3670 = vshll.u32 %v3520, 16
      %v3672 = vrot.slane %v3670, 5
      %v3673 = vsel %vm194, %v3668, %v3672
      %v3675 = vshrl.u32 %v3521, 16
      %v3677 = vrot.slane %v3675, 4
      %v3678 = vshll.u32 %v3521, 16
      %v3680 = vrot.slane %v3678, 5
      %v3681 = vor.u32 %v3677, %v3680
      %v3682 = vrot.slane %v3681, 4
      %v3684 = vshll.u32 %v3522, 16
      %v3686 = vrot.slane %v3684, 5
      %v3687 = vsel %vm194, %v3682, %v3686
      %v3688 = vshrl.u32 %v3522, 16
      %v3690 = vrot.slane %v3688, 4
      %v3691 = vor.u32 %v3690, %v3686
      %v3692 = vrot.slane %v3691, 4
      %v3694 = vshll.u32 %v3523, 16
      %v3696 = vrot.slane %v3694, 5
      %v3697 = vsel %vm194, %v3692, %v3696
      %v3699 = vshrl.u32 %v3524, 16
      %v3701 = vrot.slane %v3699, 4
      %v3702 = vshll.u32 %v3524, 16
      %v3704 = vrot.slane %v3702, 5
      %v3705 = vor.u32 %v3701, %v3704
      %v3706 = vrot.slane %v3705, 4
      %v3708 = vshll.u32 %v3525, 16
      %v3710 = vrot.slane %v3708, 5
      %v3711 = vsel %vm194, %v3706, %v3710
      %v3712 = vshrl.u32 %v3525, 16
      %v3714 = vrot.slane %v3712, 4
      %v3715 = vor.u32 %v3714, %v3710
      %v3716 = vrot.slane %v3715, 4
      %v3718 = vshll.u32 %v3526, 16
      %v3720 = vrot.slane %v3718, 5
      %v3721 = vsel %vm194, %v3716, %v3720
      %v3723 = vshrl.u32 %v3527, 16
      %v3725 = vrot.slane %v3723, 4
      %v3726 = vshll.u32 %v3527, 16
      %v3728 = vrot.slane %v3726, 5
      %v3729 = vor.u32 %v3725, %v3728
      %v3730 = vrot.slane %v3729, 4
      %v3732 = vshll.u32 %v3528, 16
      %v3734 = vrot.slane %v3732, 5
      %v3735 = vsel %vm194, %v3730, %v3734
      %v3736 = vshrl.u32 %v3528, 16
      %v3738 = vrot.slane %v3736, 4
      %v3739 = vor.u32 %v3738, %v3734
      %v3740 = vrot.slane %v3739, 4
      %v3742 = vshll.u32 %v3529, 16
      %v3744 = vrot.slane %v3742, 5
      %v3745 = vsel %vm194, %v3740, %v3744
      %v3747 = vshrl.u32 %v3530, 16
      %v3749 = vrot.slane %v3747, 4
      %v3750 = vshll.u32 %v3530, 16
      %v3752 = vrot.slane %v3750, 5
      %v3753 = vor.u32 %v3749, %v3752
      %v3754 = vrot.slane %v3753, 4
      %v3756 = vshll.u32 %v3531, 16
      %v3758 = vrot.slane %v3756, 5
      %v3759 = vsel %vm194, %v3754, %v3758
      %v3760 = vshrl.u32 %v3531, 16
      %v3762 = vrot.slane %v3760, 4
      %v3763 = vor.u32 %v3762, %v3758
      %v3764 = vrot.slane %v3763, 4
      %v3766 = vshll.u32 %v3532, 16
      %v3768 = vrot.slane %v3766, 5
      %v3769 = vsel %vm194, %v3764, %v3768
      %v3771 = vshrl.u32 %v3533, 16
      %v3773 = vrot.slane %v3771, 4
      %v3774 = vshll.u32 %v3533, 16
      %v3776 = vrot.slane %v3774, 5
      %v3777 = vor.u32 %v3773, %v3776
      %v3778 = vrot.slane %v3777, 4
      %v3780 = vshll.u32 %v3534, 16
      %v3782 = vrot.slane %v3780, 5
      %v3783 = vsel %vm194, %v3778, %v3782
      %v3784 = vshrl.u32 %v3534, 16
      %v3786 = vrot.slane %v3784, 4
      %v3787 = vor.u32 %v3786, %v3782
      %v3788 = vrot.slane %v3787, 4
      %v3790 = vshll.u32 %v3535, 16
      %v3792 = vrot.slane %v3790, 5
      %v3793 = vsel %vm194, %v3788, %v3792
      %v3795 = vshrl.u32 %v3536, 16
      %v3797 = vrot.slane %v3795, 4
      %v3798 = vshll.u32 %v3536, 16
      %v3800 = vrot.slane %v3798, 5
      %v3801 = vor.u32 %v3797, %v3800
      %v3802 = vrot.slane %v3801, 4
      %v3804 = vshll.u32 %v3537, 16
      %v3806 = vrot.slane %v3804, 5
      %v3807 = vsel %vm194, %v3802, %v3806
      %v3808 = vshrl.u32 %v3537, 16
      %v3810 = vrot.slane %v3808, 4
      %v3811 = vor.u32 %v3810, %v3806
      %v3812 = vrot.slane %v3811, 4
      %v3814 = vshll.u32 %v3538, 16
      %v3816 = vrot.slane %v3814, 5
      %v3817 = vsel %vm194, %v3812, %v3816
      %v3819 = vshrl.u32 %v3539, 16
      %v3821 = vrot.slane %v3819, 4
      %v3822 = vshll.u32 %v3539, 16
      %v3824 = vrot.slane %v3822, 5
      %v3825 = vor.u32 %v3821, %v3824
      %v3826 = vrot.slane %v3825, 4
      %v3828 = vshll.u32 %v3540, 16
      %v3830 = vrot.slane %v3828, 5
      %v3831 = vsel %vm194, %v3826, %v3830
      %v3832 = vshrl.u32 %v3540, 16
      %v3834 = vrot.slane %v3832, 4
      %v3835 = vor.u32 %v3834, %v3830
      %v3836 = vrot.slane %v3835, 4
      %v3838 = vshll.u32 %v3541, 16
      %v3840 = vrot.slane %v3838, 5
      %v3841 = vsel %vm194, %v3836, %v3840
      %v3843 = vshrl.u32 %v3542, 16
      %v3845 = vrot.slane %v3843, 4
      %v3846 = vshll.u32 %v3542, 16
      %v3848 = vrot.slane %v3846, 5
      %v3849 = vor.u32 %v3845, %v3848
      %v3850 = vrot.slane %v3849, 4
      %v3852 = vshll.u32 %v3543, 16
      %v3854 = vrot.slane %v3852, 5
      %v3855 = vsel %vm194, %v3850, %v3854
      %v3856 = vshrl.u32 %v3543, 16
      %v3858 = vrot.slane %v3856, 4
      %v3859 = vor.u32 %v3858, %v3854
      %v3860 = vrot.slane %v3859, 4
      %v3862 = vshll.u32 %v3544, 16
      %v3864 = vrot.slane %v3862, 5
      %v3865 = vsel %vm194, %v3860, %v3864
      %v3867 = vshrl.u32 %v3545, 16
      %v3869 = vrot.slane %v3867, 4
      %v3870 = vshll.u32 %v3545, 16
      %v3872 = vrot.slane %v3870, 5
      %v3873 = vor.u32 %v3869, %v3872
      %v3874 = vrot.slane %v3873, 4
      %v3876 = vshll.u32 %v3546, 16
      %v3878 = vrot.slane %v3876, 5
      %v3879 = vsel %vm194, %v3874, %v3878
      %v3880 = vshrl.u32 %v3546, 16
      %v3882 = vrot.slane %v3880, 4
      %v3883 = vor.u32 %v3882, %v3878
      %v3884 = vrot.slane %v3883, 4
      %v3886 = vshll.u32 %v3547, 16
      %v3888 = vrot.slane %v3886, 5
      %v3889 = vsel %vm194, %v3884, %v3888
      %v3891 = vshrl.u32 %v3548, 16
      %v3893 = vrot.slane %v3891, 4
      %v3894 = vshll.u32 %v3548, 16
      %v3896 = vrot.slane %v3894, 5
      %v3897 = vor.u32 %v3893, %v3896
      %v3898 = vrot.slane %v3897, 4
      %v3900 = vshll.u32 %v3549, 16
      %v3902 = vrot.slane %v3900, 5
      %v3903 = vsel %vm194, %v3898, %v3902
      %v3904 = vshrl.u32 %v3549, 16
      %v3906 = vrot.slane %v3904, 4
      %v3907 = vor.u32 %v3906, %v3902
      %v3908 = vrot.slane %v3907, 4
      %v3910 = vshll.u32 %v3550, 16
      %v3912 = vrot.slane %v3910, 5
      %v3913 = vsel %vm194, %v3908, %v3912
      %v3915 = vshrl.u32 %v3551, 16
      %v3917 = vrot.slane %v3915, 4
      %v3918 = vshll.u32 %v3551, 16
      %v3920 = vrot.slane %v3918, 5
      %v3921 = vor.u32 %v3917, %v3920
      %v3922 = vrot.slane %v3921, 4
      %v3924 = vshll.u32 %v3552, 16
      %v3926 = vrot.slane %v3924, 5
      %v3927 = vsel %vm194, %v3922, %v3926
      %v3928 = vshrl.u32 %v3552, 16
      %v3930 = vrot.slane %v3928, 4
      %v3931 = vor.u32 %v3930, %v3926
      %v3932 = vrot.slane %v3931, 4
      %v3934 = vshll.u32 %v3553, 16
      %v3936 = vrot.slane %v3934, 5
      %v3937 = vsel %vm194, %v3932, %v3936
      %s3938 = scalar_lea.vmem %s1, 14
      %v3939 = vld [vmem:[%s3938] sm:$0x3]
      %v3940 = vunpack.c.l.b16 %v3567
      %v3941 = vunpack.c.l.b16 %v3577
      %v3942 = vunpack.c.l.b16 %v3591
      %v3943 = vunpack.c.l.b16 %v3601
      %v3944 = vunpack.c.l.b16 %v3615
      %v3945 = vunpack.c.l.b16 %v3625
      %v3946 = vunpack.c.l.b16 %v3639
      %v3947 = vunpack.c.l.b16 %v3649
      %v3948 = vunpack.c.l.b16 %v3663
      %v3949 = vunpack.c.l.b16 %v3673
      %v3950 = vunpack.c.l.b16 %v3687
      %v3951 = vunpack.c.l.b16 %v3697
      %v3952 = vunpack.c.l.b16 %v3711
      %v3953 = vunpack.c.l.b16 %v3721
      %v3954 = vunpack.c.l.b16 %v3735
      %v3955 = vunpack.c.l.b16 %v3745
      %v3956 = vunpack.c.l.b16 %v3759
      %v3957 = vunpack.c.l.b16 %v3769
      %v3958 = vunpack.c.l.b16 %v3783
      %v3959 = vunpack.c.l.b16 %v3793
      %v3960 = vunpack.c.l.b16 %v3807
      %v3961 = vunpack.c.l.b16 %v3817
      %v3962 = vunpack.c.l.b16 %v3831
      %v3963 = vunpack.c.l.b16 %v3841
      %v3964 = vunpack.c.l.b16 %v3855
      %v3965 = vunpack.c.l.b16 %v3865
      %v3966 = vunpack.c.l.b16 %v3879
      %v3967 = vunpack.c.l.b16 %v3889
      %v3968 = vunpack.c.l.b16 %v3903
      %v3969 = vunpack.c.l.b16 %v3913
      %v3970 = vunpack.c.l.b16 %v3927
      %v3971 = vunpack.c.l.b16 %v3937
      %v3972 = vpack.c.b16 %v3941, %v3940
      %v3973 = vpack.c.b16 %v3943, %v3942
      %v3974 = vpack.c.b16 %v3945, %v3944
      %v3975 = vpack.c.b16 %v3947, %v3946
      %v3976 = vpack.c.b16 %v3949, %v3948
      %v3977 = vpack.c.b16 %v3951, %v3950
      %v3978 = vpack.c.b16 %v3953, %v3952
      %v3979 = vpack.c.b16 %v3955, %v3954
      %v3980 = vpack.c.b16 %v3957, %v3956
      %v3981 = vpack.c.b16 %v3959, %v3958
      %v3982 = vpack.c.b16 %v3961, %v3960
      %v3983 = vpack.c.b16 %v3963, %v3962
      %v3984 = vpack.c.b16 %v3965, %v3964
      %v3985 = vpack.c.b16 %v3967, %v3966
      %v3986 = vpack.c.b16 %v3969, %v3968
      %v3987 = vpack.c.b16 %v3971, %v3970
      %v3989 = vsel %vm629, %v3972, 0
      %v3992 = vsel %vm629, %v3973, 0
      %v3995 = vsel %vm629, %v3974, 0
      %v3998 = vsel %vm629, %v3975, 0
      %v4001 = vsel %vm629, %v3976, 0
      %v4004 = vsel %vm629, %v3977, 0
      %v4007 = vsel %vm629, %v3978, 0
      %v4010 = vsel %vm629, %v3979, 0
      %v4013 = vsel %vm629, %v3980, 0
      %v4016 = vsel %vm629, %v3981, 0
      %v4019 = vsel %vm629, %v3982, 0
      %v4022 = vsel %vm629, %v3983, 0
      %v4025 = vsel %vm629, %v3984, 0
      %v4028 = vsel %vm629, %v3985, 0
      %v4031 = vsel %vm629, %v3986, 0
      %v4034 = vsel %vm629, %v3987, 0
      %v4037 = vsel %vm678, %v3939, 0
      %4039 = vmatprep.subr.bf16.mxu0 0
      %4040 = vmatpush1.bf16.msra.mxu0 %v4037
      %4041 = vmatprep.subr.bf16.mxu0 0
      %4042 = vmatpush1.bf16.msra.mxu0 0
      %4043 = vmatprep.subr.bf16.mxu0 0
      %4044 = vmatpush1.bf16.msra.mxu0 0
      %4045 = vmatprep.subr.bf16.mxu0 0
      %4046 = vmatpush1.bf16.msra.mxu0 0
      %4047 = vmatprep.subr.bf16.mxu0 0
      %4048 = vmatpush1.bf16.msra.mxu0 0
      %4049 = vmatprep.subr.bf16.mxu0 0
      %4050 = vmatpush1.bf16.msra.mxu0 0
      %4051 = vmatprep.subr.bf16.mxu0 0
      %4052 = vmatpush1.bf16.msra.mxu0 0
      %4053 = vmatprep.subr.bf16.mxu0 0
      %4054 = vmatpush1.bf16.msra.mxu0 0
      %4055 = vmatprep.subr.bf16.mxu0 0
      %4056 = vmatpush1.bf16.msra.mxu0 0
      %4057 = vmatprep.subr.bf16.mxu0 0
      %4058 = vmatpush1.bf16.msra.mxu0 0
      %4059 = vmatprep.subr.bf16.mxu0 0
      %4060 = vmatpush1.bf16.msra.mxu0 0
      %4061 = vmatprep.subr.bf16.mxu0 0
      %4062 = vmatpush1.bf16.msra.mxu0 0
      %4063 = vmatprep.subr.bf16.mxu0 0
      %4064 = vmatpush1.bf16.msra.mxu0 0
      %4065 = vmatprep.subr.bf16.mxu0 0
      %4066 = vmatpush1.bf16.msra.mxu0 0
      %4067 = vmatprep.subr.bf16.mxu0 0
      %4068 = vmatpush1.bf16.msra.mxu0 0
      %4069 = vmatprep.subr.bf16.mxu0 0
      %4070 = vmatpush1.bf16.msra.mxu0 0
      %4071 = vmatprep.mubr.bf16.mxu0 0
      %4072 = vmatmul.mubr.bf16.gmra.mrb[0].mxu0 %v3989
      %v4073 = vpop.f32.mrb[0].mxu0
      %v4074 = vadd.f32 0.0, %v4073
      %v4075 = vpop.f32.mrb[0].mxu0
      %v4076 = vpop.f32.mrb[0].mxu0
      %v4077 = vadd.f32 0.0, %v4076
      %v4078 = vpop.f32.mrb[0].mxu0
      %4079 = vmatprep.mubr.bf16.mxu0 0
      %4080 = vmatmul.mubr.bf16.gmra.mrb[0].mxu0 %v3992
      %v4081 = vpop.f32.mrb[0].mxu0
      %v4082 = vadd.f32 0.0, %v4081
      %v4083 = vpop.f32.mrb[0].mxu0
      %v4084 = vpop.f32.mrb[0].mxu0
      %v4085 = vadd.f32 0.0, %v4084
      %v4086 = vpop.f32.mrb[0].mxu0
      %4087 = vmatprep.mubr.bf16.mxu0 0
      %4088 = vmatmul.mubr.bf16.gmra.mrb[0].mxu0 %v3995
      %v4089 = vpop.f32.mrb[0].mxu0
      %v4090 = vadd.f32 0.0, %v4089
      %v4091 = vpop.f32.mrb[0].mxu0
      %v4092 = vpop.f32.mrb[0].mxu0
      %v4093 = vadd.f32 0.0, %v4092
      %v4094 = vpop.f32.mrb[0].mxu0
      %4095 = vmatprep.mubr.bf16.mxu0 0
      %4096 = vmatmul.mubr.bf16.gmra.mrb[0].mxu0 %v3998
      %v4097 = vpop.f32.mrb[0].mxu0
      %v4098 = vadd.f32 0.0, %v4097
      %v4099 = vpop.f32.mrb[0].mxu0
      %v4100 = vpop.f32.mrb[0].mxu0
      %v4101 = vadd.f32 0.0, %v4100
      %v4102 = vpop.f32.mrb[0].mxu0
      %4103 = vmatprep.mubr.bf16.mxu0 0
      %4104 = vmatmul.mubr.bf16.gmra.mrb[0].mxu0 %v4001
      %v4105 = vpop.f32.mrb[0].mxu0
      %v4106 = vadd.f32 0.0, %v4105
      %v4107 = vpop.f32.mrb[0].mxu0
      %v4108 = vpop.f32.mrb[0].mxu0
      %v4109 = vadd.f32 0.0, %v4108
      %v4110 = vpop.f32.mrb[0].mxu0
      %4111 = vmatprep.mubr.bf16.mxu0 0
      %4112 = vmatmul.mubr.bf16.gmra.mrb[0].mxu0 %v4004
      %v4113 = vpop.f32.mrb[0].mxu0
      %v4114 = vadd.f32 0.0, %v4113
      %v4115 = vpop.f32.mrb[0].mxu0
      %v4116 = vpop.f32.mrb[0].mxu0
      %v4117 = vadd.f32 0.0, %v4116
      %v4118 = vpop.f32.mrb[0].mxu0
      %4119 = vmatprep.mubr.bf16.mxu0 0
      %4120 = vmatmul.mubr.bf16.gmra.mrb[0].mxu0 %v4007
      %v4121 = vpop.f32.mrb[0].mxu0
      %v4122 = vadd.f32 0.0, %v4121
      %v4123 = vpop.f32.mrb[0].mxu0
      %v4124 = vpop.f32.mrb[0].mxu0
      %v4125 = vadd.f32 0.0, %v4124
      %v4126 = vpop.f32.mrb[0].mxu0
      %4127 = vmatprep.mubr.bf16.mxu0 0
      %4128 = vmatmul.mubr.bf16.gmra.mrb[0].mxu0 %v4010
      %v4129 = vpop.f32.mrb[0].mxu0
      %v4130 = vadd.f32 0.0, %v4129
      %v4131 = vpop.f32.mrb[0].mxu0
      %v4132 = vpop.f32.mrb[0].mxu0
      %v4133 = vadd.f32 0.0, %v4132
      %v4134 = vpop.f32.mrb[0].mxu0
      %4135 = vmatprep.mubr.bf16.mxu0 0
      %4136 = vmatmul.mubr.bf16.gmra.mrb[0].mxu0 %v4013
      %v4137 = vpop.f32.mrb[0].mxu0
      %v4138 = vadd.f32 0.0, %v4137
      %v4139 = vpop.f32.mrb[0].mxu0
      %v4140 = vpop.f32.mrb[0].mxu0
      %v4141 = vadd.f32 0.0, %v4140
      %v4142 = vpop.f32.mrb[0].mxu0
      %4143 = vmatprep.mubr.bf16.mxu0 0
      %4144 = vmatmul.mubr.bf16.gmra.mrb[0].mxu0 %v4016
      %v4145 = vpop.f32.mrb[0].mxu0
      %v4146 = vadd.f32 0.0, %v4145
      %v4147 = vpop.f32.mrb[0].mxu0
      %v4148 = vpop.f32.mrb[0].mxu0
      %v4149 = vadd.f32 0.0, %v4148
      %v4150 = vpop.f32.mrb[0].mxu0
      %4151 = vmatprep.mubr.bf16.mxu0 0
      %4152 = vmatmul.mubr.bf16.gmra.mrb[0].mxu0 %v4019
      %v4153 = vpop.f32.mrb[0].mxu0
      %v4154 = vadd.f32 0.0, %v4153
      %v4155 = vpop.f32.mrb[0].mxu0
      %v4156 = vpop.f32.mrb[0].mxu0
      %v4157 = vadd.f32 0.0, %v4156
      %v4158 = vpop.f32.mrb[0].mxu0
      %4159 = vmatprep.mubr.bf16.mxu0 0
      %4160 = vmatmul.mubr.bf16.gmra.mrb[0].mxu0 %v4022
      %v4161 = vpop.f32.mrb[0].mxu0
      %v4162 = vadd.f32 0.0, %v4161
      %v4163 = vpop.f32.mrb[0].mxu0
      %v4164 = vpop.f32.mrb[0].mxu0
      %v4165 = vadd.f32 0.0, %v4164
      %v4166 = vpop.f32.mrb[0].mxu0
      %4167 = vmatprep.mubr.bf16.mxu0 0
      %4168 = vmatmul.mubr.bf16.gmra.mrb[0].mxu0 %v4025
      %v4169 = vpop.f32.mrb[0].mxu0
      %v4170 = vadd.f32 0.0, %v4169
      %v4171 = vpop.f32.mrb[0].mxu0
      %v4172 = vpop.f32.mrb[0].mxu0
      %v4173 = vadd.f32 0.0, %v4172
      %v4174 = vpop.f32.mrb[0].mxu0
      %4175 = vmatprep.mubr.bf16.mxu0 0
      %4176 = vmatmul.mubr.bf16.gmra.mrb[0].mxu0 %v4028
      %v4177 = vpop.f32.mrb[0].mxu0
      %v4178 = vadd.f32 0.0, %v4177
      %v4179 = vpop.f32.mrb[0].mxu0
      %v4180 = vpop.f32.mrb[0].mxu0
      %v4181 = vadd.f32 0.0, %v4180
      %v4182 = vpop.f32.mrb[0].mxu0
      %4183 = vmatprep.mubr.bf16.mxu0 0
      %4184 = vmatmul.mubr.bf16.gmra.mrb[0].mxu0 %v4031
      %v4185 = vpop.f32.mrb[0].mxu0
      %v4186 = vadd.f32 0.0, %v4185
      %v4187 = vpop.f32.mrb[0].mxu0
      %v4188 = vpop.f32.mrb[0].mxu0
      %v4189 = vadd.f32 0.0, %v4188
      %v4190 = vpop.f32.mrb[0].mxu0
      %4191 = vmatprep.mubr.bf16.mxu0 0
      %4192 = vmatmul.mubr.bf16.gmra.mrb[0].mxu0 %v4034
      %v4193 = vpop.f32.mrb[0].mxu0
      %v4194 = vadd.f32 0.0, %v4193
      %v4195 = vpop.f32.mrb[0].mxu0
      %v4196 = vpop.f32.mrb[0].mxu0
      %v4197 = vadd.f32 0.0, %v4196
      %v4198 = vpop.f32.mrb[0].mxu0
      %4199 = vdwg.mxu0
      %v4200 = vadd.f32 %v3474, %v4074
      %v4201 = vadd.f32 %v3475, %v4077
      %v4202 = vadd.f32 %v3476, %v4082
      %v4203 = vadd.f32 %v3477, %v4085
      %v4204 = vadd.f32 %v3478, %v4090
      %v4205 = vadd.f32 %v3479, %v4093
      %v4206 = vadd.f32 %v3480, %v4098
      %v4207 = vadd.f32 %v3481, %v4101
      %v4208 = vadd.f32 %v3482, %v4106
      %v4209 = vadd.f32 %v3483, %v4109
      %v4210 = vadd.f32 %v3484, %v4114
      %v4211 = vadd.f32 %v3485, %v4117
      %v4212 = vadd.f32 %v3486, %v4122
      %v4213 = vadd.f32 %v3487, %v4125
      %v4214 = vadd.f32 %v3488, %v4130
      %v4215 = vadd.f32 %v3489, %v4133
      %v4216 = vadd.f32 %v3490, %v4138
      %v4217 = vadd.f32 %v3491, %v4141
      %v4218 = vadd.f32 %v3492, %v4146
      %v4219 = vadd.f32 %v3493, %v4149
      %v4220 = vadd.f32 %v3494, %v4154
      %v4221 = vadd.f32 %v3495, %v4157
      %v4222 = vadd.f32 %v3496, %v4162
      %v4223 = vadd.f32 %v3497, %v4165
      %v4224 = vadd.f32 %v3498, %v4170
      %v4225 = vadd.f32 %v3499, %v4173
      %v4226 = vadd.f32 %v3500, %v4178
      %v4227 = vadd.f32 %v3501, %v4181
      %v4228 = vadd.f32 %v3502, %v4186
      %v4229 = vadd.f32 %v3503, %v4189
      %v4230 = vadd.f32 %v3504, %v4194
      %v4231 = vadd.f32 %v3505, %v4197
      %v4232 = vld [vmem:[%s3147] sm:$0xe]
      %v4233 = vld [vmem:[%s3147 + $0xc] sm:$0xe]
      %v4234 = vld [vmem:[%s3147 + $0x18] sm:$0xe]
      %v4235 = vld [vmem:[%s3147 + $0x24] sm:$0xe]
      %v4236 = vld [vmem:[%s3147 + $0x30] sm:$0xe]
      %v4237 = vld [vmem:[%s3147 + $0x3c] sm:$0xe]
      %v4238 = vld [vmem:[%s3147 + $0x48] sm:$0xe]
      %v4239 = vld [vmem:[%s3147 + $0x54] sm:$0xe]
      %v4240 = vld [vmem:[%s3147 + $0x60] sm:$0xe]
      %v4241 = vld [vmem:[%s3147 + $0x6c] sm:$0xe]
      %v4242 = vld [vmem:[%s3147 + $0x78] sm:$0xe]
      %v4243 = vld [vmem:[%s3147 + $0x84] sm:$0xe]
      %v4244 = vld [vmem:[%s3147 + $0x90] sm:$0xe]
      %v4245 = vld [vmem:[%s3147 + $0x9c] sm:$0xe]
      %v4246 = vld [vmem:[%s3147 + $0xa8] sm:$0xe]
      %v4247 = vld [vmem:[%s3147 + $0xb4] sm:$0xe]
      %v4296 = vrot.slane %v4232, 5
      %v4297 = vrot.slane %v4296, 4
      %v4298 = vrot.slane %v3507, 5
      %v4299 = vsel %vm1185, %v4297, %v4298
      %v4300 = vrot.slane %v4298, 4
      %v4301 = vrot.slane %v3508, 5
      %v4302 = vsel %vm1185, %v4300, %v4301
      %v4303 = vrot.slane %v4233, 5
      %v4304 = vrot.slane %v4303, 4
      %v4305 = vrot.slane %v3510, 5
      %v4306 = vsel %vm1185, %v4304, %v4305
      %v4307 = vrot.slane %v4305, 4
      %v4308 = vrot.slane %v3511, 5
      %v4309 = vsel %vm1185, %v4307, %v4308
      %v4310 = vrot.slane %v4234, 5
      %v4311 = vrot.slane %v4310, 4
      %v4312 = vrot.slane %v3513, 5
      %v4313 = vsel %vm1185, %v4311, %v4312
      %v4314 = vrot.slane %v4312, 4
      %v4315 = vrot.slane %v3514, 5
      %v4316 = vsel %vm1185, %v4314, %v4315
      %v4317 = vrot.slane %v4235, 5
      %v4318 = vrot.slane %v4317, 4
      %v4319 = vrot.slane %v3516, 5
      %v4320 = vsel %vm1185, %v4318, %v4319
      %v4321 = vrot.slane %v4319, 4
      %v4322 = vrot.slane %v3517, 5
      %v4323 = vsel %vm1185, %v4321, %v4322
      %v4324 = vrot.slane %v4236, 5
      %v4325 = vrot.slane %v4324, 4
      %v4326 = vrot.slane %v3519, 5
      %v4327 = vsel %vm1185, %v4325, %v4326
      %v4328 = vrot.slane %v4326, 4
      %v4329 = vrot.slane %v3520, 5
      %v4330 = vsel %vm1185, %v4328, %v4329
      %v4331 = vrot.slane %v4237, 5
      %v4332 = vrot.slane %v4331, 4
      %v4333 = vrot.slane %v3522, 5
      %v4334 = vsel %vm1185, %v4332, %v4333
      %v4335 = vrot.slane %v4333, 4
      %v4336 = vrot.slane %v3523, 5
      %v4337 = vsel %vm1185, %v4335, %v4336
      %v4338 = vrot.slane %v4238, 5
      %v4339 = vrot.slane %v4338, 4
      %v4340 = vrot.slane %v3525, 5
      %v4341 = vsel %vm1185, %v4339, %v4340
      %v4342 = vrot.slane %v4340, 4
      %v4343 = vrot.slane %v3526, 5
      %v4344 = vsel %vm1185, %v4342, %v4343
      %v4345 = vrot.slane %v4239, 5
      %v4346 = vrot.slane %v4345, 4
      %v4347 = vrot.slane %v3528, 5
      %v4348 = vsel %vm1185, %v4346, %v4347
      %v4349 = vrot.slane %v4347, 4
      %v4350 = vrot.slane %v3529, 5
      %v4351 = vsel %vm1185, %v4349, %v4350
      %v4352 = vrot.slane %v4240, 5
      %v4353 = vrot.slane %v4352, 4
      %v4354 = vrot.slane %v3531, 5
      %v4355 = vsel %vm1185, %v4353, %v4354
      %v4356 = vrot.slane %v4354, 4
      %v4357 = vrot.slane %v3532, 5
      %v4358 = vsel %vm1185, %v4356, %v4357
      %v4359 = vrot.slane %v4241, 5
      %v4360 = vrot.slane %v4359, 4
      %v4361 = vrot.slane %v3534, 5
      %v4362 = vsel %vm1185, %v4360, %v4361
      %v4363 = vrot.slane %v4361, 4
      %v4364 = vrot.slane %v3535, 5
      %v4365 = vsel %vm1185, %v4363, %v4364
      %v4366 = vrot.slane %v4242, 5
      %v4367 = vrot.slane %v4366, 4
      %v4368 = vrot.slane %v3537, 5
      %v4369 = vsel %vm1185, %v4367, %v4368
      %v4370 = vrot.slane %v4368, 4
      %v4371 = vrot.slane %v3538, 5
      %v4372 = vsel %vm1185, %v4370, %v4371
      %v4373 = vrot.slane %v4243, 5
      %v4374 = vrot.slane %v4373, 4
      %v4375 = vrot.slane %v3540, 5
      %v4376 = vsel %vm1185, %v4374, %v4375
      %v4377 = vrot.slane %v4375, 4
      %v4378 = vrot.slane %v3541, 5
      %v4379 = vsel %vm1185, %v4377, %v4378
      %v4380 = vrot.slane %v4244, 5
      %v4381 = vrot.slane %v4380, 4
      %v4382 = vrot.slane %v3543, 5
      %v4383 = vsel %vm1185, %v4381, %v4382
      %v4384 = vrot.slane %v4382, 4
      %v4385 = vrot.slane %v3544, 5
      %v4386 = vsel %vm1185, %v4384, %v4385
      %v4387 = vrot.slane %v4245, 5
      %v4388 = vrot.slane %v4387, 4
      %v4389 = vrot.slane %v3546, 5
      %v4390 = vsel %vm1185, %v4388, %v4389
      %v4391 = vrot.slane %v4389, 4
      %v4392 = vrot.slane %v3547, 5
      %v4393 = vsel %vm1185, %v4391, %v4392
      %v4394 = vrot.slane %v4246, 5
      %v4395 = vrot.slane %v4394, 4
      %v4396 = vrot.slane %v3549, 5
      %v4397 = vsel %vm1185, %v4395, %v4396
      %v4398 = vrot.slane %v4396, 4
      %v4399 = vrot.slane %v3550, 5
      %v4400 = vsel %vm1185, %v4398, %v4399
      %v4401 = vrot.slane %v4247, 5
      %v4402 = vrot.slane %v4401, 4
      %v4403 = vrot.slane %v3552, 5
      %v4404 = vsel %vm1185, %v4402, %v4403
      %v4405 = vrot.slane %v4403, 4
      %v4406 = vrot.slane %v3553, 5
      %v4407 = vsel %vm1185, %v4405, %v4406
      %s4408 = scalar_lea.vmem %s1, 16
      %v4409 = vld [vmem:[%s4408] sm:$0x3]
      %v4410 = vunpack.c.l.b16 %v4299
      %v4411 = vunpack.c.l.b16 %v4302
      %v4412 = vunpack.c.l.b16 %v4306
      %v4413 = vunpack.c.l.b16 %v4309
      %v4414 = vunpack.c.l.b16 %v4313
      %v4415 = vunpack.c.l.b16 %v4316
      %v4416 = vunpack.c.l.b16 %v4320
      %v4417 = vunpack.c.l.b16 %v4323
      %v4418 = vunpack.c.l.b16 %v4327
      %v4419 = vunpack.c.l.b16 %v4330
      %v4420 = vunpack.c.l.b16 %v4334
      %v4421 = vunpack.c.l.b16 %v4337
      %v4422 = vunpack.c.l.b16 %v4341
      %v4423 = vunpack.c.l.b16 %v4344
      %v4424 = vunpack.c.l.b16 %v4348
      %v4425 = vunpack.c.l.b16 %v4351
      %v4426 = vunpack.c.l.b16 %v4355
      %v4427 = vunpack.c.l.b16 %v4358
      %v4428 = vunpack.c.l.b16 %v4362
      %v4429 = vunpack.c.l.b16 %v4365
      %v4430 = vunpack.c.l.b16 %v4369
      %v4431 = vunpack.c.l.b16 %v4372
      %v4432 = vunpack.c.l.b16 %v4376
      %v4433 = vunpack.c.l.b16 %v4379
      %v4434 = vunpack.c.l.b16 %v4383
      %v4435 = vunpack.c.l.b16 %v4386
      %v4436 = vunpack.c.l.b16 %v4390
      %v4437 = vunpack.c.l.b16 %v4393
      %v4438 = vunpack.c.l.b16 %v4397
      %v4439 = vunpack.c.l.b16 %v4400
      %v4440 = vunpack.c.l.b16 %v4404
      %v4441 = vunpack.c.l.b16 %v4407
      %v4442 = vpack.c.b16 %v4411, %v4410
      %v4443 = vpack.c.b16 %v4413, %v4412
      %v4444 = vpack.c.b16 %v4415, %v4414
      %v4445 = vpack.c.b16 %v4417, %v4416
      %v4446 = vpack.c.b16 %v4419, %v4418
      %v4447 = vpack.c.b16 %v4421, %v4420
      %v4448 = vpack.c.b16 %v4423, %v4422
      %v4449 = vpack.c.b16 %v4425, %v4424
      %v4450 = vpack.c.b16 %v4427, %v4426
      %v4451 = vpack.c.b16 %v4429, %v4428
      %v4452 = vpack.c.b16 %v4431, %v4430
      %v4453 = vpack.c.b16 %v4433, %v4432
      %v4454 = vpack.c.b16 %v4435, %v4434
      %v4455 = vpack.c.b16 %v4437, %v4436
      %v4456 = vpack.c.b16 %v4439, %v4438
      %v4457 = vpack.c.b16 %v4441, %v4440
      %v4459 = vsel %vm629, %v4442, 0
      %v4462 = vsel %vm629, %v4443, 0
      %v4465 = vsel %vm629, %v4444, 0
      %v4468 = vsel %vm629, %v4445, 0
      %v4471 = vsel %vm629, %v4446, 0
      %v4474 = vsel %vm629, %v4447, 0
      %v4477 = vsel %vm629, %v4448, 0
      %v4480 = vsel %vm629, %v4449, 0
      %v4483 = vsel %vm629, %v4450, 0
      %v4486 = vsel %vm629, %v4451, 0
      %v4489 = vsel %vm629, %v4452, 0
      %v4492 = vsel %vm629, %v4453, 0
      %v4495 = vsel %vm629, %v4454, 0
      %v4498 = vsel %vm629, %v4455, 0
      %v4501 = vsel %vm629, %v4456, 0
      %v4504 = vsel %vm629, %v4457, 0
      %v4507 = vsel %vm678, %v4409, 0
      %4509 = vmatprep.subr.bf16.mxu0 0
      %4510 = vmatpush1.bf16.msra.mxu0 %v4507
      %4511 = vmatprep.subr.bf16.mxu0 0
      %4512 = vmatpush1.bf16.msra.mxu0 0
      %4513 = vmatprep.subr.bf16.mxu0 0
      %4514 = vmatpush1.bf16.msra.mxu0 0
      %4515 = vmatprep.subr.bf16.mxu0 0
      %4516 = vmatpush1.bf16.msra.mxu0 0
      %4517 = vmatprep.subr.bf16.mxu0 0
      %4518 = vmatpush1.bf16.msra.mxu0 0
      %4519 = vmatprep.subr.bf16.mxu0 0
      %4520 = vmatpush1.bf16.msra.mxu0 0
      %4521 = vmatprep.subr.bf16.mxu0 0
      %4522 = vmatpush1.bf16.msra.mxu0 0
      %4523 = vmatprep.subr.bf16.mxu0 0
      %4524 = vmatpush1.bf16.msra.mxu0 0
      %4525 = vmatprep.subr.bf16.mxu0 0
      %4526 = vmatpush1.bf16.msra.mxu0 0
      %4527 = vmatprep.subr.bf16.mxu0 0
      %4528 = vmatpush1.bf16.msra.mxu0 0
      %4529 = vmatprep.subr.bf16.mxu0 0
      %4530 = vmatpush1.bf16.msra.mxu0 0
      %4531 = vmatprep.subr.bf16.mxu0 0
      %4532 = vmatpush1.bf16.msra.mxu0 0
      %4533 = vmatprep.subr.bf16.mxu0 0
      %4534 = vmatpush1.bf16.msra.mxu0 0
      %4535 = vmatprep.subr.bf16.mxu0 0
      %4536 = vmatpush1.bf16.msra.mxu0 0
      %4537 = vmatprep.subr.bf16.mxu0 0
      %4538 = vmatpush1.bf16.msra.mxu0 0
      %4539 = vmatprep.subr.bf16.mxu0 0
      %4540 = vmatpush1.bf16.msra.mxu0 0
      %4541 = vmatprep.mubr.bf16.mxu0 0
      %4542 = vmatmul.mubr.bf16.gmra.mrb[0].mxu0 %v4459
      %v4543 = vpop.f32.mrb[0].mxu0
      %v4544 = vadd.f32 0.0, %v4543
      %v4545 = vpop.f32.mrb[0].mxu0
      %v4546 = vpop.f32.mrb[0].mxu0
      %v4547 = vadd.f32 0.0, %v4546
      %v4548 = vpop.f32.mrb[0].mxu0
      %4549 = vmatprep.mubr.bf16.mxu0 0
      %4550 = vmatmul.mubr.bf16.gmra.mrb[0].mxu0 %v4462
      %v4551 = vpop.f32.mrb[0].mxu0
      %v4552 = vadd.f32 0.0, %v4551
      %v4553 = vpop.f32.mrb[0].mxu0
      %v4554 = vpop.f32.mrb[0].mxu0
      %v4555 = vadd.f32 0.0, %v4554
      %v4556 = vpop.f32.mrb[0].mxu0
      %4557 = vmatprep.mubr.bf16.mxu0 0
      %4558 = vmatmul.mubr.bf16.gmra.mrb[0].mxu0 %v4465
      %v4559 = vpop.f32.mrb[0].mxu0
      %v4560 = vadd.f32 0.0, %v4559
      %v4561 = vpop.f32.mrb[0].mxu0
      %v4562 = vpop.f32.mrb[0].mxu0
      %v4563 = vadd.f32 0.0, %v4562
      %v4564 = vpop.f32.mrb[0].mxu0
      %4565 = vmatprep.mubr.bf16.mxu0 0
      %4566 = vmatmul.mubr.bf16.gmra.mrb[0].mxu0 %v4468
      %v4567 = vpop.f32.mrb[0].mxu0
      %v4568 = vadd.f32 0.0, %v4567
      %v4569 = vpop.f32.mrb[0].mxu0
      %v4570 = vpop.f32.mrb[0].mxu0
      %v4571 = vadd.f32 0.0, %v4570
      %v4572 = vpop.f32.mrb[0].mxu0
      %4573 = vmatprep.mubr.bf16.mxu0 0
      %4574 = vmatmul.mubr.bf16.gmra.mrb[0].mxu0 %v4471
      %v4575 = vpop.f32.mrb[0].mxu0
      %v4576 = vadd.f32 0.0, %v4575
      %v4577 = vpop.f32.mrb[0].mxu0
      %v4578 = vpop.f32.mrb[0].mxu0
      %v4579 = vadd.f32 0.0, %v4578
      %v4580 = vpop.f32.mrb[0].mxu0
      %4581 = vmatprep.mubr.bf16.mxu0 0
      %4582 = vmatmul.mubr.bf16.gmra.mrb[0].mxu0 %v4474
      %v4583 = vpop.f32.mrb[0].mxu0
      %v4584 = vadd.f32 0.0, %v4583
      %v4585 = vpop.f32.mrb[0].mxu0
      %v4586 = vpop.f32.mrb[0].mxu0
      %v4587 = vadd.f32 0.0, %v4586
      %v4588 = vpop.f32.mrb[0].mxu0
      %4589 = vmatprep.mubr.bf16.mxu0 0
      %4590 = vmatmul.mubr.bf16.gmra.mrb[0].mxu0 %v4477
      %v4591 = vpop.f32.mrb[0].mxu0
      %v4592 = vadd.f32 0.0, %v4591
      %v4593 = vpop.f32.mrb[0].mxu0
      %v4594 = vpop.f32.mrb[0].mxu0
      %v4595 = vadd.f32 0.0, %v4594
      %v4596 = vpop.f32.mrb[0].mxu0
      %4597 = vmatprep.mubr.bf16.mxu0 0
      %4598 = vmatmul.mubr.bf16.gmra.mrb[0].mxu0 %v4480
      %v4599 = vpop.f32.mrb[0].mxu0
      %v4600 = vadd.f32 0.0, %v4599
      %v4601 = vpop.f32.mrb[0].mxu0
      %v4602 = vpop.f32.mrb[0].mxu0
      %v4603 = vadd.f32 0.0, %v4602
      %v4604 = vpop.f32.mrb[0].mxu0
      %4605 = vmatprep.mubr.bf16.mxu0 0
      %4606 = vmatmul.mubr.bf16.gmra.mrb[0].mxu0 %v4483
      %v4607 = vpop.f32.mrb[0].mxu0
      %v4608 = vadd.f32 0.0, %v4607
      %v4609 = vpop.f32.mrb[0].mxu0
      %v4610 = vpop.f32.mrb[0].mxu0
      %v4611 = vadd.f32 0.0, %v4610
      %v4612 = vpop.f32.mrb[0].mxu0
      %4613 = vmatprep.mubr.bf16.mxu0 0
      %4614 = vmatmul.mubr.bf16.gmra.mrb[0].mxu0 %v4486
      %v4615 = vpop.f32.mrb[0].mxu0
      %v4616 = vadd.f32 0.0, %v4615
      %v4617 = vpop.f32.mrb[0].mxu0
      %v4618 = vpop.f32.mrb[0].mxu0
      %v4619 = vadd.f32 0.0, %v4618
      %v4620 = vpop.f32.mrb[0].mxu0
      %4621 = vmatprep.mubr.bf16.mxu0 0
      %4622 = vmatmul.mubr.bf16.gmra.mrb[0].mxu0 %v4489
      %v4623 = vpop.f32.mrb[0].mxu0
      %v4624 = vadd.f32 0.0, %v4623
      %v4625 = vpop.f32.mrb[0].mxu0
      %v4626 = vpop.f32.mrb[0].mxu0
      %v4627 = vadd.f32 0.0, %v4626
      %v4628 = vpop.f32.mrb[0].mxu0
      %4629 = vmatprep.mubr.bf16.mxu0 0
      %4630 = vmatmul.mubr.bf16.gmra.mrb[0].mxu0 %v4492
      %v4631 = vpop.f32.mrb[0].mxu0
      %v4632 = vadd.f32 0.0, %v4631
      %v4633 = vpop.f32.mrb[0].mxu0
      %v4634 = vpop.f32.mrb[0].mxu0
      %v4635 = vadd.f32 0.0, %v4634
      %v4636 = vpop.f32.mrb[0].mxu0
      %4637 = vmatprep.mubr.bf16.mxu0 0
      %4638 = vmatmul.mubr.bf16.gmra.mrb[0].mxu0 %v4495
      %v4639 = vpop.f32.mrb[0].mxu0
      %v4640 = vadd.f32 0.0, %v4639
      %v4641 = vpop.f32.mrb[0].mxu0
      %v4642 = vpop.f32.mrb[0].mxu0
      %v4643 = vadd.f32 0.0, %v4642
      %v4644 = vpop.f32.mrb[0].mxu0
      %4645 = vmatprep.mubr.bf16.mxu0 0
      %4646 = vmatmul.mubr.bf16.gmra.mrb[0].mxu0 %v4498
      %v4647 = vpop.f32.mrb[0].mxu0
      %v4648 = vadd.f32 0.0, %v4647
      %v4649 = vpop.f32.mrb[0].mxu0
      %v4650 = vpop.f32.mrb[0].mxu0
      %v4651 = vadd.f32 0.0, %v4650
      %v4652 = vpop.f32.mrb[0].mxu0
      %4653 = vmatprep.mubr.bf16.mxu0 0
      %4654 = vmatmul.mubr.bf16.gmra.mrb[0].mxu0 %v4501
      %v4655 = vpop.f32.mrb[0].mxu0
      %v4656 = vadd.f32 0.0, %v4655
      %v4657 = vpop.f32.mrb[0].mxu0
      %v4658 = vpop.f32.mrb[0].mxu0
      %v4659 = vadd.f32 0.0, %v4658
      %v4660 = vpop.f32.mrb[0].mxu0
      %4661 = vmatprep.mubr.bf16.mxu0 0
      %4662 = vmatmul.mubr.bf16.gmra.mrb[0].mxu0 %v4504
      %v4663 = vpop.f32.mrb[0].mxu0
      %v4664 = vadd.f32 0.0, %v4663
      %v4665 = vpop.f32.mrb[0].mxu0
      %v4666 = vpop.f32.mrb[0].mxu0
      %v4667 = vadd.f32 0.0, %v4666
      %v4668 = vpop.f32.mrb[0].mxu0
      %4669 = vdwg.mxu0
      %v4670 = vadd.f32 %v4200, %v4544
      %v4671 = vadd.f32 %v4201, %v4547
      %v4672 = vadd.f32 %v4202, %v4552
      %v4673 = vadd.f32 %v4203, %v4555
      %v4674 = vadd.f32 %v4204, %v4560
      %v4675 = vadd.f32 %v4205, %v4563
      %v4676 = vadd.f32 %v4206, %v4568
      %v4677 = vadd.f32 %v4207, %v4571
      %v4678 = vadd.f32 %v4208, %v4576
      %v4679 = vadd.f32 %v4209, %v4579
      %v4680 = vadd.f32 %v4210, %v4584
      %v4681 = vadd.f32 %v4211, %v4587
      %v4682 = vadd.f32 %v4212, %v4592
      %v4683 = vadd.f32 %v4213, %v4595
      %v4684 = vadd.f32 %v4214, %v4600
      %v4685 = vadd.f32 %v4215, %v4603
      %v4686 = vadd.f32 %v4216, %v4608
      %v4687 = vadd.f32 %v4217, %v4611
      %v4688 = vadd.f32 %v4218, %v4616
      %v4689 = vadd.f32 %v4219, %v4619
      %v4690 = vadd.f32 %v4220, %v4624
      %v4691 = vadd.f32 %v4221, %v4627
      %v4692 = vadd.f32 %v4222, %v4632
      %v4693 = vadd.f32 %v4223, %v4635
      %v4694 = vadd.f32 %v4224, %v4640
      %v4695 = vadd.f32 %v4225, %v4643
      %v4696 = vadd.f32 %v4226, %v4648
      %v4697 = vadd.f32 %v4227, %v4651
      %v4698 = vadd.f32 %v4228, %v4656
      %v4699 = vadd.f32 %v4229, %v4659
      %v4700 = vadd.f32 %v4230, %v4664
      %v4701 = vadd.f32 %v4231, %v4667
      %vm4702 = vcmask 261120
      %v4703 = vsel %vm4702, %v4670, 0.0
      %v4704 = vsel %vm4702, %v4671, 0.0
      %v4705 = vadd.f32 %v4703, %v4704
      %v4706 = vsel %vm4702, %v4672, 0.0
      %v4707 = vadd.f32 %v4705, %v4706
      %v4708 = vsel %vm4702, %v4673, 0.0
      %v4709 = vadd.f32 %v4707, %v4708
      %v4710 = vsel %vm4702, %v4674, 0.0
      %v4711 = vadd.f32 %v4709, %v4710
      %v4712 = vsel %vm4702, %v4675, 0.0
      %v4713 = vadd.f32 %v4711, %v4712
      %v4714 = vsel %vm4702, %v4676, 0.0
      %v4715 = vadd.f32 %v4713, %v4714
      %v4716 = vsel %vm4702, %v4677, 0.0
      %v4717 = vadd.f32 %v4715, %v4716
      %v4718 = vsel %vm4702, %v4678, 0.0
      %v4719 = vadd.f32 %v4717, %v4718
      %v4720 = vsel %vm4702, %v4679, 0.0
      %v4721 = vadd.f32 %v4719, %v4720
      %v4722 = vsel %vm4702, %v4680, 0.0
      %v4723 = vadd.f32 %v4721, %v4722
      %v4724 = vsel %vm4702, %v4681, 0.0
      %v4725 = vadd.f32 %v4723, %v4724
      %v4726 = vsel %vm4702, %v4682, 0.0
      %v4727 = vadd.f32 %v4725, %v4726
      %v4728 = vsel %vm4702, %v4683, 0.0
      %v4729 = vadd.f32 %v4727, %v4728
      %v4730 = vsel %vm4702, %v4684, 0.0
      %v4731 = vadd.f32 %v4729, %v4730
      %v4732 = vsel %vm4702, %v4685, 0.0
      %v4733 = vadd.f32 %v4731, %v4732
      %v4734 = vsel %vm4702, %v4686, 0.0
      %v4735 = vadd.f32 %v4733, %v4734
      %v4736 = vsel %vm4702, %v4687, 0.0
      %v4737 = vadd.f32 %v4735, %v4736
      %v4738 = vsel %vm4702, %v4688, 0.0
      %v4739 = vadd.f32 %v4737, %v4738
      %v4740 = vsel %vm4702, %v4689, 0.0
      %v4741 = vadd.f32 %v4739, %v4740
      %v4742 = vsel %vm4702, %v4690, 0.0
      %v4743 = vadd.f32 %v4741, %v4742
      %v4744 = vsel %vm4702, %v4691, 0.0
      %v4745 = vadd.f32 %v4743, %v4744
      %v4746 = vsel %vm4702, %v4692, 0.0
      %v4747 = vadd.f32 %v4745, %v4746
      %v4748 = vsel %vm4702, %v4693, 0.0
      %v4749 = vadd.f32 %v4747, %v4748
      %v4750 = vsel %vm4702, %v4694, 0.0
      %v4751 = vadd.f32 %v4749, %v4750
      %v4752 = vsel %vm4702, %v4695, 0.0
      %v4753 = vadd.f32 %v4751, %v4752
      %v4754 = vsel %vm4702, %v4696, 0.0
      %v4755 = vadd.f32 %v4753, %v4754
      %v4756 = vsel %vm4702, %v4697, 0.0
      %v4757 = vadd.f32 %v4755, %v4756
      %v4758 = vsel %vm4702, %v4698, 0.0
      %v4759 = vadd.f32 %v4757, %v4758
      %v4760 = vsel %vm4702, %v4699, 0.0
      %v4761 = vadd.f32 %v4759, %v4760
      %v4762 = vsel %vm4702, %v4700, 0.0
      %v4763 = vadd.f32 %v4761, %v4762
      %v4764 = vsel %vm4702, %v4701, 0.0
      %v4765 = vadd.f32 %v4763, %v4764
      %v4766 = vrot.slane %v4765, 4
      %v4767 = vadd.f32 %v4765, %v4766
      %v4768 = vrot.slane %v4767, 2
      %v4769 = vadd.f32 %v4767, %v4768
      %v4770 = vrot.slane %v4769, 1
      %v4771 = vadd.f32 %v4769, %v4770
      %v4772 = vmul.f32 %v4771, 0.00390625
      %v4773 = vsub.f32 %v4670, %v4772
      %v4774 = vsub.f32 %v4671, %v4772
      %v4775 = vsub.f32 %v4672, %v4772
      %v4776 = vsub.f32 %v4673, %v4772
      %v4777 = vsub.f32 %v4674, %v4772
      %v4778 = vsub.f32 %v4675, %v4772
      %v4779 = vsub.f32 %v4676, %v4772
      %v4780 = vsub.f32 %v4677, %v4772
      %v4781 = vsub.f32 %v4678, %v4772
      %v4782 = vsub.f32 %v4679, %v4772
      %v4783 = vsub.f32 %v4680, %v4772
      %v4784 = vsub.f32 %v4681, %v4772
      %v4785 = vsub.f32 %v4682, %v4772
      %v4786 = vsub.f32 %v4683, %v4772
      %v4787 = vsub.f32 %v4684, %v4772
      %v4788 = vsub.f32 %v4685, %v4772
      %v4789 = vsub.f32 %v4686, %v4772
      %v4790 = vsub.f32 %v4687, %v4772
      %v4791 = vsub.f32 %v4688, %v4772
      %v4792 = vsub.f32 %v4689, %v4772
      %v4793 = vsub.f32 %v4690, %v4772
      %v4794 = vsub.f32 %v4691, %v4772
      %v4795 = vsub.f32 %v4692, %v4772
      %v4796 = vsub.f32 %v4693, %v4772
      %v4797 = vsub.f32 %v4694, %v4772
      %v4798 = vsub.f32 %v4695, %v4772
      %v4799 = vsub.f32 %v4696, %v4772
      %v4800 = vsub.f32 %v4697, %v4772
      %v4801 = vsub.f32 %v4698, %v4772
      %v4802 = vsub.f32 %v4699, %v4772
      %v4803 = vsub.f32 %v4700, %v4772
      %v4804 = vsub.f32 %v4701, %v4772
      %v4805 = vmul.f32 %v4773, %v4773
      %v4806 = vmul.f32 %v4774, %v4774
      %v4807 = vmul.f32 %v4775, %v4775
      %v4808 = vmul.f32 %v4776, %v4776
      %v4809 = vmul.f32 %v4777, %v4777
      %v4810 = vmul.f32 %v4778, %v4778
      %v4811 = vmul.f32 %v4779, %v4779
      %v4812 = vmul.f32 %v4780, %v4780
      %v4813 = vmul.f32 %v4781, %v4781
      %v4814 = vmul.f32 %v4782, %v4782
      %v4815 = vmul.f32 %v4783, %v4783
      %v4816 = vmul.f32 %v4784, %v4784
      %v4817 = vmul.f32 %v4785, %v4785
      %v4818 = vmul.f32 %v4786, %v4786
      %v4819 = vmul.f32 %v4787, %v4787
      %v4820 = vmul.f32 %v4788, %v4788
      %v4821 = vmul.f32 %v4789, %v4789
      %v4822 = vmul.f32 %v4790, %v4790
      %v4823 = vmul.f32 %v4791, %v4791
      %v4824 = vmul.f32 %v4792, %v4792
      %v4825 = vmul.f32 %v4793, %v4793
      %v4826 = vmul.f32 %v4794, %v4794
      %v4827 = vmul.f32 %v4795, %v4795
      %v4828 = vmul.f32 %v4796, %v4796
      %v4829 = vmul.f32 %v4797, %v4797
      %v4830 = vmul.f32 %v4798, %v4798
      %v4831 = vmul.f32 %v4799, %v4799
      %v4832 = vmul.f32 %v4800, %v4800
      %v4833 = vmul.f32 %v4801, %v4801
      %v4834 = vmul.f32 %v4802, %v4802
      %v4835 = vmul.f32 %v4803, %v4803
      %v4836 = vmul.f32 %v4804, %v4804
      %v4837 = vsel %vm4702, %v4805, 0.0
      %v4838 = vsel %vm4702, %v4806, 0.0
      %v4839 = vadd.f32 %v4837, %v4838
      %v4840 = vsel %vm4702, %v4807, 0.0
      %v4841 = vadd.f32 %v4839, %v4840
      %v4842 = vsel %vm4702, %v4808, 0.0
      %v4843 = vadd.f32 %v4841, %v4842
      %v4844 = vsel %vm4702, %v4809, 0.0
      %v4845 = vadd.f32 %v4843, %v4844
      %v4846 = vsel %vm4702, %v4810, 0.0
      %v4847 = vadd.f32 %v4845, %v4846
      %v4848 = vsel %vm4702, %v4811, 0.0
      %v4849 = vadd.f32 %v4847, %v4848
      %v4850 = vsel %vm4702, %v4812, 0.0
      %v4851 = vadd.f32 %v4849, %v4850
      %v4852 = vsel %vm4702, %v4813, 0.0
      %v4853 = vadd.f32 %v4851, %v4852
      %v4854 = vsel %vm4702, %v4814, 0.0
      %v4855 = vadd.f32 %v4853, %v4854
      %v4856 = vsel %vm4702, %v4815, 0.0
      %v4857 = vadd.f32 %v4855, %v4856
      %v4858 = vsel %vm4702, %v4816, 0.0
      %v4859 = vadd.f32 %v4857, %v4858
      %v4860 = vsel %vm4702, %v4817, 0.0
      %v4861 = vadd.f32 %v4859, %v4860
      %v4862 = vsel %vm4702, %v4818, 0.0
      %v4863 = vadd.f32 %v4861, %v4862
      %v4864 = vsel %vm4702, %v4819, 0.0
      %v4865 = vadd.f32 %v4863, %v4864
      %v4866 = vsel %vm4702, %v4820, 0.0
      %v4867 = vadd.f32 %v4865, %v4866
      %v4868 = vsel %vm4702, %v4821, 0.0
      %v4869 = vadd.f32 %v4867, %v4868
      %v4870 = vsel %vm4702, %v4822, 0.0
      %v4871 = vadd.f32 %v4869, %v4870
      %v4872 = vsel %vm4702, %v4823, 0.0
      %v4873 = vadd.f32 %v4871, %v4872
      %v4874 = vsel %vm4702, %v4824, 0.0
      %v4875 = vadd.f32 %v4873, %v4874
      %v4876 = vsel %vm4702, %v4825, 0.0
      %v4877 = vadd.f32 %v4875, %v4876
      %v4878 = vsel %vm4702, %v4826, 0.0
      %v4879 = vadd.f32 %v4877, %v4878
      %v4880 = vsel %vm4702, %v4827, 0.0
      %v4881 = vadd.f32 %v4879, %v4880
      %v4882 = vsel %vm4702, %v4828, 0.0
      %v4883 = vadd.f32 %v4881, %v4882
      %v4884 = vsel %vm4702, %v4829, 0.0
      %v4885 = vadd.f32 %v4883, %v4884
      %v4886 = vsel %vm4702, %v4830, 0.0
      %v4887 = vadd.f32 %v4885, %v4886
      %v4888 = vsel %vm4702, %v4831, 0.0
      %v4889 = vadd.f32 %v4887, %v4888
      %v4890 = vsel %vm4702, %v4832, 0.0
      %v4891 = vadd.f32 %v4889, %v4890
      %v4892 = vsel %vm4702, %v4833, 0.0
      %v4893 = vadd.f32 %v4891, %v4892
      %v4894 = vsel %vm4702, %v4834, 0.0
      %v4895 = vadd.f32 %v4893, %v4894
      %v4896 = vsel %vm4702, %v4835, 0.0
      %v4897 = vadd.f32 %v4895, %v4896
      %v4898 = vsel %vm4702, %v4836, 0.0
      %v4899 = vadd.f32 %v4897, %v4898
      %v4900 = vrot.slane %v4899, 4
      %v4901 = vadd.f32 %v4899, %v4900
      %v4902 = vrot.slane %v4901, 2
      %v4903 = vadd.f32 %v4901, %v4902
      %v4904 = vrot.slane %v4903, 1
      %v4905 = vadd.f32 %v4903, %v4904
      %vm4906 = vcmask 253952
      %4907 = vst.msk [vmem:[%s141] sm:$0x1] %vm4906, %v4771
      %4908 = vst.msk [vmem:[%s141 + $0x1] sm:$0x1] %vm4906, %v4905
      %p4909 = scmp.lt.s32.totalorder %s13, 1
      %s4910 = scalar_select %p4909, %s13, 1
      %s4911 = smul.addr %s4910, 8
      %s4912 = scalar_lea.vmem %s2, %s4911
      // Predicated region
      $region29: #{deconv_block_forward.2} parent=27 // pred_check
        %p4913 = pneg %p78
      $region30: #{deconv_block_forward.2} parent=27 // pred_check_branch
        %4915 = sbr.rel (%p4913) target = $region32
      $region31: #{deconv_block_forward.2} parent=27 // pred_region
        _
      $region32: #{deconv_block_forward.2} parent=27 // pred_fallthru
        _
    $region28: #{deconv_block_forward.2} parent=5 // pred_fallthru
      _
    %p4916 = scmp.le.s32.totalorder 2, %s8
    // Predicated region
    $region33: #{deconv_block_forward.2} parent=5 // pred_check
      %p4917 = pneg %p4916
    $region34: #{deconv_block_forward.2} parent=5 // pred_check_branch
      %4919 = sbr.rel (%p4917) target = $region36
    $region35: #{deconv_block_forward.2} parent=5 // pred_region
      %s4920 = ssub.s32 %s8, 2
      // Predicated region
      $region37: #{deconv_block_forward.2} parent=35 // pred_check
        %p4921 = pneg %p84
      $region38: #{deconv_block_forward.2} parent=35 // pred_check_branch
        %4923 = sbr.rel (%p4921) target = $region40
      $region39: #{deconv_block_forward.2} parent=35 // pred_region
        %p4924 = scmp.lt.s32.totalorder %s14, 1
        %s4925 = scalar_select %p4924, %s14, 1
        %s4926 = smul.addr %s4925, 8
        %s4927 = scalar_lea.vmem %s2, %s4926
      $region40: #{deconv_block_forward.2} parent=35 // pred_fallthru
        _
    $region36: #{deconv_block_forward.2} parent=5 // pred_fallthru
      _
  $region6: #{deconv_block_forward.2} parent=0 // loop_footer
    %s12 = sadd.s32 1, %s8
  $region7: #{deconv_block_forward.2} parent=0 // loop_footer_branch
    %7 = sbr.rel target = $region3
  $region8: #{deconv_block_forward.2} parent=0 // loop_exit
    _

</llo_original>
